<compile_context>
chip_gen: v6e
topology: v6e:2x2x1
jax: 0.10.0
libtpu: 0.0.40
codegen_flags: <defaults>
</compile_context>

<pallas_src>
import math
from functools import partial

import jax
import jax.numpy as jnp
from jax.experimental import pallas as pl
from jax.experimental.pallas import tpu as pltpu

Z_DIM = 128
HL_DIM = (100, 150, 150, 150, 150)
LRELU_SLOPE = 0.2
BN_EPS = 1e-5


def _round_up(v, m):
    return -(-v // m) * m


# Segment layout (kernel lane order): [x, z0, z1, z2, z3, z4], each padded to 128-multiple.
SEG_REAL = (Z_DIM,) + HL_DIM                                    # (128, 100, 150, 150, 150, 150)
SEG_PAD = tuple(_round_up(s, 128) for s in SEG_REAL)            # (128, 128, 256, 256, 256, 256)
SEG_OFF = tuple(sum(SEG_PAD[:i]) for i in range(len(SEG_PAD)))  # (0, 128, 256, 512, 768, 1024)
TOTAL_PAD = sum(SEG_PAD)                                        # 1280
N_LAYERS = len(HL_DIM)
SCRATCH_LANES = SEG_OFF[N_LAYERS]                               # 1024 (z4 only feeds the head)
BIAS_W = max(SEG_PAD[1:])                                       # 256


def _disc_kernel(x_ref, *refs):
    """refs = [W_0..W_4 (bf16, BN-folded), bias_stack, w_out_row, b_out, out_ref, h_scratch]."""
    w_refs = refs[:N_LAYERS]
    bias_ref = refs[N_LAYERS]          # (N_LAYERS, 256) f32, BN-folded biases
    wout_ref = refs[N_LAYERS + 1]      # (1, TOTAL_PAD) f32, BN-folded head row (kernel lane layout)
    bout_ref = refs[N_LAYERS + 2]      # (1, 1) f32, BN-folded head bias
    out_ref = refs[N_LAYERS + 3]       # (TB, 1) f32
    h_ref = refs[N_LAYERS + 4]         # (TB, 1024) bf16 scratch (pre-BN, post-LeakyReLU acts)

    x = x_ref[...]                     # (TB, 128) f32
    xb = x.astype(jnp.bfloat16)
    h_ref[:, 0:SEG_PAD[0]] = xb        # x segment @ lane 0

    # Deferred head reduction: accumulate elementwise products; reduce once at the end.
    acc_n = x * wout_ref[:, 0:SEG_PAD[0]]      # (TB, 128) f32: x + 128-wide segments
    acc_w = None                               # (TB, 256) f32: 256-wide segments

    for i in range(N_LAYERS):
        din_pad = SEG_OFF[i + 1]       # padded width of [x, z0..z_{i-1}]
        o_off = SEG_OFF[i + 1]         # this layer's output segment offset
        o_pad = SEG_PAD[i + 1]

        lhs = xb if i == 0 else h_ref[:, 0:din_pad]            # bf16, 128-aligned slice
        # Single contiguous K=din_pad MXU dot (do not split per segment), f32 accumulate.
        z = jnp.dot(lhs, w_refs[i][...], preferred_element_type=jnp.float32)
        z = z + bias_ref[i:i + 1, 0:o_pad]                     # BN-folded bias (padded lanes 0)
        z = jnp.maximum(z, LRELU_SLOPE * z)                    # LeakyReLU(0.2) as one vmax
        # (BatchNorm1d eval + Dropout eval are folded into weights / identity.)

        # Head contribution of this segment (BN fold already in wout row).
        contrib = z * wout_ref[:, o_off:o_off + o_pad]
        if o_pad <= 128:
            acc_n = acc_n + contrib
        elif acc_w is None:
            acc_w = contrib
        else:
            acc_w = acc_w + contrib

        if i + 1 < N_LAYERS:                                   # z4 never feeds another layer
            h_ref[:, o_off:o_off + o_pad] = z.astype(jnp.bfloat16)

    logit = (jnp.sum(acc_n, axis=-1, keepdims=True)
             + jnp.sum(acc_w, axis=-1, keepdims=True))
    out_ref[...] = jax.nn.sigmoid(logit + bout_ref[...])


def init_params(key):
    """Raw params, PyTorch-like layout (linear weights pre-transposed to (din, dout))."""
    raw = {"blocks": [], "w_out": None, "b_out": None}
    dim = Z_DIM
    keys = iter(jax.random.split(key, 6 * N_LAYERS + 2))
    for o in HL_DIM:
        bound = 1.0 / math.sqrt(dim)
        w = jax.random.uniform(next(keys), (dim, o), jnp.float32, -bound, bound)
        b = jax.random.uniform(next(keys), (o,), jnp.float32, -bound, bound)
        g = 1.0 + 0.1 * jax.random.normal(next(keys), (o,), jnp.float32)       # BN gamma
        beta = 0.1 * jax.random.normal(next(keys), (o,), jnp.float32)          # BN beta
        mean = 0.1 * jax.random.normal(next(keys), (o,), jnp.float32)          # BN running_mean
        var = 1.0 + 0.2 * jax.random.uniform(next(keys), (o,), jnp.float32)    # BN running_var
        raw["blocks"].append((w, b, g, beta, mean, var))
        dim += o
    bound = 1.0 / math.sqrt(dim)
    raw["w_out"] = jax.random.uniform(next(keys), (dim, 1), jnp.float32, -bound, bound)
    raw["b_out"] = jax.random.uniform(next(keys), (1, 1), jnp.float32, -bound, bound)
    return raw


def _bn_fold(raw):
    scales, shifts = [], []
    for (_, _, g, beta, mean, var) in raw["blocks"]:
        s = g / jnp.sqrt(var + BN_EPS)
        scales.append(s)
        shifts.append(beta - mean * s)
    return scales, shifts


def prepare_params(raw):
    """One-time wrapper-side prep: permute/zero-pad weights to the 128-aligned kernel lane
    layout, fold eval-BatchNorm of each segment into every downstream consumer's weights /
    biases (and the head row / b_out), pack biases into one stack, cast weights bf16."""
    scales, shifts = _bn_fold(raw)

    w_list = []
    bias_stack = jnp.zeros((N_LAYERS, BIAS_W), jnp.float32)
    for i, (w, b, *_rest) in enumerate(raw["blocks"]):
        dout = HL_DIM[i]
        din_pad = SEG_OFF[i + 1]
        dout_pad = SEG_PAD[i + 1]
        wp = jnp.zeros((din_pad, dout_pad), jnp.float32)
        b_fold = b
        # PyTorch concat order of rows in w: [z_{i-1}, ..., z_0, x]; kernel layout: [x, z_0, ...].
        off = 0
        for k in range(i - 1, -1, -1):
            r = HL_DIM[k]
            rows = w[off:off + r, :]                              # rows consuming segment z_k
            # downstream sees y_k = z_k*scale_k + shift_k  ->  scale rows, fold shift into bias
            wp = wp.at[SEG_OFF[k + 1]:SEG_OFF[k + 1] + r, :dout].set(rows * scales[k][:, None])
            b_fold = b_fold + shifts[k] @ rows
            off += r
        wp = wp.at[0:Z_DIM, :dout].set(w[off:off + Z_DIM, :])     # x rows, unscaled
        w_list.append(wp.astype(jnp.bfloat16))
        bias_stack = bias_stack.at[i, :dout].set(b_fold)

    # Head row (kernel lane layout) with the same BN fold; shift contribution goes into b_out.
    w_out = raw["w_out"][:, 0]
    row = jnp.zeros((1, TOTAL_PAD), jnp.float32)
    b_out = raw["b_out"].reshape(1, 1).astype(jnp.float32)
    off = 0
    for k in range(N_LAYERS - 1, -1, -1):
        r = HL_DIM[k]
        seg = w_out[off:off + r]
        row = row.at[0, SEG_OFF[k + 1]:SEG_OFF[k + 1] + r].set(seg * scales[k])
        b_out = b_out + jnp.sum(shifts[k] * seg)
        off += r
    row = row.at[0, 0:Z_DIM].set(w_out[off:off + Z_DIM])
    return tuple(w_list) + (bias_stack, row, b_out)


def _pick_block_b(batch):
    """Batch tile: big enough to fill the MXU / amortize ~0.35us per-step overhead, but
    clamped so the grid still has >= n_cores steps (v7x has 2 TCs per chip)."""
    dev = jax.devices()[0]
    kind = getattr(dev, "device_kind", "").lower()
    n_cores = int(getattr(dev, "num_cores", 1) or 1)
    if "v5e" in kind or "v5 lite" in kind or "v5lite" in kind:
        target = 512            # v5e: 128-deep MXU already full at M=128; 512 amortizes overhead
    else:
        target = 1024           # v6e/v7x: fill the 256-deep MXU, stay inside default scoped VMEM
    per_core = _round_up(pl.cdiv(max(int(batch), 1), max(n_cores, 1)), 128)
    return max(128, min(target, per_core))


def _vmem_budget_bytes(block_b):
    """Rough per-step VMEM footprint (resident weights + pipelined x/out + scratch + temps)."""
    w_bytes = sum(SEG_OFF[i + 1] * SEG_PAD[i + 1] for i in range(N_LAYERS)) * 2   # bf16 Wp
    w_bytes += (8 * BIAS_W + 8 * TOTAL_PAD + 8 * 128) * 4                         # bias/head/b_out
    x_bytes = 2 * block_b * Z_DIM * 4                                             # double-buffered x
    out_bytes = 2 * block_b * 128 * 4                                             # (TB,1) padded lanes
    h_bytes = block_b * SCRATCH_LANES * 2                                          # bf16 scratch
    tmp_bytes = 4 * block_b * 256 * 4                                              # z / accumulators
    return w_bytes + x_bytes + out_bytes + h_bytes + tmp_bytes


@partial(jax.jit, static_argnames=("block_b",))
def _disc_forward(x, params, *, block_b):
    B = x.shape[0]
    nb = pl.cdiv(B, block_b)
    Bp = nb * block_b
    if Bp != B:
        x = jnp.pad(x, ((0, Bp - B), (0, 0)))

    n_params = len(params)
    grid_spec = pltpu.PrefetchScalarGridSpec(
        num_scalar_prefetch=0,
        grid=(nb,),
        in_specs=[pl.BlockSpec((block_b, Z_DIM), lambda i: (i, 0))]
                 + [pl.BlockSpec(memory_space=pltpu.MemorySpace.VMEM)] * n_params,
        out_specs=pl.BlockSpec((block_b, 1), lambda i: (i, 0)),
        scratch_shapes=[pltpu.VMEM((block_b, SCRATCH_LANES), jnp.bfloat16)],
    )

    cp_kwargs = dict(dimension_semantics=("parallel",))
    budget = _vmem_budget_bytes(block_b)
    if budget > 12 * 2**20:
        # Raise the scoped-VMEM limit (default 16 MiB on v5e, 32 MiB on v6e/v7x) for big
        # tiles; cap well under v7x's 64 MiB *physical* per-TC VMEM.
        cp_kwargs["vmem_limit_bytes"] = int(min(budget * 3 // 2, 48 * 2**20))

    out = pl.pallas_call(
        _disc_kernel,
        out_shape=jax.ShapeDtypeStruct((Bp, 1), jnp.float32),
        grid_spec=grid_spec,
        compiler_params=pltpu.CompilerParams(**cp_kwargs),
    )(x, *params)
    return out[:B]


def discriminator_pallas(x, prepped, *, block_b=None):
    if block_b is None:
        block_b = _pick_block_b(x.shape[0])
    return _disc_forward(x, prepped, block_b=int(block_b))


def discriminator_ref(x, raw):
    """Pure-JAX reference mirroring the kernel's folded-BN dataflow (bf16 matmul inputs,
    f32 elsewhere) built directly from the RAW params — catches prep + kernel bugs."""
    scales, shifts = _bn_fold(raw)
    zs = []                                   # pre-BN, post-LeakyReLU activations (f32)
    for i, (w, b, *_rest) in enumerate(raw["blocks"]):
        wf = w
        bf = b
        parts = []
        off = 0
        for k in range(i - 1, -1, -1):        # PyTorch row order: [z_{i-1}, ..., z_0, x]
            r = HL_DIM[k]
            rows = w[off:off + r, :]
            wf = wf.at[off:off + r, :].set(rows * scales[k][:, None])
            bf = bf + shifts[k] @ rows
            parts.append(zs[k].astype(jnp.bfloat16))
            off += r
        parts.append(x.astype(jnp.bfloat16))
        lhs = jnp.concatenate(parts, axis=1) if len(parts) > 1 else parts[0]
        pre = jnp.dot(lhs, wf.astype(jnp.bfloat16),
                      preferred_element_type=jnp.float32) + bf[None, :]
        zs.append(jnp.maximum(pre, LRELU_SLOPE * pre))

    w_out = raw["w_out"][:, 0]
    b_out = raw["b_out"].reshape(1, 1).astype(jnp.float32)
    logit = jnp.zeros((x.shape[0], 1), jnp.float32)
    off = 0
    for k in range(N_LAYERS - 1, -1, -1):
        r = HL_DIM[k]
        seg = w_out[off:off + r]
        logit = logit + jnp.sum(zs[k] * (seg * scales[k])[None, :], axis=-1, keepdims=True)
        b_out = b_out + jnp.sum(shifts[k] * seg)
        off += r
    logit = logit + jnp.sum(x * w_out[off:off + Z_DIM][None, :], axis=-1, keepdims=True)
    return jax.nn.sigmoid(logit + b_out)


def discriminator_ref_f32(x, raw):
    """Exact PyTorch eval-mode forward in f32 (BN applied after LeakyReLU, no fold)."""
    h = x
    for (w, b, g, beta, mean, var) in raw["blocks"]:
        z = h @ w + b[None, :]
        z = jnp.maximum(z, LRELU_SLOPE * z)
        scale = g / jnp.sqrt(var + BN_EPS)
        z = z * scale[None, :] + (beta - mean * scale)[None, :]
        h = jnp.concatenate([z, h], axis=1)
    return jax.nn.sigmoid(h @ raw["w_out"] + raw["b_out"])


if __name__ == "__main__":
    key = jax.random.PRNGKey(0)
    k_x, k_p = jax.random.split(key)

    B = 200                              # deliberately not a multiple of the row tile
    x = jax.random.normal(k_x, (B, Z_DIM), dtype=jnp.float32)
    raw = init_params(k_p)
    prepped = prepare_params(raw)

    out = discriminator_pallas(x, prepped)          # block_b auto-picked per device
    out = jax.block_until_ready(out)
    assert out.shape == (B, 1), out.shape

    ref_mirror = discriminator_ref(x, raw)          # same dataflow -> tight tolerance
    assert jnp.allclose(out, ref_mirror, atol=1e-3, rtol=1e-3), \
        float(jnp.max(jnp.abs(out - ref_mirror)))

    ref_exact = discriminator_ref_f32(x, raw)       # pure f32 math -> bf16-level tolerance
    assert jnp.allclose(out, ref_exact, atol=1e-2, rtol=1e-2), \
        float(jnp.max(jnp.abs(out - ref_exact)))

    print("KERNEL_OK")
</pallas_src>

<mosaic_0001>
module attributes {stable_mosaic.version = 11 : i64} {
  func.func @_disc_kernel(%arg0: i32, %arg1: memref<256x128xf32, #tpu.memory_space<vmem>>, %arg2: memref<128x128xbf16, #tpu.memory_space<vmem>>, %arg3: memref<256x256xbf16, #tpu.memory_space<vmem>>, %arg4: memref<512x256xbf16, #tpu.memory_space<vmem>>, %arg5: memref<768x256xbf16, #tpu.memory_space<vmem>>, %arg6: memref<1024x256xbf16, #tpu.memory_space<vmem>>, %arg7: memref<5x256xf32, #tpu.memory_space<vmem>>, %arg8: memref<1x1280xf32, #tpu.memory_space<vmem>>, %arg9: memref<1x1xf32, #tpu.memory_space<vmem>>, %arg10: memref<256x1xf32, #tpu.memory_space<vmem>>, %arg11: memref<256x1024xbf16, #tpu.memory_space<vmem>>) attributes {dimension_semantics = [#tpu.dimension_semantics<parallel>], iteration_bounds = array<i64: 1>, scalar_prefetch = 0 : i64, scratch_operands = 1 : i64, tpu.core_type = #tpu.core_type<tc>, window_params = [{transform_indices = @transform_0, window_bounds = array<i64: 256, 128>}, {pipeline_mode = #tpu.pipeline_mode<synchronous>, transform_indices = @transform_1, window_bounds = array<i64: 128, 128>}, {pipeline_mode = #tpu.pipeline_mode<synchronous>, transform_indices = @transform_2, window_bounds = array<i64: 256, 256>}, {pipeline_mode = #tpu.pipeline_mode<synchronous>, transform_indices = @transform_3, window_bounds = array<i64: 512, 256>}, {pipeline_mode = #tpu.pipeline_mode<synchronous>, transform_indices = @transform_4, window_bounds = array<i64: 768, 256>}, {pipeline_mode = #tpu.pipeline_mode<synchronous>, transform_indices = @transform_5, window_bounds = array<i64: 1024, 256>}, {pipeline_mode = #tpu.pipeline_mode<synchronous>, transform_indices = @transform_6, window_bounds = array<i64: 5, 256>}, {pipeline_mode = #tpu.pipeline_mode<synchronous>, transform_indices = @transform_7, window_bounds = array<i64: 1, 1280>}, {pipeline_mode = #tpu.pipeline_mode<synchronous>, transform_indices = @transform_8, window_bounds = array<i64: 1, 1>}, {transform_indices = @transform_9, window_bounds = array<i64: 256, 1>}]} {
    %c0 = arith.constant 0 : index
    %c0_0 = arith.constant 0 : index
    %0 = vector.load %arg1[%c0, %c0_0] : memref<256x128xf32, #tpu.memory_space<vmem>>, vector<256x128xf32>
    %1 = arith.truncf %0 : vector<256x128xf32> to vector<256x128xbf16>
    %c0_1 = arith.constant 0 : index
    %c0_2 = arith.constant 0 : index
    %2 = vector.load %arg11[%c0_1, %c0_2] : memref<256x1024xbf16, #tpu.memory_space<vmem>>, vector<256x128xbf16>
    tpu.vector_store %arg11[%c0_1, %c0_2], %1 {strides = array<i32>} : memref<256x1024xbf16, #tpu.memory_space<vmem>>, vector<256x128xbf16>,
    %c0_3 = arith.constant 0 : index
    %c0_4 = arith.constant 0 : index
    %3 = vector.load %arg8[%c0_3, %c0_4] : memref<1x1280xf32, #tpu.memory_space<vmem>>, vector<1x128xf32>
    %4 = vector.broadcast %3 : vector<1x128xf32> to vector<256x128xf32>
    %5 = arith.mulf %0, %4 : vector<256x128xf32>
    %c0_5 = arith.constant 0 : index
    %c0_6 = arith.constant 0 : index
    %6 = vector.load %arg2[%c0_5, %c0_6] : memref<128x128xbf16, #tpu.memory_space<vmem>>, vector<128x128xbf16>
    %cst = arith.constant dense<0.000000e+00> : vector<256x128xf32>
    %7 = tpu.matmul %1, %6, %cst {dimension_numbers = #tpu.dot_dimension_numbers<[1], [0], [0], [1], [0, 0, 1, 1], [], []>} : vector<256x128xbf16>, vector<128x128xbf16>, vector<256x128xf32> -> vector<256x128xf32>
    %c0_7 = arith.constant 0 : index
    %c0_8 = arith.constant 0 : index
    %8 = vector.load %arg7[%c0_7, %c0_8] : memref<5x256xf32, #tpu.memory_space<vmem>>, vector<1x128xf32>
    %9 = vector.broadcast %8 : vector<1x128xf32> to vector<256x128xf32>
    %10 = arith.addf %7, %9 : vector<256x128xf32>
    %cst_9 = arith.constant 2.000000e-01 : f32
    %11 = vector.broadcast %cst_9 : f32 to vector<256x128xf32>
    %12 = arith.mulf %11, %10 : vector<256x128xf32>
    %13 = arith.maximumf %10, %12 : vector<256x128xf32>
    %c0_10 = arith.constant 0 : index
    %c128 = arith.constant 128 : index
    %14 = vector.load %arg8[%c0_10, %c128] : memref<1x1280xf32, #tpu.memory_space<vmem>>, vector<1x128xf32>
    %15 = vector.broadcast %14 : vector<1x128xf32> to vector<256x128xf32>
    %16 = arith.mulf %13, %15 : vector<256x128xf32>
    %17 = arith.addf %5, %16 : vector<256x128xf32>
    %18 = arith.truncf %13 : vector<256x128xf32> to vector<256x128xbf16>
    %c0_11 = arith.constant 0 : index
    %c128_12 = arith.constant 128 : index
    %19 = vector.load %arg11[%c0_11, %c128_12] : memref<256x1024xbf16, #tpu.memory_space<vmem>>, vector<256x128xbf16>
    tpu.vector_store %arg11[%c0_11, %c128_12], %18 {strides = array<i32>} : memref<256x1024xbf16, #tpu.memory_space<vmem>>, vector<256x128xbf16>,
    %c0_13 = arith.constant 0 : index
    %c0_14 = arith.constant 0 : index
    %20 = vector.load %arg11[%c0_13, %c0_14] : memref<256x1024xbf16, #tpu.memory_space<vmem>>, vector<256x256xbf16>
    %c0_15 = arith.constant 0 : index
    %c0_16 = arith.constant 0 : index
    %21 = vector.load %arg3[%c0_15, %c0_16] : memref<256x256xbf16, #tpu.memory_space<vmem>>, vector<256x256xbf16>
    %cst_17 = arith.constant dense<0.000000e+00> : vector<256x256xf32>
    %22 = tpu.matmul %20, %21, %cst_17 {dimension_numbers = #tpu.dot_dimension_numbers<[1], [0], [0], [1], [0, 0, 1, 1], [], []>} : vector<256x256xbf16>, vector<256x256xbf16>, vector<256x256xf32> -> vector<256x256xf32>
    %c1 = arith.constant 1 : index
    %c0_18 = arith.constant 0 : index
    %23 = vector.load %arg7[%c1, %c0_18] : memref<5x256xf32, #tpu.memory_space<vmem>>, vector<1x256xf32>
    %24 = vector.broadcast %23 : vector<1x256xf32> to vector<256x256xf32>
    %25 = arith.addf %22, %24 : vector<256x256xf32>
    %cst_19 = arith.constant 2.000000e-01 : f32
    %26 = vector.broadcast %cst_19 : f32 to vector<256x256xf32>
    %27 = arith.mulf %26, %25 : vector<256x256xf32>
    %28 = arith.maximumf %25, %27 : vector<256x256xf32>
    %c0_20 = arith.constant 0 : index
    %c256 = arith.constant 256 : index
    %29 = vector.load %arg8[%c0_20, %c256] : memref<1x1280xf32, #tpu.memory_space<vmem>>, vector<1x256xf32>
    %30 = vector.broadcast %29 : vector<1x256xf32> to vector<256x256xf32>
    %31 = arith.mulf %28, %30 : vector<256x256xf32>
    %32 = arith.truncf %28 : vector<256x256xf32> to vector<256x256xbf16>
    %c0_21 = arith.constant 0 : index
    %c256_22 = arith.constant 256 : index
    %33 = vector.load %arg11[%c0_21, %c256_22] : memref<256x1024xbf16, #tpu.memory_space<vmem>>, vector<256x256xbf16>
    tpu.vector_store %arg11[%c0_21, %c256_22], %32 {strides = array<i32>} : memref<256x1024xbf16, #tpu.memory_space<vmem>>, vector<256x256xbf16>,
    %c0_23 = arith.constant 0 : index
    %c0_24 = arith.constant 0 : index
    %34 = vector.load %arg11[%c0_23, %c0_24] : memref<256x1024xbf16, #tpu.memory_space<vmem>>, vector<256x512xbf16>
    %c0_25 = arith.constant 0 : index
    %c0_26 = arith.constant 0 : index
    %35 = vector.load %arg4[%c0_25, %c0_26] : memref<512x256xbf16, #tpu.memory_space<vmem>>, vector<512x256xbf16>
    %cst_27 = arith.constant dense<0.000000e+00> : vector<256x256xf32>
    %36 = tpu.matmul %34, %35, %cst_27 {dimension_numbers = #tpu.dot_dimension_numbers<[1], [0], [0], [1], [0, 0, 1, 1], [], []>} : vector<256x512xbf16>, vector<512x256xbf16>, vector<256x256xf32> -> vector<256x256xf32>
    %c2 = arith.constant 2 : index
    %c0_28 = arith.constant 0 : index
    %37 = vector.load %arg7[%c2, %c0_28] : memref<5x256xf32, #tpu.memory_space<vmem>>, vector<1x256xf32>
    %38 = vector.broadcast %37 : vector<1x256xf32> to vector<256x256xf32>
    %39 = arith.addf %36, %38 : vector<256x256xf32>
    %cst_29 = arith.constant 2.000000e-01 : f32
    %40 = vector.broadcast %cst_29 : f32 to vector<256x256xf32>
    %41 = arith.mulf %40, %39 : vector<256x256xf32>
    %42 = arith.maximumf %39, %41 : vector<256x256xf32>
    %c0_30 = arith.constant 0 : index
    %c512 = arith.constant 512 : index
    %43 = vector.load %arg8[%c0_30, %c512] : memref<1x1280xf32, #tpu.memory_space<vmem>>, vector<1x256xf32>
    %44 = vector.broadcast %43 : vector<1x256xf32> to vector<256x256xf32>
    %45 = arith.mulf %42, %44 : vector<256x256xf32>
    %46 = arith.addf %31, %45 : vector<256x256xf32>
    %47 = arith.truncf %42 : vector<256x256xf32> to vector<256x256xbf16>
    %c0_31 = arith.constant 0 : index
    %c512_32 = arith.constant 512 : index
    %48 = vector.load %arg11[%c0_31, %c512_32] : memref<256x1024xbf16, #tpu.memory_space<vmem>>, vector<256x256xbf16>
    tpu.vector_store %arg11[%c0_31, %c512_32], %47 {strides = array<i32>} : memref<256x1024xbf16, #tpu.memory_space<vmem>>, vector<256x256xbf16>,
    %c0_33 = arith.constant 0 : index
    %c0_34 = arith.constant 0 : index
    %49 = vector.load %arg11[%c0_33, %c0_34] : memref<256x1024xbf16, #tpu.memory_space<vmem>>, vector<256x768xbf16>
    %c0_35 = arith.constant 0 : index
    %c0_36 = arith.constant 0 : index
    %50 = vector.load %arg5[%c0_35, %c0_36] : memref<768x256xbf16, #tpu.memory_space<vmem>>, vector<768x256xbf16>
    %cst_37 = arith.constant dense<0.000000e+00> : vector<256x256xf32>
    %51 = tpu.matmul %49, %50, %cst_37 {dimension_numbers = #tpu.dot_dimension_numbers<[1], [0], [0], [1], [0, 0, 1, 1], [], []>} : vector<256x768xbf16>, vector<768x256xbf16>, vector<256x256xf32> -> vector<256x256xf32>
    %c3 = arith.constant 3 : index
    %c0_38 = arith.constant 0 : index
    %52 = vector.load %arg7[%c3, %c0_38] : memref<5x256xf32, #tpu.memory_space<vmem>>, vector<1x256xf32>
    %53 = vector.broadcast %52 : vector<1x256xf32> to vector<256x256xf32>
    %54 = arith.addf %51, %53 : vector<256x256xf32>
    %cst_39 = arith.constant 2.000000e-01 : f32
    %55 = vector.broadcast %cst_39 : f32 to vector<256x256xf32>
    %56 = arith.mulf %55, %54 : vector<256x256xf32>
    %57 = arith.maximumf %54, %56 : vector<256x256xf32>
    %c0_40 = arith.constant 0 : index
    %c768 = arith.constant 768 : index
    %58 = vector.load %arg8[%c0_40, %c768] : memref<1x1280xf32, #tpu.memory_space<vmem>>, vector<1x256xf32>
    %59 = vector.broadcast %58 : vector<1x256xf32> to vector<256x256xf32>
    %60 = arith.mulf %57, %59 : vector<256x256xf32>
    %61 = arith.addf %46, %60 : vector<256x256xf32>
    %62 = arith.truncf %57 : vector<256x256xf32> to vector<256x256xbf16>
    %c0_41 = arith.constant 0 : index
    %c768_42 = arith.constant 768 : index
    %63 = vector.load %arg11[%c0_41, %c768_42] : memref<256x1024xbf16, #tpu.memory_space<vmem>>, vector<256x256xbf16>
    tpu.vector_store %arg11[%c0_41, %c768_42], %62 {strides = array<i32>} : memref<256x1024xbf16, #tpu.memory_space<vmem>>, vector<256x256xbf16>,
    %c0_43 = arith.constant 0 : index
    %c0_44 = arith.constant 0 : index
    %64 = vector.load %arg11[%c0_43, %c0_44] : memref<256x1024xbf16, #tpu.memory_space<vmem>>, vector<256x1024xbf16>
    %c0_45 = arith.constant 0 : index
    %c0_46 = arith.constant 0 : index
    %65 = vector.load %arg6[%c0_45, %c0_46] : memref<1024x256xbf16, #tpu.memory_space<vmem>>, vector<1024x256xbf16>
    %cst_47 = arith.constant dense<0.000000e+00> : vector<256x256xf32>
    %66 = tpu.matmul %64, %65, %cst_47 {dimension_numbers = #tpu.dot_dimension_numbers<[1], [0], [0], [1], [0, 0, 1, 1], [], []>} : vector<256x1024xbf16>, vector<1024x256xbf16>, vector<256x256xf32> -> vector<256x256xf32>
    %c4 = arith.constant 4 : index
    %c0_48 = arith.constant 0 : index
    %67 = vector.load %arg7[%c4, %c0_48] : memref<5x256xf32, #tpu.memory_space<vmem>>, vector<1x256xf32>
    %68 = vector.broadcast %67 : vector<1x256xf32> to vector<256x256xf32>
    %69 = arith.addf %66, %68 : vector<256x256xf32>
    %cst_49 = arith.constant 2.000000e-01 : f32
    %70 = vector.broadcast %cst_49 : f32 to vector<256x256xf32>
    %71 = arith.mulf %70, %69 : vector<256x256xf32>
    %72 = arith.maximumf %69, %71 : vector<256x256xf32>
    %c0_50 = arith.constant 0 : index
    %c1024 = arith.constant 1024 : index
    %73 = vector.load %arg8[%c0_50, %c1024] : memref<1x1280xf32, #tpu.memory_space<vmem>>, vector<1x256xf32>
    %74 = vector.broadcast %73 : vector<1x256xf32> to vector<256x256xf32>
    %75 = arith.mulf %72, %74 : vector<256x256xf32>
    %76 = arith.addf %61, %75 : vector<256x256xf32>
    %cst_51 = arith.constant dense<0.000000e+00> : vector<256xf32>
    %77 = vector.multi_reduction <add>, %17, %cst_51 [1] : vector<256x128xf32> to vector<256xf32>
    %78 = vector.shape_cast %77 : vector<256xf32> to vector<256x1xf32>
    %cst_52 = arith.constant dense<0.000000e+00> : vector<256xf32>
    %79 = vector.multi_reduction <add>, %76, %cst_52 [1] : vector<256x256xf32> to vector<256xf32>
    %80 = vector.shape_cast %79 : vector<256xf32> to vector<256x1xf32>
    %81 = arith.addf %78, %80 : vector<256x1xf32>
    %c0_53 = arith.constant 0 : index
    %c0_54 = arith.constant 0 : index
    %82 = vector.load %arg9[%c0_53, %c0_54] : memref<1x1xf32, #tpu.memory_space<vmem>>, vector<1x1xf32>
    %83 = vector.broadcast %82 : vector<1x1xf32> to vector<256x1xf32>
    %84 = arith.addf %81, %83 : vector<256x1xf32>
    %85 = arith.negf %84 : vector<256x1xf32>
    %86 = math.exp %85 : vector<256x1xf32>
    %cst_55 = arith.constant 1.000000e+00 : f32
    %87 = vector.broadcast %cst_55 : f32 to vector<256x1xf32>
    %88 = arith.addf %87, %86 : vector<256x1xf32>
    %89 = arith.divf %87, %88 : vector<256x1xf32>
    %c0_56 = arith.constant 0 : index
    %c0_57 = arith.constant 0 : index
    %90 = vector.load %arg10[%c0_56, %c0_57] : memref<256x1xf32, #tpu.memory_space<vmem>>, vector<256x1xf32>
    tpu.vector_store %arg10[%c0_56, %c0_57], %89 {strides = array<i32>} : memref<256x1xf32, #tpu.memory_space<vmem>>, vector<256x1xf32>,
    return
  }
  func.func @transform_0(%arg0: i32) -> (i32, i32) {
    %c0_i32 = arith.constant 0 : i32
    %c0_i32_0 = arith.constant 0 : i32
    return %arg0, %c0_i32 : i32, i32
  }
  func.func @transform_1(%arg0: i32) -> (i32, i32) {
    %c0_i32 = arith.constant 0 : i32
    %c0_i32_0 = arith.constant 0 : i32
    %c0_i32_1 = arith.constant 0 : i32
    return %c0_i32, %c0_i32_0 : i32, i32
  }
  func.func @transform_2(%arg0: i32) -> (i32, i32) {
    %c0_i32 = arith.constant 0 : i32
    %c0_i32_0 = arith.constant 0 : i32
    %c0_i32_1 = arith.constant 0 : i32
    return %c0_i32, %c0_i32_0 : i32, i32
  }
  func.func @transform_3(%arg0: i32) -> (i32, i32) {
    %c0_i32 = arith.constant 0 : i32
    %c0_i32_0 = arith.constant 0 : i32
    %c0_i32_1 = arith.constant 0 : i32
    return %c0_i32, %c0_i32_0 : i32, i32
  }
  func.func @transform_4(%arg0: i32) -> (i32, i32) {
    %c0_i32 = arith.constant 0 : i32
    %c0_i32_0 = arith.constant 0 : i32
    %c0_i32_1 = arith.constant 0 : i32
    return %c0_i32, %c0_i32_0 : i32, i32
  }
  func.func @transform_5(%arg0: i32) -> (i32, i32) {
    %c0_i32 = arith.constant 0 : i32
    %c0_i32_0 = arith.constant 0 : i32
    %c0_i32_1 = arith.constant 0 : i32
    return %c0_i32, %c0_i32_0 : i32, i32
  }
  func.func @transform_6(%arg0: i32) -> (i32, i32) {
    %c0_i32 = arith.constant 0 : i32
    %c0_i32_0 = arith.constant 0 : i32
    %c0_i32_1 = arith.constant 0 : i32
    return %c0_i32, %c0_i32_0 : i32, i32
  }
  func.func @transform_7(%arg0: i32) -> (i32, i32) {
    %c0_i32 = arith.constant 0 : i32
    %c0_i32_0 = arith.constant 0 : i32
    %c0_i32_1 = arith.constant 0 : i32
    return %c0_i32, %c0_i32_0 : i32, i32
  }
  func.func @transform_8(%arg0: i32) -> (i32, i32) {
    %c0_i32 = arith.constant 0 : i32
    %c0_i32_0 = arith.constant 0 : i32
    %c0_i32_1 = arith.constant 0 : i32
    return %c0_i32, %c0_i32_0 : i32, i32
  }
  func.func @transform_9(%arg0: i32) -> (i32, i32) {
    %c0_i32 = arith.constant 0 : i32
    %c0_i32_0 = arith.constant 0 : i32
    return %arg0, %c0_i32 : i32, i32
  }
}

</mosaic_0001>

<llo_original>
// kernel: _disc_forward.1
$region0: #{_disc_forward.1}
  #allocation0 [shape = 'u32[]', space=smem, size = 0x4, offset = 0x4, fixed_abs, tag = 'smem constant byte address 0x4 - core index']
  #allocation1 [shape = 'u32[144,128]{1,0:T(1,128)}', space=vmem, size = 0x12000, scoped, tag = 'internal scratch']
  #allocation2 [shape = 'bf16[256,1024]{1,0:T(8,128)(2,1)}', space=vmem, size = 0x80000, scoped, tag = 'scratch operand']
  #allocation3 [shape = 'f32[1,1]{1,0:T(1,128)S(1)}', space=vmem, size = 0x200, scoped, tag = 'scoped memory for _disc_forward.1']
  %s0 = inlined_call_operand.vmem [shape: f32[256,128], index: 0, kind: input, shape index: {}]
  %s1 = inlined_call_operand.vmem [shape: bf16[128,128], index: 1, kind: input, shape index: {}]
  %s2 = inlined_call_operand.vmem [shape: bf16[256,256], index: 2, kind: input, shape index: {}]
  %s3 = inlined_call_operand.hbm [shape: bf16[512,256], index: 3, kind: input, shape index: {}]
  %s4 = inlined_call_operand.hbm [shape: bf16[768,256], index: 4, kind: input, shape index: {}]
  %s5 = inlined_call_operand.hbm [shape: bf16[1024,256], index: 5, kind: input, shape index: {}]
  %s6 = inlined_call_operand.vmem [shape: f32[5,256], index: 6, kind: input, shape index: {}]
  %s7 = inlined_call_operand.vmem [shape: f32[1,1280], index: 7, kind: input, shape index: {}]
  %s8 = inlined_call_operand.<no memory space> [shape: f32[1,1], index: 8, kind: input, shape index: {}]
  %s9 = inlined_call_operand.vmem [shape: f32[256,1], index: 9, kind: output, shape index: {}]
  %s10 = sld [smem:[#allocation0]]
  $region58: #{_disc_forward.1} parent=0
    _
  %s12 = ssub.s32 1, %s10
  %s13 = scalar_select 0, %s12, %s10
  %v14 = vstv %s8
  %15 = vst [vmem:[#allocation3] sm:$0x1] %v14
  $region1: #{_disc_forward.1} parent=0
    #allocation4 [shape = 'u8[262144]{0}', space=vmem, size = 0x40000, scoped, tag = 'input window, operand 3, single buffered']
    #allocation5 [shape = 's32[1]{0}', space=sflag, size = 0x4, scoped, tag = 'scoped memory for _disc_forward.1']
    #allocation6 [shape = 'u8[393216]{0}', space=vmem, size = 0x60000, scoped, tag = 'input window, operand 4, single buffered']
    #allocation7 [shape = 's32[1]{0}', space=sflag, size = 0x4, scoped, tag = 'scoped memory for _disc_forward.1']
    #allocation8 [shape = 'u8[524288]{0}', space=vmem, size = 0x80000, scoped, tag = 'input window, operand 5, single buffered']
    %16 = vsyncpa [#allocation5], 0
    %17 = vsyncpa [#allocation7], 0
    // Predicated region
    $region2: #{_disc_forward.1} parent=1 // pred_check
      _
    $region3: #{_disc_forward.1} parent=1 // pred_check_branch
      %19 = sbr.rel (0) target = $region5
    $region4: #{_disc_forward.1} parent=1 // pred_region
      _
    $region5: #{_disc_forward.1} parent=1 // pred_fallthru
      _
    // Predicated region
    $region6: #{_disc_forward.1} parent=1 // pred_check
      _
    $region7: #{_disc_forward.1} parent=1 // pred_check_branch
      %21 = sbr.rel (0) target = $region9
    $region8: #{_disc_forward.1} parent=1 // pred_region
      _
    $region9: #{_disc_forward.1} parent=1 // pred_fallthru
      _
    // Predicated region
    $region10: #{_disc_forward.1} parent=1 // pred_check
      _
    $region11: #{_disc_forward.1} parent=1 // pred_check_branch
      %23 = sbr.rel (0) target = $region13
    $region12: #{_disc_forward.1} parent=1 // pred_region
      _
    $region13: #{_disc_forward.1} parent=1 // pred_fallthru
      _
    // Predicated region
    $region14: #{_disc_forward.1} parent=1 // pred_check
      _
    $region15: #{_disc_forward.1} parent=1 // pred_check_branch
      %25 = sbr.rel (0) target = $region17
    $region16: #{_disc_forward.1} parent=1 // pred_region
      %s27 = ssub.s32 8192, 8192
      %28 = vsyncadd [#allocation5], %s27
      %s29 = sshll.u32 [#allocation4], 4
      %s30 = int_to_ptr.vmem [resolvable:$true] %s29
      %35 = dma.hbm_to_vmem [thread:$0]  %s3, 8192, %s30, [#allocation5], 128, 128, 8
    $region17: #{_disc_forward.1} parent=1 // pred_fallthru
      _
    // Predicated region
    $region18: #{_disc_forward.1} parent=1 // pred_check
      _
    $region19: #{_disc_forward.1} parent=1 // pred_check_branch
      %37 = sbr.rel (0) target = $region21
    $region20: #{_disc_forward.1} parent=1 // pred_region
      %s39 = ssub.s32 12288, 12288
      %40 = vsyncadd [#allocation7], %s39
      %s41 = sshll.u32 [#allocation6], 4
      %s42 = int_to_ptr.vmem [resolvable:$true] %s41
      %47 = dma.hbm_to_vmem [thread:$0]  %s4, 12288, %s42, [#allocation7], 128, 128, 8
    $region21: #{_disc_forward.1} parent=1 // pred_fallthru
      _
    // Predicated region
    $region22: #{_disc_forward.1} parent=1 // pred_check
      _
    $region23: #{_disc_forward.1} parent=1 // pred_check_branch
      %49 = sbr.rel (0) target = $region25
    $region24: #{_disc_forward.1} parent=1 // pred_region
      %s51 = ssub.s32 16384, 16384
      %52 = vsyncadd [#allocation7], %s51
      %s53 = sshll.u32 [#allocation8], 4
      %s54 = int_to_ptr.vmem [resolvable:$true] %s53
      %59 = dma.hbm_to_vmem [thread:$0]  %s5, 16384, %s54, [#allocation7], 128, 128, 8
    $region25: #{_disc_forward.1} parent=1 // pred_fallthru
      _
    // Predicated region
    $region26: #{_disc_forward.1} parent=1 // pred_check
      _
    $region27: #{_disc_forward.1} parent=1 // pred_check_branch
      %61 = sbr.rel (0) target = $region29
    $region28: #{_disc_forward.1} parent=1 // pred_region
      _
    $region29: #{_disc_forward.1} parent=1 // pred_fallthru
      _
    // Predicated region
    $region30: #{_disc_forward.1} parent=1 // pred_check
      _
    $region31: #{_disc_forward.1} parent=1 // pred_check_branch
      %63 = sbr.rel (0) target = $region33
    $region32: #{_disc_forward.1} parent=1 // pred_region
      _
    $region33: #{_disc_forward.1} parent=1 // pred_fallthru
      _
    // Predicated region
    $region34: #{_disc_forward.1} parent=1 // pred_check
      _
    $region35: #{_disc_forward.1} parent=1 // pred_check_branch
      %65 = sbr.rel (0) target = $region37
    $region36: #{_disc_forward.1} parent=1 // pred_region
      _
    $region37: #{_disc_forward.1} parent=1 // pred_fallthru
      _
    // Predicated region
    $region38: #{_disc_forward.1} parent=1 // pred_check
      _
    $region39: #{_disc_forward.1} parent=1 // pred_check_branch
      %67 = sbr.rel (0) target = $region41
    $region40: #{_disc_forward.1} parent=1 // pred_region
      %68 = dma.done [#allocation5], 8192
    $region41: #{_disc_forward.1} parent=1 // pred_fallthru
      _
    // Predicated region
    $region42: #{_disc_forward.1} parent=1 // pred_check
      _
    $region43: #{_disc_forward.1} parent=1 // pred_check_branch
      %70 = sbr.rel (0) target = $region45
    $region44: #{_disc_forward.1} parent=1 // pred_region
      %71 = dma.done [#allocation7], 12288
    $region45: #{_disc_forward.1} parent=1 // pred_fallthru
      _
    // Predicated region
    $region46: #{_disc_forward.1} parent=1 // pred_check
      _
    $region47: #{_disc_forward.1} parent=1 // pred_check_branch
      %73 = sbr.rel (0) target = $region49
    $region48: #{_disc_forward.1} parent=1 // pred_region
      %74 = dma.done [#allocation7], 16384
    $region49: #{_disc_forward.1} parent=1 // pred_fallthru
      _
    %v76 = vld [vmem:[%s0] sm:$0xff]
    %v77 = vld [vmem:[%s0 + $0x8] sm:$0xff]
    %v78 = vld [vmem:[%s0 + $0x10] sm:$0xff]
    %v79 = vld [vmem:[%s0 + $0x18] sm:$0xff]
    %v80 = vld [vmem:[%s0 + $0x20] sm:$0xff]
    %v81 = vld [vmem:[%s0 + $0x28] sm:$0xff]
    %v82 = vld [vmem:[%s0 + $0x30] sm:$0xff]
    %v83 = vld [vmem:[%s0 + $0x38] sm:$0xff]
    %v84 = vld [vmem:[%s0 + $0x40] sm:$0xff]
    %v85 = vld [vmem:[%s0 + $0x48] sm:$0xff]
    %v86 = vld [vmem:[%s0 + $0x50] sm:$0xff]
    %v87 = vld [vmem:[%s0 + $0x58] sm:$0xff]
    %v88 = vld [vmem:[%s0 + $0x60] sm:$0xff]
    %v89 = vld [vmem:[%s0 + $0x68] sm:$0xff]
    %v90 = vld [vmem:[%s0 + $0x70] sm:$0xff]
    %v91 = vld [vmem:[%s0 + $0x78] sm:$0xff]
    %v92 = vld [vmem:[%s0 + $0x80] sm:$0xff]
    %v93 = vld [vmem:[%s0 + $0x88] sm:$0xff]
    %v94 = vld [vmem:[%s0 + $0x90] sm:$0xff]
    %v95 = vld [vmem:[%s0 + $0x98] sm:$0xff]
    %v96 = vld [vmem:[%s0 + $0xa0] sm:$0xff]
    %v97 = vld [vmem:[%s0 + $0xa8] sm:$0xff]
    %v98 = vld [vmem:[%s0 + $0xb0] sm:$0xff]
    %v99 = vld [vmem:[%s0 + $0xb8] sm:$0xff]
    %v100 = vld [vmem:[%s0 + $0xc0] sm:$0xff]
    %v101 = vld [vmem:[%s0 + $0xc8] sm:$0xff]
    %v102 = vld [vmem:[%s0 + $0xd0] sm:$0xff]
    %v103 = vld [vmem:[%s0 + $0xd8] sm:$0xff]
    %v104 = vld [vmem:[%s0 + $0xe0] sm:$0xff]
    %v105 = vld [vmem:[%s0 + $0xe8] sm:$0xff]
    %v106 = vld [vmem:[%s0 + $0xf0] sm:$0xff]
    %v107 = vld [vmem:[%s0 + $0xf8] sm:$0xff]
    %v108 = vpack.c.bf16 %v77, %v76
    %v109 = vpack.c.bf16 %v79, %v78
    %v110 = vpack.c.bf16 %v81, %v80
    %v111 = vpack.c.bf16 %v83, %v82
    %v112 = vpack.c.bf16 %v85, %v84
    %v113 = vpack.c.bf16 %v87, %v86
    %v114 = vpack.c.bf16 %v89, %v88
    %v115 = vpack.c.bf16 %v91, %v90
    %v116 = vpack.c.bf16 %v93, %v92
    %v117 = vpack.c.bf16 %v95, %v94
    %v118 = vpack.c.bf16 %v97, %v96
    %v119 = vpack.c.bf16 %v99, %v98
    %v120 = vpack.c.bf16 %v101, %v100
    %v121 = vpack.c.bf16 %v103, %v102
    %v122 = vpack.c.bf16 %v105, %v104
    %v123 = vpack.c.bf16 %v107, %v106
    %v140 = vunpack.c.l.b16 %v108
    %v141 = vunpack.c.h.b16 %v108
    %v142 = vunpack.c.l.b16 %v109
    %v143 = vunpack.c.h.b16 %v109
    %v144 = vunpack.c.l.b16 %v110
    %v145 = vunpack.c.h.b16 %v110
    %v146 = vunpack.c.l.b16 %v111
    %v147 = vunpack.c.h.b16 %v111
    %v148 = vunpack.c.l.b16 %v112
    %v149 = vunpack.c.h.b16 %v112
    %v150 = vunpack.c.l.b16 %v113
    %v151 = vunpack.c.h.b16 %v113
    %v152 = vunpack.c.l.b16 %v114
    %v153 = vunpack.c.h.b16 %v114
    %v154 = vunpack.c.l.b16 %v115
    %v155 = vunpack.c.h.b16 %v115
    %v156 = vunpack.c.l.b16 %v116
    %v157 = vunpack.c.h.b16 %v116
    %v158 = vunpack.c.l.b16 %v117
    %v159 = vunpack.c.h.b16 %v117
    %v160 = vunpack.c.l.b16 %v118
    %v161 = vunpack.c.h.b16 %v118
    %v162 = vunpack.c.l.b16 %v119
    %v163 = vunpack.c.h.b16 %v119
    %v164 = vunpack.c.l.b16 %v120
    %v165 = vunpack.c.h.b16 %v120
    %v166 = vunpack.c.l.b16 %v121
    %v167 = vunpack.c.h.b16 %v121
    %v168 = vunpack.c.l.b16 %v122
    %v169 = vunpack.c.h.b16 %v122
    %v170 = vunpack.c.l.b16 %v123
    %v171 = vunpack.c.h.b16 %v123
    %v172 = vpack.c.b16 %v140, %v140
    %v173 = vpack.c.b16 %v141, %v141
    %v174 = vpack.c.b16 %v142, %v142
    %v175 = vpack.c.b16 %v143, %v143
    %v176 = vpack.c.b16 %v144, %v144
    %v177 = vpack.c.b16 %v145, %v145
    %v178 = vpack.c.b16 %v146, %v146
    %v179 = vpack.c.b16 %v147, %v147
    %v180 = vpack.c.b16 %v148, %v148
    %v181 = vpack.c.b16 %v149, %v149
    %v182 = vpack.c.b16 %v150, %v150
    %v183 = vpack.c.b16 %v151, %v151
    %v184 = vpack.c.b16 %v152, %v152
    %v185 = vpack.c.b16 %v153, %v153
    %v186 = vpack.c.b16 %v154, %v154
    %v187 = vpack.c.b16 %v155, %v155
    %v188 = vpack.c.b16 %v156, %v156
    %v189 = vpack.c.b16 %v157, %v157
    %v190 = vpack.c.b16 %v158, %v158
    %v191 = vpack.c.b16 %v159, %v159
    %v192 = vpack.c.b16 %v160, %v160
    %v193 = vpack.c.b16 %v161, %v161
    %v194 = vpack.c.b16 %v162, %v162
    %v195 = vpack.c.b16 %v163, %v163
    %v196 = vpack.c.b16 %v164, %v164
    %v197 = vpack.c.b16 %v165, %v165
    %v198 = vpack.c.b16 %v166, %v166
    %v199 = vpack.c.b16 %v167, %v167
    %v200 = vpack.c.b16 %v168, %v168
    %v201 = vpack.c.b16 %v169, %v169
    %v202 = vpack.c.b16 %v170, %v170
    %v203 = vpack.c.b16 %v171, %v171
    %236 = vst [vmem:[#allocation2] sm:$0xf] %v172
    %237 = vst [vmem:[#allocation2 + $0x20] sm:$0xf] %v173
    %238 = vst [vmem:[#allocation2 + $0x40] sm:$0xf] %v174
    %239 = vst [vmem:[#allocation2 + $0x60] sm:$0xf] %v175
    %240 = vst [vmem:[#allocation2 + $0x80] sm:$0xf] %v176
    %241 = vst [vmem:[#allocation2 + $0xa0] sm:$0xf] %v177
    %242 = vst [vmem:[#allocation2 + $0xc0] sm:$0xf] %v178
    %243 = vst [vmem:[#allocation2 + $0xe0] sm:$0xf] %v179
    %244 = vst [vmem:[#allocation2 + $0x100] sm:$0xf] %v180
    %245 = vst [vmem:[#allocation2 + $0x120] sm:$0xf] %v181
    %246 = vst [vmem:[#allocation2 + $0x140] sm:$0xf] %v182
    %247 = vst [vmem:[#allocation2 + $0x160] sm:$0xf] %v183
    %248 = vst [vmem:[#allocation2 + $0x180] sm:$0xf] %v184
    %249 = vst [vmem:[#allocation2 + $0x1a0] sm:$0xf] %v185
    %250 = vst [vmem:[#allocation2 + $0x1c0] sm:$0xf] %v186
    %251 = vst [vmem:[#allocation2 + $0x1e0] sm:$0xf] %v187
    %252 = vst [vmem:[#allocation2 + $0x200] sm:$0xf] %v188
    %253 = vst [vmem:[#allocation2 + $0x220] sm:$0xf] %v189
    %254 = vst [vmem:[#allocation2 + $0x240] sm:$0xf] %v190
    %255 = vst [vmem:[#allocation2 + $0x260] sm:$0xf] %v191
    %256 = vst [vmem:[#allocation2 + $0x280] sm:$0xf] %v192
    %257 = vst [vmem:[#allocation2 + $0x2a0] sm:$0xf] %v193
    %258 = vst [vmem:[#allocation2 + $0x2c0] sm:$0xf] %v194
    %259 = vst [vmem:[#allocation2 + $0x2e0] sm:$0xf] %v195
    %260 = vst [vmem:[#allocation2 + $0x300] sm:$0xf] %v196
    %261 = vst [vmem:[#allocation2 + $0x320] sm:$0xf] %v197
    %262 = vst [vmem:[#allocation2 + $0x340] sm:$0xf] %v198
    %263 = vst [vmem:[#allocation2 + $0x360] sm:$0xf] %v199
    %264 = vst [vmem:[#allocation2 + $0x380] sm:$0xf] %v200
    %265 = vst [vmem:[#allocation2 + $0x3a0] sm:$0xf] %v201
    %266 = vst [vmem:[#allocation2 + $0x3c0] sm:$0xf] %v202
    %267 = vst [vmem:[#allocation2 + $0x3e0] sm:$0xf] %v203
    %v268 = vld [vmem:[%s7] sm:$0x1]
    %v270 = vlaneseq
    %v271 = vshrl.u32 %v270, 7
    %v272 = vsub.s32 0, %v271
    %v273 = vrot.slane %v268, %v272
    %v275 = vmul.f32 %v76, %v273
    %v276 = vmul.f32 %v77, %v273
    %v277 = vmul.f32 %v78, %v273
    %v278 = vmul.f32 %v79, %v273
    %v279 = vmul.f32 %v80, %v273
    %v280 = vmul.f32 %v81, %v273
    %v281 = vmul.f32 %v82, %v273
    %v282 = vmul.f32 %v83, %v273
    %v283 = vmul.f32 %v84, %v273
    %v284 = vmul.f32 %v85, %v273
    %v285 = vmul.f32 %v86, %v273
    %v286 = vmul.f32 %v87, %v273
    %v287 = vmul.f32 %v88, %v273
    %v288 = vmul.f32 %v89, %v273
    %v289 = vmul.f32 %v90, %v273
    %v290 = vmul.f32 %v91, %v273
    %v291 = vmul.f32 %v92, %v273
    %v292 = vmul.f32 %v93, %v273
    %v293 = vmul.f32 %v94, %v273
    %v294 = vmul.f32 %v95, %v273
    %v295 = vmul.f32 %v96, %v273
    %v296 = vmul.f32 %v97, %v273
    %v297 = vmul.f32 %v98, %v273
    %v298 = vmul.f32 %v99, %v273
    %v299 = vmul.f32 %v100, %v273
    %v300 = vmul.f32 %v101, %v273
    %v301 = vmul.f32 %v102, %v273
    %v302 = vmul.f32 %v103, %v273
    %v303 = vmul.f32 %v104, %v273
    %v304 = vmul.f32 %v105, %v273
    %v305 = vmul.f32 %v106, %v273
    %v306 = vmul.f32 %v107, %v273
    %v307 = vld [vmem:[%s1] sm:$0xf]
    %v308 = vld [vmem:[%s1 + $0x4] sm:$0xf]
    %v309 = vld [vmem:[%s1 + $0x8] sm:$0xf]
    %v310 = vld [vmem:[%s1 + $0xc] sm:$0xf]
    %v311 = vld [vmem:[%s1 + $0x10] sm:$0xf]
    %v312 = vld [vmem:[%s1 + $0x14] sm:$0xf]
    %v313 = vld [vmem:[%s1 + $0x18] sm:$0xf]
    %v314 = vld [vmem:[%s1 + $0x1c] sm:$0xf]
    %v315 = vld [vmem:[%s1 + $0x20] sm:$0xf]
    %v316 = vld [vmem:[%s1 + $0x24] sm:$0xf]
    %v317 = vld [vmem:[%s1 + $0x28] sm:$0xf]
    %v318 = vld [vmem:[%s1 + $0x2c] sm:$0xf]
    %v319 = vld [vmem:[%s1 + $0x30] sm:$0xf]
    %v320 = vld [vmem:[%s1 + $0x34] sm:$0xf]
    %v321 = vld [vmem:[%s1 + $0x38] sm:$0xf]
    %v322 = vld [vmem:[%s1 + $0x3c] sm:$0xf]
    %v323 = vld [vmem:[%s6] ss:$0 sm:$0xff]
    %v340 = vunpack.c.l.b16 %v307
    %v341 = vunpack.c.l.b16 %v308
    %v342 = vunpack.c.l.b16 %v309
    %v343 = vunpack.c.l.b16 %v310
    %v344 = vunpack.c.l.b16 %v311
    %v345 = vunpack.c.l.b16 %v312
    %v346 = vunpack.c.l.b16 %v313
    %v347 = vunpack.c.l.b16 %v314
    %v348 = vunpack.c.l.b16 %v315
    %v349 = vunpack.c.l.b16 %v316
    %v350 = vunpack.c.l.b16 %v317
    %v351 = vunpack.c.l.b16 %v318
    %v352 = vunpack.c.l.b16 %v319
    %v353 = vunpack.c.l.b16 %v320
    %v354 = vunpack.c.l.b16 %v321
    %v355 = vunpack.c.l.b16 %v322
    %v356 = vpack.c.b16 %v341, %v340
    %v357 = vpack.c.b16 %v343, %v342
    %v358 = vpack.c.b16 %v345, %v344
    %v359 = vpack.c.b16 %v347, %v346
    %v360 = vpack.c.b16 %v349, %v348
    %v361 = vpack.c.b16 %v351, %v350
    %v362 = vpack.c.b16 %v353, %v352
    %v363 = vpack.c.b16 %v355, %v354
    %372 = vmatprep.subr.bf16.mxu0 0
    %373 = vmatpush1.bf16.msra.mxu0 %v363
    %374 = vmatprep.subr.bf16.mxu0 0
    %375 = vmatpush1.bf16.msra.mxu0 %v362
    %376 = vmatprep.subr.bf16.mxu0 0
    %377 = vmatpush1.bf16.msra.mxu0 %v361
    %378 = vmatprep.subr.bf16.mxu0 0
    %379 = vmatpush1.bf16.msra.mxu0 %v360
    %380 = vmatprep.subr.bf16.mxu0 0
    %381 = vmatpush1.bf16.msra.mxu0 %v359
    %382 = vmatprep.subr.bf16.mxu0 0
    %383 = vmatpush1.bf16.msra.mxu0 %v358
    %384 = vmatprep.subr.bf16.mxu0 0
    %385 = vmatpush1.bf16.msra.mxu0 %v357
    %386 = vmatprep.subr.bf16.mxu0 0
    %387 = vmatpush1.bf16.msra.mxu0 %v356
    %388 = vmatprep.subr.bf16.mxu0 0
    %389 = vmatpush2.bf16.msra.mxu0 0
    %390 = vmatprep.subr.bf16.mxu0 0
    %391 = vmatpush2.bf16.msra.mxu0 0
    %392 = vmatprep.subr.bf16.mxu0 0
    %393 = vmatpush2.bf16.msra.mxu0 0
    %394 = vmatprep.subr.bf16.mxu0 0
    %395 = vmatpush2.bf16.msra.mxu0 0
    %396 = vmatprep.subr.bf16.mxu0 0
    %397 = vmatpush2.bf16.msra.mxu0 0
    %398 = vmatprep.subr.bf16.mxu0 0
    %399 = vmatpush2.bf16.msra.mxu0 0
    %400 = vmatprep.subr.bf16.mxu0 0
    %401 = vmatpush2.bf16.msra.mxu0 0
    %402 = vmatprep.subr.bf16.mxu0 0
    %403 = vmatpush2.bf16.msra.mxu0 0
    %404 = vmatprep.mubr.bf16.mxu0 0
    %405 = vmatmul.mubr.bf16.gmra.mxu0 %v108
    %v406 = vpop.f32.mrf.mxu0
    %v407 = vadd.f32 %v323, %v406
    %v408 = vpop.f32.mrf.mxu0
    %v409 = vpop.f32.mrf.mxu0
    %v410 = vadd.f32 %v323, %v409
    %v411 = vpop.f32.mrf.mxu0
    %412 = vmatprep.mubr.bf16.mxu0 0
    %413 = vmatmul.mubr.bf16.gmra.mxu0 %v109
    %v414 = vpop.f32.mrf.mxu0
    %v415 = vadd.f32 %v323, %v414
    %v416 = vpop.f32.mrf.mxu0
    %v417 = vpop.f32.mrf.mxu0
    %v418 = vadd.f32 %v323, %v417
    %v419 = vpop.f32.mrf.mxu0
    %420 = vmatprep.mubr.bf16.mxu0 0
    %421 = vmatmul.mubr.bf16.gmra.mxu0 %v110
    %v422 = vpop.f32.mrf.mxu0
    %v423 = vadd.f32 %v323, %v422
    %v424 = vpop.f32.mrf.mxu0
    %v425 = vpop.f32.mrf.mxu0
    %v426 = vadd.f32 %v323, %v425
    %v427 = vpop.f32.mrf.mxu0
    %428 = vmatprep.mubr.bf16.mxu0 0
    %429 = vmatmul.mubr.bf16.gmra.mxu0 %v111
    %v430 = vpop.f32.mrf.mxu0
    %v431 = vadd.f32 %v323, %v430
    %v432 = vpop.f32.mrf.mxu0
    %v433 = vpop.f32.mrf.mxu0
    %v434 = vadd.f32 %v323, %v433
    %v435 = vpop.f32.mrf.mxu0
    %436 = vmatprep.mubr.bf16.mxu0 0
    %437 = vmatmul.mubr.bf16.gmra.mxu0 %v112
    %v438 = vpop.f32.mrf.mxu0
    %v439 = vadd.f32 %v323, %v438
    %v440 = vpop.f32.mrf.mxu0
    %v441 = vpop.f32.mrf.mxu0
    %v442 = vadd.f32 %v323, %v441
    %v443 = vpop.f32.mrf.mxu0
    %444 = vmatprep.mubr.bf16.mxu0 0
    %445 = vmatmul.mubr.bf16.gmra.mxu0 %v113
    %v446 = vpop.f32.mrf.mxu0
    %v447 = vadd.f32 %v323, %v446
    %v448 = vpop.f32.mrf.mxu0
    %v449 = vpop.f32.mrf.mxu0
    %v450 = vadd.f32 %v323, %v449
    %v451 = vpop.f32.mrf.mxu0
    %452 = vmatprep.mubr.bf16.mxu0 0
    %453 = vmatmul.mubr.bf16.gmra.mxu0 %v114
    %v454 = vpop.f32.mrf.mxu0
    %v455 = vadd.f32 %v323, %v454
    %v456 = vpop.f32.mrf.mxu0
    %v457 = vpop.f32.mrf.mxu0
    %v458 = vadd.f32 %v323, %v457
    %v459 = vpop.f32.mrf.mxu0
    %460 = vmatprep.mubr.bf16.mxu0 0
    %461 = vmatmul.mubr.bf16.gmra.mxu0 %v115
    %v462 = vpop.f32.mrf.mxu0
    %v463 = vadd.f32 %v323, %v462
    %v464 = vpop.f32.mrf.mxu0
    %v465 = vpop.f32.mrf.mxu0
    %v466 = vadd.f32 %v323, %v465
    %v467 = vpop.f32.mrf.mxu0
    %468 = vmatprep.mubr.bf16.mxu0 0
    %469 = vmatmul.mubr.bf16.gmra.mxu0 %v116
    %v470 = vpop.f32.mrf.mxu0
    %v471 = vadd.f32 %v323, %v470
    %v472 = vpop.f32.mrf.mxu0
    %v473 = vpop.f32.mrf.mxu0
    %v474 = vadd.f32 %v323, %v473
    %v475 = vpop.f32.mrf.mxu0
    %476 = vmatprep.mubr.bf16.mxu0 0
    %477 = vmatmul.mubr.bf16.gmra.mxu0 %v117
    %v478 = vpop.f32.mrf.mxu0
    %v479 = vadd.f32 %v323, %v478
    %v480 = vpop.f32.mrf.mxu0
    %v481 = vpop.f32.mrf.mxu0
    %v482 = vadd.f32 %v323, %v481
    %v483 = vpop.f32.mrf.mxu0
    %484 = vmatprep.mubr.bf16.mxu0 0
    %485 = vmatmul.mubr.bf16.gmra.mxu0 %v118
    %v486 = vpop.f32.mrf.mxu0
    %v487 = vadd.f32 %v323, %v486
    %v488 = vpop.f32.mrf.mxu0
    %v489 = vpop.f32.mrf.mxu0
    %v490 = vadd.f32 %v323, %v489
    %v491 = vpop.f32.mrf.mxu0
    %492 = vmatprep.mubr.bf16.mxu0 0
    %493 = vmatmul.mubr.bf16.gmra.mxu0 %v119
    %v494 = vpop.f32.mrf.mxu0
    %v495 = vadd.f32 %v323, %v494
    %v496 = vpop.f32.mrf.mxu0
    %v497 = vpop.f32.mrf.mxu0
    %v498 = vadd.f32 %v323, %v497
    %v499 = vpop.f32.mrf.mxu0
    %500 = vmatprep.mubr.bf16.mxu0 0
    %501 = vmatmul.mubr.bf16.gmra.mxu0 %v120
    %v502 = vpop.f32.mrf.mxu0
    %v503 = vadd.f32 %v323, %v502
    %v504 = vpop.f32.mrf.mxu0
    %v505 = vpop.f32.mrf.mxu0
    %v506 = vadd.f32 %v323, %v505
    %v507 = vpop.f32.mrf.mxu0
    %508 = vmatprep.mubr.bf16.mxu0 0
    %509 = vmatmul.mubr.bf16.gmra.mxu0 %v121
    %v510 = vpop.f32.mrf.mxu0
    %v511 = vadd.f32 %v323, %v510
    %v512 = vpop.f32.mrf.mxu0
    %v513 = vpop.f32.mrf.mxu0
    %v514 = vadd.f32 %v323, %v513
    %v515 = vpop.f32.mrf.mxu0
    %516 = vmatprep.mubr.bf16.mxu0 0
    %517 = vmatmul.mubr.bf16.gmra.mxu0 %v122
    %v518 = vpop.f32.mrf.mxu0
    %v519 = vadd.f32 %v323, %v518
    %v520 = vpop.f32.mrf.mxu0
    %v521 = vpop.f32.mrf.mxu0
    %v522 = vadd.f32 %v323, %v521
    %v523 = vpop.f32.mrf.mxu0
    %524 = vmatprep.mubr.bf16.mxu0 0
    %525 = vmatmul.mubr.bf16.gmra.mxu0 %v123
    %v526 = vpop.f32.mrf.mxu0
    %v527 = vadd.f32 %v323, %v526
    %v528 = vpop.f32.mrf.mxu0
    %v529 = vpop.f32.mrf.mxu0
    %v530 = vadd.f32 %v323, %v529
    %v531 = vpop.f32.mrf.mxu0
    %532 = vdwg.mxu0
    %v533 = vmul.f32 %v407, 0.2
    %v534 = vmul.f32 %v410, 0.2
    %v535 = vmul.f32 %v415, 0.2
    %v536 = vmul.f32 %v418, 0.2
    %v537 = vmul.f32 %v423, 0.2
    %v538 = vmul.f32 %v426, 0.2
    %v539 = vmul.f32 %v431, 0.2
    %v540 = vmul.f32 %v434, 0.2
    %v541 = vmul.f32 %v439, 0.2
    %v542 = vmul.f32 %v442, 0.2
    %v543 = vmul.f32 %v447, 0.2
    %v544 = vmul.f32 %v450, 0.2
    %v545 = vmul.f32 %v455, 0.2
    %v546 = vmul.f32 %v458, 0.2
    %v547 = vmul.f32 %v463, 0.2
    %v548 = vmul.f32 %v466, 0.2
    %v549 = vmul.f32 %v471, 0.2
    %v550 = vmul.f32 %v474, 0.2
    %v551 = vmul.f32 %v479, 0.2
    %v552 = vmul.f32 %v482, 0.2
    %v553 = vmul.f32 %v487, 0.2
    %v554 = vmul.f32 %v490, 0.2
    %v555 = vmul.f32 %v495, 0.2
    %v556 = vmul.f32 %v498, 0.2
    %v557 = vmul.f32 %v503, 0.2
    %v558 = vmul.f32 %v506, 0.2
    %v559 = vmul.f32 %v511, 0.2
    %v560 = vmul.f32 %v514, 0.2
    %v561 = vmul.f32 %v519, 0.2
    %v562 = vmul.f32 %v522, 0.2
    %v563 = vmul.f32 %v527, 0.2
    %v564 = vmul.f32 %v530, 0.2
    %v565 = vmax.f32 %v407, %v533
    %v566 = vmax.f32 %v410, %v534
    %v567 = vmax.f32 %v415, %v535
    %v568 = vmax.f32 %v418, %v536
    %v569 = vmax.f32 %v423, %v537
    %v570 = vmax.f32 %v426, %v538
    %v571 = vmax.f32 %v431, %v539
    %v572 = vmax.f32 %v434, %v540
    %v573 = vmax.f32 %v439, %v541
    %v574 = vmax.f32 %v442, %v542
    %v575 = vmax.f32 %v447, %v543
    %v576 = vmax.f32 %v450, %v544
    %v577 = vmax.f32 %v455, %v545
    %v578 = vmax.f32 %v458, %v546
    %v579 = vmax.f32 %v463, %v547
    %v580 = vmax.f32 %v466, %v548
    %v581 = vmax.f32 %v471, %v549
    %v582 = vmax.f32 %v474, %v550
    %v583 = vmax.f32 %v479, %v551
    %v584 = vmax.f32 %v482, %v552
    %v585 = vmax.f32 %v487, %v553
    %v586 = vmax.f32 %v490, %v554
    %v587 = vmax.f32 %v495, %v555
    %v588 = vmax.f32 %v498, %v556
    %v589 = vmax.f32 %v503, %v557
    %v590 = vmax.f32 %v506, %v558
    %v591 = vmax.f32 %v511, %v559
    %v592 = vmax.f32 %v514, %v560
    %v593 = vmax.f32 %v519, %v561
    %v594 = vmax.f32 %v522, %v562
    %v595 = vmax.f32 %v527, %v563
    %v596 = vmax.f32 %v530, %v564
    %v597 = vld [vmem:[%s7 + $0x1] sm:$0x1]
    %v599 = vlaneseq
    %v600 = vshrl.u32 %v599, 7
    %v601 = vsub.s32 0, %v600
    %v602 = vrot.slane %v597, %v601
    %v604 = vmul.f32 %v565, %v602
    %v605 = vmul.f32 %v566, %v602
    %v606 = vmul.f32 %v567, %v602
    %v607 = vmul.f32 %v568, %v602
    %v608 = vmul.f32 %v569, %v602
    %v609 = vmul.f32 %v570, %v602
    %v610 = vmul.f32 %v571, %v602
    %v611 = vmul.f32 %v572, %v602
    %v612 = vmul.f32 %v573, %v602
    %v613 = vmul.f32 %v574, %v602
    %v614 = vmul.f32 %v575, %v602
    %v615 = vmul.f32 %v576, %v602
    %v616 = vmul.f32 %v577, %v602
    %v617 = vmul.f32 %v578, %v602
    %v618 = vmul.f32 %v579, %v602
    %v619 = vmul.f32 %v580, %v602
    %v620 = vmul.f32 %v581, %v602
    %v621 = vmul.f32 %v582, %v602
    %v622 = vmul.f32 %v583, %v602
    %v623 = vmul.f32 %v584, %v602
    %v624 = vmul.f32 %v585, %v602
    %v625 = vmul.f32 %v586, %v602
    %v626 = vmul.f32 %v587, %v602
    %v627 = vmul.f32 %v588, %v602
    %v628 = vmul.f32 %v589, %v602
    %v629 = vmul.f32 %v590, %v602
    %v630 = vmul.f32 %v591, %v602
    %v631 = vmul.f32 %v592, %v602
    %v632 = vmul.f32 %v593, %v602
    %v633 = vmul.f32 %v594, %v602
    %v634 = vmul.f32 %v595, %v602
    %v635 = vmul.f32 %v596, %v602
    %v636 = vadd.f32 %v275, %v604
    %v637 = vadd.f32 %v276, %v605
    %v638 = vadd.f32 %v277, %v606
    %v639 = vadd.f32 %v278, %v607
    %v640 = vadd.f32 %v279, %v608
    %v641 = vadd.f32 %v280, %v609
    %v642 = vadd.f32 %v281, %v610
    %v643 = vadd.f32 %v282, %v611
    %v644 = vadd.f32 %v283, %v612
    %v645 = vadd.f32 %v284, %v613
    %v646 = vadd.f32 %v285, %v614
    %v647 = vadd.f32 %v286, %v615
    %v648 = vadd.f32 %v287, %v616
    %v649 = vadd.f32 %v288, %v617
    %v650 = vadd.f32 %v289, %v618
    %v651 = vadd.f32 %v290, %v619
    %v652 = vadd.f32 %v291, %v620
    %v653 = vadd.f32 %v292, %v621
    %v654 = vadd.f32 %v293, %v622
    %v655 = vadd.f32 %v294, %v623
    %v656 = vadd.f32 %v295, %v624
    %v657 = vadd.f32 %v296, %v625
    %v658 = vadd.f32 %v297, %v626
    %v659 = vadd.f32 %v298, %v627
    %v660 = vadd.f32 %v299, %v628
    %v661 = vadd.f32 %v300, %v629
    %v662 = vadd.f32 %v301, %v630
    %v663 = vadd.f32 %v302, %v631
    %v664 = vadd.f32 %v303, %v632
    %v665 = vadd.f32 %v304, %v633
    %v666 = vadd.f32 %v305, %v634
    %v667 = vadd.f32 %v306, %v635
    %v668 = vpack.c.bf16 %v566, %v565
    %v669 = vpack.c.bf16 %v568, %v567
    %v670 = vpack.c.bf16 %v570, %v569
    %v671 = vpack.c.bf16 %v572, %v571
    %v672 = vpack.c.bf16 %v574, %v573
    %v673 = vpack.c.bf16 %v576, %v575
    %v674 = vpack.c.bf16 %v578, %v577
    %v675 = vpack.c.bf16 %v580, %v579
    %v676 = vpack.c.bf16 %v582, %v581
    %v677 = vpack.c.bf16 %v584, %v583
    %v678 = vpack.c.bf16 %v586, %v585
    %v679 = vpack.c.bf16 %v588, %v587
    %v680 = vpack.c.bf16 %v590, %v589
    %v681 = vpack.c.bf16 %v592, %v591
    %v682 = vpack.c.bf16 %v594, %v593
    %v683 = vpack.c.bf16 %v596, %v595
    %v700 = vunpack.c.l.b16 %v668
    %v701 = vunpack.c.h.b16 %v668
    %v702 = vunpack.c.l.b16 %v669
    %v703 = vunpack.c.h.b16 %v669
    %v704 = vunpack.c.l.b16 %v670
    %v705 = vunpack.c.h.b16 %v670
    %v706 = vunpack.c.l.b16 %v671
    %v707 = vunpack.c.h.b16 %v671
    %v708 = vunpack.c.l.b16 %v672
    %v709 = vunpack.c.h.b16 %v672
    %v710 = vunpack.c.l.b16 %v673
    %v711 = vunpack.c.h.b16 %v673
    %v712 = vunpack.c.l.b16 %v674
    %v713 = vunpack.c.h.b16 %v674
    %v714 = vunpack.c.l.b16 %v675
    %v715 = vunpack.c.h.b16 %v675
    %v716 = vunpack.c.l.b16 %v676
    %v717 = vunpack.c.h.b16 %v676
    %v718 = vunpack.c.l.b16 %v677
    %v719 = vunpack.c.h.b16 %v677
    %v720 = vunpack.c.l.b16 %v678
    %v721 = vunpack.c.h.b16 %v678
    %v722 = vunpack.c.l.b16 %v679
    %v723 = vunpack.c.h.b16 %v679
    %v724 = vunpack.c.l.b16 %v680
    %v725 = vunpack.c.h.b16 %v680
    %v726 = vunpack.c.l.b16 %v681
    %v727 = vunpack.c.h.b16 %v681
    %v728 = vunpack.c.l.b16 %v682
    %v729 = vunpack.c.h.b16 %v682
    %v730 = vunpack.c.l.b16 %v683
    %v731 = vunpack.c.h.b16 %v683
    %v732 = vpack.c.b16 %v700, %v700
    %v733 = vpack.c.b16 %v701, %v701
    %v734 = vpack.c.b16 %v702, %v702
    %v735 = vpack.c.b16 %v703, %v703
    %v736 = vpack.c.b16 %v704, %v704
    %v737 = vpack.c.b16 %v705, %v705
    %v738 = vpack.c.b16 %v706, %v706
    %v739 = vpack.c.b16 %v707, %v707
    %v740 = vpack.c.b16 %v708, %v708
    %v741 = vpack.c.b16 %v709, %v709
    %v742 = vpack.c.b16 %v710, %v710
    %v743 = vpack.c.b16 %v711, %v711
    %v744 = vpack.c.b16 %v712, %v712
    %v745 = vpack.c.b16 %v713, %v713
    %v746 = vpack.c.b16 %v714, %v714
    %v747 = vpack.c.b16 %v715, %v715
    %v748 = vpack.c.b16 %v716, %v716
    %v749 = vpack.c.b16 %v717, %v717
    %v750 = vpack.c.b16 %v718, %v718
    %v751 = vpack.c.b16 %v719, %v719
    %v752 = vpack.c.b16 %v720, %v720
    %v753 = vpack.c.b16 %v721, %v721
    %v754 = vpack.c.b16 %v722, %v722
    %v755 = vpack.c.b16 %v723, %v723
    %v756 = vpack.c.b16 %v724, %v724
    %v757 = vpack.c.b16 %v725, %v725
    %v758 = vpack.c.b16 %v726, %v726
    %v759 = vpack.c.b16 %v727, %v727
    %v760 = vpack.c.b16 %v728, %v728
    %v761 = vpack.c.b16 %v729, %v729
    %v762 = vpack.c.b16 %v730, %v730
    %v763 = vpack.c.b16 %v731, %v731
    %796 = vst [vmem:[#allocation2 + $0x4] sm:$0xf] %v732
    %797 = vst [vmem:[#allocation2 + $0x24] sm:$0xf] %v733
    %798 = vst [vmem:[#allocation2 + $0x44] sm:$0xf] %v734
    %799 = vst [vmem:[#allocation2 + $0x64] sm:$0xf] %v735
    %800 = vst [vmem:[#allocation2 + $0x84] sm:$0xf] %v736
    %801 = vst [vmem:[#allocation2 + $0xa4] sm:$0xf] %v737
    %802 = vst [vmem:[#allocation2 + $0xc4] sm:$0xf] %v738
    %803 = vst [vmem:[#allocation2 + $0xe4] sm:$0xf] %v739
    %804 = vst [vmem:[#allocation2 + $0x104] sm:$0xf] %v740
    %805 = vst [vmem:[#allocation2 + $0x124] sm:$0xf] %v741
    %806 = vst [vmem:[#allocation2 + $0x144] sm:$0xf] %v742
    %807 = vst [vmem:[#allocation2 + $0x164] sm:$0xf] %v743
    %808 = vst [vmem:[#allocation2 + $0x184] sm:$0xf] %v744
    %809 = vst [vmem:[#allocation2 + $0x1a4] sm:$0xf] %v745
    %810 = vst [vmem:[#allocation2 + $0x1c4] sm:$0xf] %v746
    %811 = vst [vmem:[#allocation2 + $0x1e4] sm:$0xf] %v747
    %812 = vst [vmem:[#allocation2 + $0x204] sm:$0xf] %v748
    %813 = vst [vmem:[#allocation2 + $0x224] sm:$0xf] %v749
    %814 = vst [vmem:[#allocation2 + $0x244] sm:$0xf] %v750
    %815 = vst [vmem:[#allocation2 + $0x264] sm:$0xf] %v751
    %816 = vst [vmem:[#allocation2 + $0x284] sm:$0xf] %v752
    %817 = vst [vmem:[#allocation2 + $0x2a4] sm:$0xf] %v753
    %818 = vst [vmem:[#allocation2 + $0x2c4] sm:$0xf] %v754
    %819 = vst [vmem:[#allocation2 + $0x2e4] sm:$0xf] %v755
    %820 = vst [vmem:[#allocation2 + $0x304] sm:$0xf] %v756
    %821 = vst [vmem:[#allocation2 + $0x324] sm:$0xf] %v757
    %822 = vst [vmem:[#allocation2 + $0x344] sm:$0xf] %v758
    %823 = vst [vmem:[#allocation2 + $0x364] sm:$0xf] %v759
    %824 = vst [vmem:[#allocation2 + $0x384] sm:$0xf] %v760
    %825 = vst [vmem:[#allocation2 + $0x3a4] sm:$0xf] %v761
    %826 = vst [vmem:[#allocation2 + $0x3c4] sm:$0xf] %v762
    %827 = vst [vmem:[#allocation2 + $0x3e4] sm:$0xf] %v763
    %v828 = vld [vmem:[#allocation2] sm:$0xff]
    %v829 = vld [vmem:[#allocation2 + $0x20] sm:$0xff]
    %v830 = vld [vmem:[#allocation2 + $0x40] sm:$0xff]
    %v831 = vld [vmem:[#allocation2 + $0x60] sm:$0xff]
    %v832 = vld [vmem:[#allocation2 + $0x80] sm:$0xff]
    %v833 = vld [vmem:[#allocation2 + $0xa0] sm:$0xff]
    %v834 = vld [vmem:[#allocation2 + $0xc0] sm:$0xff]
    %v835 = vld [vmem:[#allocation2 + $0xe0] sm:$0xff]
    %v836 = vld [vmem:[#allocation2 + $0x100] sm:$0xff]
    %v837 = vld [vmem:[#allocation2 + $0x120] sm:$0xff]
    %v838 = vld [vmem:[#allocation2 + $0x140] sm:$0xff]
    %v839 = vld [vmem:[#allocation2 + $0x160] sm:$0xff]
    %v840 = vld [vmem:[#allocation2 + $0x180] sm:$0xff]
    %v841 = vld [vmem:[#allocation2 + $0x1a0] sm:$0xff]
    %v842 = vld [vmem:[#allocation2 + $0x1c0] sm:$0xff]
    %v843 = vld [vmem:[#allocation2 + $0x1e0] sm:$0xff]
    %v844 = vld [vmem:[#allocation2 + $0x200] sm:$0xff]
    %v845 = vld [vmem:[#allocation2 + $0x220] sm:$0xff]
    %v846 = vld [vmem:[#allocation2 + $0x240] sm:$0xff]
    %v847 = vld [vmem:[#allocation2 + $0x260] sm:$0xff]
    %v848 = vld [vmem:[#allocation2 + $0x280] sm:$0xff]
    %v849 = vld [vmem:[#allocation2 + $0x2a0] sm:$0xff]
    %v850 = vld [vmem:[#allocation2 + $0x2c0] sm:$0xff]
    %v851 = vld [vmem:[#allocation2 + $0x2e0] sm:$0xff]
    %v852 = vld [vmem:[#allocation2 + $0x300] sm:$0xff]
    %v853 = vld [vmem:[#allocation2 + $0x320] sm:$0xff]
    %v854 = vld [vmem:[#allocation2 + $0x340] sm:$0xff]
    %v855 = vld [vmem:[#allocation2 + $0x360] sm:$0xff]
    %v856 = vld [vmem:[#allocation2 + $0x380] sm:$0xff]
    %v857 = vld [vmem:[#allocation2 + $0x3a0] sm:$0xff]
    %v858 = vld [vmem:[#allocation2 + $0x3c0] sm:$0xff]
    %v859 = vld [vmem:[#allocation2 + $0x3e0] sm:$0xff]
    %v860 = vld [vmem:[%s2] sm:$0xff]
    %v861 = vld [vmem:[%s2 + $0x8] sm:$0xff]
    %v862 = vld [vmem:[%s2 + $0x10] sm:$0xff]
    %v863 = vld [vmem:[%s2 + $0x18] sm:$0xff]
    %v864 = vld [vmem:[%s2 + $0x20] sm:$0xff]
    %v865 = vld [vmem:[%s2 + $0x28] sm:$0xff]
    %v866 = vld [vmem:[%s2 + $0x30] sm:$0xff]
    %v867 = vld [vmem:[%s2 + $0x38] sm:$0xff]
    %v868 = vld [vmem:[%s2 + $0x40] sm:$0xff]
    %v869 = vld [vmem:[%s2 + $0x48] sm:$0xff]
    %v870 = vld [vmem:[%s2 + $0x50] sm:$0xff]
    %v871 = vld [vmem:[%s2 + $0x58] sm:$0xff]
    %v872 = vld [vmem:[%s2 + $0x60] sm:$0xff]
    %v873 = vld [vmem:[%s2 + $0x68] sm:$0xff]
    %v874 = vld [vmem:[%s2 + $0x70] sm:$0xff]
    %v875 = vld [vmem:[%s2 + $0x78] sm:$0xff]
    %v876 = vld [vmem:[%s2 + $0x80] sm:$0xff]
    %v877 = vld [vmem:[%s2 + $0x88] sm:$0xff]
    %v878 = vld [vmem:[%s2 + $0x90] sm:$0xff]
    %v879 = vld [vmem:[%s2 + $0x98] sm:$0xff]
    %v880 = vld [vmem:[%s2 + $0xa0] sm:$0xff]
    %v881 = vld [vmem:[%s2 + $0xa8] sm:$0xff]
    %v882 = vld [vmem:[%s2 + $0xb0] sm:$0xff]
    %v883 = vld [vmem:[%s2 + $0xb8] sm:$0xff]
    %v884 = vld [vmem:[%s2 + $0xc0] sm:$0xff]
    %v885 = vld [vmem:[%s2 + $0xc8] sm:$0xff]
    %v886 = vld [vmem:[%s2 + $0xd0] sm:$0xff]
    %v887 = vld [vmem:[%s2 + $0xd8] sm:$0xff]
    %v888 = vld [vmem:[%s2 + $0xe0] sm:$0xff]
    %v889 = vld [vmem:[%s2 + $0xe8] sm:$0xff]
    %v890 = vld [vmem:[%s2 + $0xf0] sm:$0xff]
    %v891 = vld [vmem:[%s2 + $0xf8] sm:$0xff]
    %s892 = scalar_lea.vmem %s6, 1
    %v893 = vld [vmem:[%s892] ss:$8 sm:$0x3]
    %v895 = vlaneseq
    %v896 = vshrl.u32 %v895, 7
    %v897 = vsub.s32 0, %v896
    %v898 = vrot.slane %v893, %v897
    %v899 = vlaneseq
    %v900 = vshrl.u32 %v899, 7
    %v901 = vsub.s32 1, %v900
    %v902 = vrot.slane %v893, %v901
    %v937 = vunpack.c.l.b16 %v828
    %v938 = vunpack.c.h.b16 %v828
    %v939 = vunpack.c.l.b16 %v829
    %v940 = vunpack.c.h.b16 %v829
    %v941 = vunpack.c.l.b16 %v830
    %v942 = vunpack.c.h.b16 %v830
    %v943 = vunpack.c.l.b16 %v831
    %v944 = vunpack.c.h.b16 %v831
    %v945 = vunpack.c.l.b16 %v832
    %v946 = vunpack.c.h.b16 %v832
    %v947 = vunpack.c.l.b16 %v833
    %v948 = vunpack.c.h.b16 %v833
    %v949 = vunpack.c.l.b16 %v834
    %v950 = vunpack.c.h.b16 %v834
    %v951 = vunpack.c.l.b16 %v835
    %v952 = vunpack.c.h.b16 %v835
    %v953 = vunpack.c.l.b16 %v836
    %v954 = vunpack.c.h.b16 %v836
    %v955 = vunpack.c.l.b16 %v837
    %v956 = vunpack.c.h.b16 %v837
    %v957 = vunpack.c.l.b16 %v838
    %v958 = vunpack.c.h.b16 %v838
    %v959 = vunpack.c.l.b16 %v839
    %v960 = vunpack.c.h.b16 %v839
    %v961 = vunpack.c.l.b16 %v840
    %v962 = vunpack.c.h.b16 %v840
    %v963 = vunpack.c.l.b16 %v841
    %v964 = vunpack.c.h.b16 %v841
    %v965 = vunpack.c.l.b16 %v842
    %v966 = vunpack.c.h.b16 %v842
    %v967 = vunpack.c.l.b16 %v843
    %v968 = vunpack.c.h.b16 %v843
    %v969 = vunpack.c.l.b16 %v844
    %v970 = vunpack.c.h.b16 %v844
    %v971 = vunpack.c.l.b16 %v845
    %v972 = vunpack.c.h.b16 %v845
    %v973 = vunpack.c.l.b16 %v846
    %v974 = vunpack.c.h.b16 %v846
    %v975 = vunpack.c.l.b16 %v847
    %v976 = vunpack.c.h.b16 %v847
    %v977 = vunpack.c.l.b16 %v848
    %v978 = vunpack.c.h.b16 %v848
    %v979 = vunpack.c.l.b16 %v849
    %v980 = vunpack.c.h.b16 %v849
    %v981 = vunpack.c.l.b16 %v850
    %v982 = vunpack.c.h.b16 %v850
    %v983 = vunpack.c.l.b16 %v851
    %v984 = vunpack.c.h.b16 %v851
    %v985 = vunpack.c.l.b16 %v852
    %v986 = vunpack.c.h.b16 %v852
    %v987 = vunpack.c.l.b16 %v853
    %v988 = vunpack.c.h.b16 %v853
    %v989 = vunpack.c.l.b16 %v854
    %v990 = vunpack.c.h.b16 %v854
    %v991 = vunpack.c.l.b16 %v855
    %v992 = vunpack.c.h.b16 %v855
    %v993 = vunpack.c.l.b16 %v856
    %v994 = vunpack.c.h.b16 %v856
    %v995 = vunpack.c.l.b16 %v857
    %v996 = vunpack.c.h.b16 %v857
    %v997 = vunpack.c.l.b16 %v858
    %v998 = vunpack.c.h.b16 %v858
    %v999 = vunpack.c.l.b16 %v859
    %v1000 = vunpack.c.h.b16 %v859
    %v1001 = vpack.c.b16 %v939, %v937
    %v1002 = vpack.c.b16 %v940, %v938
    %v1003 = vpack.c.b16 %v943, %v941
    %v1004 = vpack.c.b16 %v944, %v942
    %v1005 = vpack.c.b16 %v947, %v945
    %v1006 = vpack.c.b16 %v948, %v946
    %v1007 = vpack.c.b16 %v951, %v949
    %v1008 = vpack.c.b16 %v952, %v950
    %v1009 = vpack.c.b16 %v955, %v953
    %v1010 = vpack.c.b16 %v956, %v954
    %v1011 = vpack.c.b16 %v959, %v957
    %v1012 = vpack.c.b16 %v960, %v958
    %v1013 = vpack.c.b16 %v963, %v961
    %v1014 = vpack.c.b16 %v964, %v962
    %v1015 = vpack.c.b16 %v967, %v965
    %v1016 = vpack.c.b16 %v968, %v966
    %v1017 = vpack.c.b16 %v971, %v969
    %v1018 = vpack.c.b16 %v972, %v970
    %v1019 = vpack.c.b16 %v975, %v973
    %v1020 = vpack.c.b16 %v976, %v974
    %v1021 = vpack.c.b16 %v979, %v977
    %v1022 = vpack.c.b16 %v980, %v978
    %v1023 = vpack.c.b16 %v983, %v981
    %v1024 = vpack.c.b16 %v984, %v982
    %v1025 = vpack.c.b16 %v987, %v985
    %v1026 = vpack.c.b16 %v988, %v986
    %v1027 = vpack.c.b16 %v991, %v989
    %v1028 = vpack.c.b16 %v992, %v990
    %v1029 = vpack.c.b16 %v995, %v993
    %v1030 = vpack.c.b16 %v996, %v994
    %v1031 = vpack.c.b16 %v999, %v997
    %v1032 = vpack.c.b16 %v1000, %v998
    %v1097 = vunpack.c.l.b16 %v860
    %v1098 = vunpack.c.h.b16 %v860
    %v1099 = vunpack.c.l.b16 %v861
    %v1100 = vunpack.c.h.b16 %v861
    %v1101 = vunpack.c.l.b16 %v862
    %v1102 = vunpack.c.h.b16 %v862
    %v1103 = vunpack.c.l.b16 %v863
    %v1104 = vunpack.c.h.b16 %v863
    %v1105 = vunpack.c.l.b16 %v864
    %v1106 = vunpack.c.h.b16 %v864
    %v1107 = vunpack.c.l.b16 %v865
    %v1108 = vunpack.c.h.b16 %v865
    %v1109 = vunpack.c.l.b16 %v866
    %v1110 = vunpack.c.h.b16 %v866
    %v1111 = vunpack.c.l.b16 %v867
    %v1112 = vunpack.c.h.b16 %v867
    %v1113 = vunpack.c.l.b16 %v868
    %v1114 = vunpack.c.h.b16 %v868
    %v1115 = vunpack.c.l.b16 %v869
    %v1116 = vunpack.c.h.b16 %v869
    %v1117 = vunpack.c.l.b16 %v870
    %v1118 = vunpack.c.h.b16 %v870
    %v1119 = vunpack.c.l.b16 %v871
    %v1120 = vunpack.c.h.b16 %v871
    %v1121 = vunpack.c.l.b16 %v872
    %v1122 = vunpack.c.h.b16 %v872
    %v1123 = vunpack.c.l.b16 %v873
    %v1124 = vunpack.c.h.b16 %v873
    %v1125 = vunpack.c.l.b16 %v874
    %v1126 = vunpack.c.h.b16 %v874
    %v1127 = vunpack.c.l.b16 %v875
    %v1128 = vunpack.c.h.b16 %v875
    %v1129 = vunpack.c.l.b16 %v876
    %v1130 = vunpack.c.h.b16 %v876
    %v1131 = vunpack.c.l.b16 %v877
    %v1132 = vunpack.c.h.b16 %v877
    %v1133 = vunpack.c.l.b16 %v878
    %v1134 = vunpack.c.h.b16 %v878
    %v1135 = vunpack.c.l.b16 %v879
    %v1136 = vunpack.c.h.b16 %v879
    %v1137 = vunpack.c.l.b16 %v880
    %v1138 = vunpack.c.h.b16 %v880
    %v1139 = vunpack.c.l.b16 %v881
    %v1140 = vunpack.c.h.b16 %v881
    %v1141 = vunpack.c.l.b16 %v882
    %v1142 = vunpack.c.h.b16 %v882
    %v1143 = vunpack.c.l.b16 %v883
    %v1144 = vunpack.c.h.b16 %v883
    %v1145 = vunpack.c.l.b16 %v884
    %v1146 = vunpack.c.h.b16 %v884
    %v1147 = vunpack.c.l.b16 %v885
    %v1148 = vunpack.c.h.b16 %v885
    %v1149 = vunpack.c.l.b16 %v886
    %v1150 = vunpack.c.h.b16 %v886
    %v1151 = vunpack.c.l.b16 %v887
    %v1152 = vunpack.c.h.b16 %v887
    %v1153 = vunpack.c.l.b16 %v888
    %v1154 = vunpack.c.h.b16 %v888
    %v1155 = vunpack.c.l.b16 %v889
    %v1156 = vunpack.c.h.b16 %v889
    %v1157 = vunpack.c.l.b16 %v890
    %v1158 = vunpack.c.h.b16 %v890
    %v1159 = vunpack.c.l.b16 %v891
    %v1160 = vunpack.c.h.b16 %v891
    %v1161 = vpack.c.b16 %v1099, %v1097
    %v1162 = vpack.c.b16 %v1100, %v1098
    %v1163 = vpack.c.b16 %v1103, %v1101
    %v1164 = vpack.c.b16 %v1104, %v1102
    %v1165 = vpack.c.b16 %v1107, %v1105
    %v1166 = vpack.c.b16 %v1108, %v1106
    %v1167 = vpack.c.b16 %v1111, %v1109
    %v1168 = vpack.c.b16 %v1112, %v1110
    %v1169 = vpack.c.b16 %v1115, %v1113
    %v1170 = vpack.c.b16 %v1116, %v1114
    %v1171 = vpack.c.b16 %v1119, %v1117
    %v1172 = vpack.c.b16 %v1120, %v1118
    %v1173 = vpack.c.b16 %v1123, %v1121
    %v1174 = vpack.c.b16 %v1124, %v1122
    %v1175 = vpack.c.b16 %v1127, %v1125
    %v1176 = vpack.c.b16 %v1128, %v1126
    %v1177 = vpack.c.b16 %v1131, %v1129
    %v1178 = vpack.c.b16 %v1132, %v1130
    %v1179 = vpack.c.b16 %v1135, %v1133
    %v1180 = vpack.c.b16 %v1136, %v1134
    %v1181 = vpack.c.b16 %v1139, %v1137
    %v1182 = vpack.c.b16 %v1140, %v1138
    %v1183 = vpack.c.b16 %v1143, %v1141
    %v1184 = vpack.c.b16 %v1144, %v1142
    %v1185 = vpack.c.b16 %v1147, %v1145
    %v1186 = vpack.c.b16 %v1148, %v1146
    %v1187 = vpack.c.b16 %v1151, %v1149
    %v1188 = vpack.c.b16 %v1152, %v1150
    %v1189 = vpack.c.b16 %v1155, %v1153
    %v1190 = vpack.c.b16 %v1156, %v1154
    %v1191 = vpack.c.b16 %v1159, %v1157
    %v1192 = vpack.c.b16 %v1160, %v1158
    %1225 = vmatprep.subr.bf16.mxu0 %v1176
    %1226 = vmatpush1.bf16.msra.mxu0 %v1175
    %1227 = vmatprep.subr.bf16.mxu0 %v1174
    %1228 = vmatpush1.bf16.msra.mxu0 %v1173
    %1229 = vmatprep.subr.bf16.mxu0 %v1172
    %1230 = vmatpush1.bf16.msra.mxu0 %v1171
    %1231 = vmatprep.subr.bf16.mxu0 %v1170
    %1232 = vmatpush1.bf16.msra.mxu0 %v1169
    %1233 = vmatprep.subr.bf16.mxu0 %v1168
    %1234 = vmatpush1.bf16.msra.mxu0 %v1167
    %1235 = vmatprep.subr.bf16.mxu0 %v1166
    %1236 = vmatpush1.bf16.msra.mxu0 %v1165
    %1237 = vmatprep.subr.bf16.mxu0 %v1164
    %1238 = vmatpush1.bf16.msra.mxu0 %v1163
    %1239 = vmatprep.subr.bf16.mxu0 %v1162
    %1240 = vmatpush1.bf16.msra.mxu0 %v1161
    %1241 = vmatprep.subr.bf16.mxu0 %v1192
    %1242 = vmatpush2.bf16.msra.mxu0 %v1191
    %1243 = vmatprep.subr.bf16.mxu0 %v1190
    %1244 = vmatpush2.bf16.msra.mxu0 %v1189
    %1245 = vmatprep.subr.bf16.mxu0 %v1188
    %1246 = vmatpush2.bf16.msra.mxu0 %v1187
    %1247 = vmatprep.subr.bf16.mxu0 %v1186
    %1248 = vmatpush2.bf16.msra.mxu0 %v1185
    %1249 = vmatprep.subr.bf16.mxu0 %v1184
    %1250 = vmatpush2.bf16.msra.mxu0 %v1183
    %1251 = vmatprep.subr.bf16.mxu0 %v1182
    %1252 = vmatpush2.bf16.msra.mxu0 %v1181
    %1253 = vmatprep.subr.bf16.mxu0 %v1180
    %1254 = vmatpush2.bf16.msra.mxu0 %v1179
    %1255 = vmatprep.subr.bf16.mxu0 %v1178
    %1256 = vmatpush2.bf16.msra.mxu0 %v1177
    %1257 = vmatprep.mubr.bf16.mxu0 %v1002
    %1258 = vmatmul.mubr.bf16.gmra.mxu0 %v1001
    %v1259 = vpop.f32.mrf.mxu0
    %v1260 = vadd.f32 %v898, %v1259
    %v1261 = vpop.f32.mrf.mxu0
    %v1262 = vadd.f32 %v902, %v1261
    %v1263 = vpop.f32.mrf.mxu0
    %v1264 = vadd.f32 %v898, %v1263
    %v1265 = vpop.f32.mrf.mxu0
    %v1266 = vadd.f32 %v902, %v1265
    %1267 = vmatprep.mubr.bf16.mxu0 %v1004
    %1268 = vmatmul.mubr.bf16.gmra.mxu0 %v1003
    %v1269 = vpop.f32.mrf.mxu0
    %v1270 = vadd.f32 %v898, %v1269
    %v1271 = vpop.f32.mrf.mxu0
    %v1272 = vadd.f32 %v902, %v1271
    %v1273 = vpop.f32.mrf.mxu0
    %v1274 = vadd.f32 %v898, %v1273
    %v1275 = vpop.f32.mrf.mxu0
    %v1276 = vadd.f32 %v902, %v1275
    %1277 = vmatprep.mubr.bf16.mxu0 %v1006
    %1278 = vmatmul.mubr.bf16.gmra.mxu0 %v1005
    %v1279 = vpop.f32.mrf.mxu0
    %v1280 = vadd.f32 %v898, %v1279
    %v1281 = vpop.f32.mrf.mxu0
    %v1282 = vadd.f32 %v902, %v1281
    %v1283 = vpop.f32.mrf.mxu0
    %v1284 = vadd.f32 %v898, %v1283
    %v1285 = vpop.f32.mrf.mxu0
    %v1286 = vadd.f32 %v902, %v1285
    %1287 = vmatprep.mubr.bf16.mxu0 %v1008
    %1288 = vmatmul.mubr.bf16.gmra.mxu0 %v1007
    %v1289 = vpop.f32.mrf.mxu0
    %v1290 = vadd.f32 %v898, %v1289
    %v1291 = vpop.f32.mrf.mxu0
    %v1292 = vadd.f32 %v902, %v1291
    %v1293 = vpop.f32.mrf.mxu0
    %v1294 = vadd.f32 %v898, %v1293
    %v1295 = vpop.f32.mrf.mxu0
    %v1296 = vadd.f32 %v902, %v1295
    %1297 = vmatprep.mubr.bf16.mxu0 %v1010
    %1298 = vmatmul.mubr.bf16.gmra.mxu0 %v1009
    %v1299 = vpop.f32.mrf.mxu0
    %v1300 = vadd.f32 %v898, %v1299
    %v1301 = vpop.f32.mrf.mxu0
    %v1302 = vadd.f32 %v902, %v1301
    %v1303 = vpop.f32.mrf.mxu0
    %v1304 = vadd.f32 %v898, %v1303
    %v1305 = vpop.f32.mrf.mxu0
    %v1306 = vadd.f32 %v902, %v1305
    %1307 = vmatprep.mubr.bf16.mxu0 %v1012
    %1308 = vmatmul.mubr.bf16.gmra.mxu0 %v1011
    %v1309 = vpop.f32.mrf.mxu0
    %v1310 = vadd.f32 %v898, %v1309
    %v1311 = vpop.f32.mrf.mxu0
    %v1312 = vadd.f32 %v902, %v1311
    %v1313 = vpop.f32.mrf.mxu0
    %v1314 = vadd.f32 %v898, %v1313
    %v1315 = vpop.f32.mrf.mxu0
    %v1316 = vadd.f32 %v902, %v1315
    %1317 = vmatprep.mubr.bf16.mxu0 %v1014
    %1318 = vmatmul.mubr.bf16.gmra.mxu0 %v1013
    %v1319 = vpop.f32.mrf.mxu0
    %v1320 = vadd.f32 %v898, %v1319
    %v1321 = vpop.f32.mrf.mxu0
    %v1322 = vadd.f32 %v902, %v1321
    %v1323 = vpop.f32.mrf.mxu0
    %v1324 = vadd.f32 %v898, %v1323
    %v1325 = vpop.f32.mrf.mxu0
    %v1326 = vadd.f32 %v902, %v1325
    %1327 = vmatprep.mubr.bf16.mxu0 %v1016
    %1328 = vmatmul.mubr.bf16.gmra.mxu0 %v1015
    %v1329 = vpop.f32.mrf.mxu0
    %v1330 = vadd.f32 %v898, %v1329
    %v1331 = vpop.f32.mrf.mxu0
    %v1332 = vadd.f32 %v902, %v1331
    %v1333 = vpop.f32.mrf.mxu0
    %v1334 = vadd.f32 %v898, %v1333
    %v1335 = vpop.f32.mrf.mxu0
    %v1336 = vadd.f32 %v902, %v1335
    %1337 = vmatprep.mubr.bf16.mxu0 %v1018
    %1338 = vmatmul.mubr.bf16.gmra.mxu0 %v1017
    %v1339 = vpop.f32.mrf.mxu0
    %v1340 = vadd.f32 %v898, %v1339
    %v1341 = vpop.f32.mrf.mxu0
    %v1342 = vadd.f32 %v902, %v1341
    %v1343 = vpop.f32.mrf.mxu0
    %v1344 = vadd.f32 %v898, %v1343
    %v1345 = vpop.f32.mrf.mxu0
    %v1346 = vadd.f32 %v902, %v1345
    %1347 = vmatprep.mubr.bf16.mxu0 %v1020
    %1348 = vmatmul.mubr.bf16.gmra.mxu0 %v1019
    %v1349 = vpop.f32.mrf.mxu0
    %v1350 = vadd.f32 %v898, %v1349
    %v1351 = vpop.f32.mrf.mxu0
    %v1352 = vadd.f32 %v902, %v1351
    %v1353 = vpop.f32.mrf.mxu0
    %v1354 = vadd.f32 %v898, %v1353
    %v1355 = vpop.f32.mrf.mxu0
    %v1356 = vadd.f32 %v902, %v1355
    %1357 = vmatprep.mubr.bf16.mxu0 %v1022
    %1358 = vmatmul.mubr.bf16.gmra.mxu0 %v1021
    %v1359 = vpop.f32.mrf.mxu0
    %v1360 = vadd.f32 %v898, %v1359
    %v1361 = vpop.f32.mrf.mxu0
    %v1362 = vadd.f32 %v902, %v1361
    %v1363 = vpop.f32.mrf.mxu0
    %v1364 = vadd.f32 %v898, %v1363
    %v1365 = vpop.f32.mrf.mxu0
    %v1366 = vadd.f32 %v902, %v1365
    %1367 = vmatprep.mubr.bf16.mxu0 %v1024
    %1368 = vmatmul.mubr.bf16.gmra.mxu0 %v1023
    %v1369 = vpop.f32.mrf.mxu0
    %v1370 = vadd.f32 %v898, %v1369
    %v1371 = vpop.f32.mrf.mxu0
    %v1372 = vadd.f32 %v902, %v1371
    %v1373 = vpop.f32.mrf.mxu0
    %v1374 = vadd.f32 %v898, %v1373
    %v1375 = vpop.f32.mrf.mxu0
    %v1376 = vadd.f32 %v902, %v1375
    %1377 = vmatprep.mubr.bf16.mxu0 %v1026
    %1378 = vmatmul.mubr.bf16.gmra.mxu0 %v1025
    %v1379 = vpop.f32.mrf.mxu0
    %v1380 = vadd.f32 %v898, %v1379
    %v1381 = vpop.f32.mrf.mxu0
    %v1382 = vadd.f32 %v902, %v1381
    %v1383 = vpop.f32.mrf.mxu0
    %v1384 = vadd.f32 %v898, %v1383
    %v1385 = vpop.f32.mrf.mxu0
    %v1386 = vadd.f32 %v902, %v1385
    %1387 = vmatprep.mubr.bf16.mxu0 %v1028
    %1388 = vmatmul.mubr.bf16.gmra.mxu0 %v1027
    %v1389 = vpop.f32.mrf.mxu0
    %v1390 = vadd.f32 %v898, %v1389
    %v1391 = vpop.f32.mrf.mxu0
    %v1392 = vadd.f32 %v902, %v1391
    %v1393 = vpop.f32.mrf.mxu0
    %v1394 = vadd.f32 %v898, %v1393
    %v1395 = vpop.f32.mrf.mxu0
    %v1396 = vadd.f32 %v902, %v1395
    %1397 = vmatprep.mubr.bf16.mxu0 %v1030
    %1398 = vmatmul.mubr.bf16.gmra.mxu0 %v1029
    %v1399 = vpop.f32.mrf.mxu0
    %v1400 = vadd.f32 %v898, %v1399
    %v1401 = vpop.f32.mrf.mxu0
    %v1402 = vadd.f32 %v902, %v1401
    %v1403 = vpop.f32.mrf.mxu0
    %v1404 = vadd.f32 %v898, %v1403
    %v1405 = vpop.f32.mrf.mxu0
    %v1406 = vadd.f32 %v902, %v1405
    %1407 = vmatprep.mubr.bf16.mxu0 %v1032
    %1408 = vmatmul.mubr.bf16.gmra.mxu0 %v1031
    %v1409 = vpop.f32.mrf.mxu0
    %v1410 = vadd.f32 %v898, %v1409
    %v1411 = vpop.f32.mrf.mxu0
    %v1412 = vadd.f32 %v902, %v1411
    %v1413 = vpop.f32.mrf.mxu0
    %v1414 = vadd.f32 %v898, %v1413
    %v1415 = vpop.f32.mrf.mxu0
    %v1416 = vadd.f32 %v902, %v1415
    %1417 = vdwg.mxu0
    %v1418 = vmul.f32 %v1260, 0.2
    %v1419 = vmul.f32 %v1262, 0.2
    %v1420 = vmul.f32 %v1264, 0.2
    %v1421 = vmul.f32 %v1266, 0.2
    %v1422 = vmul.f32 %v1270, 0.2
    %v1423 = vmul.f32 %v1272, 0.2
    %v1424 = vmul.f32 %v1274, 0.2
    %v1425 = vmul.f32 %v1276, 0.2
    %v1426 = vmul.f32 %v1280, 0.2
    %v1427 = vmul.f32 %v1282, 0.2
    %v1428 = vmul.f32 %v1284, 0.2
    %v1429 = vmul.f32 %v1286, 0.2
    %v1430 = vmul.f32 %v1290, 0.2
    %v1431 = vmul.f32 %v1292, 0.2
    %v1432 = vmul.f32 %v1294, 0.2
    %v1433 = vmul.f32 %v1296, 0.2
    %v1434 = vmul.f32 %v1300, 0.2
    %v1435 = vmul.f32 %v1302, 0.2
    %v1436 = vmul.f32 %v1304, 0.2
    %v1437 = vmul.f32 %v1306, 0.2
    %v1438 = vmul.f32 %v1310, 0.2
    %v1439 = vmul.f32 %v1312, 0.2
    %v1440 = vmul.f32 %v1314, 0.2
    %v1441 = vmul.f32 %v1316, 0.2
    %v1442 = vmul.f32 %v1320, 0.2
    %v1443 = vmul.f32 %v1322, 0.2
    %v1444 = vmul.f32 %v1324, 0.2
    %v1445 = vmul.f32 %v1326, 0.2
    %v1446 = vmul.f32 %v1330, 0.2
    %v1447 = vmul.f32 %v1332, 0.2
    %v1448 = vmul.f32 %v1334, 0.2
    %v1449 = vmul.f32 %v1336, 0.2
    %v1450 = vmul.f32 %v1340, 0.2
    %v1451 = vmul.f32 %v1342, 0.2
    %v1452 = vmul.f32 %v1344, 0.2
    %v1453 = vmul.f32 %v1346, 0.2
    %v1454 = vmul.f32 %v1350, 0.2
    %v1455 = vmul.f32 %v1352, 0.2
    %v1456 = vmul.f32 %v1354, 0.2
    %v1457 = vmul.f32 %v1356, 0.2
    %v1458 = vmul.f32 %v1360, 0.2
    %v1459 = vmul.f32 %v1362, 0.2
    %v1460 = vmul.f32 %v1364, 0.2
    %v1461 = vmul.f32 %v1366, 0.2
    %v1462 = vmul.f32 %v1370, 0.2
    %v1463 = vmul.f32 %v1372, 0.2
    %v1464 = vmul.f32 %v1374, 0.2
    %v1465 = vmul.f32 %v1376, 0.2
    %v1466 = vmul.f32 %v1380, 0.2
    %v1467 = vmul.f32 %v1382, 0.2
    %v1468 = vmul.f32 %v1384, 0.2
    %v1469 = vmul.f32 %v1386, 0.2
    %v1470 = vmul.f32 %v1390, 0.2
    %v1471 = vmul.f32 %v1392, 0.2
    %v1472 = vmul.f32 %v1394, 0.2
    %v1473 = vmul.f32 %v1396, 0.2
    %v1474 = vmul.f32 %v1400, 0.2
    %v1475 = vmul.f32 %v1402, 0.2
    %v1476 = vmul.f32 %v1404, 0.2
    %v1477 = vmul.f32 %v1406, 0.2
    %v1478 = vmul.f32 %v1410, 0.2
    %v1479 = vmul.f32 %v1412, 0.2
    %v1480 = vmul.f32 %v1414, 0.2
    %v1481 = vmul.f32 %v1416, 0.2
    %v1482 = vmax.f32 %v1260, %v1418
    %v1483 = vmax.f32 %v1262, %v1419
    %v1484 = vmax.f32 %v1264, %v1420
    %v1485 = vmax.f32 %v1266, %v1421
    %v1486 = vmax.f32 %v1270, %v1422
    %v1487 = vmax.f32 %v1272, %v1423
    %v1488 = vmax.f32 %v1274, %v1424
    %v1489 = vmax.f32 %v1276, %v1425
    %v1490 = vmax.f32 %v1280, %v1426
    %v1491 = vmax.f32 %v1282, %v1427
    %v1492 = vmax.f32 %v1284, %v1428
    %v1493 = vmax.f32 %v1286, %v1429
    %v1494 = vmax.f32 %v1290, %v1430
    %v1495 = vmax.f32 %v1292, %v1431
    %v1496 = vmax.f32 %v1294, %v1432
    %v1497 = vmax.f32 %v1296, %v1433
    %v1498 = vmax.f32 %v1300, %v1434
    %v1499 = vmax.f32 %v1302, %v1435
    %v1500 = vmax.f32 %v1304, %v1436
    %v1501 = vmax.f32 %v1306, %v1437
    %v1502 = vmax.f32 %v1310, %v1438
    %v1503 = vmax.f32 %v1312, %v1439
    %v1504 = vmax.f32 %v1314, %v1440
    %v1505 = vmax.f32 %v1316, %v1441
    %v1506 = vmax.f32 %v1320, %v1442
    %v1507 = vmax.f32 %v1322, %v1443
    %v1508 = vmax.f32 %v1324, %v1444
    %v1509 = vmax.f32 %v1326, %v1445
    %v1510 = vmax.f32 %v1330, %v1446
    %v1511 = vmax.f32 %v1332, %v1447
    %v1512 = vmax.f32 %v1334, %v1448
    %v1513 = vmax.f32 %v1336, %v1449
    %v1514 = vmax.f32 %v1340, %v1450
    %v1515 = vmax.f32 %v1342, %v1451
    %v1516 = vmax.f32 %v1344, %v1452
    %v1517 = vmax.f32 %v1346, %v1453
    %v1518 = vmax.f32 %v1350, %v1454
    %v1519 = vmax.f32 %v1352, %v1455
    %v1520 = vmax.f32 %v1354, %v1456
    %v1521 = vmax.f32 %v1356, %v1457
    %v1522 = vmax.f32 %v1360, %v1458
    %v1523 = vmax.f32 %v1362, %v1459
    %v1524 = vmax.f32 %v1364, %v1460
    %v1525 = vmax.f32 %v1366, %v1461
    %v1526 = vmax.f32 %v1370, %v1462
    %v1527 = vmax.f32 %v1372, %v1463
    %v1528 = vmax.f32 %v1374, %v1464
    %v1529 = vmax.f32 %v1376, %v1465
    %v1530 = vmax.f32 %v1380, %v1466
    %v1531 = vmax.f32 %v1382, %v1467
    %v1532 = vmax.f32 %v1384, %v1468
    %v1533 = vmax.f32 %v1386, %v1469
    %v1534 = vmax.f32 %v1390, %v1470
    %v1535 = vmax.f32 %v1392, %v1471
    %v1536 = vmax.f32 %v1394, %v1472
    %v1537 = vmax.f32 %v1396, %v1473
    %v1538 = vmax.f32 %v1400, %v1474
    %v1539 = vmax.f32 %v1402, %v1475
    %v1540 = vmax.f32 %v1404, %v1476
    %v1541 = vmax.f32 %v1406, %v1477
    %v1542 = vmax.f32 %v1410, %v1478
    %v1543 = vmax.f32 %v1412, %v1479
    %v1544 = vmax.f32 %v1414, %v1480
    %v1545 = vmax.f32 %v1416, %v1481
    %v1546 = vld [vmem:[%s7 + $0x2] sm:$0x3]
    %v1548 = vlaneseq
    %v1549 = vshrl.u32 %v1548, 7
    %v1550 = vsub.s32 0, %v1549
    %v1551 = vrot.slane %v1546, %v1550
    %v1552 = vlaneseq
    %v1553 = vshrl.u32 %v1552, 7
    %v1554 = vsub.s32 1, %v1553
    %v1555 = vrot.slane %v1546, %v1554
    %v1558 = vmul.f32 %v1482, %v1551
    %v1559 = vmul.f32 %v1483, %v1555
    %v1560 = vmul.f32 %v1484, %v1551
    %v1561 = vmul.f32 %v1485, %v1555
    %v1562 = vmul.f32 %v1486, %v1551
    %v1563 = vmul.f32 %v1487, %v1555
    %v1564 = vmul.f32 %v1488, %v1551
    %v1565 = vmul.f32 %v1489, %v1555
    %v1566 = vmul.f32 %v1490, %v1551
    %v1567 = vmul.f32 %v1491, %v1555
    %v1568 = vmul.f32 %v1492, %v1551
    %v1569 = vmul.f32 %v1493, %v1555
    %v1570 = vmul.f32 %v1494, %v1551
    %v1571 = vmul.f32 %v1495, %v1555
    %v1572 = vmul.f32 %v1496, %v1551
    %v1573 = vmul.f32 %v1497, %v1555
    %v1574 = vmul.f32 %v1498, %v1551
    %v1575 = vmul.f32 %v1499, %v1555
    %v1576 = vmul.f32 %v1500, %v1551
    %v1577 = vmul.f32 %v1501, %v1555
    %v1578 = vmul.f32 %v1502, %v1551
    %v1579 = vmul.f32 %v1503, %v1555
    %v1580 = vmul.f32 %v1504, %v1551
    %v1581 = vmul.f32 %v1505, %v1555
    %v1582 = vmul.f32 %v1506, %v1551
    %v1583 = vmul.f32 %v1507, %v1555
    %v1584 = vmul.f32 %v1508, %v1551
    %v1585 = vmul.f32 %v1509, %v1555
    %v1586 = vmul.f32 %v1510, %v1551
    %v1587 = vmul.f32 %v1511, %v1555
    %v1588 = vmul.f32 %v1512, %v1551
    %v1589 = vmul.f32 %v1513, %v1555
    %v1590 = vmul.f32 %v1514, %v1551
    %v1591 = vmul.f32 %v1515, %v1555
    %v1592 = vmul.f32 %v1516, %v1551
    %v1593 = vmul.f32 %v1517, %v1555
    %v1594 = vmul.f32 %v1518, %v1551
    %v1595 = vmul.f32 %v1519, %v1555
    %v1596 = vmul.f32 %v1520, %v1551
    %v1597 = vmul.f32 %v1521, %v1555
    %v1598 = vmul.f32 %v1522, %v1551
    %v1599 = vmul.f32 %v1523, %v1555
    %v1600 = vmul.f32 %v1524, %v1551
    %v1601 = vmul.f32 %v1525, %v1555
    %v1602 = vmul.f32 %v1526, %v1551
    %v1603 = vmul.f32 %v1527, %v1555
    %v1604 = vmul.f32 %v1528, %v1551
    %v1605 = vmul.f32 %v1529, %v1555
    %v1606 = vmul.f32 %v1530, %v1551
    %v1607 = vmul.f32 %v1531, %v1555
    %v1608 = vmul.f32 %v1532, %v1551
    %v1609 = vmul.f32 %v1533, %v1555
    %v1610 = vmul.f32 %v1534, %v1551
    %v1611 = vmul.f32 %v1535, %v1555
    %v1612 = vmul.f32 %v1536, %v1551
    %v1613 = vmul.f32 %v1537, %v1555
    %v1614 = vmul.f32 %v1538, %v1551
    %v1615 = vmul.f32 %v1539, %v1555
    %v1616 = vmul.f32 %v1540, %v1551
    %v1617 = vmul.f32 %v1541, %v1555
    %v1618 = vmul.f32 %v1542, %v1551
    %v1619 = vmul.f32 %v1543, %v1555
    %v1620 = vmul.f32 %v1544, %v1551
    %v1621 = vmul.f32 %v1545, %v1555
    %v1622 = vpack.c.bf16 %v1484, %v1482
    %v1623 = vpack.c.bf16 %v1485, %v1483
    %v1624 = vpack.c.bf16 %v1488, %v1486
    %v1625 = vpack.c.bf16 %v1489, %v1487
    %v1626 = vpack.c.bf16 %v1492, %v1490
    %v1627 = vpack.c.bf16 %v1493, %v1491
    %v1628 = vpack.c.bf16 %v1496, %v1494
    %v1629 = vpack.c.bf16 %v1497, %v1495
    %v1630 = vpack.c.bf16 %v1500, %v1498
    %v1631 = vpack.c.bf16 %v1501, %v1499
    %v1632 = vpack.c.bf16 %v1504, %v1502
    %v1633 = vpack.c.bf16 %v1505, %v1503
    %v1634 = vpack.c.bf16 %v1508, %v1506
    %v1635 = vpack.c.bf16 %v1509, %v1507
    %v1636 = vpack.c.bf16 %v1512, %v1510
    %v1637 = vpack.c.bf16 %v1513, %v1511
    %v1638 = vpack.c.bf16 %v1516, %v1514
    %v1639 = vpack.c.bf16 %v1517, %v1515
    %v1640 = vpack.c.bf16 %v1520, %v1518
    %v1641 = vpack.c.bf16 %v1521, %v1519
    %v1642 = vpack.c.bf16 %v1524, %v1522
    %v1643 = vpack.c.bf16 %v1525, %v1523
    %v1644 = vpack.c.bf16 %v1528, %v1526
    %v1645 = vpack.c.bf16 %v1529, %v1527
    %v1646 = vpack.c.bf16 %v1532, %v1530
    %v1647 = vpack.c.bf16 %v1533, %v1531
    %v1648 = vpack.c.bf16 %v1536, %v1534
    %v1649 = vpack.c.bf16 %v1537, %v1535
    %v1650 = vpack.c.bf16 %v1540, %v1538
    %v1651 = vpack.c.bf16 %v1541, %v1539
    %v1652 = vpack.c.bf16 %v1544, %v1542
    %v1653 = vpack.c.bf16 %v1545, %v1543
    %v1686 = vunpack.c.l.b16 %v1622
    %v1687 = vunpack.c.l.b16 %v1623
    %v1688 = vunpack.c.h.b16 %v1622
    %v1689 = vunpack.c.h.b16 %v1623
    %v1690 = vunpack.c.l.b16 %v1624
    %v1691 = vunpack.c.l.b16 %v1625
    %v1692 = vunpack.c.h.b16 %v1624
    %v1693 = vunpack.c.h.b16 %v1625
    %v1694 = vunpack.c.l.b16 %v1626
    %v1695 = vunpack.c.l.b16 %v1627
    %v1696 = vunpack.c.h.b16 %v1626
    %v1697 = vunpack.c.h.b16 %v1627
    %v1698 = vunpack.c.l.b16 %v1628
    %v1699 = vunpack.c.l.b16 %v1629
    %v1700 = vunpack.c.h.b16 %v1628
    %v1701 = vunpack.c.h.b16 %v1629
    %v1702 = vunpack.c.l.b16 %v1630
    %v1703 = vunpack.c.l.b16 %v1631
    %v1704 = vunpack.c.h.b16 %v1630
    %v1705 = vunpack.c.h.b16 %v1631
    %v1706 = vunpack.c.l.b16 %v1632
    %v1707 = vunpack.c.l.b16 %v1633
    %v1708 = vunpack.c.h.b16 %v1632
    %v1709 = vunpack.c.h.b16 %v1633
    %v1710 = vunpack.c.l.b16 %v1634
    %v1711 = vunpack.c.l.b16 %v1635
    %v1712 = vunpack.c.h.b16 %v1634
    %v1713 = vunpack.c.h.b16 %v1635
    %v1714 = vunpack.c.l.b16 %v1636
    %v1715 = vunpack.c.l.b16 %v1637
    %v1716 = vunpack.c.h.b16 %v1636
    %v1717 = vunpack.c.h.b16 %v1637
    %v1718 = vunpack.c.l.b16 %v1638
    %v1719 = vunpack.c.l.b16 %v1639
    %v1720 = vunpack.c.h.b16 %v1638
    %v1721 = vunpack.c.h.b16 %v1639
    %v1722 = vunpack.c.l.b16 %v1640
    %v1723 = vunpack.c.l.b16 %v1641
    %v1724 = vunpack.c.h.b16 %v1640
    %v1725 = vunpack.c.h.b16 %v1641
    %v1726 = vunpack.c.l.b16 %v1642
    %v1727 = vunpack.c.l.b16 %v1643
    %v1728 = vunpack.c.h.b16 %v1642
    %v1729 = vunpack.c.h.b16 %v1643
    %v1730 = vunpack.c.l.b16 %v1644
    %v1731 = vunpack.c.l.b16 %v1645
    %v1732 = vunpack.c.h.b16 %v1644
    %v1733 = vunpack.c.h.b16 %v1645
    %v1734 = vunpack.c.l.b16 %v1646
    %v1735 = vunpack.c.l.b16 %v1647
    %v1736 = vunpack.c.h.b16 %v1646
    %v1737 = vunpack.c.h.b16 %v1647
    %v1738 = vunpack.c.l.b16 %v1648
    %v1739 = vunpack.c.l.b16 %v1649
    %v1740 = vunpack.c.h.b16 %v1648
    %v1741 = vunpack.c.h.b16 %v1649
    %v1742 = vunpack.c.l.b16 %v1650
    %v1743 = vunpack.c.l.b16 %v1651
    %v1744 = vunpack.c.h.b16 %v1650
    %v1745 = vunpack.c.h.b16 %v1651
    %v1746 = vunpack.c.l.b16 %v1652
    %v1747 = vunpack.c.l.b16 %v1653
    %v1748 = vunpack.c.h.b16 %v1652
    %v1749 = vunpack.c.h.b16 %v1653
    %v1750 = vpack.c.b16 %v1687, %v1686
    %v1751 = vpack.c.b16 %v1689, %v1688
    %v1752 = vpack.c.b16 %v1691, %v1690
    %v1753 = vpack.c.b16 %v1693, %v1692
    %v1754 = vpack.c.b16 %v1695, %v1694
    %v1755 = vpack.c.b16 %v1697, %v1696
    %v1756 = vpack.c.b16 %v1699, %v1698
    %v1757 = vpack.c.b16 %v1701, %v1700
    %v1758 = vpack.c.b16 %v1703, %v1702
    %v1759 = vpack.c.b16 %v1705, %v1704
    %v1760 = vpack.c.b16 %v1707, %v1706
    %v1761 = vpack.c.b16 %v1709, %v1708
    %v1762 = vpack.c.b16 %v1711, %v1710
    %v1763 = vpack.c.b16 %v1713, %v1712
    %v1764 = vpack.c.b16 %v1715, %v1714
    %v1765 = vpack.c.b16 %v1717, %v1716
    %v1766 = vpack.c.b16 %v1719, %v1718
    %v1767 = vpack.c.b16 %v1721, %v1720
    %v1768 = vpack.c.b16 %v1723, %v1722
    %v1769 = vpack.c.b16 %v1725, %v1724
    %v1770 = vpack.c.b16 %v1727, %v1726
    %v1771 = vpack.c.b16 %v1729, %v1728
    %v1772 = vpack.c.b16 %v1731, %v1730
    %v1773 = vpack.c.b16 %v1733, %v1732
    %v1774 = vpack.c.b16 %v1735, %v1734
    %v1775 = vpack.c.b16 %v1737, %v1736
    %v1776 = vpack.c.b16 %v1739, %v1738
    %v1777 = vpack.c.b16 %v1741, %v1740
    %v1778 = vpack.c.b16 %v1743, %v1742
    %v1779 = vpack.c.b16 %v1745, %v1744
    %v1780 = vpack.c.b16 %v1747, %v1746
    %v1781 = vpack.c.b16 %v1749, %v1748
    %1814 = vst [vmem:[#allocation2 + $0x8] sm:$0xff] %v1750
    %1815 = vst [vmem:[#allocation2 + $0x28] sm:$0xff] %v1751
    %1816 = vst [vmem:[#allocation2 + $0x48] sm:$0xff] %v1752
    %1817 = vst [vmem:[#allocation2 + $0x68] sm:$0xff] %v1753
    %1818 = vst [vmem:[#allocation2 + $0x88] sm:$0xff] %v1754
    %1819 = vst [vmem:[#allocation2 + $0xa8] sm:$0xff] %v1755
    %1820 = vst [vmem:[#allocation2 + $0xc8] sm:$0xff] %v1756
    %1821 = vst [vmem:[#allocation2 + $0xe8] sm:$0xff] %v1757
    %1822 = vst [vmem:[#allocation2 + $0x108] sm:$0xff] %v1758
    %1823 = vst [vmem:[#allocation2 + $0x128] sm:$0xff] %v1759
    %1824 = vst [vmem:[#allocation2 + $0x148] sm:$0xff] %v1760
    %1825 = vst [vmem:[#allocation2 + $0x168] sm:$0xff] %v1761
    %1826 = vst [vmem:[#allocation2 + $0x188] sm:$0xff] %v1762
    %1827 = vst [vmem:[#allocation2 + $0x1a8] sm:$0xff] %v1763
    %1828 = vst [vmem:[#allocation2 + $0x1c8] sm:$0xff] %v1764
    %1829 = vst [vmem:[#allocation2 + $0x1e8] sm:$0xff] %v1765
    %1830 = vst [vmem:[#allocation2 + $0x208] sm:$0xff] %v1766
    %1831 = vst [vmem:[#allocation2 + $0x228] sm:$0xff] %v1767
    %1832 = vst [vmem:[#allocation2 + $0x248] sm:$0xff] %v1768
    %1833 = vst [vmem:[#allocation2 + $0x268] sm:$0xff] %v1769
    %1834 = vst [vmem:[#allocation2 + $0x288] sm:$0xff] %v1770
    %1835 = vst [vmem:[#allocation2 + $0x2a8] sm:$0xff] %v1771
    %1836 = vst [vmem:[#allocation2 + $0x2c8] sm:$0xff] %v1772
    %1837 = vst [vmem:[#allocation2 + $0x2e8] sm:$0xff] %v1773
    %1838 = vst [vmem:[#allocation2 + $0x308] sm:$0xff] %v1774
    %1839 = vst [vmem:[#allocation2 + $0x328] sm:$0xff] %v1775
    %1840 = vst [vmem:[#allocation2 + $0x348] sm:$0xff] %v1776
    %1841 = vst [vmem:[#allocation2 + $0x368] sm:$0xff] %v1777
    %1842 = vst [vmem:[#allocation2 + $0x388] sm:$0xff] %v1778
    %1843 = vst [vmem:[#allocation2 + $0x3a8] sm:$0xff] %v1779
    %1844 = vst [vmem:[#allocation2 + $0x3c8] sm:$0xff] %v1780
    %1845 = vst [vmem:[#allocation2 + $0x3e8] sm:$0xff] %v1781
    %v1846 = vld [vmem:[#allocation2] sm:$0xff]
    %v1847 = vld [vmem:[#allocation2 + $0x8] sm:$0xff]
    %v1848 = vld [vmem:[#allocation2 + $0x20] sm:$0xff]
    %v1849 = vld [vmem:[#allocation2 + $0x28] sm:$0xff]
    %v1850 = vld [vmem:[#allocation2 + $0x40] sm:$0xff]
    %v1851 = vld [vmem:[#allocation2 + $0x48] sm:$0xff]
    %v1852 = vld [vmem:[#allocation2 + $0x60] sm:$0xff]
    %v1853 = vld [vmem:[#allocation2 + $0x68] sm:$0xff]
    %v1854 = vld [vmem:[#allocation2 + $0x80] sm:$0xff]
    %v1855 = vld [vmem:[#allocation2 + $0x88] sm:$0xff]
    %v1856 = vld [vmem:[#allocation2 + $0xa0] sm:$0xff]
    %v1857 = vld [vmem:[#allocation2 + $0xa8] sm:$0xff]
    %v1858 = vld [vmem:[#allocation2 + $0xc0] sm:$0xff]
    %v1859 = vld [vmem:[#allocation2 + $0xc8] sm:$0xff]
    %v1860 = vld [vmem:[#allocation2 + $0xe0] sm:$0xff]
    %v1861 = vld [vmem:[#allocation2 + $0xe8] sm:$0xff]
    %v1862 = vld [vmem:[#allocation2 + $0x100] sm:$0xff]
    %v1863 = vld [vmem:[#allocation2 + $0x108] sm:$0xff]
    %v1864 = vld [vmem:[#allocation2 + $0x120] sm:$0xff]
    %v1865 = vld [vmem:[#allocation2 + $0x128] sm:$0xff]
    %v1866 = vld [vmem:[#allocation2 + $0x140] sm:$0xff]
    %v1867 = vld [vmem:[#allocation2 + $0x148] sm:$0xff]
    %v1868 = vld [vmem:[#allocation2 + $0x160] sm:$0xff]
    %v1869 = vld [vmem:[#allocation2 + $0x168] sm:$0xff]
    %v1870 = vld [vmem:[#allocation2 + $0x180] sm:$0xff]
    %v1871 = vld [vmem:[#allocation2 + $0x188] sm:$0xff]
    %v1872 = vld [vmem:[#allocation2 + $0x1a0] sm:$0xff]
    %v1873 = vld [vmem:[#allocation2 + $0x1a8] sm:$0xff]
    %v1874 = vld [vmem:[#allocation2 + $0x1c0] sm:$0xff]
    %v1875 = vld [vmem:[#allocation2 + $0x1c8] sm:$0xff]
    %v1876 = vld [vmem:[#allocation2 + $0x1e0] sm:$0xff]
    %v1877 = vld [vmem:[#allocation2 + $0x1e8] sm:$0xff]
    %v1878 = vld [vmem:[#allocation2 + $0x200] sm:$0xff]
    %v1879 = vld [vmem:[#allocation2 + $0x208] sm:$0xff]
    %v1880 = vld [vmem:[#allocation2 + $0x220] sm:$0xff]
    %v1881 = vld [vmem:[#allocation2 + $0x228] sm:$0xff]
    %v1882 = vld [vmem:[#allocation2 + $0x240] sm:$0xff]
    %v1883 = vld [vmem:[#allocation2 + $0x248] sm:$0xff]
    %v1884 = vld [vmem:[#allocation2 + $0x260] sm:$0xff]
    %v1885 = vld [vmem:[#allocation2 + $0x268] sm:$0xff]
    %v1886 = vld [vmem:[#allocation2 + $0x280] sm:$0xff]
    %v1887 = vld [vmem:[#allocation2 + $0x288] sm:$0xff]
    %v1888 = vld [vmem:[#allocation2 + $0x2a0] sm:$0xff]
    %v1889 = vld [vmem:[#allocation2 + $0x2a8] sm:$0xff]
    %v1890 = vld [vmem:[#allocation2 + $0x2c0] sm:$0xff]
    %v1891 = vld [vmem:[#allocation2 + $0x2c8] sm:$0xff]
    %v1892 = vld [vmem:[#allocation2 + $0x2e0] sm:$0xff]
    %v1893 = vld [vmem:[#allocation2 + $0x2e8] sm:$0xff]
    %v1894 = vld [vmem:[#allocation2 + $0x300] sm:$0xff]
    %v1895 = vld [vmem:[#allocation2 + $0x308] sm:$0xff]
    %v1896 = vld [vmem:[#allocation2 + $0x320] sm:$0xff]
    %v1897 = vld [vmem:[#allocation2 + $0x328] sm:$0xff]
    %v1898 = vld [vmem:[#allocation2 + $0x340] sm:$0xff]
    %v1899 = vld [vmem:[#allocation2 + $0x348] sm:$0xff]
    %v1900 = vld [vmem:[#allocation2 + $0x360] sm:$0xff]
    %v1901 = vld [vmem:[#allocation2 + $0x368] sm:$0xff]
    %v1902 = vld [vmem:[#allocation2 + $0x380] sm:$0xff]
    %v1903 = vld [vmem:[#allocation2 + $0x388] sm:$0xff]
    %v1904 = vld [vmem:[#allocation2 + $0x3a0] sm:$0xff]
    %v1905 = vld [vmem:[#allocation2 + $0x3a8] sm:$0xff]
    %v1906 = vld [vmem:[#allocation2 + $0x3c0] sm:$0xff]
    %v1907 = vld [vmem:[#allocation2 + $0x3c8] sm:$0xff]
    %v1908 = vld [vmem:[#allocation2 + $0x3e0] sm:$0xff]
    %v1909 = vld [vmem:[#allocation2 + $0x3e8] sm:$0xff]
    %v1910 = vld [vmem:[#allocation4] sm:$0xff]
    %v1911 = vld [vmem:[#allocation4 + $0x8] sm:$0xff]
    %v1912 = vld [vmem:[#allocation4 + $0x10] sm:$0xff]
    %v1913 = vld [vmem:[#allocation4 + $0x18] sm:$0xff]
    %v1914 = vld [vmem:[#allocation4 + $0x20] sm:$0xff]
    %v1915 = vld [vmem:[#allocation4 + $0x28] sm:$0xff]
    %v1916 = vld [vmem:[#allocation4 + $0x30] sm:$0xff]
    %v1917 = vld [vmem:[#allocation4 + $0x38] sm:$0xff]
    %v1918 = vld [vmem:[#allocation4 + $0x40] sm:$0xff]
    %v1919 = vld [vmem:[#allocation4 + $0x48] sm:$0xff]
    %v1920 = vld [vmem:[#allocation4 + $0x50] sm:$0xff]
    %v1921 = vld [vmem:[#allocation4 + $0x58] sm:$0xff]
    %v1922 = vld [vmem:[#allocation4 + $0x60] sm:$0xff]
    %v1923 = vld [vmem:[#allocation4 + $0x68] sm:$0xff]
    %v1924 = vld [vmem:[#allocation4 + $0x70] sm:$0xff]
    %v1925 = vld [vmem:[#allocation4 + $0x78] sm:$0xff]
    %v1926 = vld [vmem:[#allocation4 + $0x80] sm:$0xff]
    %v1927 = vld [vmem:[#allocation4 + $0x88] sm:$0xff]
    %v1928 = vld [vmem:[#allocation4 + $0x90] sm:$0xff]
    %v1929 = vld [vmem:[#allocation4 + $0x98] sm:$0xff]
    %v1930 = vld [vmem:[#allocation4 + $0xa0] sm:$0xff]
    %v1931 = vld [vmem:[#allocation4 + $0xa8] sm:$0xff]
    %v1932 = vld [vmem:[#allocation4 + $0xb0] sm:$0xff]
    %v1933 = vld [vmem:[#allocation4 + $0xb8] sm:$0xff]
    %v1934 = vld [vmem:[#allocation4 + $0xc0] sm:$0xff]
    %v1935 = vld [vmem:[#allocation4 + $0xc8] sm:$0xff]
    %v1936 = vld [vmem:[#allocation4 + $0xd0] sm:$0xff]
    %v1937 = vld [vmem:[#allocation4 + $0xd8] sm:$0xff]
    %v1938 = vld [vmem:[#allocation4 + $0xe0] sm:$0xff]
    %v1939 = vld [vmem:[#allocation4 + $0xe8] sm:$0xff]
    %v1940 = vld [vmem:[#allocation4 + $0xf0] sm:$0xff]
    %v1941 = vld [vmem:[#allocation4 + $0xf8] sm:$0xff]
    %v1942 = vld [vmem:[#allocation4 + $0x100] sm:$0xff]
    %v1943 = vld [vmem:[#allocation4 + $0x108] sm:$0xff]
    %v1944 = vld [vmem:[#allocation4 + $0x110] sm:$0xff]
    %v1945 = vld [vmem:[#allocation4 + $0x118] sm:$0xff]
    %v1946 = vld [vmem:[#allocation4 + $0x120] sm:$0xff]
    %v1947 = vld [vmem:[#allocation4 + $0x128] sm:$0xff]
    %v1948 = vld [vmem:[#allocation4 + $0x130] sm:$0xff]
    %v1949 = vld [vmem:[#allocation4 + $0x138] sm:$0xff]
    %v1950 = vld [vmem:[#allocation4 + $0x140] sm:$0xff]
    %v1951 = vld [vmem:[#allocation4 + $0x148] sm:$0xff]
    %v1952 = vld [vmem:[#allocation4 + $0x150] sm:$0xff]
    %v1953 = vld [vmem:[#allocation4 + $0x158] sm:$0xff]
    %v1954 = vld [vmem:[#allocation4 + $0x160] sm:$0xff]
    %v1955 = vld [vmem:[#allocation4 + $0x168] sm:$0xff]
    %v1956 = vld [vmem:[#allocation4 + $0x170] sm:$0xff]
    %v1957 = vld [vmem:[#allocation4 + $0x178] sm:$0xff]
    %v1958 = vld [vmem:[#allocation4 + $0x180] sm:$0xff]
    %v1959 = vld [vmem:[#allocation4 + $0x188] sm:$0xff]
    %v1960 = vld [vmem:[#allocation4 + $0x190] sm:$0xff]
    %v1961 = vld [vmem:[#allocation4 + $0x198] sm:$0xff]
    %v1962 = vld [vmem:[#allocation4 + $0x1a0] sm:$0xff]
    %v1963 = vld [vmem:[#allocation4 + $0x1a8] sm:$0xff]
    %v1964 = vld [vmem:[#allocation4 + $0x1b0] sm:$0xff]
    %v1965 = vld [vmem:[#allocation4 + $0x1b8] sm:$0xff]
    %v1966 = vld [vmem:[#allocation4 + $0x1c0] sm:$0xff]
    %v1967 = vld [vmem:[#allocation4 + $0x1c8] sm:$0xff]
    %v1968 = vld [vmem:[#allocation4 + $0x1d0] sm:$0xff]
    %v1969 = vld [vmem:[#allocation4 + $0x1d8] sm:$0xff]
    %v1970 = vld [vmem:[#allocation4 + $0x1e0] sm:$0xff]
    %v1971 = vld [vmem:[#allocation4 + $0x1e8] sm:$0xff]
    %v1972 = vld [vmem:[#allocation4 + $0x1f0] sm:$0xff]
    %v1973 = vld [vmem:[#allocation4 + $0x1f8] sm:$0xff]
    %s1974 = scalar_lea.vmem %s6, 2
    %v1975 = vld [vmem:[%s1974] ss:$8 sm:$0x3]
    %v1977 = vlaneseq
    %v1978 = vshrl.u32 %v1977, 7
    %v1979 = vsub.s32 0, %v1978
    %v1980 = vrot.slane %v1975, %v1979
    %v1981 = vlaneseq
    %v1982 = vshrl.u32 %v1981, 7
    %v1983 = vsub.s32 1, %v1982
    %v1984 = vrot.slane %v1975, %v1983
    %v2051 = vunpack.c.l.b16 %v1846
    %v2052 = vunpack.c.h.b16 %v1846
    %v2053 = vunpack.c.l.b16 %v1847
    %v2054 = vunpack.c.h.b16 %v1847
    %v2055 = vunpack.c.l.b16 %v1848
    %v2056 = vunpack.c.h.b16 %v1848
    %v2057 = vunpack.c.l.b16 %v1849
    %v2058 = vunpack.c.h.b16 %v1849
    %v2059 = vunpack.c.l.b16 %v1850
    %v2060 = vunpack.c.h.b16 %v1850
    %v2061 = vunpack.c.l.b16 %v1851
    %v2062 = vunpack.c.h.b16 %v1851
    %v2063 = vunpack.c.l.b16 %v1852
    %v2064 = vunpack.c.h.b16 %v1852
    %v2065 = vunpack.c.l.b16 %v1853
    %v2066 = vunpack.c.h.b16 %v1853
    %v2067 = vunpack.c.l.b16 %v1854
    %v2068 = vunpack.c.h.b16 %v1854
    %v2069 = vunpack.c.l.b16 %v1855
    %v2070 = vunpack.c.h.b16 %v1855
    %v2071 = vunpack.c.l.b16 %v1856
    %v2072 = vunpack.c.h.b16 %v1856
    %v2073 = vunpack.c.l.b16 %v1857
    %v2074 = vunpack.c.h.b16 %v1857
    %v2075 = vunpack.c.l.b16 %v1858
    %v2076 = vunpack.c.h.b16 %v1858
    %v2077 = vunpack.c.l.b16 %v1859
    %v2078 = vunpack.c.h.b16 %v1859
    %v2079 = vunpack.c.l.b16 %v1860
    %v2080 = vunpack.c.h.b16 %v1860
    %v2081 = vunpack.c.l.b16 %v1861
    %v2082 = vunpack.c.h.b16 %v1861
    %v2083 = vunpack.c.l.b16 %v1862
    %v2084 = vunpack.c.h.b16 %v1862
    %v2085 = vunpack.c.l.b16 %v1863
    %v2086 = vunpack.c.h.b16 %v1863
    %v2087 = vunpack.c.l.b16 %v1864
    %v2088 = vunpack.c.h.b16 %v1864
    %v2089 = vunpack.c.l.b16 %v1865
    %v2090 = vunpack.c.h.b16 %v1865
    %v2091 = vunpack.c.l.b16 %v1866
    %v2092 = vunpack.c.h.b16 %v1866
    %v2093 = vunpack.c.l.b16 %v1867
    %v2094 = vunpack.c.h.b16 %v1867
    %v2095 = vunpack.c.l.b16 %v1868
    %v2096 = vunpack.c.h.b16 %v1868
    %v2097 = vunpack.c.l.b16 %v1869
    %v2098 = vunpack.c.h.b16 %v1869
    %v2099 = vunpack.c.l.b16 %v1870
    %v2100 = vunpack.c.h.b16 %v1870
    %v2101 = vunpack.c.l.b16 %v1871
    %v2102 = vunpack.c.h.b16 %v1871
    %v2103 = vunpack.c.l.b16 %v1872
    %v2104 = vunpack.c.h.b16 %v1872
    %v2105 = vunpack.c.l.b16 %v1873
    %v2106 = vunpack.c.h.b16 %v1873
    %v2107 = vunpack.c.l.b16 %v1874
    %v2108 = vunpack.c.h.b16 %v1874
    %v2109 = vunpack.c.l.b16 %v1875
    %v2110 = vunpack.c.h.b16 %v1875
    %v2111 = vunpack.c.l.b16 %v1876
    %v2112 = vunpack.c.h.b16 %v1876
    %v2113 = vunpack.c.l.b16 %v1877
    %v2114 = vunpack.c.h.b16 %v1877
    %v2115 = vunpack.c.l.b16 %v1878
    %v2116 = vunpack.c.h.b16 %v1878
    %v2117 = vunpack.c.l.b16 %v1879
    %v2118 = vunpack.c.h.b16 %v1879
    %v2119 = vunpack.c.l.b16 %v1880
    %v2120 = vunpack.c.h.b16 %v1880
    %v2121 = vunpack.c.l.b16 %v1881
    %v2122 = vunpack.c.h.b16 %v1881
    %v2123 = vunpack.c.l.b16 %v1882
    %v2124 = vunpack.c.h.b16 %v1882
    %v2125 = vunpack.c.l.b16 %v1883
    %v2126 = vunpack.c.h.b16 %v1883
    %v2127 = vunpack.c.l.b16 %v1884
    %v2128 = vunpack.c.h.b16 %v1884
    %v2129 = vunpack.c.l.b16 %v1885
    %v2130 = vunpack.c.h.b16 %v1885
    %v2131 = vunpack.c.l.b16 %v1886
    %v2132 = vunpack.c.h.b16 %v1886
    %v2133 = vunpack.c.l.b16 %v1887
    %v2134 = vunpack.c.h.b16 %v1887
    %v2135 = vunpack.c.l.b16 %v1888
    %v2136 = vunpack.c.h.b16 %v1888
    %v2137 = vunpack.c.l.b16 %v1889
    %v2138 = vunpack.c.h.b16 %v1889
    %v2139 = vunpack.c.l.b16 %v1890
    %v2140 = vunpack.c.h.b16 %v1890
    %v2141 = vunpack.c.l.b16 %v1891
    %v2142 = vunpack.c.h.b16 %v1891
    %v2143 = vunpack.c.l.b16 %v1892
    %v2144 = vunpack.c.h.b16 %v1892
    %v2145 = vunpack.c.l.b16 %v1893
    %v2146 = vunpack.c.h.b16 %v1893
    %v2147 = vunpack.c.l.b16 %v1894
    %v2148 = vunpack.c.h.b16 %v1894
    %v2149 = vunpack.c.l.b16 %v1895
    %v2150 = vunpack.c.h.b16 %v1895
    %v2151 = vunpack.c.l.b16 %v1896
    %v2152 = vunpack.c.h.b16 %v1896
    %v2153 = vunpack.c.l.b16 %v1897
    %v2154 = vunpack.c.h.b16 %v1897
    %v2155 = vunpack.c.l.b16 %v1898
    %v2156 = vunpack.c.h.b16 %v1898
    %v2157 = vunpack.c.l.b16 %v1899
    %v2158 = vunpack.c.h.b16 %v1899
    %v2159 = vunpack.c.l.b16 %v1900
    %v2160 = vunpack.c.h.b16 %v1900
    %v2161 = vunpack.c.l.b16 %v1901
    %v2162 = vunpack.c.h.b16 %v1901
    %v2163 = vunpack.c.l.b16 %v1902
    %v2164 = vunpack.c.h.b16 %v1902
    %v2165 = vunpack.c.l.b16 %v1903
    %v2166 = vunpack.c.h.b16 %v1903
    %v2167 = vunpack.c.l.b16 %v1904
    %v2168 = vunpack.c.h.b16 %v1904
    %v2169 = vunpack.c.l.b16 %v1905
    %v2170 = vunpack.c.h.b16 %v1905
    %v2171 = vunpack.c.l.b16 %v1906
    %v2172 = vunpack.c.h.b16 %v1906
    %v2173 = vunpack.c.l.b16 %v1907
    %v2174 = vunpack.c.h.b16 %v1907
    %v2175 = vunpack.c.l.b16 %v1908
    %v2176 = vunpack.c.h.b16 %v1908
    %v2177 = vunpack.c.l.b16 %v1909
    %v2178 = vunpack.c.h.b16 %v1909
    %v2179 = vpack.c.b16 %v2055, %v2051
    %v2180 = vpack.c.b16 %v2056, %v2052
    %v2181 = vpack.c.b16 %v2057, %v2053
    %v2182 = vpack.c.b16 %v2058, %v2054
    %v2183 = vpack.c.b16 %v2063, %v2059
    %v2184 = vpack.c.b16 %v2064, %v2060
    %v2185 = vpack.c.b16 %v2065, %v2061
    %v2186 = vpack.c.b16 %v2066, %v2062
    %v2187 = vpack.c.b16 %v2071, %v2067
    %v2188 = vpack.c.b16 %v2072, %v2068
    %v2189 = vpack.c.b16 %v2073, %v2069
    %v2190 = vpack.c.b16 %v2074, %v2070
    %v2191 = vpack.c.b16 %v2079, %v2075
    %v2192 = vpack.c.b16 %v2080, %v2076
    %v2193 = vpack.c.b16 %v2081, %v2077
    %v2194 = vpack.c.b16 %v2082, %v2078
    %v2195 = vpack.c.b16 %v2087, %v2083
    %v2196 = vpack.c.b16 %v2088, %v2084
    %v2197 = vpack.c.b16 %v2089, %v2085
    %v2198 = vpack.c.b16 %v2090, %v2086
    %v2199 = vpack.c.b16 %v2095, %v2091
    %v2200 = vpack.c.b16 %v2096, %v2092
    %v2201 = vpack.c.b16 %v2097, %v2093
    %v2202 = vpack.c.b16 %v2098, %v2094
    %v2203 = vpack.c.b16 %v2103, %v2099
    %v2204 = vpack.c.b16 %v2104, %v2100
    %v2205 = vpack.c.b16 %v2105, %v2101
    %v2206 = vpack.c.b16 %v2106, %v2102
    %v2207 = vpack.c.b16 %v2111, %v2107
    %v2208 = vpack.c.b16 %v2112, %v2108
    %v2209 = vpack.c.b16 %v2113, %v2109
    %v2210 = vpack.c.b16 %v2114, %v2110
    %v2211 = vpack.c.b16 %v2119, %v2115
    %v2212 = vpack.c.b16 %v2120, %v2116
    %v2213 = vpack.c.b16 %v2121, %v2117
    %v2214 = vpack.c.b16 %v2122, %v2118
    %v2215 = vpack.c.b16 %v2127, %v2123
    %v2216 = vpack.c.b16 %v2128, %v2124
    %v2217 = vpack.c.b16 %v2129, %v2125
    %v2218 = vpack.c.b16 %v2130, %v2126
    %v2219 = vpack.c.b16 %v2135, %v2131
    %v2220 = vpack.c.b16 %v2136, %v2132
    %v2221 = vpack.c.b16 %v2137, %v2133
    %v2222 = vpack.c.b16 %v2138, %v2134
    %v2223 = vpack.c.b16 %v2143, %v2139
    %v2224 = vpack.c.b16 %v2144, %v2140
    %v2225 = vpack.c.b16 %v2145, %v2141
    %v2226 = vpack.c.b16 %v2146, %v2142
    %v2227 = vpack.c.b16 %v2151, %v2147
    %v2228 = vpack.c.b16 %v2152, %v2148
    %v2229 = vpack.c.b16 %v2153, %v2149
    %v2230 = vpack.c.b16 %v2154, %v2150
    %v2231 = vpack.c.b16 %v2159, %v2155
    %v2232 = vpack.c.b16 %v2160, %v2156
    %v2233 = vpack.c.b16 %v2161, %v2157
    %v2234 = vpack.c.b16 %v2162, %v2158
    %v2235 = vpack.c.b16 %v2167, %v2163
    %v2236 = vpack.c.b16 %v2168, %v2164
    %v2237 = vpack.c.b16 %v2169, %v2165
    %v2238 = vpack.c.b16 %v2170, %v2166
    %v2239 = vpack.c.b16 %v2175, %v2171
    %v2240 = vpack.c.b16 %v2176, %v2172
    %v2241 = vpack.c.b16 %v2177, %v2173
    %v2242 = vpack.c.b16 %v2178, %v2174
    %v2371 = vunpack.c.l.b16 %v1910
    %v2372 = vunpack.c.h.b16 %v1910
    %v2373 = vunpack.c.l.b16 %v1911
    %v2374 = vunpack.c.h.b16 %v1911
    %v2375 = vunpack.c.l.b16 %v1912
    %v2376 = vunpack.c.h.b16 %v1912
    %v2377 = vunpack.c.l.b16 %v1913
    %v2378 = vunpack.c.h.b16 %v1913
    %v2379 = vunpack.c.l.b16 %v1914
    %v2380 = vunpack.c.h.b16 %v1914
    %v2381 = vunpack.c.l.b16 %v1915
    %v2382 = vunpack.c.h.b16 %v1915
    %v2383 = vunpack.c.l.b16 %v1916
    %v2384 = vunpack.c.h.b16 %v1916
    %v2385 = vunpack.c.l.b16 %v1917
    %v2386 = vunpack.c.h.b16 %v1917
    %v2387 = vunpack.c.l.b16 %v1918
    %v2388 = vunpack.c.h.b16 %v1918
    %v2389 = vunpack.c.l.b16 %v1919
    %v2390 = vunpack.c.h.b16 %v1919
    %v2391 = vunpack.c.l.b16 %v1920
    %v2392 = vunpack.c.h.b16 %v1920
    %v2393 = vunpack.c.l.b16 %v1921
    %v2394 = vunpack.c.h.b16 %v1921
    %v2395 = vunpack.c.l.b16 %v1922
    %v2396 = vunpack.c.h.b16 %v1922
    %v2397 = vunpack.c.l.b16 %v1923
    %v2398 = vunpack.c.h.b16 %v1923
    %v2399 = vunpack.c.l.b16 %v1924
    %v2400 = vunpack.c.h.b16 %v1924
    %v2401 = vunpack.c.l.b16 %v1925
    %v2402 = vunpack.c.h.b16 %v1925
    %v2403 = vunpack.c.l.b16 %v1926
    %v2404 = vunpack.c.h.b16 %v1926
    %v2405 = vunpack.c.l.b16 %v1927
    %v2406 = vunpack.c.h.b16 %v1927
    %v2407 = vunpack.c.l.b16 %v1928
    %v2408 = vunpack.c.h.b16 %v1928
    %v2409 = vunpack.c.l.b16 %v1929
    %v2410 = vunpack.c.h.b16 %v1929
    %v2411 = vunpack.c.l.b16 %v1930
    %v2412 = vunpack.c.h.b16 %v1930
    %v2413 = vunpack.c.l.b16 %v1931
    %v2414 = vunpack.c.h.b16 %v1931
    %v2415 = vunpack.c.l.b16 %v1932
    %v2416 = vunpack.c.h.b16 %v1932
    %v2417 = vunpack.c.l.b16 %v1933
    %v2418 = vunpack.c.h.b16 %v1933
    %v2419 = vunpack.c.l.b16 %v1934
    %v2420 = vunpack.c.h.b16 %v1934
    %v2421 = vunpack.c.l.b16 %v1935
    %v2422 = vunpack.c.h.b16 %v1935
    %v2423 = vunpack.c.l.b16 %v1936
    %v2424 = vunpack.c.h.b16 %v1936
    %v2425 = vunpack.c.l.b16 %v1937
    %v2426 = vunpack.c.h.b16 %v1937
    %v2427 = vunpack.c.l.b16 %v1938
    %v2428 = vunpack.c.h.b16 %v1938
    %v2429 = vunpack.c.l.b16 %v1939
    %v2430 = vunpack.c.h.b16 %v1939
    %v2431 = vunpack.c.l.b16 %v1940
    %v2432 = vunpack.c.h.b16 %v1940
    %v2433 = vunpack.c.l.b16 %v1941
    %v2434 = vunpack.c.h.b16 %v1941
    %v2435 = vunpack.c.l.b16 %v1942
    %v2436 = vunpack.c.h.b16 %v1942
    %v2437 = vunpack.c.l.b16 %v1943
    %v2438 = vunpack.c.h.b16 %v1943
    %v2439 = vunpack.c.l.b16 %v1944
    %v2440 = vunpack.c.h.b16 %v1944
    %v2441 = vunpack.c.l.b16 %v1945
    %v2442 = vunpack.c.h.b16 %v1945
    %v2443 = vunpack.c.l.b16 %v1946
    %v2444 = vunpack.c.h.b16 %v1946
    %v2445 = vunpack.c.l.b16 %v1947
    %v2446 = vunpack.c.h.b16 %v1947
    %v2447 = vunpack.c.l.b16 %v1948
    %v2448 = vunpack.c.h.b16 %v1948
    %v2449 = vunpack.c.l.b16 %v1949
    %v2450 = vunpack.c.h.b16 %v1949
    %v2451 = vunpack.c.l.b16 %v1950
    %v2452 = vunpack.c.h.b16 %v1950
    %v2453 = vunpack.c.l.b16 %v1951
    %v2454 = vunpack.c.h.b16 %v1951
    %v2455 = vunpack.c.l.b16 %v1952
    %v2456 = vunpack.c.h.b16 %v1952
    %v2457 = vunpack.c.l.b16 %v1953
    %v2458 = vunpack.c.h.b16 %v1953
    %v2459 = vunpack.c.l.b16 %v1954
    %v2460 = vunpack.c.h.b16 %v1954
    %v2461 = vunpack.c.l.b16 %v1955
    %v2462 = vunpack.c.h.b16 %v1955
    %v2463 = vunpack.c.l.b16 %v1956
    %v2464 = vunpack.c.h.b16 %v1956
    %v2465 = vunpack.c.l.b16 %v1957
    %v2466 = vunpack.c.h.b16 %v1957
    %v2467 = vunpack.c.l.b16 %v1958
    %v2468 = vunpack.c.h.b16 %v1958
    %v2469 = vunpack.c.l.b16 %v1959
    %v2470 = vunpack.c.h.b16 %v1959
    %v2471 = vunpack.c.l.b16 %v1960
    %v2472 = vunpack.c.h.b16 %v1960
    %v2473 = vunpack.c.l.b16 %v1961
    %v2474 = vunpack.c.h.b16 %v1961
    %v2475 = vunpack.c.l.b16 %v1962
    %v2476 = vunpack.c.h.b16 %v1962
    %v2477 = vunpack.c.l.b16 %v1963
    %v2478 = vunpack.c.h.b16 %v1963
    %v2479 = vunpack.c.l.b16 %v1964
    %v2480 = vunpack.c.h.b16 %v1964
    %v2481 = vunpack.c.l.b16 %v1965
    %v2482 = vunpack.c.h.b16 %v1965
    %v2483 = vunpack.c.l.b16 %v1966
    %v2484 = vunpack.c.h.b16 %v1966
    %v2485 = vunpack.c.l.b16 %v1967
    %v2486 = vunpack.c.h.b16 %v1967
    %v2487 = vunpack.c.l.b16 %v1968
    %v2488 = vunpack.c.h.b16 %v1968
    %v2489 = vunpack.c.l.b16 %v1969
    %v2490 = vunpack.c.h.b16 %v1969
    %v2491 = vunpack.c.l.b16 %v1970
    %v2492 = vunpack.c.h.b16 %v1970
    %v2493 = vunpack.c.l.b16 %v1971
    %v2494 = vunpack.c.h.b16 %v1971
    %v2495 = vunpack.c.l.b16 %v1972
    %v2496 = vunpack.c.h.b16 %v1972
    %v2497 = vunpack.c.l.b16 %v1973
    %v2498 = vunpack.c.h.b16 %v1973
    %v2499 = vpack.c.b16 %v2373, %v2371
    %v2500 = vpack.c.b16 %v2374, %v2372
    %v2501 = vpack.c.b16 %v2377, %v2375
    %v2502 = vpack.c.b16 %v2378, %v2376
    %v2503 = vpack.c.b16 %v2381, %v2379
    %v2504 = vpack.c.b16 %v2382, %v2380
    %v2505 = vpack.c.b16 %v2385, %v2383
    %v2506 = vpack.c.b16 %v2386, %v2384
    %v2507 = vpack.c.b16 %v2389, %v2387
    %v2508 = vpack.c.b16 %v2390, %v2388
    %v2509 = vpack.c.b16 %v2393, %v2391
    %v2510 = vpack.c.b16 %v2394, %v2392
    %v2511 = vpack.c.b16 %v2397, %v2395
    %v2512 = vpack.c.b16 %v2398, %v2396
    %v2513 = vpack.c.b16 %v2401, %v2399
    %v2514 = vpack.c.b16 %v2402, %v2400
    %v2515 = vpack.c.b16 %v2405, %v2403
    %v2516 = vpack.c.b16 %v2406, %v2404
    %v2517 = vpack.c.b16 %v2409, %v2407
    %v2518 = vpack.c.b16 %v2410, %v2408
    %v2519 = vpack.c.b16 %v2413, %v2411
    %v2520 = vpack.c.b16 %v2414, %v2412
    %v2521 = vpack.c.b16 %v2417, %v2415
    %v2522 = vpack.c.b16 %v2418, %v2416
    %v2523 = vpack.c.b16 %v2421, %v2419
    %v2524 = vpack.c.b16 %v2422, %v2420
    %v2525 = vpack.c.b16 %v2425, %v2423
    %v2526 = vpack.c.b16 %v2426, %v2424
    %v2527 = vpack.c.b16 %v2429, %v2427
    %v2528 = vpack.c.b16 %v2430, %v2428
    %v2529 = vpack.c.b16 %v2433, %v2431
    %v2530 = vpack.c.b16 %v2434, %v2432
    %v2531 = vpack.c.b16 %v2437, %v2435
    %v2532 = vpack.c.b16 %v2438, %v2436
    %v2533 = vpack.c.b16 %v2441, %v2439
    %v2534 = vpack.c.b16 %v2442, %v2440
    %v2535 = vpack.c.b16 %v2445, %v2443
    %v2536 = vpack.c.b16 %v2446, %v2444
    %v2537 = vpack.c.b16 %v2449, %v2447
    %v2538 = vpack.c.b16 %v2450, %v2448
    %v2539 = vpack.c.b16 %v2453, %v2451
    %v2540 = vpack.c.b16 %v2454, %v2452
    %v2541 = vpack.c.b16 %v2457, %v2455
    %v2542 = vpack.c.b16 %v2458, %v2456
    %v2543 = vpack.c.b16 %v2461, %v2459
    %v2544 = vpack.c.b16 %v2462, %v2460
    %v2545 = vpack.c.b16 %v2465, %v2463
    %v2546 = vpack.c.b16 %v2466, %v2464
    %v2547 = vpack.c.b16 %v2469, %v2467
    %v2548 = vpack.c.b16 %v2470, %v2468
    %v2549 = vpack.c.b16 %v2473, %v2471
    %v2550 = vpack.c.b16 %v2474, %v2472
    %v2551 = vpack.c.b16 %v2477, %v2475
    %v2552 = vpack.c.b16 %v2478, %v2476
    %v2553 = vpack.c.b16 %v2481, %v2479
    %v2554 = vpack.c.b16 %v2482, %v2480
    %v2555 = vpack.c.b16 %v2485, %v2483
    %v2556 = vpack.c.b16 %v2486, %v2484
    %v2557 = vpack.c.b16 %v2489, %v2487
    %v2558 = vpack.c.b16 %v2490, %v2488
    %v2559 = vpack.c.b16 %v2493, %v2491
    %v2560 = vpack.c.b16 %v2494, %v2492
    %v2561 = vpack.c.b16 %v2497, %v2495
    %v2562 = vpack.c.b16 %v2498, %v2496
    %2627 = vmatprep.subr.bf16.mxu0 %v2514
    %2628 = vmatpush1.bf16.msra.mxu0 %v2513
    %2629 = vmatprep.subr.bf16.mxu0 %v2512
    %2630 = vmatpush1.bf16.msra.mxu0 %v2511
    %2631 = vmatprep.subr.bf16.mxu0 %v2510
    %2632 = vmatpush1.bf16.msra.mxu0 %v2509
    %2633 = vmatprep.subr.bf16.mxu0 %v2508
    %2634 = vmatpush1.bf16.msra.mxu0 %v2507
    %2635 = vmatprep.subr.bf16.mxu0 %v2506
    %2636 = vmatpush1.bf16.msra.mxu0 %v2505
    %2637 = vmatprep.subr.bf16.mxu0 %v2504
    %2638 = vmatpush1.bf16.msra.mxu0 %v2503
    %2639 = vmatprep.subr.bf16.mxu0 %v2502
    %2640 = vmatpush1.bf16.msra.mxu0 %v2501
    %2641 = vmatprep.subr.bf16.mxu0 %v2500
    %2642 = vmatpush1.bf16.msra.mxu0 %v2499
    %2643 = vmatprep.subr.bf16.mxu0 %v2530
    %2644 = vmatpush2.bf16.msra.mxu0 %v2529
    %2645 = vmatprep.subr.bf16.mxu0 %v2528
    %2646 = vmatpush2.bf16.msra.mxu0 %v2527
    %2647 = vmatprep.subr.bf16.mxu0 %v2526
    %2648 = vmatpush2.bf16.msra.mxu0 %v2525
    %2649 = vmatprep.subr.bf16.mxu0 %v2524
    %2650 = vmatpush2.bf16.msra.mxu0 %v2523
    %2651 = vmatprep.subr.bf16.mxu0 %v2522
    %2652 = vmatpush2.bf16.msra.mxu0 %v2521
    %2653 = vmatprep.subr.bf16.mxu0 %v2520
    %2654 = vmatpush2.bf16.msra.mxu0 %v2519
    %2655 = vmatprep.subr.bf16.mxu0 %v2518
    %2656 = vmatpush2.bf16.msra.mxu0 %v2517
    %2657 = vmatprep.subr.bf16.mxu0 %v2516
    %2658 = vmatpush2.bf16.msra.mxu0 %v2515
    %2659 = vmatprep.mubr.bf16.mxu0 %v2180
    %2660 = vmatmul.mubr.bf16.gmra.mxu0 %v2179
    %v2661 = vpop.f32.mrf.mxu0
    %v2662 = vadd.f32 %v1980, %v2661
    %v2663 = vpop.f32.mrf.mxu0
    %v2664 = vadd.f32 %v1984, %v2663
    %v2665 = vpop.f32.mrf.mxu0
    %v2666 = vadd.f32 %v1980, %v2665
    %v2667 = vpop.f32.mrf.mxu0
    %v2668 = vadd.f32 %v1984, %v2667
    %2669 = vmatprep.mubr.bf16.mxu0 %v2184
    %2670 = vmatmul.mubr.bf16.gmra.mxu0 %v2183
    %v2671 = vpop.f32.mrf.mxu0
    %v2672 = vadd.f32 %v1980, %v2671
    %v2673 = vpop.f32.mrf.mxu0
    %v2674 = vadd.f32 %v1984, %v2673
    %v2675 = vpop.f32.mrf.mxu0
    %v2676 = vadd.f32 %v1980, %v2675
    %v2677 = vpop.f32.mrf.mxu0
    %v2678 = vadd.f32 %v1984, %v2677
    %2679 = vmatprep.mubr.bf16.mxu0 %v2188
    %2680 = vmatmul.mubr.bf16.gmra.mxu0 %v2187
    %v2681 = vpop.f32.mrf.mxu0
    %v2682 = vadd.f32 %v1980, %v2681
    %v2683 = vpop.f32.mrf.mxu0
    %v2684 = vadd.f32 %v1984, %v2683
    %v2685 = vpop.f32.mrf.mxu0
    %v2686 = vadd.f32 %v1980, %v2685
    %v2687 = vpop.f32.mrf.mxu0
    %v2688 = vadd.f32 %v1984, %v2687
    %2689 = vmatprep.mubr.bf16.mxu0 %v2192
    %2690 = vmatmul.mubr.bf16.gmra.mxu0 %v2191
    %v2691 = vpop.f32.mrf.mxu0
    %v2692 = vadd.f32 %v1980, %v2691
    %v2693 = vpop.f32.mrf.mxu0
    %v2694 = vadd.f32 %v1984, %v2693
    %v2695 = vpop.f32.mrf.mxu0
    %v2696 = vadd.f32 %v1980, %v2695
    %v2697 = vpop.f32.mrf.mxu0
    %v2698 = vadd.f32 %v1984, %v2697
    %2699 = vmatprep.mubr.bf16.mxu0 %v2196
    %2700 = vmatmul.mubr.bf16.gmra.mxu0 %v2195
    %v2701 = vpop.f32.mrf.mxu0
    %v2702 = vadd.f32 %v1980, %v2701
    %v2703 = vpop.f32.mrf.mxu0
    %v2704 = vadd.f32 %v1984, %v2703
    %v2705 = vpop.f32.mrf.mxu0
    %v2706 = vadd.f32 %v1980, %v2705
    %v2707 = vpop.f32.mrf.mxu0
    %v2708 = vadd.f32 %v1984, %v2707
    %2709 = vmatprep.mubr.bf16.mxu0 %v2200
    %2710 = vmatmul.mubr.bf16.gmra.mxu0 %v2199
    %v2711 = vpop.f32.mrf.mxu0
    %v2712 = vadd.f32 %v1980, %v2711
    %v2713 = vpop.f32.mrf.mxu0
    %v2714 = vadd.f32 %v1984, %v2713
    %v2715 = vpop.f32.mrf.mxu0
    %v2716 = vadd.f32 %v1980, %v2715
    %v2717 = vpop.f32.mrf.mxu0
    %v2718 = vadd.f32 %v1984, %v2717
    %2719 = vmatprep.mubr.bf16.mxu0 %v2204
    %2720 = vmatmul.mubr.bf16.gmra.mxu0 %v2203
    %v2721 = vpop.f32.mrf.mxu0
    %v2722 = vadd.f32 %v1980, %v2721
    %v2723 = vpop.f32.mrf.mxu0
    %v2724 = vadd.f32 %v1984, %v2723
    %v2725 = vpop.f32.mrf.mxu0
    %v2726 = vadd.f32 %v1980, %v2725
    %v2727 = vpop.f32.mrf.mxu0
    %v2728 = vadd.f32 %v1984, %v2727
    %2729 = vmatprep.mubr.bf16.mxu0 %v2208
    %2730 = vmatmul.mubr.bf16.gmra.mxu0 %v2207
    %v2731 = vpop.f32.mrf.mxu0
    %v2732 = vadd.f32 %v1980, %v2731
    %v2733 = vpop.f32.mrf.mxu0
    %v2734 = vadd.f32 %v1984, %v2733
    %v2735 = vpop.f32.mrf.mxu0
    %v2736 = vadd.f32 %v1980, %v2735
    %v2737 = vpop.f32.mrf.mxu0
    %v2738 = vadd.f32 %v1984, %v2737
    %2739 = vmatprep.mubr.bf16.mxu0 %v2212
    %2740 = vmatmul.mubr.bf16.gmra.mxu0 %v2211
    %v2741 = vpop.f32.mrf.mxu0
    %v2742 = vadd.f32 %v1980, %v2741
    %v2743 = vpop.f32.mrf.mxu0
    %v2744 = vadd.f32 %v1984, %v2743
    %v2745 = vpop.f32.mrf.mxu0
    %v2746 = vadd.f32 %v1980, %v2745
    %v2747 = vpop.f32.mrf.mxu0
    %v2748 = vadd.f32 %v1984, %v2747
    %2749 = vmatprep.mubr.bf16.mxu0 %v2216
    %2750 = vmatmul.mubr.bf16.gmra.mxu0 %v2215
    %v2751 = vpop.f32.mrf.mxu0
    %v2752 = vadd.f32 %v1980, %v2751
    %v2753 = vpop.f32.mrf.mxu0
    %v2754 = vadd.f32 %v1984, %v2753
    %v2755 = vpop.f32.mrf.mxu0
    %v2756 = vadd.f32 %v1980, %v2755
    %v2757 = vpop.f32.mrf.mxu0
    %v2758 = vadd.f32 %v1984, %v2757
    %2759 = vmatprep.mubr.bf16.mxu0 %v2220
    %2760 = vmatmul.mubr.bf16.gmra.mxu0 %v2219
    %v2761 = vpop.f32.mrf.mxu0
    %v2762 = vadd.f32 %v1980, %v2761
    %v2763 = vpop.f32.mrf.mxu0
    %v2764 = vadd.f32 %v1984, %v2763
    %v2765 = vpop.f32.mrf.mxu0
    %v2766 = vadd.f32 %v1980, %v2765
    %v2767 = vpop.f32.mrf.mxu0
    %v2768 = vadd.f32 %v1984, %v2767
    %2769 = vmatprep.mubr.bf16.mxu0 %v2224
    %2770 = vmatmul.mubr.bf16.gmra.mxu0 %v2223
    %v2771 = vpop.f32.mrf.mxu0
    %v2772 = vadd.f32 %v1980, %v2771
    %v2773 = vpop.f32.mrf.mxu0
    %v2774 = vadd.f32 %v1984, %v2773
    %v2775 = vpop.f32.mrf.mxu0
    %v2776 = vadd.f32 %v1980, %v2775
    %v2777 = vpop.f32.mrf.mxu0
    %v2778 = vadd.f32 %v1984, %v2777
    %2779 = vmatprep.mubr.bf16.mxu0 %v2228
    %2780 = vmatmul.mubr.bf16.gmra.mxu0 %v2227
    %v2781 = vpop.f32.mrf.mxu0
    %v2782 = vadd.f32 %v1980, %v2781
    %v2783 = vpop.f32.mrf.mxu0
    %v2784 = vadd.f32 %v1984, %v2783
    %v2785 = vpop.f32.mrf.mxu0
    %v2786 = vadd.f32 %v1980, %v2785
    %v2787 = vpop.f32.mrf.mxu0
    %v2788 = vadd.f32 %v1984, %v2787
    %2789 = vmatprep.mubr.bf16.mxu0 %v2232
    %2790 = vmatmul.mubr.bf16.gmra.mxu0 %v2231
    %v2791 = vpop.f32.mrf.mxu0
    %v2792 = vadd.f32 %v1980, %v2791
    %v2793 = vpop.f32.mrf.mxu0
    %v2794 = vadd.f32 %v1984, %v2793
    %v2795 = vpop.f32.mrf.mxu0
    %v2796 = vadd.f32 %v1980, %v2795
    %v2797 = vpop.f32.mrf.mxu0
    %v2798 = vadd.f32 %v1984, %v2797
    %2799 = vmatprep.mubr.bf16.mxu0 %v2236
    %2800 = vmatmul.mubr.bf16.gmra.mxu0 %v2235
    %v2801 = vpop.f32.mrf.mxu0
    %v2802 = vadd.f32 %v1980, %v2801
    %v2803 = vpop.f32.mrf.mxu0
    %v2804 = vadd.f32 %v1984, %v2803
    %v2805 = vpop.f32.mrf.mxu0
    %v2806 = vadd.f32 %v1980, %v2805
    %v2807 = vpop.f32.mrf.mxu0
    %v2808 = vadd.f32 %v1984, %v2807
    %2809 = vmatprep.mubr.bf16.mxu0 %v2240
    %2810 = vmatmul.mubr.bf16.gmra.mxu0 %v2239
    %v2811 = vpop.f32.mrf.mxu0
    %v2812 = vadd.f32 %v1980, %v2811
    %v2813 = vpop.f32.mrf.mxu0
    %v2814 = vadd.f32 %v1984, %v2813
    %v2815 = vpop.f32.mrf.mxu0
    %v2816 = vadd.f32 %v1980, %v2815
    %v2817 = vpop.f32.mrf.mxu0
    %v2818 = vadd.f32 %v1984, %v2817
    %2819 = vdwg.mxu0
    %2820 = vmatprep.subr.bf16.mxu0 %v2546
    %2821 = vmatpush1.bf16.msra.mxu0 %v2545
    %2822 = vmatprep.subr.bf16.mxu0 %v2544
    %2823 = vmatpush1.bf16.msra.mxu0 %v2543
    %2824 = vmatprep.subr.bf16.mxu0 %v2542
    %2825 = vmatpush1.bf16.msra.mxu0 %v2541
    %2826 = vmatprep.subr.bf16.mxu0 %v2540
    %2827 = vmatpush1.bf16.msra.mxu0 %v2539
    %2828 = vmatprep.subr.bf16.mxu0 %v2538
    %2829 = vmatpush1.bf16.msra.mxu0 %v2537
    %2830 = vmatprep.subr.bf16.mxu0 %v2536
    %2831 = vmatpush1.bf16.msra.mxu0 %v2535
    %2832 = vmatprep.subr.bf16.mxu0 %v2534
    %2833 = vmatpush1.bf16.msra.mxu0 %v2533
    %2834 = vmatprep.subr.bf16.mxu0 %v2532
    %2835 = vmatpush1.bf16.msra.mxu0 %v2531
    %2836 = vmatprep.subr.bf16.mxu0 %v2562
    %2837 = vmatpush2.bf16.msra.mxu0 %v2561
    %2838 = vmatprep.subr.bf16.mxu0 %v2560
    %2839 = vmatpush2.bf16.msra.mxu0 %v2559
    %2840 = vmatprep.subr.bf16.mxu0 %v2558
    %2841 = vmatpush2.bf16.msra.mxu0 %v2557
    %2842 = vmatprep.subr.bf16.mxu0 %v2556
    %2843 = vmatpush2.bf16.msra.mxu0 %v2555
    %2844 = vmatprep.subr.bf16.mxu0 %v2554
    %2845 = vmatpush2.bf16.msra.mxu0 %v2553
    %2846 = vmatprep.subr.bf16.mxu0 %v2552
    %2847 = vmatpush2.bf16.msra.mxu0 %v2551
    %2848 = vmatprep.subr.bf16.mxu0 %v2550
    %2849 = vmatpush2.bf16.msra.mxu0 %v2549
    %2850 = vmatprep.subr.bf16.mxu0 %v2548
    %2851 = vmatpush2.bf16.msra.mxu0 %v2547
    %2852 = vmatprep.mubr.bf16.mxu0 %v2182
    %2853 = vmatmul.mubr.bf16.gmra.mxu0 %v2181
    %v2854 = vpop.f32.mrf.mxu0
    %v2855 = vadd.f32 %v2662, %v2854
    %v2856 = vpop.f32.mrf.mxu0
    %v2857 = vadd.f32 %v2664, %v2856
    %v2858 = vpop.f32.mrf.mxu0
    %v2859 = vadd.f32 %v2666, %v2858
    %v2860 = vpop.f32.mrf.mxu0
    %v2861 = vadd.f32 %v2668, %v2860
    %2862 = vmatprep.mubr.bf16.mxu0 %v2186
    %2863 = vmatmul.mubr.bf16.gmra.mxu0 %v2185
    %v2864 = vpop.f32.mrf.mxu0
    %v2865 = vadd.f32 %v2672, %v2864
    %v2866 = vpop.f32.mrf.mxu0
    %v2867 = vadd.f32 %v2674, %v2866
    %v2868 = vpop.f32.mrf.mxu0
    %v2869 = vadd.f32 %v2676, %v2868
    %v2870 = vpop.f32.mrf.mxu0
    %v2871 = vadd.f32 %v2678, %v2870
    %2872 = vmatprep.mubr.bf16.mxu0 %v2190
    %2873 = vmatmul.mubr.bf16.gmra.mxu0 %v2189
    %v2874 = vpop.f32.mrf.mxu0
    %v2875 = vadd.f32 %v2682, %v2874
    %v2876 = vpop.f32.mrf.mxu0
    %v2877 = vadd.f32 %v2684, %v2876
    %v2878 = vpop.f32.mrf.mxu0
    %v2879 = vadd.f32 %v2686, %v2878
    %v2880 = vpop.f32.mrf.mxu0
    %v2881 = vadd.f32 %v2688, %v2880
    %2882 = vmatprep.mubr.bf16.mxu0 %v2194
    %2883 = vmatmul.mubr.bf16.gmra.mxu0 %v2193
    %v2884 = vpop.f32.mrf.mxu0
    %v2885 = vadd.f32 %v2692, %v2884
    %v2886 = vpop.f32.mrf.mxu0
    %v2887 = vadd.f32 %v2694, %v2886
    %v2888 = vpop.f32.mrf.mxu0
    %v2889 = vadd.f32 %v2696, %v2888
    %v2890 = vpop.f32.mrf.mxu0
    %v2891 = vadd.f32 %v2698, %v2890
    %2892 = vmatprep.mubr.bf16.mxu0 %v2198
    %2893 = vmatmul.mubr.bf16.gmra.mxu0 %v2197
    %v2894 = vpop.f32.mrf.mxu0
    %v2895 = vadd.f32 %v2702, %v2894
    %v2896 = vpop.f32.mrf.mxu0
    %v2897 = vadd.f32 %v2704, %v2896
    %v2898 = vpop.f32.mrf.mxu0
    %v2899 = vadd.f32 %v2706, %v2898
    %v2900 = vpop.f32.mrf.mxu0
    %v2901 = vadd.f32 %v2708, %v2900
    %2902 = vmatprep.mubr.bf16.mxu0 %v2202
    %2903 = vmatmul.mubr.bf16.gmra.mxu0 %v2201
    %v2904 = vpop.f32.mrf.mxu0
    %v2905 = vadd.f32 %v2712, %v2904
    %v2906 = vpop.f32.mrf.mxu0
    %v2907 = vadd.f32 %v2714, %v2906
    %v2908 = vpop.f32.mrf.mxu0
    %v2909 = vadd.f32 %v2716, %v2908
    %v2910 = vpop.f32.mrf.mxu0
    %v2911 = vadd.f32 %v2718, %v2910
    %2912 = vmatprep.mubr.bf16.mxu0 %v2206
    %2913 = vmatmul.mubr.bf16.gmra.mxu0 %v2205
    %v2914 = vpop.f32.mrf.mxu0
    %v2915 = vadd.f32 %v2722, %v2914
    %v2916 = vpop.f32.mrf.mxu0
    %v2917 = vadd.f32 %v2724, %v2916
    %v2918 = vpop.f32.mrf.mxu0
    %v2919 = vadd.f32 %v2726, %v2918
    %v2920 = vpop.f32.mrf.mxu0
    %v2921 = vadd.f32 %v2728, %v2920
    %2922 = vmatprep.mubr.bf16.mxu0 %v2210
    %2923 = vmatmul.mubr.bf16.gmra.mxu0 %v2209
    %v2924 = vpop.f32.mrf.mxu0
    %v2925 = vadd.f32 %v2732, %v2924
    %v2926 = vpop.f32.mrf.mxu0
    %v2927 = vadd.f32 %v2734, %v2926
    %v2928 = vpop.f32.mrf.mxu0
    %v2929 = vadd.f32 %v2736, %v2928
    %v2930 = vpop.f32.mrf.mxu0
    %v2931 = vadd.f32 %v2738, %v2930
    %2932 = vmatprep.mubr.bf16.mxu0 %v2214
    %2933 = vmatmul.mubr.bf16.gmra.mxu0 %v2213
    %v2934 = vpop.f32.mrf.mxu0
    %v2935 = vadd.f32 %v2742, %v2934
    %v2936 = vpop.f32.mrf.mxu0
    %v2937 = vadd.f32 %v2744, %v2936
    %v2938 = vpop.f32.mrf.mxu0
    %v2939 = vadd.f32 %v2746, %v2938
    %v2940 = vpop.f32.mrf.mxu0
    %v2941 = vadd.f32 %v2748, %v2940
    %2942 = vmatprep.mubr.bf16.mxu0 %v2218
    %2943 = vmatmul.mubr.bf16.gmra.mxu0 %v2217
    %v2944 = vpop.f32.mrf.mxu0
    %v2945 = vadd.f32 %v2752, %v2944
    %v2946 = vpop.f32.mrf.mxu0
    %v2947 = vadd.f32 %v2754, %v2946
    %v2948 = vpop.f32.mrf.mxu0
    %v2949 = vadd.f32 %v2756, %v2948
    %v2950 = vpop.f32.mrf.mxu0
    %v2951 = vadd.f32 %v2758, %v2950
    %2952 = vmatprep.mubr.bf16.mxu0 %v2222
    %2953 = vmatmul.mubr.bf16.gmra.mxu0 %v2221
    %v2954 = vpop.f32.mrf.mxu0
    %v2955 = vadd.f32 %v2762, %v2954
    %v2956 = vpop.f32.mrf.mxu0
    %v2957 = vadd.f32 %v2764, %v2956
    %v2958 = vpop.f32.mrf.mxu0
    %v2959 = vadd.f32 %v2766, %v2958
    %v2960 = vpop.f32.mrf.mxu0
    %v2961 = vadd.f32 %v2768, %v2960
    %2962 = vmatprep.mubr.bf16.mxu0 %v2226
    %2963 = vmatmul.mubr.bf16.gmra.mxu0 %v2225
    %v2964 = vpop.f32.mrf.mxu0
    %v2965 = vadd.f32 %v2772, %v2964
    %v2966 = vpop.f32.mrf.mxu0
    %v2967 = vadd.f32 %v2774, %v2966
    %v2968 = vpop.f32.mrf.mxu0
    %v2969 = vadd.f32 %v2776, %v2968
    %v2970 = vpop.f32.mrf.mxu0
    %v2971 = vadd.f32 %v2778, %v2970
    %2972 = vmatprep.mubr.bf16.mxu0 %v2230
    %2973 = vmatmul.mubr.bf16.gmra.mxu0 %v2229
    %v2974 = vpop.f32.mrf.mxu0
    %v2975 = vadd.f32 %v2782, %v2974
    %v2976 = vpop.f32.mrf.mxu0
    %v2977 = vadd.f32 %v2784, %v2976
    %v2978 = vpop.f32.mrf.mxu0
    %v2979 = vadd.f32 %v2786, %v2978
    %v2980 = vpop.f32.mrf.mxu0
    %v2981 = vadd.f32 %v2788, %v2980
    %2982 = vmatprep.mubr.bf16.mxu0 %v2234
    %2983 = vmatmul.mubr.bf16.gmra.mxu0 %v2233
    %v2984 = vpop.f32.mrf.mxu0
    %v2985 = vadd.f32 %v2792, %v2984
    %v2986 = vpop.f32.mrf.mxu0
    %v2987 = vadd.f32 %v2794, %v2986
    %v2988 = vpop.f32.mrf.mxu0
    %v2989 = vadd.f32 %v2796, %v2988
    %v2990 = vpop.f32.mrf.mxu0
    %v2991 = vadd.f32 %v2798, %v2990
    %2992 = vmatprep.mubr.bf16.mxu0 %v2238
    %2993 = vmatmul.mubr.bf16.gmra.mxu0 %v2237
    %v2994 = vpop.f32.mrf.mxu0
    %v2995 = vadd.f32 %v2802, %v2994
    %v2996 = vpop.f32.mrf.mxu0
    %v2997 = vadd.f32 %v2804, %v2996
    %v2998 = vpop.f32.mrf.mxu0
    %v2999 = vadd.f32 %v2806, %v2998
    %v3000 = vpop.f32.mrf.mxu0
    %v3001 = vadd.f32 %v2808, %v3000
    %3002 = vmatprep.mubr.bf16.mxu0 %v2242
    %3003 = vmatmul.mubr.bf16.gmra.mxu0 %v2241
    %v3004 = vpop.f32.mrf.mxu0
    %v3005 = vadd.f32 %v2812, %v3004
    %v3006 = vpop.f32.mrf.mxu0
    %v3007 = vadd.f32 %v2814, %v3006
    %v3008 = vpop.f32.mrf.mxu0
    %v3009 = vadd.f32 %v2816, %v3008
    %v3010 = vpop.f32.mrf.mxu0
    %v3011 = vadd.f32 %v2818, %v3010
    %3012 = vdwg.mxu0
    %v3013 = vmul.f32 %v2855, 0.2
    %v3014 = vmul.f32 %v2857, 0.2
    %v3015 = vmul.f32 %v2859, 0.2
    %v3016 = vmul.f32 %v2861, 0.2
    %v3017 = vmul.f32 %v2865, 0.2
    %v3018 = vmul.f32 %v2867, 0.2
    %v3019 = vmul.f32 %v2869, 0.2
    %v3020 = vmul.f32 %v2871, 0.2
    %v3021 = vmul.f32 %v2875, 0.2
    %v3022 = vmul.f32 %v2877, 0.2
    %v3023 = vmul.f32 %v2879, 0.2
    %v3024 = vmul.f32 %v2881, 0.2
    %v3025 = vmul.f32 %v2885, 0.2
    %v3026 = vmul.f32 %v2887, 0.2
    %v3027 = vmul.f32 %v2889, 0.2
    %v3028 = vmul.f32 %v2891, 0.2
    %v3029 = vmul.f32 %v2895, 0.2
    %v3030 = vmul.f32 %v2897, 0.2
    %v3031 = vmul.f32 %v2899, 0.2
    %v3032 = vmul.f32 %v2901, 0.2
    %v3033 = vmul.f32 %v2905, 0.2
    %v3034 = vmul.f32 %v2907, 0.2
    %v3035 = vmul.f32 %v2909, 0.2
    %v3036 = vmul.f32 %v2911, 0.2
    %v3037 = vmul.f32 %v2915, 0.2
    %v3038 = vmul.f32 %v2917, 0.2
    %v3039 = vmul.f32 %v2919, 0.2
    %v3040 = vmul.f32 %v2921, 0.2
    %v3041 = vmul.f32 %v2925, 0.2
    %v3042 = vmul.f32 %v2927, 0.2
    %v3043 = vmul.f32 %v2929, 0.2
    %v3044 = vmul.f32 %v2931, 0.2
    %v3045 = vmul.f32 %v2935, 0.2
    %v3046 = vmul.f32 %v2937, 0.2
    %v3047 = vmul.f32 %v2939, 0.2
    %v3048 = vmul.f32 %v2941, 0.2
    %v3049 = vmul.f32 %v2945, 0.2
    %v3050 = vmul.f32 %v2947, 0.2
    %v3051 = vmul.f32 %v2949, 0.2
    %v3052 = vmul.f32 %v2951, 0.2
    %v3053 = vmul.f32 %v2955, 0.2
    %v3054 = vmul.f32 %v2957, 0.2
    %v3055 = vmul.f32 %v2959, 0.2
    %v3056 = vmul.f32 %v2961, 0.2
    %v3057 = vmul.f32 %v2965, 0.2
    %v3058 = vmul.f32 %v2967, 0.2
    %v3059 = vmul.f32 %v2969, 0.2
    %v3060 = vmul.f32 %v2971, 0.2
    %v3061 = vmul.f32 %v2975, 0.2
    %v3062 = vmul.f32 %v2977, 0.2
    %v3063 = vmul.f32 %v2979, 0.2
    %v3064 = vmul.f32 %v2981, 0.2
    %v3065 = vmul.f32 %v2985, 0.2
    %v3066 = vmul.f32 %v2987, 0.2
    %v3067 = vmul.f32 %v2989, 0.2
    %v3068 = vmul.f32 %v2991, 0.2
    %v3069 = vmul.f32 %v2995, 0.2
    %v3070 = vmul.f32 %v2997, 0.2
    %v3071 = vmul.f32 %v2999, 0.2
    %v3072 = vmul.f32 %v3001, 0.2
    %v3073 = vmul.f32 %v3005, 0.2
    %v3074 = vmul.f32 %v3007, 0.2
    %v3075 = vmul.f32 %v3009, 0.2
    %v3076 = vmul.f32 %v3011, 0.2
    %v3077 = vmax.f32 %v2855, %v3013
    %v3078 = vmax.f32 %v2857, %v3014
    %v3079 = vmax.f32 %v2859, %v3015
    %v3080 = vmax.f32 %v2861, %v3016
    %v3081 = vmax.f32 %v2865, %v3017
    %v3082 = vmax.f32 %v2867, %v3018
    %v3083 = vmax.f32 %v2869, %v3019
    %v3084 = vmax.f32 %v2871, %v3020
    %v3085 = vmax.f32 %v2875, %v3021
    %v3086 = vmax.f32 %v2877, %v3022
    %v3087 = vmax.f32 %v2879, %v3023
    %v3088 = vmax.f32 %v2881, %v3024
    %v3089 = vmax.f32 %v2885, %v3025
    %v3090 = vmax.f32 %v2887, %v3026
    %v3091 = vmax.f32 %v2889, %v3027
    %v3092 = vmax.f32 %v2891, %v3028
    %v3093 = vmax.f32 %v2895, %v3029
    %v3094 = vmax.f32 %v2897, %v3030
    %v3095 = vmax.f32 %v2899, %v3031
    %v3096 = vmax.f32 %v2901, %v3032
    %v3097 = vmax.f32 %v2905, %v3033
    %v3098 = vmax.f32 %v2907, %v3034
    %v3099 = vmax.f32 %v2909, %v3035
    %v3100 = vmax.f32 %v2911, %v3036
    %v3101 = vmax.f32 %v2915, %v3037
    %v3102 = vmax.f32 %v2917, %v3038
    %v3103 = vmax.f32 %v2919, %v3039
    %v3104 = vmax.f32 %v2921, %v3040
    %v3105 = vmax.f32 %v2925, %v3041
    %v3106 = vmax.f32 %v2927, %v3042
    %v3107 = vmax.f32 %v2929, %v3043
    %v3108 = vmax.f32 %v2931, %v3044
    %v3109 = vmax.f32 %v2935, %v3045
    %v3110 = vmax.f32 %v2937, %v3046
    %v3111 = vmax.f32 %v2939, %v3047
    %v3112 = vmax.f32 %v2941, %v3048
    %v3113 = vmax.f32 %v2945, %v3049
    %v3114 = vmax.f32 %v2947, %v3050
    %v3115 = vmax.f32 %v2949, %v3051
    %v3116 = vmax.f32 %v2951, %v3052
    %v3117 = vmax.f32 %v2955, %v3053
    %v3118 = vmax.f32 %v2957, %v3054
    %v3119 = vmax.f32 %v2959, %v3055
    %v3120 = vmax.f32 %v2961, %v3056
    %v3121 = vmax.f32 %v2965, %v3057
    %v3122 = vmax.f32 %v2967, %v3058
    %v3123 = vmax.f32 %v2969, %v3059
    %v3124 = vmax.f32 %v2971, %v3060
    %v3125 = vmax.f32 %v2975, %v3061
    %v3126 = vmax.f32 %v2977, %v3062
    %v3127 = vmax.f32 %v2979, %v3063
    %v3128 = vmax.f32 %v2981, %v3064
    %v3129 = vmax.f32 %v2985, %v3065
    %v3130 = vmax.f32 %v2987, %v3066
    %v3131 = vmax.f32 %v2989, %v3067
    %v3132 = vmax.f32 %v2991, %v3068
    %v3133 = vmax.f32 %v2995, %v3069
    %v3134 = vmax.f32 %v2997, %v3070
    %v3135 = vmax.f32 %v2999, %v3071
    %v3136 = vmax.f32 %v3001, %v3072
    %v3137 = vmax.f32 %v3005, %v3073
    %v3138 = vmax.f32 %v3007, %v3074
    %v3139 = vmax.f32 %v3009, %v3075
    %v3140 = vmax.f32 %v3011, %v3076
    %v3141 = vld [vmem:[%s7 + $0x4] sm:$0x3]
    %v3143 = vlaneseq
    %v3144 = vshrl.u32 %v3143, 7
    %v3145 = vsub.s32 0, %v3144
    %v3146 = vrot.slane %v3141, %v3145
    %v3147 = vlaneseq
    %v3148 = vshrl.u32 %v3147, 7
    %v3149 = vsub.s32 1, %v3148
    %v3150 = vrot.slane %v3141, %v3149
    %v3153 = vmul.f32 %v3077, %v3146
    %v3154 = vmul.f32 %v3078, %v3150
    %v3155 = vmul.f32 %v3079, %v3146
    %v3156 = vmul.f32 %v3080, %v3150
    %v3157 = vmul.f32 %v3081, %v3146
    %v3158 = vmul.f32 %v3082, %v3150
    %v3159 = vmul.f32 %v3083, %v3146
    %v3160 = vmul.f32 %v3084, %v3150
    %v3161 = vmul.f32 %v3085, %v3146
    %v3162 = vmul.f32 %v3086, %v3150
    %v3163 = vmul.f32 %v3087, %v3146
    %v3164 = vmul.f32 %v3088, %v3150
    %v3165 = vmul.f32 %v3089, %v3146
    %v3166 = vmul.f32 %v3090, %v3150
    %v3167 = vmul.f32 %v3091, %v3146
    %v3168 = vmul.f32 %v3092, %v3150
    %v3169 = vmul.f32 %v3093, %v3146
    %v3170 = vmul.f32 %v3094, %v3150
    %v3171 = vmul.f32 %v3095, %v3146
    %v3172 = vmul.f32 %v3096, %v3150
    %v3173 = vmul.f32 %v3097, %v3146
    %v3174 = vmul.f32 %v3098, %v3150
    %v3175 = vmul.f32 %v3099, %v3146
    %v3176 = vmul.f32 %v3100, %v3150
    %v3177 = vmul.f32 %v3101, %v3146
    %v3178 = vmul.f32 %v3102, %v3150
    %v3179 = vmul.f32 %v3103, %v3146
    %v3180 = vmul.f32 %v3104, %v3150
    %v3181 = vmul.f32 %v3105, %v3146
    %v3182 = vmul.f32 %v3106, %v3150
    %v3183 = vmul.f32 %v3107, %v3146
    %v3184 = vmul.f32 %v3108, %v3150
    %v3185 = vmul.f32 %v3109, %v3146
    %v3186 = vmul.f32 %v3110, %v3150
    %v3187 = vmul.f32 %v3111, %v3146
    %v3188 = vmul.f32 %v3112, %v3150
    %v3189 = vmul.f32 %v3113, %v3146
    %v3190 = vmul.f32 %v3114, %v3150
    %v3191 = vmul.f32 %v3115, %v3146
    %v3192 = vmul.f32 %v3116, %v3150
    %v3193 = vmul.f32 %v3117, %v3146
    %v3194 = vmul.f32 %v3118, %v3150
    %v3195 = vmul.f32 %v3119, %v3146
    %v3196 = vmul.f32 %v3120, %v3150
    %v3197 = vmul.f32 %v3121, %v3146
    %v3198 = vmul.f32 %v3122, %v3150
    %v3199 = vmul.f32 %v3123, %v3146
    %v3200 = vmul.f32 %v3124, %v3150
    %v3201 = vmul.f32 %v3125, %v3146
    %v3202 = vmul.f32 %v3126, %v3150
    %v3203 = vmul.f32 %v3127, %v3146
    %v3204 = vmul.f32 %v3128, %v3150
    %v3205 = vmul.f32 %v3129, %v3146
    %v3206 = vmul.f32 %v3130, %v3150
    %v3207 = vmul.f32 %v3131, %v3146
    %v3208 = vmul.f32 %v3132, %v3150
    %v3209 = vmul.f32 %v3133, %v3146
    %v3210 = vmul.f32 %v3134, %v3150
    %v3211 = vmul.f32 %v3135, %v3146
    %v3212 = vmul.f32 %v3136, %v3150
    %v3213 = vmul.f32 %v3137, %v3146
    %v3214 = vmul.f32 %v3138, %v3150
    %v3215 = vmul.f32 %v3139, %v3146
    %v3216 = vmul.f32 %v3140, %v3150
    %v3217 = vadd.f32 %v1558, %v3153
    %v3218 = vadd.f32 %v1559, %v3154
    %v3219 = vadd.f32 %v1560, %v3155
    %v3220 = vadd.f32 %v1561, %v3156
    %v3221 = vadd.f32 %v1562, %v3157
    %v3222 = vadd.f32 %v1563, %v3158
    %v3223 = vadd.f32 %v1564, %v3159
    %v3224 = vadd.f32 %v1565, %v3160
    %v3225 = vadd.f32 %v1566, %v3161
    %v3226 = vadd.f32 %v1567, %v3162
    %v3227 = vadd.f32 %v1568, %v3163
    %v3228 = vadd.f32 %v1569, %v3164
    %v3229 = vadd.f32 %v1570, %v3165
    %v3230 = vadd.f32 %v1571, %v3166
    %v3231 = vadd.f32 %v1572, %v3167
    %v3232 = vadd.f32 %v1573, %v3168
    %v3233 = vadd.f32 %v1574, %v3169
    %v3234 = vadd.f32 %v1575, %v3170
    %v3235 = vadd.f32 %v1576, %v3171
    %v3236 = vadd.f32 %v1577, %v3172
    %v3237 = vadd.f32 %v1578, %v3173
    %v3238 = vadd.f32 %v1579, %v3174
    %v3239 = vadd.f32 %v1580, %v3175
    %v3240 = vadd.f32 %v1581, %v3176
    %v3241 = vadd.f32 %v1582, %v3177
    %v3242 = vadd.f32 %v1583, %v3178
    %v3243 = vadd.f32 %v1584, %v3179
    %v3244 = vadd.f32 %v1585, %v3180
    %v3245 = vadd.f32 %v1586, %v3181
    %v3246 = vadd.f32 %v1587, %v3182
    %v3247 = vadd.f32 %v1588, %v3183
    %v3248 = vadd.f32 %v1589, %v3184
    %v3249 = vadd.f32 %v1590, %v3185
    %v3250 = vadd.f32 %v1591, %v3186
    %v3251 = vadd.f32 %v1592, %v3187
    %v3252 = vadd.f32 %v1593, %v3188
    %v3253 = vadd.f32 %v1594, %v3189
    %v3254 = vadd.f32 %v1595, %v3190
    %v3255 = vadd.f32 %v1596, %v3191
    %v3256 = vadd.f32 %v1597, %v3192
    %v3257 = vadd.f32 %v1598, %v3193
    %v3258 = vadd.f32 %v1599, %v3194
    %v3259 = vadd.f32 %v1600, %v3195
    %v3260 = vadd.f32 %v1601, %v3196
    %v3261 = vadd.f32 %v1602, %v3197
    %v3262 = vadd.f32 %v1603, %v3198
    %v3263 = vadd.f32 %v1604, %v3199
    %v3264 = vadd.f32 %v1605, %v3200
    %v3265 = vadd.f32 %v1606, %v3201
    %v3266 = vadd.f32 %v1607, %v3202
    %v3267 = vadd.f32 %v1608, %v3203
    %v3268 = vadd.f32 %v1609, %v3204
    %v3269 = vadd.f32 %v1610, %v3205
    %v3270 = vadd.f32 %v1611, %v3206
    %v3271 = vadd.f32 %v1612, %v3207
    %v3272 = vadd.f32 %v1613, %v3208
    %v3273 = vadd.f32 %v1614, %v3209
    %v3274 = vadd.f32 %v1615, %v3210
    %v3275 = vadd.f32 %v1616, %v3211
    %v3276 = vadd.f32 %v1617, %v3212
    %v3277 = vadd.f32 %v1618, %v3213
    %v3278 = vadd.f32 %v1619, %v3214
    %v3279 = vadd.f32 %v1620, %v3215
    %v3280 = vadd.f32 %v1621, %v3216
    %v3281 = vpack.c.bf16 %v3079, %v3077
    %v3282 = vpack.c.bf16 %v3080, %v3078
    %v3283 = vpack.c.bf16 %v3083, %v3081
    %v3284 = vpack.c.bf16 %v3084, %v3082
    %v3285 = vpack.c.bf16 %v3087, %v3085
    %v3286 = vpack.c.bf16 %v3088, %v3086
    %v3287 = vpack.c.bf16 %v3091, %v3089
    %v3288 = vpack.c.bf16 %v3092, %v3090
    %v3289 = vpack.c.bf16 %v3095, %v3093
    %v3290 = vpack.c.bf16 %v3096, %v3094
    %v3291 = vpack.c.bf16 %v3099, %v3097
    %v3292 = vpack.c.bf16 %v3100, %v3098
    %v3293 = vpack.c.bf16 %v3103, %v3101
    %v3294 = vpack.c.bf16 %v3104, %v3102
    %v3295 = vpack.c.bf16 %v3107, %v3105
    %v3296 = vpack.c.bf16 %v3108, %v3106
    %v3297 = vpack.c.bf16 %v3111, %v3109
    %v3298 = vpack.c.bf16 %v3112, %v3110
    %v3299 = vpack.c.bf16 %v3115, %v3113
    %v3300 = vpack.c.bf16 %v3116, %v3114
    %v3301 = vpack.c.bf16 %v3119, %v3117
    %v3302 = vpack.c.bf16 %v3120, %v3118
    %v3303 = vpack.c.bf16 %v3123, %v3121
    %v3304 = vpack.c.bf16 %v3124, %v3122
    %v3305 = vpack.c.bf16 %v3127, %v3125
    %v3306 = vpack.c.bf16 %v3128, %v3126
    %v3307 = vpack.c.bf16 %v3131, %v3129
    %v3308 = vpack.c.bf16 %v3132, %v3130
    %v3309 = vpack.c.bf16 %v3135, %v3133
    %v3310 = vpack.c.bf16 %v3136, %v3134
    %v3311 = vpack.c.bf16 %v3139, %v3137
    %v3312 = vpack.c.bf16 %v3140, %v3138
    %v3345 = vunpack.c.l.b16 %v3281
    %v3346 = vunpack.c.l.b16 %v3282
    %v3347 = vunpack.c.h.b16 %v3281
    %v3348 = vunpack.c.h.b16 %v3282
    %v3349 = vunpack.c.l.b16 %v3283
    %v3350 = vunpack.c.l.b16 %v3284
    %v3351 = vunpack.c.h.b16 %v3283
    %v3352 = vunpack.c.h.b16 %v3284
    %v3353 = vunpack.c.l.b16 %v3285
    %v3354 = vunpack.c.l.b16 %v3286
    %v3355 = vunpack.c.h.b16 %v3285
    %v3356 = vunpack.c.h.b16 %v3286
    %v3357 = vunpack.c.l.b16 %v3287
    %v3358 = vunpack.c.l.b16 %v3288
    %v3359 = vunpack.c.h.b16 %v3287
    %v3360 = vunpack.c.h.b16 %v3288
    %v3361 = vunpack.c.l.b16 %v3289
    %v3362 = vunpack.c.l.b16 %v3290
    %v3363 = vunpack.c.h.b16 %v3289
    %v3364 = vunpack.c.h.b16 %v3290
    %v3365 = vunpack.c.l.b16 %v3291
    %v3366 = vunpack.c.l.b16 %v3292
    %v3367 = vunpack.c.h.b16 %v3291
    %v3368 = vunpack.c.h.b16 %v3292
    %v3369 = vunpack.c.l.b16 %v3293
    %v3370 = vunpack.c.l.b16 %v3294
    %v3371 = vunpack.c.h.b16 %v3293
    %v3372 = vunpack.c.h.b16 %v3294
    %v3373 = vunpack.c.l.b16 %v3295
    %v3374 = vunpack.c.l.b16 %v3296
    %v3375 = vunpack.c.h.b16 %v3295
    %v3376 = vunpack.c.h.b16 %v3296
    %v3377 = vunpack.c.l.b16 %v3297
    %v3378 = vunpack.c.l.b16 %v3298
    %v3379 = vunpack.c.h.b16 %v3297
    %v3380 = vunpack.c.h.b16 %v3298
    %v3381 = vunpack.c.l.b16 %v3299
    %v3382 = vunpack.c.l.b16 %v3300
    %v3383 = vunpack.c.h.b16 %v3299
    %v3384 = vunpack.c.h.b16 %v3300
    %v3385 = vunpack.c.l.b16 %v3301
    %v3386 = vunpack.c.l.b16 %v3302
    %v3387 = vunpack.c.h.b16 %v3301
    %v3388 = vunpack.c.h.b16 %v3302
    %v3389 = vunpack.c.l.b16 %v3303
    %v3390 = vunpack.c.l.b16 %v3304
    %v3391 = vunpack.c.h.b16 %v3303
    %v3392 = vunpack.c.h.b16 %v3304
    %v3393 = vunpack.c.l.b16 %v3305
    %v3394 = vunpack.c.l.b16 %v3306
    %v3395 = vunpack.c.h.b16 %v3305
    %v3396 = vunpack.c.h.b16 %v3306
    %v3397 = vunpack.c.l.b16 %v3307
    %v3398 = vunpack.c.l.b16 %v3308
    %v3399 = vunpack.c.h.b16 %v3307
    %v3400 = vunpack.c.h.b16 %v3308
    %v3401 = vunpack.c.l.b16 %v3309
    %v3402 = vunpack.c.l.b16 %v3310
    %v3403 = vunpack.c.h.b16 %v3309
    %v3404 = vunpack.c.h.b16 %v3310
    %v3405 = vunpack.c.l.b16 %v3311
    %v3406 = vunpack.c.l.b16 %v3312
    %v3407 = vunpack.c.h.b16 %v3311
    %v3408 = vunpack.c.h.b16 %v3312
    %v3409 = vpack.c.b16 %v3346, %v3345
    %v3410 = vpack.c.b16 %v3348, %v3347
    %v3411 = vpack.c.b16 %v3350, %v3349
    %v3412 = vpack.c.b16 %v3352, %v3351
    %v3413 = vpack.c.b16 %v3354, %v3353
    %v3414 = vpack.c.b16 %v3356, %v3355
    %v3415 = vpack.c.b16 %v3358, %v3357
    %v3416 = vpack.c.b16 %v3360, %v3359
    %v3417 = vpack.c.b16 %v3362, %v3361
    %v3418 = vpack.c.b16 %v3364, %v3363
    %v3419 = vpack.c.b16 %v3366, %v3365
    %v3420 = vpack.c.b16 %v3368, %v3367
    %v3421 = vpack.c.b16 %v3370, %v3369
    %v3422 = vpack.c.b16 %v3372, %v3371
    %v3423 = vpack.c.b16 %v3374, %v3373
    %v3424 = vpack.c.b16 %v3376, %v3375
    %v3425 = vpack.c.b16 %v3378, %v3377
    %v3426 = vpack.c.b16 %v3380, %v3379
    %v3427 = vpack.c.b16 %v3382, %v3381
    %v3428 = vpack.c.b16 %v3384, %v3383
    %v3429 = vpack.c.b16 %v3386, %v3385
    %v3430 = vpack.c.b16 %v3388, %v3387
    %v3431 = vpack.c.b16 %v3390, %v3389
    %v3432 = vpack.c.b16 %v3392, %v3391
    %v3433 = vpack.c.b16 %v3394, %v3393
    %v3434 = vpack.c.b16 %v3396, %v3395
    %v3435 = vpack.c.b16 %v3398, %v3397
    %v3436 = vpack.c.b16 %v3400, %v3399
    %v3437 = vpack.c.b16 %v3402, %v3401
    %v3438 = vpack.c.b16 %v3404, %v3403
    %v3439 = vpack.c.b16 %v3406, %v3405
    %v3440 = vpack.c.b16 %v3408, %v3407
    %3473 = vst [vmem:[#allocation2 + $0x10] sm:$0xff] %v3409
    %3474 = vst [vmem:[#allocation2 + $0x30] sm:$0xff] %v3410
    %3475 = vst [vmem:[#allocation2 + $0x50] sm:$0xff] %v3411
    %3476 = vst [vmem:[#allocation2 + $0x70] sm:$0xff] %v3412
    %3477 = vst [vmem:[#allocation2 + $0x90] sm:$0xff] %v3413
    %3478 = vst [vmem:[#allocation2 + $0xb0] sm:$0xff] %v3414
    %3479 = vst [vmem:[#allocation2 + $0xd0] sm:$0xff] %v3415
    %3480 = vst [vmem:[#allocation2 + $0xf0] sm:$0xff] %v3416
    %3481 = vst [vmem:[#allocation2 + $0x110] sm:$0xff] %v3417
    %3482 = vst [vmem:[#allocation2 + $0x130] sm:$0xff] %v3418
    %3483 = vst [vmem:[#allocation2 + $0x150] sm:$0xff] %v3419
    %3484 = vst [vmem:[#allocation2 + $0x170] sm:$0xff] %v3420
    %3485 = vst [vmem:[#allocation2 + $0x190] sm:$0xff] %v3421
    %3486 = vst [vmem:[#allocation2 + $0x1b0] sm:$0xff] %v3422
    %3487 = vst [vmem:[#allocation2 + $0x1d0] sm:$0xff] %v3423
    %3488 = vst [vmem:[#allocation2 + $0x1f0] sm:$0xff] %v3424
    %3489 = vst [vmem:[#allocation2 + $0x210] sm:$0xff] %v3425
    %3490 = vst [vmem:[#allocation2 + $0x230] sm:$0xff] %v3426
    %3491 = vst [vmem:[#allocation2 + $0x250] sm:$0xff] %v3427
    %3492 = vst [vmem:[#allocation2 + $0x270] sm:$0xff] %v3428
    %3493 = vst [vmem:[#allocation2 + $0x290] sm:$0xff] %v3429
    %3494 = vst [vmem:[#allocation2 + $0x2b0] sm:$0xff] %v3430
    %3495 = vst [vmem:[#allocation2 + $0x2d0] sm:$0xff] %v3431
    %3496 = vst [vmem:[#allocation2 + $0x2f0] sm:$0xff] %v3432
    %3497 = vst [vmem:[#allocation2 + $0x310] sm:$0xff] %v3433
    %3498 = vst [vmem:[#allocation2 + $0x330] sm:$0xff] %v3434
    %3499 = vst [vmem:[#allocation2 + $0x350] sm:$0xff] %v3435
    %3500 = vst [vmem:[#allocation2 + $0x370] sm:$0xff] %v3436
    %3501 = vst [vmem:[#allocation2 + $0x390] sm:$0xff] %v3437
    %3502 = vst [vmem:[#allocation2 + $0x3b0] sm:$0xff] %v3438
    %3503 = vst [vmem:[#allocation2 + $0x3d0] sm:$0xff] %v3439
    %3504 = vst [vmem:[#allocation2 + $0x3f0] sm:$0xff] %v3440
    %v3505 = vld [vmem:[#allocation2] sm:$0xff]
    %v3506 = vld [vmem:[#allocation2 + $0x8] sm:$0xff]
    %v3507 = vld [vmem:[#allocation2 + $0x10] sm:$0xff]
    %v3508 = vld [vmem:[#allocation2 + $0x20] sm:$0xff]
    %v3509 = vld [vmem:[#allocation2 + $0x28] sm:$0xff]
    %v3510 = vld [vmem:[#allocation2 + $0x30] sm:$0xff]
    %v3511 = vld [vmem:[#allocation2 + $0x40] sm:$0xff]
    %v3512 = vld [vmem:[#allocation2 + $0x48] sm:$0xff]
    %v3513 = vld [vmem:[#allocation2 + $0x50] sm:$0xff]
    %v3514 = vld [vmem:[#allocation2 + $0x60] sm:$0xff]
    %v3515 = vld [vmem:[#allocation2 + $0x68] sm:$0xff]
    %v3516 = vld [vmem:[#allocation2 + $0x70] sm:$0xff]
    %v3517 = vld [vmem:[#allocation2 + $0x80] sm:$0xff]
    %v3518 = vld [vmem:[#allocation2 + $0x88] sm:$0xff]
    %v3519 = vld [vmem:[#allocation2 + $0x90] sm:$0xff]
    %v3520 = vld [vmem:[#allocation2 + $0xa0] sm:$0xff]
    %v3521 = vld [vmem:[#allocation2 + $0xa8] sm:$0xff]
    %v3522 = vld [vmem:[#allocation2 + $0xb0] sm:$0xff]
    %v3523 = vld [vmem:[#allocation2 + $0xc0] sm:$0xff]
    %v3524 = vld [vmem:[#allocation2 + $0xc8] sm:$0xff]
    %v3525 = vld [vmem:[#allocation2 + $0xd0] sm:$0xff]
    %v3526 = vld [vmem:[#allocation2 + $0xe0] sm:$0xff]
    %v3527 = vld [vmem:[#allocation2 + $0xe8] sm:$0xff]
    %v3528 = vld [vmem:[#allocation2 + $0xf0] sm:$0xff]
    %v3529 = vld [vmem:[#allocation2 + $0x100] sm:$0xff]
    %v3530 = vld [vmem:[#allocation2 + $0x108] sm:$0xff]
    %v3531 = vld [vmem:[#allocation2 + $0x110] sm:$0xff]
    %v3532 = vld [vmem:[#allocation2 + $0x120] sm:$0xff]
    %v3533 = vld [vmem:[#allocation2 + $0x128] sm:$0xff]
    %v3534 = vld [vmem:[#allocation2 + $0x130] sm:$0xff]
    %v3535 = vld [vmem:[#allocation2 + $0x140] sm:$0xff]
    %v3536 = vld [vmem:[#allocation2 + $0x148] sm:$0xff]
    %v3537 = vld [vmem:[#allocation2 + $0x150] sm:$0xff]
    %v3538 = vld [vmem:[#allocation2 + $0x160] sm:$0xff]
    %v3539 = vld [vmem:[#allocation2 + $0x168] sm:$0xff]
    %v3540 = vld [vmem:[#allocation2 + $0x170] sm:$0xff]
    %v3541 = vld [vmem:[#allocation2 + $0x180] sm:$0xff]
    %v3542 = vld [vmem:[#allocation2 + $0x188] sm:$0xff]
    %v3543 = vld [vmem:[#allocation2 + $0x190] sm:$0xff]
    %v3544 = vld [vmem:[#allocation2 + $0x1a0] sm:$0xff]
    %v3545 = vld [vmem:[#allocation2 + $0x1a8] sm:$0xff]
    %v3546 = vld [vmem:[#allocation2 + $0x1b0] sm:$0xff]
    %v3547 = vld [vmem:[#allocation2 + $0x1c0] sm:$0xff]
    %v3548 = vld [vmem:[#allocation2 + $0x1c8] sm:$0xff]
    %v3549 = vld [vmem:[#allocation2 + $0x1d0] sm:$0xff]
    %v3550 = vld [vmem:[#allocation2 + $0x1e0] sm:$0xff]
    %v3551 = vld [vmem:[#allocation2 + $0x1e8] sm:$0xff]
    %v3552 = vld [vmem:[#allocation2 + $0x1f0] sm:$0xff]
    %v3553 = vld [vmem:[#allocation2 + $0x200] sm:$0xff]
    %v3554 = vld [vmem:[#allocation2 + $0x208] sm:$0xff]
    %v3555 = vld [vmem:[#allocation2 + $0x210] sm:$0xff]
    %v3556 = vld [vmem:[#allocation2 + $0x220] sm:$0xff]
    %v3557 = vld [vmem:[#allocation2 + $0x228] sm:$0xff]
    %v3558 = vld [vmem:[#allocation2 + $0x230] sm:$0xff]
    %v3559 = vld [vmem:[#allocation2 + $0x240] sm:$0xff]
    %v3560 = vld [vmem:[#allocation2 + $0x248] sm:$0xff]
    %v3561 = vld [vmem:[#allocation2 + $0x250] sm:$0xff]
    %v3562 = vld [vmem:[#allocation2 + $0x260] sm:$0xff]
    %v3563 = vld [vmem:[#allocation2 + $0x268] sm:$0xff]
    %v3564 = vld [vmem:[#allocation2 + $0x270] sm:$0xff]
    %v3565 = vld [vmem:[#allocation2 + $0x280] sm:$0xff]
    %v3566 = vld [vmem:[#allocation2 + $0x288] sm:$0xff]
    %v3567 = vld [vmem:[#allocation2 + $0x290] sm:$0xff]
    %v3568 = vld [vmem:[#allocation2 + $0x2a0] sm:$0xff]
    %v3569 = vld [vmem:[#allocation2 + $0x2a8] sm:$0xff]
    %v3570 = vld [vmem:[#allocation2 + $0x2b0] sm:$0xff]
    %v3571 = vld [vmem:[#allocation2 + $0x2c0] sm:$0xff]
    %v3572 = vld [vmem:[#allocation2 + $0x2c8] sm:$0xff]
    %v3573 = vld [vmem:[#allocation2 + $0x2d0] sm:$0xff]
    %v3574 = vld [vmem:[#allocation2 + $0x2e0] sm:$0xff]
    %v3575 = vld [vmem:[#allocation2 + $0x2e8] sm:$0xff]
    %v3576 = vld [vmem:[#allocation2 + $0x2f0] sm:$0xff]
    %v3577 = vld [vmem:[#allocation2 + $0x300] sm:$0xff]
    %v3578 = vld [vmem:[#allocation2 + $0x308] sm:$0xff]
    %v3579 = vld [vmem:[#allocation2 + $0x310] sm:$0xff]
    %v3580 = vld [vmem:[#allocation2 + $0x320] sm:$0xff]
    %v3581 = vld [vmem:[#allocation2 + $0x328] sm:$0xff]
    %v3582 = vld [vmem:[#allocation2 + $0x330] sm:$0xff]
    %v3583 = vld [vmem:[#allocation2 + $0x340] sm:$0xff]
    %v3584 = vld [vmem:[#allocation2 + $0x348] sm:$0xff]
    %v3585 = vld [vmem:[#allocation2 + $0x350] sm:$0xff]
    %v3586 = vld [vmem:[#allocation2 + $0x360] sm:$0xff]
    %v3587 = vld [vmem:[#allocation2 + $0x368] sm:$0xff]
    %v3588 = vld [vmem:[#allocation2 + $0x370] sm:$0xff]
    %v3589 = vld [vmem:[#allocation2 + $0x380] sm:$0xff]
    %v3590 = vld [vmem:[#allocation2 + $0x388] sm:$0xff]
    %v3591 = vld [vmem:[#allocation2 + $0x390] sm:$0xff]
    %v3592 = vld [vmem:[#allocation2 + $0x3a0] sm:$0xff]
    %v3593 = vld [vmem:[#allocation2 + $0x3a8] sm:$0xff]
    %v3594 = vld [vmem:[#allocation2 + $0x3b0] sm:$0xff]
    %v3595 = vld [vmem:[#allocation2 + $0x3c0] sm:$0xff]
    %v3596 = vld [vmem:[#allocation2 + $0x3c8] sm:$0xff]
    %v3597 = vld [vmem:[#allocation2 + $0x3d0] sm:$0xff]
    %v3598 = vld [vmem:[#allocation2 + $0x3e0] sm:$0xff]
    %v3599 = vld [vmem:[#allocation2 + $0x3e8] sm:$0xff]
    %v3600 = vld [vmem:[#allocation2 + $0x3f0] sm:$0xff]
    %v3601 = vld [vmem:[#allocation6] sm:$0xff]
    %v3602 = vld [vmem:[#allocation6 + $0x8] sm:$0xff]
    %v3603 = vld [vmem:[#allocation6 + $0x10] sm:$0xff]
    %v3604 = vld [vmem:[#allocation6 + $0x18] sm:$0xff]
    %v3605 = vld [vmem:[#allocation6 + $0x20] sm:$0xff]
    %v3606 = vld [vmem:[#allocation6 + $0x28] sm:$0xff]
    %v3607 = vld [vmem:[#allocation6 + $0x30] sm:$0xff]
    %v3608 = vld [vmem:[#allocation6 + $0x38] sm:$0xff]
    %v3609 = vld [vmem:[#allocation6 + $0x40] sm:$0xff]
    %v3610 = vld [vmem:[#allocation6 + $0x48] sm:$0xff]
    %v3611 = vld [vmem:[#allocation6 + $0x50] sm:$0xff]
    %v3612 = vld [vmem:[#allocation6 + $0x58] sm:$0xff]
    %v3613 = vld [vmem:[#allocation6 + $0x60] sm:$0xff]
    %v3614 = vld [vmem:[#allocation6 + $0x68] sm:$0xff]
    %v3615 = vld [vmem:[#allocation6 + $0x70] sm:$0xff]
    %v3616 = vld [vmem:[#allocation6 + $0x78] sm:$0xff]
    %v3617 = vld [vmem:[#allocation6 + $0x80] sm:$0xff]
    %v3618 = vld [vmem:[#allocation6 + $0x88] sm:$0xff]
    %v3619 = vld [vmem:[#allocation6 + $0x90] sm:$0xff]
    %v3620 = vld [vmem:[#allocation6 + $0x98] sm:$0xff]
    %v3621 = vld [vmem:[#allocation6 + $0xa0] sm:$0xff]
    %v3622 = vld [vmem:[#allocation6 + $0xa8] sm:$0xff]
    %v3623 = vld [vmem:[#allocation6 + $0xb0] sm:$0xff]
    %v3624 = vld [vmem:[#allocation6 + $0xb8] sm:$0xff]
    %v3625 = vld [vmem:[#allocation6 + $0xc0] sm:$0xff]
    %v3626 = vld [vmem:[#allocation6 + $0xc8] sm:$0xff]
    %v3627 = vld [vmem:[#allocation6 + $0xd0] sm:$0xff]
    %v3628 = vld [vmem:[#allocation6 + $0xd8] sm:$0xff]
    %v3629 = vld [vmem:[#allocation6 + $0xe0] sm:$0xff]
    %v3630 = vld [vmem:[#allocation6 + $0xe8] sm:$0xff]
    %v3631 = vld [vmem:[#allocation6 + $0xf0] sm:$0xff]
    %v3632 = vld [vmem:[#allocation6 + $0xf8] sm:$0xff]
    %v3633 = vld [vmem:[#allocation6 + $0x100] sm:$0xff]
    %v3634 = vld [vmem:[#allocation6 + $0x108] sm:$0xff]
    %v3635 = vld [vmem:[#allocation6 + $0x110] sm:$0xff]
    %v3636 = vld [vmem:[#allocation6 + $0x118] sm:$0xff]
    %v3637 = vld [vmem:[#allocation6 + $0x120] sm:$0xff]
    %v3638 = vld [vmem:[#allocation6 + $0x128] sm:$0xff]
    %v3639 = vld [vmem:[#allocation6 + $0x130] sm:$0xff]
    %v3640 = vld [vmem:[#allocation6 + $0x138] sm:$0xff]
    %v3641 = vld [vmem:[#allocation6 + $0x140] sm:$0xff]
    %v3642 = vld [vmem:[#allocation6 + $0x148] sm:$0xff]
    %v3643 = vld [vmem:[#allocation6 + $0x150] sm:$0xff]
    %v3644 = vld [vmem:[#allocation6 + $0x158] sm:$0xff]
    %v3645 = vld [vmem:[#allocation6 + $0x160] sm:$0xff]
    %v3646 = vld [vmem:[#allocation6 + $0x168] sm:$0xff]
    %v3647 = vld [vmem:[#allocation6 + $0x170] sm:$0xff]
    %v3648 = vld [vmem:[#allocation6 + $0x178] sm:$0xff]
    %v3649 = vld [vmem:[#allocation6 + $0x180] sm:$0xff]
    %v3650 = vld [vmem:[#allocation6 + $0x188] sm:$0xff]
    %v3651 = vld [vmem:[#allocation6 + $0x190] sm:$0xff]
    %v3652 = vld [vmem:[#allocation6 + $0x198] sm:$0xff]
    %v3653 = vld [vmem:[#allocation6 + $0x1a0] sm:$0xff]
    %v3654 = vld [vmem:[#allocation6 + $0x1a8] sm:$0xff]
    %v3655 = vld [vmem:[#allocation6 + $0x1b0] sm:$0xff]
    %v3656 = vld [vmem:[#allocation6 + $0x1b8] sm:$0xff]
    %v3657 = vld [vmem:[#allocation6 + $0x1c0] sm:$0xff]
    %v3658 = vld [vmem:[#allocation6 + $0x1c8] sm:$0xff]
    %v3659 = vld [vmem:[#allocation6 + $0x1d0] sm:$0xff]
    %v3660 = vld [vmem:[#allocation6 + $0x1d8] sm:$0xff]
    %v3661 = vld [vmem:[#allocation6 + $0x1e0] sm:$0xff]
    %v3662 = vld [vmem:[#allocation6 + $0x1e8] sm:$0xff]
    %v3663 = vld [vmem:[#allocation6 + $0x1f0] sm:$0xff]
    %v3664 = vld [vmem:[#allocation6 + $0x1f8] sm:$0xff]
    %v3665 = vld [vmem:[#allocation6 + $0x200] sm:$0xff]
    %v3666 = vld [vmem:[#allocation6 + $0x208] sm:$0xff]
    %v3667 = vld [vmem:[#allocation6 + $0x210] sm:$0xff]
    %v3668 = vld [vmem:[#allocation6 + $0x218] sm:$0xff]
    %v3669 = vld [vmem:[#allocation6 + $0x220] sm:$0xff]
    %v3670 = vld [vmem:[#allocation6 + $0x228] sm:$0xff]
    %v3671 = vld [vmem:[#allocation6 + $0x230] sm:$0xff]
    %v3672 = vld [vmem:[#allocation6 + $0x238] sm:$0xff]
    %v3673 = vld [vmem:[#allocation6 + $0x240] sm:$0xff]
    %v3674 = vld [vmem:[#allocation6 + $0x248] sm:$0xff]
    %v3675 = vld [vmem:[#allocation6 + $0x250] sm:$0xff]
    %v3676 = vld [vmem:[#allocation6 + $0x258] sm:$0xff]
    %v3677 = vld [vmem:[#allocation6 + $0x260] sm:$0xff]
    %v3678 = vld [vmem:[#allocation6 + $0x268] sm:$0xff]
    %v3679 = vld [vmem:[#allocation6 + $0x270] sm:$0xff]
    %v3680 = vld [vmem:[#allocation6 + $0x278] sm:$0xff]
    %v3681 = vld [vmem:[#allocation6 + $0x280] sm:$0xff]
    %v3682 = vld [vmem:[#allocation6 + $0x288] sm:$0xff]
    %v3683 = vld [vmem:[#allocation6 + $0x290] sm:$0xff]
    %v3684 = vld [vmem:[#allocation6 + $0x298] sm:$0xff]
    %v3685 = vld [vmem:[#allocation6 + $0x2a0] sm:$0xff]
    %v3686 = vld [vmem:[#allocation6 + $0x2a8] sm:$0xff]
    %v3687 = vld [vmem:[#allocation6 + $0x2b0] sm:$0xff]
    %v3688 = vld [vmem:[#allocation6 + $0x2b8] sm:$0xff]
    %v3689 = vld [vmem:[#allocation6 + $0x2c0] sm:$0xff]
    %v3690 = vld [vmem:[#allocation6 + $0x2c8] sm:$0xff]
    %v3691 = vld [vmem:[#allocation6 + $0x2d0] sm:$0xff]
    %v3692 = vld [vmem:[#allocation6 + $0x2d8] sm:$0xff]
    %v3693 = vld [vmem:[#allocation6 + $0x2e0] sm:$0xff]
    %v3694 = vld [vmem:[#allocation6 + $0x2e8] sm:$0xff]
    %v3695 = vld [vmem:[#allocation6 + $0x2f0] sm:$0xff]
    %v3696 = vld [vmem:[#allocation6 + $0x2f8] sm:$0xff]
    %s3697 = scalar_lea.vmem %s6, 3
    %v3698 = vld [vmem:[%s3697] ss:$8 sm:$0x3]
    %v3700 = vlaneseq
    %v3701 = vshrl.u32 %v3700, 7
    %v3702 = vsub.s32 0, %v3701
    %v3703 = vrot.slane %v3698, %v3702
    %v3704 = vlaneseq
    %v3705 = vshrl.u32 %v3704, 7
    %v3706 = vsub.s32 1, %v3705
    %v3707 = vrot.slane %v3698, %v3706
    %v3806 = vunpack.c.l.b16 %v3505
    %v3807 = vunpack.c.h.b16 %v3505
    %v3808 = vunpack.c.l.b16 %v3506
    %v3809 = vunpack.c.h.b16 %v3506
    %v3810 = vunpack.c.l.b16 %v3507
    %v3811 = vunpack.c.h.b16 %v3507
    %v3812 = vunpack.c.l.b16 %v3508
    %v3813 = vunpack.c.h.b16 %v3508
    %v3814 = vunpack.c.l.b16 %v3509
    %v3815 = vunpack.c.h.b16 %v3509
    %v3816 = vunpack.c.l.b16 %v3510
    %v3817 = vunpack.c.h.b16 %v3510
    %v3818 = vunpack.c.l.b16 %v3511
    %v3819 = vunpack.c.h.b16 %v3511
    %v3820 = vunpack.c.l.b16 %v3512
    %v3821 = vunpack.c.h.b16 %v3512
    %v3822 = vunpack.c.l.b16 %v3513
    %v3823 = vunpack.c.h.b16 %v3513
    %v3824 = vunpack.c.l.b16 %v3514
    %v3825 = vunpack.c.h.b16 %v3514
    %v3826 = vunpack.c.l.b16 %v3515
    %v3827 = vunpack.c.h.b16 %v3515
    %v3828 = vunpack.c.l.b16 %v3516
    %v3829 = vunpack.c.h.b16 %v3516
    %v3830 = vunpack.c.l.b16 %v3517
    %v3831 = vunpack.c.h.b16 %v3517
    %v3832 = vunpack.c.l.b16 %v3518
    %v3833 = vunpack.c.h.b16 %v3518
    %v3834 = vunpack.c.l.b16 %v3519
    %v3835 = vunpack.c.h.b16 %v3519
    %v3836 = vunpack.c.l.b16 %v3520
    %v3837 = vunpack.c.h.b16 %v3520
    %v3838 = vunpack.c.l.b16 %v3521
    %v3839 = vunpack.c.h.b16 %v3521
    %v3840 = vunpack.c.l.b16 %v3522
    %v3841 = vunpack.c.h.b16 %v3522
    %v3842 = vunpack.c.l.b16 %v3523
    %v3843 = vunpack.c.h.b16 %v3523
    %v3844 = vunpack.c.l.b16 %v3524
    %v3845 = vunpack.c.h.b16 %v3524
    %v3846 = vunpack.c.l.b16 %v3525
    %v3847 = vunpack.c.h.b16 %v3525
    %v3848 = vunpack.c.l.b16 %v3526
    %v3849 = vunpack.c.h.b16 %v3526
    %v3850 = vunpack.c.l.b16 %v3527
    %v3851 = vunpack.c.h.b16 %v3527
    %v3852 = vunpack.c.l.b16 %v3528
    %v3853 = vunpack.c.h.b16 %v3528
    %v3854 = vunpack.c.l.b16 %v3529
    %v3855 = vunpack.c.h.b16 %v3529
    %v3856 = vunpack.c.l.b16 %v3530
    %v3857 = vunpack.c.h.b16 %v3530
    %v3858 = vunpack.c.l.b16 %v3531
    %v3859 = vunpack.c.h.b16 %v3531
    %v3860 = vunpack.c.l.b16 %v3532
    %v3861 = vunpack.c.h.b16 %v3532
    %v3862 = vunpack.c.l.b16 %v3533
    %v3863 = vunpack.c.h.b16 %v3533
    %v3864 = vunpack.c.l.b16 %v3534
    %v3865 = vunpack.c.h.b16 %v3534
    %v3866 = vunpack.c.l.b16 %v3535
    %v3867 = vunpack.c.h.b16 %v3535
    %v3868 = vunpack.c.l.b16 %v3536
    %v3869 = vunpack.c.h.b16 %v3536
    %v3870 = vunpack.c.l.b16 %v3537
    %v3871 = vunpack.c.h.b16 %v3537
    %v3872 = vunpack.c.l.b16 %v3538
    %v3873 = vunpack.c.h.b16 %v3538
    %v3874 = vunpack.c.l.b16 %v3539
    %v3875 = vunpack.c.h.b16 %v3539
    %v3876 = vunpack.c.l.b16 %v3540
    %v3877 = vunpack.c.h.b16 %v3540
    %v3878 = vunpack.c.l.b16 %v3541
    %v3879 = vunpack.c.h.b16 %v3541
    %v3880 = vunpack.c.l.b16 %v3542
    %v3881 = vunpack.c.h.b16 %v3542
    %v3882 = vunpack.c.l.b16 %v3543
    %v3883 = vunpack.c.h.b16 %v3543
    %v3884 = vunpack.c.l.b16 %v3544
    %v3885 = vunpack.c.h.b16 %v3544
    %v3886 = vunpack.c.l.b16 %v3545
    %v3887 = vunpack.c.h.b16 %v3545
    %v3888 = vunpack.c.l.b16 %v3546
    %v3889 = vunpack.c.h.b16 %v3546
    %v3890 = vunpack.c.l.b16 %v3547
    %v3891 = vunpack.c.h.b16 %v3547
    %v3892 = vunpack.c.l.b16 %v3548
    %v3893 = vunpack.c.h.b16 %v3548
    %v3894 = vunpack.c.l.b16 %v3549
    %v3895 = vunpack.c.h.b16 %v3549
    %v3896 = vunpack.c.l.b16 %v3550
    %v3897 = vunpack.c.h.b16 %v3550
    %v3898 = vunpack.c.l.b16 %v3551
    %v3899 = vunpack.c.h.b16 %v3551
    %v3900 = vunpack.c.l.b16 %v3552
    %v3901 = vunpack.c.h.b16 %v3552
    %v3902 = vunpack.c.l.b16 %v3553
    %v3903 = vunpack.c.h.b16 %v3553
    %v3904 = vunpack.c.l.b16 %v3554
    %v3905 = vunpack.c.h.b16 %v3554
    %v3906 = vunpack.c.l.b16 %v3555
    %v3907 = vunpack.c.h.b16 %v3555
    %v3908 = vunpack.c.l.b16 %v3556
    %v3909 = vunpack.c.h.b16 %v3556
    %v3910 = vunpack.c.l.b16 %v3557
    %v3911 = vunpack.c.h.b16 %v3557
    %v3912 = vunpack.c.l.b16 %v3558
    %v3913 = vunpack.c.h.b16 %v3558
    %v3914 = vunpack.c.l.b16 %v3559
    %v3915 = vunpack.c.h.b16 %v3559
    %v3916 = vunpack.c.l.b16 %v3560
    %v3917 = vunpack.c.h.b16 %v3560
    %v3918 = vunpack.c.l.b16 %v3561
    %v3919 = vunpack.c.h.b16 %v3561
    %v3920 = vunpack.c.l.b16 %v3562
    %v3921 = vunpack.c.h.b16 %v3562
    %v3922 = vunpack.c.l.b16 %v3563
    %v3923 = vunpack.c.h.b16 %v3563
    %v3924 = vunpack.c.l.b16 %v3564
    %v3925 = vunpack.c.h.b16 %v3564
    %v3926 = vunpack.c.l.b16 %v3565
    %v3927 = vunpack.c.h.b16 %v3565
    %v3928 = vunpack.c.l.b16 %v3566
    %v3929 = vunpack.c.h.b16 %v3566
    %v3930 = vunpack.c.l.b16 %v3567
    %v3931 = vunpack.c.h.b16 %v3567
    %v3932 = vunpack.c.l.b16 %v3568
    %v3933 = vunpack.c.h.b16 %v3568
    %v3934 = vunpack.c.l.b16 %v3569
    %v3935 = vunpack.c.h.b16 %v3569
    %v3936 = vunpack.c.l.b16 %v3570
    %v3937 = vunpack.c.h.b16 %v3570
    %v3938 = vunpack.c.l.b16 %v3571
    %v3939 = vunpack.c.h.b16 %v3571
    %v3940 = vunpack.c.l.b16 %v3572
    %v3941 = vunpack.c.h.b16 %v3572
    %v3942 = vunpack.c.l.b16 %v3573
    %v3943 = vunpack.c.h.b16 %v3573
    %v3944 = vunpack.c.l.b16 %v3574
    %v3945 = vunpack.c.h.b16 %v3574
    %v3946 = vunpack.c.l.b16 %v3575
    %v3947 = vunpack.c.h.b16 %v3575
    %v3948 = vunpack.c.l.b16 %v3576
    %v3949 = vunpack.c.h.b16 %v3576
    %v3950 = vunpack.c.l.b16 %v3577
    %v3951 = vunpack.c.h.b16 %v3577
    %v3952 = vunpack.c.l.b16 %v3578
    %v3953 = vunpack.c.h.b16 %v3578
    %v3954 = vunpack.c.l.b16 %v3579
    %v3955 = vunpack.c.h.b16 %v3579
    %v3956 = vunpack.c.l.b16 %v3580
    %v3957 = vunpack.c.h.b16 %v3580
    %v3958 = vunpack.c.l.b16 %v3581
    %v3959 = vunpack.c.h.b16 %v3581
    %v3960 = vunpack.c.l.b16 %v3582
    %v3961 = vunpack.c.h.b16 %v3582
    %v3962 = vunpack.c.l.b16 %v3583
    %v3963 = vunpack.c.h.b16 %v3583
    %v3964 = vunpack.c.l.b16 %v3584
    %v3965 = vunpack.c.h.b16 %v3584
    %v3966 = vunpack.c.l.b16 %v3585
    %v3967 = vunpack.c.h.b16 %v3585
    %v3968 = vunpack.c.l.b16 %v3586
    %v3969 = vunpack.c.h.b16 %v3586
    %v3970 = vunpack.c.l.b16 %v3587
    %v3971 = vunpack.c.h.b16 %v3587
    %v3972 = vunpack.c.l.b16 %v3588
    %v3973 = vunpack.c.h.b16 %v3588
    %v3974 = vunpack.c.l.b16 %v3589
    %v3975 = vunpack.c.h.b16 %v3589
    %v3976 = vunpack.c.l.b16 %v3590
    %v3977 = vunpack.c.h.b16 %v3590
    %v3978 = vunpack.c.l.b16 %v3591
    %v3979 = vunpack.c.h.b16 %v3591
    %v3980 = vunpack.c.l.b16 %v3592
    %v3981 = vunpack.c.h.b16 %v3592
    %v3982 = vunpack.c.l.b16 %v3593
    %v3983 = vunpack.c.h.b16 %v3593
    %v3984 = vunpack.c.l.b16 %v3594
    %v3985 = vunpack.c.h.b16 %v3594
    %v3986 = vunpack.c.l.b16 %v3595
    %v3987 = vunpack.c.h.b16 %v3595
    %v3988 = vunpack.c.l.b16 %v3596
    %v3989 = vunpack.c.h.b16 %v3596
    %v3990 = vunpack.c.l.b16 %v3597
    %v3991 = vunpack.c.h.b16 %v3597
    %v3992 = vunpack.c.l.b16 %v3598
    %v3993 = vunpack.c.h.b16 %v3598
    %v3994 = vunpack.c.l.b16 %v3599
    %v3995 = vunpack.c.h.b16 %v3599
    %v3996 = vunpack.c.l.b16 %v3600
    %v3997 = vunpack.c.h.b16 %v3600
    %v3998 = vpack.c.b16 %v3812, %v3806
    %v3999 = vpack.c.b16 %v3813, %v3807
    %v4000 = vpack.c.b16 %v3814, %v3808
    %v4001 = vpack.c.b16 %v3815, %v3809
    %v4002 = vpack.c.b16 %v3816, %v3810
    %v4003 = vpack.c.b16 %v3817, %v3811
    %v4004 = vpack.c.b16 %v3824, %v3818
    %v4005 = vpack.c.b16 %v3825, %v3819
    %v4006 = vpack.c.b16 %v3826, %v3820
    %v4007 = vpack.c.b16 %v3827, %v3821
    %v4008 = vpack.c.b16 %v3828, %v3822
    %v4009 = vpack.c.b16 %v3829, %v3823
    %v4010 = vpack.c.b16 %v3836, %v3830
    %v4011 = vpack.c.b16 %v3837, %v3831
    %v4012 = vpack.c.b16 %v3838, %v3832
    %v4013 = vpack.c.b16 %v3839, %v3833
    %v4014 = vpack.c.b16 %v3840, %v3834
    %v4015 = vpack.c.b16 %v3841, %v3835
    %v4016 = vpack.c.b16 %v3848, %v3842
    %v4017 = vpack.c.b16 %v3849, %v3843
    %v4018 = vpack.c.b16 %v3850, %v3844
    %v4019 = vpack.c.b16 %v3851, %v3845
    %v4020 = vpack.c.b16 %v3852, %v3846
    %v4021 = vpack.c.b16 %v3853, %v3847
    %v4022 = vpack.c.b16 %v3860, %v3854
    %v4023 = vpack.c.b16 %v3861, %v3855
    %v4024 = vpack.c.b16 %v3862, %v3856
    %v4025 = vpack.c.b16 %v3863, %v3857
    %v4026 = vpack.c.b16 %v3864, %v3858
    %v4027 = vpack.c.b16 %v3865, %v3859
    %v4028 = vpack.c.b16 %v3872, %v3866
    %v4029 = vpack.c.b16 %v3873, %v3867
    %v4030 = vpack.c.b16 %v3874, %v3868
    %v4031 = vpack.c.b16 %v3875, %v3869
    %v4032 = vpack.c.b16 %v3876, %v3870
    %v4033 = vpack.c.b16 %v3877, %v3871
    %v4034 = vpack.c.b16 %v3884, %v3878
    %v4035 = vpack.c.b16 %v3885, %v3879
    %v4036 = vpack.c.b16 %v3886, %v3880
    %v4037 = vpack.c.b16 %v3887, %v3881
    %v4038 = vpack.c.b16 %v3888, %v3882
    %v4039 = vpack.c.b16 %v3889, %v3883
    %v4040 = vpack.c.b16 %v3896, %v3890
    %v4041 = vpack.c.b16 %v3897, %v3891
    %v4042 = vpack.c.b16 %v3898, %v3892
    %v4043 = vpack.c.b16 %v3899, %v3893
    %v4044 = vpack.c.b16 %v3900, %v3894
    %v4045 = vpack.c.b16 %v3901, %v3895
    %v4046 = vpack.c.b16 %v3908, %v3902
    %v4047 = vpack.c.b16 %v3909, %v3903
    %v4048 = vpack.c.b16 %v3910, %v3904
    %v4049 = vpack.c.b16 %v3911, %v3905
    %v4050 = vpack.c.b16 %v3912, %v3906
    %v4051 = vpack.c.b16 %v3913, %v3907
    %v4052 = vpack.c.b16 %v3920, %v3914
    %v4053 = vpack.c.b16 %v3921, %v3915
    %v4054 = vpack.c.b16 %v3922, %v3916
    %v4055 = vpack.c.b16 %v3923, %v3917
    %v4056 = vpack.c.b16 %v3924, %v3918
    %v4057 = vpack.c.b16 %v3925, %v3919
    %v4058 = vpack.c.b16 %v3932, %v3926
    %v4059 = vpack.c.b16 %v3933, %v3927
    %v4060 = vpack.c.b16 %v3934, %v3928
    %v4061 = vpack.c.b16 %v3935, %v3929
    %v4062 = vpack.c.b16 %v3936, %v3930
    %v4063 = vpack.c.b16 %v3937, %v3931
    %v4064 = vpack.c.b16 %v3944, %v3938
    %v4065 = vpack.c.b16 %v3945, %v3939
    %v4066 = vpack.c.b16 %v3946, %v3940
    %v4067 = vpack.c.b16 %v3947, %v3941
    %v4068 = vpack.c.b16 %v3948, %v3942
    %v4069 = vpack.c.b16 %v3949, %v3943
    %v4070 = vpack.c.b16 %v3956, %v3950
    %v4071 = vpack.c.b16 %v3957, %v3951
    %v4072 = vpack.c.b16 %v3958, %v3952
    %v4073 = vpack.c.b16 %v3959, %v3953
    %v4074 = vpack.c.b16 %v3960, %v3954
    %v4075 = vpack.c.b16 %v3961, %v3955
    %v4076 = vpack.c.b16 %v3968, %v3962
    %v4077 = vpack.c.b16 %v3969, %v3963
    %v4078 = vpack.c.b16 %v3970, %v3964
    %v4079 = vpack.c.b16 %v3971, %v3965
    %v4080 = vpack.c.b16 %v3972, %v3966
    %v4081 = vpack.c.b16 %v3973, %v3967
    %v4082 = vpack.c.b16 %v3980, %v3974
    %v4083 = vpack.c.b16 %v3981, %v3975
    %v4084 = vpack.c.b16 %v3982, %v3976
    %v4085 = vpack.c.b16 %v3983, %v3977
    %v4086 = vpack.c.b16 %v3984, %v3978
    %v4087 = vpack.c.b16 %v3985, %v3979
    %v4088 = vpack.c.b16 %v3992, %v3986
    %v4089 = vpack.c.b16 %v3993, %v3987
    %v4090 = vpack.c.b16 %v3994, %v3988
    %v4091 = vpack.c.b16 %v3995, %v3989
    %v4092 = vpack.c.b16 %v3996, %v3990
    %v4093 = vpack.c.b16 %v3997, %v3991
    %v4286 = vunpack.c.l.b16 %v3601
    %v4287 = vunpack.c.h.b16 %v3601
    %v4288 = vunpack.c.l.b16 %v3602
    %v4289 = vunpack.c.h.b16 %v3602
    %v4290 = vunpack.c.l.b16 %v3603
    %v4291 = vunpack.c.h.b16 %v3603
    %v4292 = vunpack.c.l.b16 %v3604
    %v4293 = vunpack.c.h.b16 %v3604
    %v4294 = vunpack.c.l.b16 %v3605
    %v4295 = vunpack.c.h.b16 %v3605
    %v4296 = vunpack.c.l.b16 %v3606
    %v4297 = vunpack.c.h.b16 %v3606
    %v4298 = vunpack.c.l.b16 %v3607
    %v4299 = vunpack.c.h.b16 %v3607
    %v4300 = vunpack.c.l.b16 %v3608
    %v4301 = vunpack.c.h.b16 %v3608
    %v4302 = vunpack.c.l.b16 %v3609
    %v4303 = vunpack.c.h.b16 %v3609
    %v4304 = vunpack.c.l.b16 %v3610
    %v4305 = vunpack.c.h.b16 %v3610
    %v4306 = vunpack.c.l.b16 %v3611
    %v4307 = vunpack.c.h.b16 %v3611
    %v4308 = vunpack.c.l.b16 %v3612
    %v4309 = vunpack.c.h.b16 %v3612
    %v4310 = vunpack.c.l.b16 %v3613
    %v4311 = vunpack.c.h.b16 %v3613
    %v4312 = vunpack.c.l.b16 %v3614
    %v4313 = vunpack.c.h.b16 %v3614
    %v4314 = vunpack.c.l.b16 %v3615
    %v4315 = vunpack.c.h.b16 %v3615
    %v4316 = vunpack.c.l.b16 %v3616
    %v4317 = vunpack.c.h.b16 %v3616
    %v4318 = vunpack.c.l.b16 %v3617
    %v4319 = vunpack.c.h.b16 %v3617
    %v4320 = vunpack.c.l.b16 %v3618
    %v4321 = vunpack.c.h.b16 %v3618
    %v4322 = vunpack.c.l.b16 %v3619
    %v4323 = vunpack.c.h.b16 %v3619
    %v4324 = vunpack.c.l.b16 %v3620
    %v4325 = vunpack.c.h.b16 %v3620
    %v4326 = vunpack.c.l.b16 %v3621
    %v4327 = vunpack.c.h.b16 %v3621
    %v4328 = vunpack.c.l.b16 %v3622
    %v4329 = vunpack.c.h.b16 %v3622
    %v4330 = vunpack.c.l.b16 %v3623
    %v4331 = vunpack.c.h.b16 %v3623
    %v4332 = vunpack.c.l.b16 %v3624
    %v4333 = vunpack.c.h.b16 %v3624
    %v4334 = vunpack.c.l.b16 %v3625
    %v4335 = vunpack.c.h.b16 %v3625
    %v4336 = vunpack.c.l.b16 %v3626
    %v4337 = vunpack.c.h.b16 %v3626
    %v4338 = vunpack.c.l.b16 %v3627
    %v4339 = vunpack.c.h.b16 %v3627
    %v4340 = vunpack.c.l.b16 %v3628
    %v4341 = vunpack.c.h.b16 %v3628
    %v4342 = vunpack.c.l.b16 %v3629
    %v4343 = vunpack.c.h.b16 %v3629
    %v4344 = vunpack.c.l.b16 %v3630
    %v4345 = vunpack.c.h.b16 %v3630
    %v4346 = vunpack.c.l.b16 %v3631
    %v4347 = vunpack.c.h.b16 %v3631
    %v4348 = vunpack.c.l.b16 %v3632
    %v4349 = vunpack.c.h.b16 %v3632
    %v4350 = vunpack.c.l.b16 %v3633
    %v4351 = vunpack.c.h.b16 %v3633
    %v4352 = vunpack.c.l.b16 %v3634
    %v4353 = vunpack.c.h.b16 %v3634
    %v4354 = vunpack.c.l.b16 %v3635
    %v4355 = vunpack.c.h.b16 %v3635
    %v4356 = vunpack.c.l.b16 %v3636
    %v4357 = vunpack.c.h.b16 %v3636
    %v4358 = vunpack.c.l.b16 %v3637
    %v4359 = vunpack.c.h.b16 %v3637
    %v4360 = vunpack.c.l.b16 %v3638
    %v4361 = vunpack.c.h.b16 %v3638
    %v4362 = vunpack.c.l.b16 %v3639
    %v4363 = vunpack.c.h.b16 %v3639
    %v4364 = vunpack.c.l.b16 %v3640
    %v4365 = vunpack.c.h.b16 %v3640
    %v4366 = vunpack.c.l.b16 %v3641
    %v4367 = vunpack.c.h.b16 %v3641
    %v4368 = vunpack.c.l.b16 %v3642
    %v4369 = vunpack.c.h.b16 %v3642
    %v4370 = vunpack.c.l.b16 %v3643
    %v4371 = vunpack.c.h.b16 %v3643
    %v4372 = vunpack.c.l.b16 %v3644
    %v4373 = vunpack.c.h.b16 %v3644
    %v4374 = vunpack.c.l.b16 %v3645
    %v4375 = vunpack.c.h.b16 %v3645
    %v4376 = vunpack.c.l.b16 %v3646
    %v4377 = vunpack.c.h.b16 %v3646
    %v4378 = vunpack.c.l.b16 %v3647
    %v4379 = vunpack.c.h.b16 %v3647
    %v4380 = vunpack.c.l.b16 %v3648
    %v4381 = vunpack.c.h.b16 %v3648
    %v4382 = vunpack.c.l.b16 %v3649
    %v4383 = vunpack.c.h.b16 %v3649
    %v4384 = vunpack.c.l.b16 %v3650
    %v4385 = vunpack.c.h.b16 %v3650
    %v4386 = vunpack.c.l.b16 %v3651
    %v4387 = vunpack.c.h.b16 %v3651
    %v4388 = vunpack.c.l.b16 %v3652
    %v4389 = vunpack.c.h.b16 %v3652
    %v4390 = vunpack.c.l.b16 %v3653
    %v4391 = vunpack.c.h.b16 %v3653
    %v4392 = vunpack.c.l.b16 %v3654
    %v4393 = vunpack.c.h.b16 %v3654
    %v4394 = vunpack.c.l.b16 %v3655
    %v4395 = vunpack.c.h.b16 %v3655
    %v4396 = vunpack.c.l.b16 %v3656
    %v4397 = vunpack.c.h.b16 %v3656
    %v4398 = vunpack.c.l.b16 %v3657
    %v4399 = vunpack.c.h.b16 %v3657
    %v4400 = vunpack.c.l.b16 %v3658
    %v4401 = vunpack.c.h.b16 %v3658
    %v4402 = vunpack.c.l.b16 %v3659
    %v4403 = vunpack.c.h.b16 %v3659
    %v4404 = vunpack.c.l.b16 %v3660
    %v4405 = vunpack.c.h.b16 %v3660
    %v4406 = vunpack.c.l.b16 %v3661
    %v4407 = vunpack.c.h.b16 %v3661
    %v4408 = vunpack.c.l.b16 %v3662
    %v4409 = vunpack.c.h.b16 %v3662
    %v4410 = vunpack.c.l.b16 %v3663
    %v4411 = vunpack.c.h.b16 %v3663
    %v4412 = vunpack.c.l.b16 %v3664
    %v4413 = vunpack.c.h.b16 %v3664
    %v4414 = vunpack.c.l.b16 %v3665
    %v4415 = vunpack.c.h.b16 %v3665
    %v4416 = vunpack.c.l.b16 %v3666
    %v4417 = vunpack.c.h.b16 %v3666
    %v4418 = vunpack.c.l.b16 %v3667
    %v4419 = vunpack.c.h.b16 %v3667
    %v4420 = vunpack.c.l.b16 %v3668
    %v4421 = vunpack.c.h.b16 %v3668
    %v4422 = vunpack.c.l.b16 %v3669
    %v4423 = vunpack.c.h.b16 %v3669
    %v4424 = vunpack.c.l.b16 %v3670
    %v4425 = vunpack.c.h.b16 %v3670
    %v4426 = vunpack.c.l.b16 %v3671
    %v4427 = vunpack.c.h.b16 %v3671
    %v4428 = vunpack.c.l.b16 %v3672
    %v4429 = vunpack.c.h.b16 %v3672
    %v4430 = vunpack.c.l.b16 %v3673
    %v4431 = vunpack.c.h.b16 %v3673
    %v4432 = vunpack.c.l.b16 %v3674
    %v4433 = vunpack.c.h.b16 %v3674
    %v4434 = vunpack.c.l.b16 %v3675
    %v4435 = vunpack.c.h.b16 %v3675
    %v4436 = vunpack.c.l.b16 %v3676
    %v4437 = vunpack.c.h.b16 %v3676
    %v4438 = vunpack.c.l.b16 %v3677
    %v4439 = vunpack.c.h.b16 %v3677
    %v4440 = vunpack.c.l.b16 %v3678
    %v4441 = vunpack.c.h.b16 %v3678
    %v4442 = vunpack.c.l.b16 %v3679
    %v4443 = vunpack.c.h.b16 %v3679
    %v4444 = vunpack.c.l.b16 %v3680
    %v4445 = vunpack.c.h.b16 %v3680
    %v4446 = vunpack.c.l.b16 %v3681
    %v4447 = vunpack.c.h.b16 %v3681
    %v4448 = vunpack.c.l.b16 %v3682
    %v4449 = vunpack.c.h.b16 %v3682
    %v4450 = vunpack.c.l.b16 %v3683
    %v4451 = vunpack.c.h.b16 %v3683
    %v4452 = vunpack.c.l.b16 %v3684
    %v4453 = vunpack.c.h.b16 %v3684
    %v4454 = vunpack.c.l.b16 %v3685
    %v4455 = vunpack.c.h.b16 %v3685
    %v4456 = vunpack.c.l.b16 %v3686
    %v4457 = vunpack.c.h.b16 %v3686
    %v4458 = vunpack.c.l.b16 %v3687
    %v4459 = vunpack.c.h.b16 %v3687
    %v4460 = vunpack.c.l.b16 %v3688
    %v4461 = vunpack.c.h.b16 %v3688
    %v4462 = vunpack.c.l.b16 %v3689
    %v4463 = vunpack.c.h.b16 %v3689
    %v4464 = vunpack.c.l.b16 %v3690
    %v4465 = vunpack.c.h.b16 %v3690
    %v4466 = vunpack.c.l.b16 %v3691
    %v4467 = vunpack.c.h.b16 %v3691
    %v4468 = vunpack.c.l.b16 %v3692
    %v4469 = vunpack.c.h.b16 %v3692
    %v4470 = vunpack.c.l.b16 %v3693
    %v4471 = vunpack.c.h.b16 %v3693
    %v4472 = vunpack.c.l.b16 %v3694
    %v4473 = vunpack.c.h.b16 %v3694
    %v4474 = vunpack.c.l.b16 %v3695
    %v4475 = vunpack.c.h.b16 %v3695
    %v4476 = vunpack.c.l.b16 %v3696
    %v4477 = vunpack.c.h.b16 %v3696
    %v4478 = vpack.c.b16 %v4288, %v4286
    %v4479 = vpack.c.b16 %v4289, %v4287
    %v4480 = vpack.c.b16 %v4292, %v4290
    %v4481 = vpack.c.b16 %v4293, %v4291
    %v4482 = vpack.c.b16 %v4296, %v4294
    %v4483 = vpack.c.b16 %v4297, %v4295
    %v4484 = vpack.c.b16 %v4300, %v4298
    %v4485 = vpack.c.b16 %v4301, %v4299
    %v4486 = vpack.c.b16 %v4304, %v4302
    %v4487 = vpack.c.b16 %v4305, %v4303
    %v4488 = vpack.c.b16 %v4308, %v4306
    %v4489 = vpack.c.b16 %v4309, %v4307
    %v4490 = vpack.c.b16 %v4312, %v4310
    %v4491 = vpack.c.b16 %v4313, %v4311
    %v4492 = vpack.c.b16 %v4316, %v4314
    %v4493 = vpack.c.b16 %v4317, %v4315
    %v4494 = vpack.c.b16 %v4320, %v4318
    %v4495 = vpack.c.b16 %v4321, %v4319
    %v4496 = vpack.c.b16 %v4324, %v4322
    %v4497 = vpack.c.b16 %v4325, %v4323
    %v4498 = vpack.c.b16 %v4328, %v4326
    %v4499 = vpack.c.b16 %v4329, %v4327
    %v4500 = vpack.c.b16 %v4332, %v4330
    %v4501 = vpack.c.b16 %v4333, %v4331
    %v4502 = vpack.c.b16 %v4336, %v4334
    %v4503 = vpack.c.b16 %v4337, %v4335
    %v4504 = vpack.c.b16 %v4340, %v4338
    %v4505 = vpack.c.b16 %v4341, %v4339
    %v4506 = vpack.c.b16 %v4344, %v4342
    %v4507 = vpack.c.b16 %v4345, %v4343
    %v4508 = vpack.c.b16 %v4348, %v4346
    %v4509 = vpack.c.b16 %v4349, %v4347
    %v4510 = vpack.c.b16 %v4352, %v4350
    %v4511 = vpack.c.b16 %v4353, %v4351
    %v4512 = vpack.c.b16 %v4356, %v4354
    %v4513 = vpack.c.b16 %v4357, %v4355
    %v4514 = vpack.c.b16 %v4360, %v4358
    %v4515 = vpack.c.b16 %v4361, %v4359
    %v4516 = vpack.c.b16 %v4364, %v4362
    %v4517 = vpack.c.b16 %v4365, %v4363
    %v4518 = vpack.c.b16 %v4368, %v4366
    %v4519 = vpack.c.b16 %v4369, %v4367
    %v4520 = vpack.c.b16 %v4372, %v4370
    %v4521 = vpack.c.b16 %v4373, %v4371
    %v4522 = vpack.c.b16 %v4376, %v4374
    %v4523 = vpack.c.b16 %v4377, %v4375
    %v4524 = vpack.c.b16 %v4380, %v4378
    %v4525 = vpack.c.b16 %v4381, %v4379
    %v4526 = vpack.c.b16 %v4384, %v4382
    %v4527 = vpack.c.b16 %v4385, %v4383
    %v4528 = vpack.c.b16 %v4388, %v4386
    %v4529 = vpack.c.b16 %v4389, %v4387
    %v4530 = vpack.c.b16 %v4392, %v4390
    %v4531 = vpack.c.b16 %v4393, %v4391
    %v4532 = vpack.c.b16 %v4396, %v4394
    %v4533 = vpack.c.b16 %v4397, %v4395
    %v4534 = vpack.c.b16 %v4400, %v4398
    %v4535 = vpack.c.b16 %v4401, %v4399
    %v4536 = vpack.c.b16 %v4404, %v4402
    %v4537 = vpack.c.b16 %v4405, %v4403
    %v4538 = vpack.c.b16 %v4408, %v4406
    %v4539 = vpack.c.b16 %v4409, %v4407
    %v4540 = vpack.c.b16 %v4412, %v4410
    %v4541 = vpack.c.b16 %v4413, %v4411
    %v4542 = vpack.c.b16 %v4416, %v4414
    %v4543 = vpack.c.b16 %v4417, %v4415
    %v4544 = vpack.c.b16 %v4420, %v4418
    %v4545 = vpack.c.b16 %v4421, %v4419
    %v4546 = vpack.c.b16 %v4424, %v4422
    %v4547 = vpack.c.b16 %v4425, %v4423
    %v4548 = vpack.c.b16 %v4428, %v4426
    %v4549 = vpack.c.b16 %v4429, %v4427
    %v4550 = vpack.c.b16 %v4432, %v4430
    %v4551 = vpack.c.b16 %v4433, %v4431
    %v4552 = vpack.c.b16 %v4436, %v4434
    %v4553 = vpack.c.b16 %v4437, %v4435
    %v4554 = vpack.c.b16 %v4440, %v4438
    %v4555 = vpack.c.b16 %v4441, %v4439
    %v4556 = vpack.c.b16 %v4444, %v4442
    %v4557 = vpack.c.b16 %v4445, %v4443
    %v4558 = vpack.c.b16 %v4448, %v4446
    %v4559 = vpack.c.b16 %v4449, %v4447
    %v4560 = vpack.c.b16 %v4452, %v4450
    %v4561 = vpack.c.b16 %v4453, %v4451
    %v4562 = vpack.c.b16 %v4456, %v4454
    %v4563 = vpack.c.b16 %v4457, %v4455
    %v4564 = vpack.c.b16 %v4460, %v4458
    %v4565 = vpack.c.b16 %v4461, %v4459
    %v4566 = vpack.c.b16 %v4464, %v4462
    %v4567 = vpack.c.b16 %v4465, %v4463
    %v4568 = vpack.c.b16 %v4468, %v4466
    %v4569 = vpack.c.b16 %v4469, %v4467
    %v4570 = vpack.c.b16 %v4472, %v4470
    %v4571 = vpack.c.b16 %v4473, %v4471
    %v4572 = vpack.c.b16 %v4476, %v4474
    %v4573 = vpack.c.b16 %v4477, %v4475
    %4670 = vmatprep.subr.bf16.mxu0 %v4493
    %4671 = vmatpush1.bf16.msra.mxu0 %v4492
    %4672 = vmatprep.subr.bf16.mxu0 %v4491
    %4673 = vmatpush1.bf16.msra.mxu0 %v4490
    %4674 = vmatprep.subr.bf16.mxu0 %v4489
    %4675 = vmatpush1.bf16.msra.mxu0 %v4488
    %4676 = vmatprep.subr.bf16.mxu0 %v4487
    %4677 = vmatpush1.bf16.msra.mxu0 %v4486
    %4678 = vmatprep.subr.bf16.mxu0 %v4485
    %4679 = vmatpush1.bf16.msra.mxu0 %v4484
    %4680 = vmatprep.subr.bf16.mxu0 %v4483
    %4681 = vmatpush1.bf16.msra.mxu0 %v4482
    %4682 = vmatprep.subr.bf16.mxu0 %v4481
    %4683 = vmatpush1.bf16.msra.mxu0 %v4480
    %4684 = vmatprep.subr.bf16.mxu0 %v4479
    %4685 = vmatpush1.bf16.msra.mxu0 %v4478
    %4686 = vmatprep.subr.bf16.mxu0 %v4509
    %4687 = vmatpush2.bf16.msra.mxu0 %v4508
    %4688 = vmatprep.subr.bf16.mxu0 %v4507
    %4689 = vmatpush2.bf16.msra.mxu0 %v4506
    %4690 = vmatprep.subr.bf16.mxu0 %v4505
    %4691 = vmatpush2.bf16.msra.mxu0 %v4504
    %4692 = vmatprep.subr.bf16.mxu0 %v4503
    %4693 = vmatpush2.bf16.msra.mxu0 %v4502
    %4694 = vmatprep.subr.bf16.mxu0 %v4501
    %4695 = vmatpush2.bf16.msra.mxu0 %v4500
    %4696 = vmatprep.subr.bf16.mxu0 %v4499
    %4697 = vmatpush2.bf16.msra.mxu0 %v4498
    %4698 = vmatprep.subr.bf16.mxu0 %v4497
    %4699 = vmatpush2.bf16.msra.mxu0 %v4496
    %4700 = vmatprep.subr.bf16.mxu0 %v4495
    %4701 = vmatpush2.bf16.msra.mxu0 %v4494
    %4702 = vmatprep.mubr.bf16.mxu0 %v3999
    %4703 = vmatmul.mubr.bf16.gmra.mxu0 %v3998
    %v4704 = vpop.f32.mrf.mxu0
    %v4705 = vadd.f32 %v3703, %v4704
    %v4706 = vpop.f32.mrf.mxu0
    %v4707 = vadd.f32 %v3707, %v4706
    %v4708 = vpop.f32.mrf.mxu0
    %v4709 = vadd.f32 %v3703, %v4708
    %v4710 = vpop.f32.mrf.mxu0
    %v4711 = vadd.f32 %v3707, %v4710
    %4712 = vmatprep.mubr.bf16.mxu0 %v4005
    %4713 = vmatmul.mubr.bf16.gmra.mxu0 %v4004
    %v4714 = vpop.f32.mrf.mxu0
    %v4715 = vadd.f32 %v3703, %v4714
    %v4716 = vpop.f32.mrf.mxu0
    %v4717 = vadd.f32 %v3707, %v4716
    %v4718 = vpop.f32.mrf.mxu0
    %v4719 = vadd.f32 %v3703, %v4718
    %v4720 = vpop.f32.mrf.mxu0
    %v4721 = vadd.f32 %v3707, %v4720
    %4722 = vmatprep.mubr.bf16.mxu0 %v4011
    %4723 = vmatmul.mubr.bf16.gmra.mxu0 %v4010
    %v4724 = vpop.f32.mrf.mxu0
    %v4725 = vadd.f32 %v3703, %v4724
    %v4726 = vpop.f32.mrf.mxu0
    %v4727 = vadd.f32 %v3707, %v4726
    %v4728 = vpop.f32.mrf.mxu0
    %v4729 = vadd.f32 %v3703, %v4728
    %v4730 = vpop.f32.mrf.mxu0
    %v4731 = vadd.f32 %v3707, %v4730
    %4732 = vmatprep.mubr.bf16.mxu0 %v4017
    %4733 = vmatmul.mubr.bf16.gmra.mxu0 %v4016
    %v4734 = vpop.f32.mrf.mxu0
    %v4735 = vadd.f32 %v3703, %v4734
    %v4736 = vpop.f32.mrf.mxu0
    %v4737 = vadd.f32 %v3707, %v4736
    %v4738 = vpop.f32.mrf.mxu0
    %v4739 = vadd.f32 %v3703, %v4738
    %v4740 = vpop.f32.mrf.mxu0
    %v4741 = vadd.f32 %v3707, %v4740
    %4742 = vmatprep.mubr.bf16.mxu0 %v4023
    %4743 = vmatmul.mubr.bf16.gmra.mxu0 %v4022
    %v4744 = vpop.f32.mrf.mxu0
    %v4745 = vadd.f32 %v3703, %v4744
    %v4746 = vpop.f32.mrf.mxu0
    %v4747 = vadd.f32 %v3707, %v4746
    %v4748 = vpop.f32.mrf.mxu0
    %v4749 = vadd.f32 %v3703, %v4748
    %v4750 = vpop.f32.mrf.mxu0
    %v4751 = vadd.f32 %v3707, %v4750
    %4752 = vmatprep.mubr.bf16.mxu0 %v4029
    %4753 = vmatmul.mubr.bf16.gmra.mxu0 %v4028
    %v4754 = vpop.f32.mrf.mxu0
    %v4755 = vadd.f32 %v3703, %v4754
    %v4756 = vpop.f32.mrf.mxu0
    %v4757 = vadd.f32 %v3707, %v4756
    %v4758 = vpop.f32.mrf.mxu0
    %v4759 = vadd.f32 %v3703, %v4758
    %v4760 = vpop.f32.mrf.mxu0
    %v4761 = vadd.f32 %v3707, %v4760
    %4762 = vmatprep.mubr.bf16.mxu0 %v4035
    %4763 = vmatmul.mubr.bf16.gmra.mxu0 %v4034
    %v4764 = vpop.f32.mrf.mxu0
    %v4765 = vadd.f32 %v3703, %v4764
    %v4766 = vpop.f32.mrf.mxu0
    %v4767 = vadd.f32 %v3707, %v4766
    %v4768 = vpop.f32.mrf.mxu0
    %v4769 = vadd.f32 %v3703, %v4768
    %v4770 = vpop.f32.mrf.mxu0
    %v4771 = vadd.f32 %v3707, %v4770
    %4772 = vmatprep.mubr.bf16.mxu0 %v4041
    %4773 = vmatmul.mubr.bf16.gmra.mxu0 %v4040
    %v4774 = vpop.f32.mrf.mxu0
    %v4775 = vadd.f32 %v3703, %v4774
    %v4776 = vpop.f32.mrf.mxu0
    %v4777 = vadd.f32 %v3707, %v4776
    %v4778 = vpop.f32.mrf.mxu0
    %v4779 = vadd.f32 %v3703, %v4778
    %v4780 = vpop.f32.mrf.mxu0
    %v4781 = vadd.f32 %v3707, %v4780
    %4782 = vmatprep.mubr.bf16.mxu0 %v4047
    %4783 = vmatmul.mubr.bf16.gmra.mxu0 %v4046
    %v4784 = vpop.f32.mrf.mxu0
    %v4785 = vadd.f32 %v3703, %v4784
    %v4786 = vpop.f32.mrf.mxu0
    %v4787 = vadd.f32 %v3707, %v4786
    %v4788 = vpop.f32.mrf.mxu0
    %v4789 = vadd.f32 %v3703, %v4788
    %v4790 = vpop.f32.mrf.mxu0
    %v4791 = vadd.f32 %v3707, %v4790
    %4792 = vmatprep.mubr.bf16.mxu0 %v4053
    %4793 = vmatmul.mubr.bf16.gmra.mxu0 %v4052
    %v4794 = vpop.f32.mrf.mxu0
    %v4795 = vadd.f32 %v3703, %v4794
    %v4796 = vpop.f32.mrf.mxu0
    %v4797 = vadd.f32 %v3707, %v4796
    %v4798 = vpop.f32.mrf.mxu0
    %v4799 = vadd.f32 %v3703, %v4798
    %v4800 = vpop.f32.mrf.mxu0
    %v4801 = vadd.f32 %v3707, %v4800
    %4802 = vmatprep.mubr.bf16.mxu0 %v4059
    %4803 = vmatmul.mubr.bf16.gmra.mxu0 %v4058
    %v4804 = vpop.f32.mrf.mxu0
    %v4805 = vadd.f32 %v3703, %v4804
    %v4806 = vpop.f32.mrf.mxu0
    %v4807 = vadd.f32 %v3707, %v4806
    %v4808 = vpop.f32.mrf.mxu0
    %v4809 = vadd.f32 %v3703, %v4808
    %v4810 = vpop.f32.mrf.mxu0
    %v4811 = vadd.f32 %v3707, %v4810
    %4812 = vmatprep.mubr.bf16.mxu0 %v4065
    %4813 = vmatmul.mubr.bf16.gmra.mxu0 %v4064
    %v4814 = vpop.f32.mrf.mxu0
    %v4815 = vadd.f32 %v3703, %v4814
    %v4816 = vpop.f32.mrf.mxu0
    %v4817 = vadd.f32 %v3707, %v4816
    %v4818 = vpop.f32.mrf.mxu0
    %v4819 = vadd.f32 %v3703, %v4818
    %v4820 = vpop.f32.mrf.mxu0
    %v4821 = vadd.f32 %v3707, %v4820
    %4822 = vmatprep.mubr.bf16.mxu0 %v4071
    %4823 = vmatmul.mubr.bf16.gmra.mxu0 %v4070
    %v4824 = vpop.f32.mrf.mxu0
    %v4825 = vadd.f32 %v3703, %v4824
    %v4826 = vpop.f32.mrf.mxu0
    %v4827 = vadd.f32 %v3707, %v4826
    %v4828 = vpop.f32.mrf.mxu0
    %v4829 = vadd.f32 %v3703, %v4828
    %v4830 = vpop.f32.mrf.mxu0
    %v4831 = vadd.f32 %v3707, %v4830
    %4832 = vmatprep.mubr.bf16.mxu0 %v4077
    %4833 = vmatmul.mubr.bf16.gmra.mxu0 %v4076
    %v4834 = vpop.f32.mrf.mxu0
    %v4835 = vadd.f32 %v3703, %v4834
    %v4836 = vpop.f32.mrf.mxu0
    %v4837 = vadd.f32 %v3707, %v4836
    %v4838 = vpop.f32.mrf.mxu0
    %v4839 = vadd.f32 %v3703, %v4838
    %v4840 = vpop.f32.mrf.mxu0
    %v4841 = vadd.f32 %v3707, %v4840
    %4842 = vmatprep.mubr.bf16.mxu0 %v4083
    %4843 = vmatmul.mubr.bf16.gmra.mxu0 %v4082
    %v4844 = vpop.f32.mrf.mxu0
    %v4845 = vadd.f32 %v3703, %v4844
    %v4846 = vpop.f32.mrf.mxu0
    %v4847 = vadd.f32 %v3707, %v4846
    %v4848 = vpop.f32.mrf.mxu0
    %v4849 = vadd.f32 %v3703, %v4848
    %v4850 = vpop.f32.mrf.mxu0
    %v4851 = vadd.f32 %v3707, %v4850
    %4852 = vmatprep.mubr.bf16.mxu0 %v4089
    %4853 = vmatmul.mubr.bf16.gmra.mxu0 %v4088
    %v4854 = vpop.f32.mrf.mxu0
    %v4855 = vadd.f32 %v3703, %v4854
    %v4856 = vpop.f32.mrf.mxu0
    %v4857 = vadd.f32 %v3707, %v4856
    %v4858 = vpop.f32.mrf.mxu0
    %v4859 = vadd.f32 %v3703, %v4858
    %v4860 = vpop.f32.mrf.mxu0
    %v4861 = vadd.f32 %v3707, %v4860
    %4862 = vdwg.mxu0
    %4863 = vmatprep.subr.bf16.mxu0 %v4525
    %4864 = vmatpush1.bf16.msra.mxu0 %v4524
    %4865 = vmatprep.subr.bf16.mxu0 %v4523
    %4866 = vmatpush1.bf16.msra.mxu0 %v4522
    %4867 = vmatprep.subr.bf16.mxu0 %v4521
    %4868 = vmatpush1.bf16.msra.mxu0 %v4520
    %4869 = vmatprep.subr.bf16.mxu0 %v4519
    %4870 = vmatpush1.bf16.msra.mxu0 %v4518
    %4871 = vmatprep.subr.bf16.mxu0 %v4517
    %4872 = vmatpush1.bf16.msra.mxu0 %v4516
    %4873 = vmatprep.subr.bf16.mxu0 %v4515
    %4874 = vmatpush1.bf16.msra.mxu0 %v4514
    %4875 = vmatprep.subr.bf16.mxu0 %v4513
    %4876 = vmatpush1.bf16.msra.mxu0 %v4512
    %4877 = vmatprep.subr.bf16.mxu0 %v4511
    %4878 = vmatpush1.bf16.msra.mxu0 %v4510
    %4879 = vmatprep.subr.bf16.mxu0 %v4541
    %4880 = vmatpush2.bf16.msra.mxu0 %v4540
    %4881 = vmatprep.subr.bf16.mxu0 %v4539
    %4882 = vmatpush2.bf16.msra.mxu0 %v4538
    %4883 = vmatprep.subr.bf16.mxu0 %v4537
    %4884 = vmatpush2.bf16.msra.mxu0 %v4536
    %4885 = vmatprep.subr.bf16.mxu0 %v4535
    %4886 = vmatpush2.bf16.msra.mxu0 %v4534
    %4887 = vmatprep.subr.bf16.mxu0 %v4533
    %4888 = vmatpush2.bf16.msra.mxu0 %v4532
    %4889 = vmatprep.subr.bf16.mxu0 %v4531
    %4890 = vmatpush2.bf16.msra.mxu0 %v4530
    %4891 = vmatprep.subr.bf16.mxu0 %v4529
    %4892 = vmatpush2.bf16.msra.mxu0 %v4528
    %4893 = vmatprep.subr.bf16.mxu0 %v4527
    %4894 = vmatpush2.bf16.msra.mxu0 %v4526
    %4895 = vmatprep.mubr.bf16.mxu0 %v4001
    %4896 = vmatmul.mubr.bf16.gmra.mxu0 %v4000
    %v4897 = vpop.f32.mrf.mxu0
    %v4898 = vadd.f32 %v4705, %v4897
    %v4899 = vpop.f32.mrf.mxu0
    %v4900 = vadd.f32 %v4707, %v4899
    %v4901 = vpop.f32.mrf.mxu0
    %v4902 = vadd.f32 %v4709, %v4901
    %v4903 = vpop.f32.mrf.mxu0
    %v4904 = vadd.f32 %v4711, %v4903
    %4905 = vmatprep.mubr.bf16.mxu0 %v4007
    %4906 = vmatmul.mubr.bf16.gmra.mxu0 %v4006
    %v4907 = vpop.f32.mrf.mxu0
    %v4908 = vadd.f32 %v4715, %v4907
    %v4909 = vpop.f32.mrf.mxu0
    %v4910 = vadd.f32 %v4717, %v4909
    %v4911 = vpop.f32.mrf.mxu0
    %v4912 = vadd.f32 %v4719, %v4911
    %v4913 = vpop.f32.mrf.mxu0
    %v4914 = vadd.f32 %v4721, %v4913
    %4915 = vmatprep.mubr.bf16.mxu0 %v4013
    %4916 = vmatmul.mubr.bf16.gmra.mxu0 %v4012
    %v4917 = vpop.f32.mrf.mxu0
    %v4918 = vadd.f32 %v4725, %v4917
    %v4919 = vpop.f32.mrf.mxu0
    %v4920 = vadd.f32 %v4727, %v4919
    %v4921 = vpop.f32.mrf.mxu0
    %v4922 = vadd.f32 %v4729, %v4921
    %v4923 = vpop.f32.mrf.mxu0
    %v4924 = vadd.f32 %v4731, %v4923
    %4925 = vmatprep.mubr.bf16.mxu0 %v4019
    %4926 = vmatmul.mubr.bf16.gmra.mxu0 %v4018
    %v4927 = vpop.f32.mrf.mxu0
    %v4928 = vadd.f32 %v4735, %v4927
    %v4929 = vpop.f32.mrf.mxu0
    %v4930 = vadd.f32 %v4737, %v4929
    %v4931 = vpop.f32.mrf.mxu0
    %v4932 = vadd.f32 %v4739, %v4931
    %v4933 = vpop.f32.mrf.mxu0
    %v4934 = vadd.f32 %v4741, %v4933
    %4935 = vmatprep.mubr.bf16.mxu0 %v4025
    %4936 = vmatmul.mubr.bf16.gmra.mxu0 %v4024
    %v4937 = vpop.f32.mrf.mxu0
    %v4938 = vadd.f32 %v4745, %v4937
    %v4939 = vpop.f32.mrf.mxu0
    %v4940 = vadd.f32 %v4747, %v4939
    %v4941 = vpop.f32.mrf.mxu0
    %v4942 = vadd.f32 %v4749, %v4941
    %v4943 = vpop.f32.mrf.mxu0
    %v4944 = vadd.f32 %v4751, %v4943
    %4945 = vmatprep.mubr.bf16.mxu0 %v4031
    %4946 = vmatmul.mubr.bf16.gmra.mxu0 %v4030
    %v4947 = vpop.f32.mrf.mxu0
    %v4948 = vadd.f32 %v4755, %v4947
    %v4949 = vpop.f32.mrf.mxu0
    %v4950 = vadd.f32 %v4757, %v4949
    %v4951 = vpop.f32.mrf.mxu0
    %v4952 = vadd.f32 %v4759, %v4951
    %v4953 = vpop.f32.mrf.mxu0
    %v4954 = vadd.f32 %v4761, %v4953
    %4955 = vmatprep.mubr.bf16.mxu0 %v4037
    %4956 = vmatmul.mubr.bf16.gmra.mxu0 %v4036
    %v4957 = vpop.f32.mrf.mxu0
    %v4958 = vadd.f32 %v4765, %v4957
    %v4959 = vpop.f32.mrf.mxu0
    %v4960 = vadd.f32 %v4767, %v4959
    %v4961 = vpop.f32.mrf.mxu0
    %v4962 = vadd.f32 %v4769, %v4961
    %v4963 = vpop.f32.mrf.mxu0
    %v4964 = vadd.f32 %v4771, %v4963
    %4965 = vmatprep.mubr.bf16.mxu0 %v4043
    %4966 = vmatmul.mubr.bf16.gmra.mxu0 %v4042
    %v4967 = vpop.f32.mrf.mxu0
    %v4968 = vadd.f32 %v4775, %v4967
    %v4969 = vpop.f32.mrf.mxu0
    %v4970 = vadd.f32 %v4777, %v4969
    %v4971 = vpop.f32.mrf.mxu0
    %v4972 = vadd.f32 %v4779, %v4971
    %v4973 = vpop.f32.mrf.mxu0
    %v4974 = vadd.f32 %v4781, %v4973
    %4975 = vmatprep.mubr.bf16.mxu0 %v4049
    %4976 = vmatmul.mubr.bf16.gmra.mxu0 %v4048
    %v4977 = vpop.f32.mrf.mxu0
    %v4978 = vadd.f32 %v4785, %v4977
    %v4979 = vpop.f32.mrf.mxu0
    %v4980 = vadd.f32 %v4787, %v4979
    %v4981 = vpop.f32.mrf.mxu0
    %v4982 = vadd.f32 %v4789, %v4981
    %v4983 = vpop.f32.mrf.mxu0
    %v4984 = vadd.f32 %v4791, %v4983
    %4985 = vmatprep.mubr.bf16.mxu0 %v4055
    %4986 = vmatmul.mubr.bf16.gmra.mxu0 %v4054
    %v4987 = vpop.f32.mrf.mxu0
    %v4988 = vadd.f32 %v4795, %v4987
    %v4989 = vpop.f32.mrf.mxu0
    %v4990 = vadd.f32 %v4797, %v4989
    %v4991 = vpop.f32.mrf.mxu0
    %v4992 = vadd.f32 %v4799, %v4991
    %v4993 = vpop.f32.mrf.mxu0
    %v4994 = vadd.f32 %v4801, %v4993
    %4995 = vmatprep.mubr.bf16.mxu0 %v4061
    %4996 = vmatmul.mubr.bf16.gmra.mxu0 %v4060
    %v4997 = vpop.f32.mrf.mxu0
    %v4998 = vadd.f32 %v4805, %v4997
    %v4999 = vpop.f32.mrf.mxu0
    %v5000 = vadd.f32 %v4807, %v4999
    %v5001 = vpop.f32.mrf.mxu0
    %v5002 = vadd.f32 %v4809, %v5001
    %v5003 = vpop.f32.mrf.mxu0
    %v5004 = vadd.f32 %v4811, %v5003
    %5005 = vmatprep.mubr.bf16.mxu0 %v4067
    %5006 = vmatmul.mubr.bf16.gmra.mxu0 %v4066
    %v5007 = vpop.f32.mrf.mxu0
    %v5008 = vadd.f32 %v4815, %v5007
    %v5009 = vpop.f32.mrf.mxu0
    %v5010 = vadd.f32 %v4817, %v5009
    %v5011 = vpop.f32.mrf.mxu0
    %v5012 = vadd.f32 %v4819, %v5011
    %v5013 = vpop.f32.mrf.mxu0
    %v5014 = vadd.f32 %v4821, %v5013
    %5015 = vmatprep.mubr.bf16.mxu0 %v4073
    %5016 = vmatmul.mubr.bf16.gmra.mxu0 %v4072
    %v5017 = vpop.f32.mrf.mxu0
    %v5018 = vadd.f32 %v4825, %v5017
    %v5019 = vpop.f32.mrf.mxu0
    %v5020 = vadd.f32 %v4827, %v5019
    %v5021 = vpop.f32.mrf.mxu0
    %v5022 = vadd.f32 %v4829, %v5021
    %v5023 = vpop.f32.mrf.mxu0
    %v5024 = vadd.f32 %v4831, %v5023
    %5025 = vmatprep.mubr.bf16.mxu0 %v4079
    %5026 = vmatmul.mubr.bf16.gmra.mxu0 %v4078
    %v5027 = vpop.f32.mrf.mxu0
    %v5028 = vadd.f32 %v4835, %v5027
    %v5029 = vpop.f32.mrf.mxu0
    %v5030 = vadd.f32 %v4837, %v5029
    %v5031 = vpop.f32.mrf.mxu0
    %v5032 = vadd.f32 %v4839, %v5031
    %v5033 = vpop.f32.mrf.mxu0
    %v5034 = vadd.f32 %v4841, %v5033
    %5035 = vmatprep.mubr.bf16.mxu0 %v4085
    %5036 = vmatmul.mubr.bf16.gmra.mxu0 %v4084
    %v5037 = vpop.f32.mrf.mxu0
    %v5038 = vadd.f32 %v4845, %v5037
    %v5039 = vpop.f32.mrf.mxu0
    %v5040 = vadd.f32 %v4847, %v5039
    %v5041 = vpop.f32.mrf.mxu0
    %v5042 = vadd.f32 %v4849, %v5041
    %v5043 = vpop.f32.mrf.mxu0
    %v5044 = vadd.f32 %v4851, %v5043
    %5045 = vmatprep.mubr.bf16.mxu0 %v4091
    %5046 = vmatmul.mubr.bf16.gmra.mxu0 %v4090
    %v5047 = vpop.f32.mrf.mxu0
    %v5048 = vadd.f32 %v4855, %v5047
    %v5049 = vpop.f32.mrf.mxu0
    %v5050 = vadd.f32 %v4857, %v5049
    %v5051 = vpop.f32.mrf.mxu0
    %v5052 = vadd.f32 %v4859, %v5051
    %v5053 = vpop.f32.mrf.mxu0
    %v5054 = vadd.f32 %v4861, %v5053
    %5055 = vdwg.mxu0
    %5056 = vmatprep.subr.bf16.mxu0 %v4557
    %5057 = vmatpush1.bf16.msra.mxu0 %v4556
    %5058 = vmatprep.subr.bf16.mxu0 %v4555
    %5059 = vmatpush1.bf16.msra.mxu0 %v4554
    %5060 = vmatprep.subr.bf16.mxu0 %v4553
    %5061 = vmatpush1.bf16.msra.mxu0 %v4552
    %5062 = vmatprep.subr.bf16.mxu0 %v4551
    %5063 = vmatpush1.bf16.msra.mxu0 %v4550
    %5064 = vmatprep.subr.bf16.mxu0 %v4549
    %5065 = vmatpush1.bf16.msra.mxu0 %v4548
    %5066 = vmatprep.subr.bf16.mxu0 %v4547
    %5067 = vmatpush1.bf16.msra.mxu0 %v4546
    %5068 = vmatprep.subr.bf16.mxu0 %v4545
    %5069 = vmatpush1.bf16.msra.mxu0 %v4544
    %5070 = vmatprep.subr.bf16.mxu0 %v4543
    %5071 = vmatpush1.bf16.msra.mxu0 %v4542
    %5072 = vmatprep.subr.bf16.mxu0 %v4573
    %5073 = vmatpush2.bf16.msra.mxu0 %v4572
    %5074 = vmatprep.subr.bf16.mxu0 %v4571
    %5075 = vmatpush2.bf16.msra.mxu0 %v4570
    %5076 = vmatprep.subr.bf16.mxu0 %v4569
    %5077 = vmatpush2.bf16.msra.mxu0 %v4568
    %5078 = vmatprep.subr.bf16.mxu0 %v4567
    %5079 = vmatpush2.bf16.msra.mxu0 %v4566
    %5080 = vmatprep.subr.bf16.mxu0 %v4565
    %5081 = vmatpush2.bf16.msra.mxu0 %v4564
    %5082 = vmatprep.subr.bf16.mxu0 %v4563
    %5083 = vmatpush2.bf16.msra.mxu0 %v4562
    %5084 = vmatprep.subr.bf16.mxu0 %v4561
    %5085 = vmatpush2.bf16.msra.mxu0 %v4560
    %5086 = vmatprep.subr.bf16.mxu0 %v4559
    %5087 = vmatpush2.bf16.msra.mxu0 %v4558
    %5088 = vmatprep.mubr.bf16.mxu0 %v4003
    %5089 = vmatmul.mubr.bf16.gmra.mxu0 %v4002
    %v5090 = vpop.f32.mrf.mxu0
    %v5091 = vadd.f32 %v4898, %v5090
    %v5092 = vpop.f32.mrf.mxu0
    %v5093 = vadd.f32 %v4900, %v5092
    %v5094 = vpop.f32.mrf.mxu0
    %v5095 = vadd.f32 %v4902, %v5094
    %v5096 = vpop.f32.mrf.mxu0
    %v5097 = vadd.f32 %v4904, %v5096
    %5098 = vmatprep.mubr.bf16.mxu0 %v4009
    %5099 = vmatmul.mubr.bf16.gmra.mxu0 %v4008
    %v5100 = vpop.f32.mrf.mxu0
    %v5101 = vadd.f32 %v4908, %v5100
    %v5102 = vpop.f32.mrf.mxu0
    %v5103 = vadd.f32 %v4910, %v5102
    %v5104 = vpop.f32.mrf.mxu0
    %v5105 = vadd.f32 %v4912, %v5104
    %v5106 = vpop.f32.mrf.mxu0
    %v5107 = vadd.f32 %v4914, %v5106
    %5108 = vmatprep.mubr.bf16.mxu0 %v4015
    %5109 = vmatmul.mubr.bf16.gmra.mxu0 %v4014
    %v5110 = vpop.f32.mrf.mxu0
    %v5111 = vadd.f32 %v4918, %v5110
    %v5112 = vpop.f32.mrf.mxu0
    %v5113 = vadd.f32 %v4920, %v5112
    %v5114 = vpop.f32.mrf.mxu0
    %v5115 = vadd.f32 %v4922, %v5114
    %v5116 = vpop.f32.mrf.mxu0
    %v5117 = vadd.f32 %v4924, %v5116
    %5118 = vmatprep.mubr.bf16.mxu0 %v4021
    %5119 = vmatmul.mubr.bf16.gmra.mxu0 %v4020
    %v5120 = vpop.f32.mrf.mxu0
    %v5121 = vadd.f32 %v4928, %v5120
    %v5122 = vpop.f32.mrf.mxu0
    %v5123 = vadd.f32 %v4930, %v5122
    %v5124 = vpop.f32.mrf.mxu0
    %v5125 = vadd.f32 %v4932, %v5124
    %v5126 = vpop.f32.mrf.mxu0
    %v5127 = vadd.f32 %v4934, %v5126
    %5128 = vmatprep.mubr.bf16.mxu0 %v4027
    %5129 = vmatmul.mubr.bf16.gmra.mxu0 %v4026
    %v5130 = vpop.f32.mrf.mxu0
    %v5131 = vadd.f32 %v4938, %v5130
    %v5132 = vpop.f32.mrf.mxu0
    %v5133 = vadd.f32 %v4940, %v5132
    %v5134 = vpop.f32.mrf.mxu0
    %v5135 = vadd.f32 %v4942, %v5134
    %v5136 = vpop.f32.mrf.mxu0
    %v5137 = vadd.f32 %v4944, %v5136
    %5138 = vmatprep.mubr.bf16.mxu0 %v4033
    %5139 = vmatmul.mubr.bf16.gmra.mxu0 %v4032
    %v5140 = vpop.f32.mrf.mxu0
    %v5141 = vadd.f32 %v4948, %v5140
    %v5142 = vpop.f32.mrf.mxu0
    %v5143 = vadd.f32 %v4950, %v5142
    %v5144 = vpop.f32.mrf.mxu0
    %v5145 = vadd.f32 %v4952, %v5144
    %v5146 = vpop.f32.mrf.mxu0
    %v5147 = vadd.f32 %v4954, %v5146
    %5148 = vmatprep.mubr.bf16.mxu0 %v4039
    %5149 = vmatmul.mubr.bf16.gmra.mxu0 %v4038
    %v5150 = vpop.f32.mrf.mxu0
    %v5151 = vadd.f32 %v4958, %v5150
    %v5152 = vpop.f32.mrf.mxu0
    %v5153 = vadd.f32 %v4960, %v5152
    %v5154 = vpop.f32.mrf.mxu0
    %v5155 = vadd.f32 %v4962, %v5154
    %v5156 = vpop.f32.mrf.mxu0
    %v5157 = vadd.f32 %v4964, %v5156
    %5158 = vmatprep.mubr.bf16.mxu0 %v4045
    %5159 = vmatmul.mubr.bf16.gmra.mxu0 %v4044
    %v5160 = vpop.f32.mrf.mxu0
    %v5161 = vadd.f32 %v4968, %v5160
    %v5162 = vpop.f32.mrf.mxu0
    %v5163 = vadd.f32 %v4970, %v5162
    %v5164 = vpop.f32.mrf.mxu0
    %v5165 = vadd.f32 %v4972, %v5164
    %v5166 = vpop.f32.mrf.mxu0
    %v5167 = vadd.f32 %v4974, %v5166
    %5168 = vmatprep.mubr.bf16.mxu0 %v4051
    %5169 = vmatmul.mubr.bf16.gmra.mxu0 %v4050
    %v5170 = vpop.f32.mrf.mxu0
    %v5171 = vadd.f32 %v4978, %v5170
    %v5172 = vpop.f32.mrf.mxu0
    %v5173 = vadd.f32 %v4980, %v5172
    %v5174 = vpop.f32.mrf.mxu0
    %v5175 = vadd.f32 %v4982, %v5174
    %v5176 = vpop.f32.mrf.mxu0
    %v5177 = vadd.f32 %v4984, %v5176
    %5178 = vmatprep.mubr.bf16.mxu0 %v4057
    %5179 = vmatmul.mubr.bf16.gmra.mxu0 %v4056
    %v5180 = vpop.f32.mrf.mxu0
    %v5181 = vadd.f32 %v4988, %v5180
    %v5182 = vpop.f32.mrf.mxu0
    %v5183 = vadd.f32 %v4990, %v5182
    %v5184 = vpop.f32.mrf.mxu0
    %v5185 = vadd.f32 %v4992, %v5184
    %v5186 = vpop.f32.mrf.mxu0
    %v5187 = vadd.f32 %v4994, %v5186
    %5188 = vmatprep.mubr.bf16.mxu0 %v4063
    %5189 = vmatmul.mubr.bf16.gmra.mxu0 %v4062
    %v5190 = vpop.f32.mrf.mxu0
    %v5191 = vadd.f32 %v4998, %v5190
    %v5192 = vpop.f32.mrf.mxu0
    %v5193 = vadd.f32 %v5000, %v5192
    %v5194 = vpop.f32.mrf.mxu0
    %v5195 = vadd.f32 %v5002, %v5194
    %v5196 = vpop.f32.mrf.mxu0
    %v5197 = vadd.f32 %v5004, %v5196
    %5198 = vmatprep.mubr.bf16.mxu0 %v4069
    %5199 = vmatmul.mubr.bf16.gmra.mxu0 %v4068
    %v5200 = vpop.f32.mrf.mxu0
    %v5201 = vadd.f32 %v5008, %v5200
    %v5202 = vpop.f32.mrf.mxu0
    %v5203 = vadd.f32 %v5010, %v5202
    %v5204 = vpop.f32.mrf.mxu0
    %v5205 = vadd.f32 %v5012, %v5204
    %v5206 = vpop.f32.mrf.mxu0
    %v5207 = vadd.f32 %v5014, %v5206
    %5208 = vmatprep.mubr.bf16.mxu0 %v4075
    %5209 = vmatmul.mubr.bf16.gmra.mxu0 %v4074
    %v5210 = vpop.f32.mrf.mxu0
    %v5211 = vadd.f32 %v5018, %v5210
    %v5212 = vpop.f32.mrf.mxu0
    %v5213 = vadd.f32 %v5020, %v5212
    %v5214 = vpop.f32.mrf.mxu0
    %v5215 = vadd.f32 %v5022, %v5214
    %v5216 = vpop.f32.mrf.mxu0
    %v5217 = vadd.f32 %v5024, %v5216
    %5218 = vmatprep.mubr.bf16.mxu0 %v4081
    %5219 = vmatmul.mubr.bf16.gmra.mxu0 %v4080
    %v5220 = vpop.f32.mrf.mxu0
    %v5221 = vadd.f32 %v5028, %v5220
    %v5222 = vpop.f32.mrf.mxu0
    %v5223 = vadd.f32 %v5030, %v5222
    %v5224 = vpop.f32.mrf.mxu0
    %v5225 = vadd.f32 %v5032, %v5224
    %v5226 = vpop.f32.mrf.mxu0
    %v5227 = vadd.f32 %v5034, %v5226
    %5228 = vmatprep.mubr.bf16.mxu0 %v4087
    %5229 = vmatmul.mubr.bf16.gmra.mxu0 %v4086
    %v5230 = vpop.f32.mrf.mxu0
    %v5231 = vadd.f32 %v5038, %v5230
    %v5232 = vpop.f32.mrf.mxu0
    %v5233 = vadd.f32 %v5040, %v5232
    %v5234 = vpop.f32.mrf.mxu0
    %v5235 = vadd.f32 %v5042, %v5234
    %v5236 = vpop.f32.mrf.mxu0
    %v5237 = vadd.f32 %v5044, %v5236
    %5238 = vmatprep.mubr.bf16.mxu0 %v4093
    %5239 = vmatmul.mubr.bf16.gmra.mxu0 %v4092
    %v5240 = vpop.f32.mrf.mxu0
    %v5241 = vadd.f32 %v5048, %v5240
    %v5242 = vpop.f32.mrf.mxu0
    %v5243 = vadd.f32 %v5050, %v5242
    %v5244 = vpop.f32.mrf.mxu0
    %v5245 = vadd.f32 %v5052, %v5244
    %v5246 = vpop.f32.mrf.mxu0
    %v5247 = vadd.f32 %v5054, %v5246
    %5248 = vdwg.mxu0
    %v5249 = vmul.f32 %v5091, 0.2
    %v5250 = vmul.f32 %v5093, 0.2
    %v5251 = vmul.f32 %v5095, 0.2
    %v5252 = vmul.f32 %v5097, 0.2
    %v5253 = vmul.f32 %v5101, 0.2
    %v5254 = vmul.f32 %v5103, 0.2
    %v5255 = vmul.f32 %v5105, 0.2
    %v5256 = vmul.f32 %v5107, 0.2
    %v5257 = vmul.f32 %v5111, 0.2
    %v5258 = vmul.f32 %v5113, 0.2
    %v5259 = vmul.f32 %v5115, 0.2
    %v5260 = vmul.f32 %v5117, 0.2
    %v5261 = vmul.f32 %v5121, 0.2
    %v5262 = vmul.f32 %v5123, 0.2
    %v5263 = vmul.f32 %v5125, 0.2
    %v5264 = vmul.f32 %v5127, 0.2
    %v5265 = vmul.f32 %v5131, 0.2
    %v5266 = vmul.f32 %v5133, 0.2
    %v5267 = vmul.f32 %v5135, 0.2
    %v5268 = vmul.f32 %v5137, 0.2
    %v5269 = vmul.f32 %v5141, 0.2
    %v5270 = vmul.f32 %v5143, 0.2
    %v5271 = vmul.f32 %v5145, 0.2
    %v5272 = vmul.f32 %v5147, 0.2
    %v5273 = vmul.f32 %v5151, 0.2
    %v5274 = vmul.f32 %v5153, 0.2
    %v5275 = vmul.f32 %v5155, 0.2
    %v5276 = vmul.f32 %v5157, 0.2
    %v5277 = vmul.f32 %v5161, 0.2
    %v5278 = vmul.f32 %v5163, 0.2
    %v5279 = vmul.f32 %v5165, 0.2
    %v5280 = vmul.f32 %v5167, 0.2
    %v5281 = vmul.f32 %v5171, 0.2
    %v5282 = vmul.f32 %v5173, 0.2
    %v5283 = vmul.f32 %v5175, 0.2
    %v5284 = vmul.f32 %v5177, 0.2
    %v5285 = vmul.f32 %v5181, 0.2
    %v5286 = vmul.f32 %v5183, 0.2
    %v5287 = vmul.f32 %v5185, 0.2
    %v5288 = vmul.f32 %v5187, 0.2
    %v5289 = vmul.f32 %v5191, 0.2
    %v5290 = vmul.f32 %v5193, 0.2
    %v5291 = vmul.f32 %v5195, 0.2
    %v5292 = vmul.f32 %v5197, 0.2
    %v5293 = vmul.f32 %v5201, 0.2
    %v5294 = vmul.f32 %v5203, 0.2
    %v5295 = vmul.f32 %v5205, 0.2
    %v5296 = vmul.f32 %v5207, 0.2
    %v5297 = vmul.f32 %v5211, 0.2
    %v5298 = vmul.f32 %v5213, 0.2
    %v5299 = vmul.f32 %v5215, 0.2
    %v5300 = vmul.f32 %v5217, 0.2
    %v5301 = vmul.f32 %v5221, 0.2
    %v5302 = vmul.f32 %v5223, 0.2
    %v5303 = vmul.f32 %v5225, 0.2
    %v5304 = vmul.f32 %v5227, 0.2
    %v5305 = vmul.f32 %v5231, 0.2
    %v5306 = vmul.f32 %v5233, 0.2
    %v5307 = vmul.f32 %v5235, 0.2
    %v5308 = vmul.f32 %v5237, 0.2
    %v5309 = vmul.f32 %v5241, 0.2
    %v5310 = vmul.f32 %v5243, 0.2
    %v5311 = vmul.f32 %v5245, 0.2
    %v5312 = vmul.f32 %v5247, 0.2
    %v5313 = vmax.f32 %v5091, %v5249
    %v5314 = vmax.f32 %v5093, %v5250
    %v5315 = vmax.f32 %v5095, %v5251
    %v5316 = vmax.f32 %v5097, %v5252
    %v5317 = vmax.f32 %v5101, %v5253
    %v5318 = vmax.f32 %v5103, %v5254
    %v5319 = vmax.f32 %v5105, %v5255
    %v5320 = vmax.f32 %v5107, %v5256
    %v5321 = vmax.f32 %v5111, %v5257
    %v5322 = vmax.f32 %v5113, %v5258
    %v5323 = vmax.f32 %v5115, %v5259
    %v5324 = vmax.f32 %v5117, %v5260
    %v5325 = vmax.f32 %v5121, %v5261
    %v5326 = vmax.f32 %v5123, %v5262
    %v5327 = vmax.f32 %v5125, %v5263
    %v5328 = vmax.f32 %v5127, %v5264
    %v5329 = vmax.f32 %v5131, %v5265
    %v5330 = vmax.f32 %v5133, %v5266
    %v5331 = vmax.f32 %v5135, %v5267
    %v5332 = vmax.f32 %v5137, %v5268
    %v5333 = vmax.f32 %v5141, %v5269
    %v5334 = vmax.f32 %v5143, %v5270
    %v5335 = vmax.f32 %v5145, %v5271
    %v5336 = vmax.f32 %v5147, %v5272
    %v5337 = vmax.f32 %v5151, %v5273
    %v5338 = vmax.f32 %v5153, %v5274
    %v5339 = vmax.f32 %v5155, %v5275
    %v5340 = vmax.f32 %v5157, %v5276
    %v5341 = vmax.f32 %v5161, %v5277
    %v5342 = vmax.f32 %v5163, %v5278
    %v5343 = vmax.f32 %v5165, %v5279
    %v5344 = vmax.f32 %v5167, %v5280
    %v5345 = vmax.f32 %v5171, %v5281
    %v5346 = vmax.f32 %v5173, %v5282
    %v5347 = vmax.f32 %v5175, %v5283
    %v5348 = vmax.f32 %v5177, %v5284
    %v5349 = vmax.f32 %v5181, %v5285
    %v5350 = vmax.f32 %v5183, %v5286
    %v5351 = vmax.f32 %v5185, %v5287
    %v5352 = vmax.f32 %v5187, %v5288
    %v5353 = vmax.f32 %v5191, %v5289
    %v5354 = vmax.f32 %v5193, %v5290
    %v5355 = vmax.f32 %v5195, %v5291
    %v5356 = vmax.f32 %v5197, %v5292
    %v5357 = vmax.f32 %v5201, %v5293
    %v5358 = vmax.f32 %v5203, %v5294
    %v5359 = vmax.f32 %v5205, %v5295
    %v5360 = vmax.f32 %v5207, %v5296
    %v5361 = vmax.f32 %v5211, %v5297
    %v5362 = vmax.f32 %v5213, %v5298
    %v5363 = vmax.f32 %v5215, %v5299
    %v5364 = vmax.f32 %v5217, %v5300
    %v5365 = vmax.f32 %v5221, %v5301
    %v5366 = vmax.f32 %v5223, %v5302
    %v5367 = vmax.f32 %v5225, %v5303
    %v5368 = vmax.f32 %v5227, %v5304
    %v5369 = vmax.f32 %v5231, %v5305
    %v5370 = vmax.f32 %v5233, %v5306
    %v5371 = vmax.f32 %v5235, %v5307
    %v5372 = vmax.f32 %v5237, %v5308
    %v5373 = vmax.f32 %v5241, %v5309
    %v5374 = vmax.f32 %v5243, %v5310
    %v5375 = vmax.f32 %v5245, %v5311
    %v5376 = vmax.f32 %v5247, %v5312
    %v5377 = vld [vmem:[%s7 + $0x6] sm:$0x3]
    %v5379 = vlaneseq
    %v5380 = vshrl.u32 %v5379, 7
    %v5381 = vsub.s32 0, %v5380
    %v5382 = vrot.slane %v5377, %v5381
    %v5383 = vlaneseq
    %v5384 = vshrl.u32 %v5383, 7
    %v5385 = vsub.s32 1, %v5384
    %v5386 = vrot.slane %v5377, %v5385
    %v5389 = vmul.f32 %v5313, %v5382
    %v5390 = vmul.f32 %v5314, %v5386
    %v5391 = vmul.f32 %v5315, %v5382
    %v5392 = vmul.f32 %v5316, %v5386
    %v5393 = vmul.f32 %v5317, %v5382
    %v5394 = vmul.f32 %v5318, %v5386
    %v5395 = vmul.f32 %v5319, %v5382
    %v5396 = vmul.f32 %v5320, %v5386
    %v5397 = vmul.f32 %v5321, %v5382
    %v5398 = vmul.f32 %v5322, %v5386
    %v5399 = vmul.f32 %v5323, %v5382
    %v5400 = vmul.f32 %v5324, %v5386
    %v5401 = vmul.f32 %v5325, %v5382
    %v5402 = vmul.f32 %v5326, %v5386
    %v5403 = vmul.f32 %v5327, %v5382
    %v5404 = vmul.f32 %v5328, %v5386
    %v5405 = vmul.f32 %v5329, %v5382
    %v5406 = vmul.f32 %v5330, %v5386
    %v5407 = vmul.f32 %v5331, %v5382
    %v5408 = vmul.f32 %v5332, %v5386
    %v5409 = vmul.f32 %v5333, %v5382
    %v5410 = vmul.f32 %v5334, %v5386
    %v5411 = vmul.f32 %v5335, %v5382
    %v5412 = vmul.f32 %v5336, %v5386
    %v5413 = vmul.f32 %v5337, %v5382
    %v5414 = vmul.f32 %v5338, %v5386
    %v5415 = vmul.f32 %v5339, %v5382
    %v5416 = vmul.f32 %v5340, %v5386
    %v5417 = vmul.f32 %v5341, %v5382
    %v5418 = vmul.f32 %v5342, %v5386
    %v5419 = vmul.f32 %v5343, %v5382
    %v5420 = vmul.f32 %v5344, %v5386
    %v5421 = vmul.f32 %v5345, %v5382
    %v5422 = vmul.f32 %v5346, %v5386
    %v5423 = vmul.f32 %v5347, %v5382
    %v5424 = vmul.f32 %v5348, %v5386
    %v5425 = vmul.f32 %v5349, %v5382
    %v5426 = vmul.f32 %v5350, %v5386
    %v5427 = vmul.f32 %v5351, %v5382
    %v5428 = vmul.f32 %v5352, %v5386
    %v5429 = vmul.f32 %v5353, %v5382
    %v5430 = vmul.f32 %v5354, %v5386
    %v5431 = vmul.f32 %v5355, %v5382
    %v5432 = vmul.f32 %v5356, %v5386
    %v5433 = vmul.f32 %v5357, %v5382
    %v5434 = vmul.f32 %v5358, %v5386
    %v5435 = vmul.f32 %v5359, %v5382
    %v5436 = vmul.f32 %v5360, %v5386
    %v5437 = vmul.f32 %v5361, %v5382
    %v5438 = vmul.f32 %v5362, %v5386
    %v5439 = vmul.f32 %v5363, %v5382
    %v5440 = vmul.f32 %v5364, %v5386
    %v5441 = vmul.f32 %v5365, %v5382
    %v5442 = vmul.f32 %v5366, %v5386
    %v5443 = vmul.f32 %v5367, %v5382
    %v5444 = vmul.f32 %v5368, %v5386
    %v5445 = vmul.f32 %v5369, %v5382
    %v5446 = vmul.f32 %v5370, %v5386
    %v5447 = vmul.f32 %v5371, %v5382
    %v5448 = vmul.f32 %v5372, %v5386
    %v5449 = vmul.f32 %v5373, %v5382
    %v5450 = vmul.f32 %v5374, %v5386
    %v5451 = vmul.f32 %v5375, %v5382
    %v5452 = vmul.f32 %v5376, %v5386
    %v5453 = vadd.f32 %v3217, %v5389
    %v5454 = vadd.f32 %v3218, %v5390
    %v5455 = vadd.f32 %v3219, %v5391
    %v5456 = vadd.f32 %v3220, %v5392
    %v5457 = vadd.f32 %v3221, %v5393
    %v5458 = vadd.f32 %v3222, %v5394
    %v5459 = vadd.f32 %v3223, %v5395
    %v5460 = vadd.f32 %v3224, %v5396
    %v5461 = vadd.f32 %v3225, %v5397
    %v5462 = vadd.f32 %v3226, %v5398
    %v5463 = vadd.f32 %v3227, %v5399
    %v5464 = vadd.f32 %v3228, %v5400
    %v5465 = vadd.f32 %v3229, %v5401
    %v5466 = vadd.f32 %v3230, %v5402
    %v5467 = vadd.f32 %v3231, %v5403
    %v5468 = vadd.f32 %v3232, %v5404
    %v5469 = vadd.f32 %v3233, %v5405
    %v5470 = vadd.f32 %v3234, %v5406
    %v5471 = vadd.f32 %v3235, %v5407
    %v5472 = vadd.f32 %v3236, %v5408
    %v5473 = vadd.f32 %v3237, %v5409
    %v5474 = vadd.f32 %v3238, %v5410
    %v5475 = vadd.f32 %v3239, %v5411
    %v5476 = vadd.f32 %v3240, %v5412
    %v5477 = vadd.f32 %v3241, %v5413
    %v5478 = vadd.f32 %v3242, %v5414
    %v5479 = vadd.f32 %v3243, %v5415
    %v5480 = vadd.f32 %v3244, %v5416
    %v5481 = vadd.f32 %v3245, %v5417
    %v5482 = vadd.f32 %v3246, %v5418
    %v5483 = vadd.f32 %v3247, %v5419
    %v5484 = vadd.f32 %v3248, %v5420
    %v5485 = vadd.f32 %v3249, %v5421
    %v5486 = vadd.f32 %v3250, %v5422
    %v5487 = vadd.f32 %v3251, %v5423
    %v5488 = vadd.f32 %v3252, %v5424
    %v5489 = vadd.f32 %v3253, %v5425
    %v5490 = vadd.f32 %v3254, %v5426
    %v5491 = vadd.f32 %v3255, %v5427
    %v5492 = vadd.f32 %v3256, %v5428
    %v5493 = vadd.f32 %v3257, %v5429
    %v5494 = vadd.f32 %v3258, %v5430
    %v5495 = vadd.f32 %v3259, %v5431
    %v5496 = vadd.f32 %v3260, %v5432
    %v5497 = vadd.f32 %v3261, %v5433
    %v5498 = vadd.f32 %v3262, %v5434
    %v5499 = vadd.f32 %v3263, %v5435
    %v5500 = vadd.f32 %v3264, %v5436
    %v5501 = vadd.f32 %v3265, %v5437
    %v5502 = vadd.f32 %v3266, %v5438
    %v5503 = vadd.f32 %v3267, %v5439
    %v5504 = vadd.f32 %v3268, %v5440
    %v5505 = vadd.f32 %v3269, %v5441
    %v5506 = vadd.f32 %v3270, %v5442
    %v5507 = vadd.f32 %v3271, %v5443
    %v5508 = vadd.f32 %v3272, %v5444
    %v5509 = vadd.f32 %v3273, %v5445
    %v5510 = vadd.f32 %v3274, %v5446
    %v5511 = vadd.f32 %v3275, %v5447
    %v5512 = vadd.f32 %v3276, %v5448
    %v5513 = vadd.f32 %v3277, %v5449
    %v5514 = vadd.f32 %v3278, %v5450
    %v5515 = vadd.f32 %v3279, %v5451
    %v5516 = vadd.f32 %v3280, %v5452
    %v5517 = vpack.c.bf16 %v5315, %v5313
    %v5518 = vpack.c.bf16 %v5316, %v5314
    %v5519 = vpack.c.bf16 %v5319, %v5317
    %v5520 = vpack.c.bf16 %v5320, %v5318
    %v5521 = vpack.c.bf16 %v5323, %v5321
    %v5522 = vpack.c.bf16 %v5324, %v5322
    %v5523 = vpack.c.bf16 %v5327, %v5325
    %v5524 = vpack.c.bf16 %v5328, %v5326
    %v5525 = vpack.c.bf16 %v5331, %v5329
    %v5526 = vpack.c.bf16 %v5332, %v5330
    %v5527 = vpack.c.bf16 %v5335, %v5333
    %v5528 = vpack.c.bf16 %v5336, %v5334
    %v5529 = vpack.c.bf16 %v5339, %v5337
    %v5530 = vpack.c.bf16 %v5340, %v5338
    %v5531 = vpack.c.bf16 %v5343, %v5341
    %v5532 = vpack.c.bf16 %v5344, %v5342
    %v5533 = vpack.c.bf16 %v5347, %v5345
    %v5534 = vpack.c.bf16 %v5348, %v5346
    %v5535 = vpack.c.bf16 %v5351, %v5349
    %v5536 = vpack.c.bf16 %v5352, %v5350
    %v5537 = vpack.c.bf16 %v5355, %v5353
    %v5538 = vpack.c.bf16 %v5356, %v5354
    %v5539 = vpack.c.bf16 %v5359, %v5357
    %v5540 = vpack.c.bf16 %v5360, %v5358
    %v5541 = vpack.c.bf16 %v5363, %v5361
    %v5542 = vpack.c.bf16 %v5364, %v5362
    %v5543 = vpack.c.bf16 %v5367, %v5365
    %v5544 = vpack.c.bf16 %v5368, %v5366
    %v5545 = vpack.c.bf16 %v5371, %v5369
    %v5546 = vpack.c.bf16 %v5372, %v5370
    %v5547 = vpack.c.bf16 %v5375, %v5373
    %v5548 = vpack.c.bf16 %v5376, %v5374
    %v5581 = vunpack.c.l.b16 %v5517
    %v5582 = vunpack.c.l.b16 %v5518
    %v5583 = vunpack.c.h.b16 %v5517
    %v5584 = vunpack.c.h.b16 %v5518
    %v5585 = vunpack.c.l.b16 %v5519
    %v5586 = vunpack.c.l.b16 %v5520
    %v5587 = vunpack.c.h.b16 %v5519
    %v5588 = vunpack.c.h.b16 %v5520
    %v5589 = vunpack.c.l.b16 %v5521
    %v5590 = vunpack.c.l.b16 %v5522
    %v5591 = vunpack.c.h.b16 %v5521
    %v5592 = vunpack.c.h.b16 %v5522
    %v5593 = vunpack.c.l.b16 %v5523
    %v5594 = vunpack.c.l.b16 %v5524
    %v5595 = vunpack.c.h.b16 %v5523
    %v5596 = vunpack.c.h.b16 %v5524
    %v5597 = vunpack.c.l.b16 %v5525
    %v5598 = vunpack.c.l.b16 %v5526
    %v5599 = vunpack.c.h.b16 %v5525
    %v5600 = vunpack.c.h.b16 %v5526
    %v5601 = vunpack.c.l.b16 %v5527
    %v5602 = vunpack.c.l.b16 %v5528
    %v5603 = vunpack.c.h.b16 %v5527
    %v5604 = vunpack.c.h.b16 %v5528
    %v5605 = vunpack.c.l.b16 %v5529
    %v5606 = vunpack.c.l.b16 %v5530
    %v5607 = vunpack.c.h.b16 %v5529
    %v5608 = vunpack.c.h.b16 %v5530
    %v5609 = vunpack.c.l.b16 %v5531
    %v5610 = vunpack.c.l.b16 %v5532
    %v5611 = vunpack.c.h.b16 %v5531
    %v5612 = vunpack.c.h.b16 %v5532
    %v5613 = vunpack.c.l.b16 %v5533
    %v5614 = vunpack.c.l.b16 %v5534
    %v5615 = vunpack.c.h.b16 %v5533
    %v5616 = vunpack.c.h.b16 %v5534
    %v5617 = vunpack.c.l.b16 %v5535
    %v5618 = vunpack.c.l.b16 %v5536
    %v5619 = vunpack.c.h.b16 %v5535
    %v5620 = vunpack.c.h.b16 %v5536
    %v5621 = vunpack.c.l.b16 %v5537
    %v5622 = vunpack.c.l.b16 %v5538
    %v5623 = vunpack.c.h.b16 %v5537
    %v5624 = vunpack.c.h.b16 %v5538
    %v5625 = vunpack.c.l.b16 %v5539
    %v5626 = vunpack.c.l.b16 %v5540
    %v5627 = vunpack.c.h.b16 %v5539
    %v5628 = vunpack.c.h.b16 %v5540
    %v5629 = vunpack.c.l.b16 %v5541
    %v5630 = vunpack.c.l.b16 %v5542
    %v5631 = vunpack.c.h.b16 %v5541
    %v5632 = vunpack.c.h.b16 %v5542
    %v5633 = vunpack.c.l.b16 %v5543
    %v5634 = vunpack.c.l.b16 %v5544
    %v5635 = vunpack.c.h.b16 %v5543
    %v5636 = vunpack.c.h.b16 %v5544
    %v5637 = vunpack.c.l.b16 %v5545
    %v5638 = vunpack.c.l.b16 %v5546
    %v5639 = vunpack.c.h.b16 %v5545
    %v5640 = vunpack.c.h.b16 %v5546
    %v5641 = vunpack.c.l.b16 %v5547
    %v5642 = vunpack.c.l.b16 %v5548
    %v5643 = vunpack.c.h.b16 %v5547
    %v5644 = vunpack.c.h.b16 %v5548
    %v5645 = vpack.c.b16 %v5582, %v5581
    %v5646 = vpack.c.b16 %v5584, %v5583
    %v5647 = vpack.c.b16 %v5586, %v5585
    %v5648 = vpack.c.b16 %v5588, %v5587
    %v5649 = vpack.c.b16 %v5590, %v5589
    %v5650 = vpack.c.b16 %v5592, %v5591
    %v5651 = vpack.c.b16 %v5594, %v5593
    %v5652 = vpack.c.b16 %v5596, %v5595
    %v5653 = vpack.c.b16 %v5598, %v5597
    %v5654 = vpack.c.b16 %v5600, %v5599
    %v5655 = vpack.c.b16 %v5602, %v5601
    %v5656 = vpack.c.b16 %v5604, %v5603
    %v5657 = vpack.c.b16 %v5606, %v5605
    %v5658 = vpack.c.b16 %v5608, %v5607
    %v5659 = vpack.c.b16 %v5610, %v5609
    %v5660 = vpack.c.b16 %v5612, %v5611
    %v5661 = vpack.c.b16 %v5614, %v5613
    %v5662 = vpack.c.b16 %v5616, %v5615
    %v5663 = vpack.c.b16 %v5618, %v5617
    %v5664 = vpack.c.b16 %v5620, %v5619
    %v5665 = vpack.c.b16 %v5622, %v5621
    %v5666 = vpack.c.b16 %v5624, %v5623
    %v5667 = vpack.c.b16 %v5626, %v5625
    %v5668 = vpack.c.b16 %v5628, %v5627
    %v5669 = vpack.c.b16 %v5630, %v5629
    %v5670 = vpack.c.b16 %v5632, %v5631
    %v5671 = vpack.c.b16 %v5634, %v5633
    %v5672 = vpack.c.b16 %v5636, %v5635
    %v5673 = vpack.c.b16 %v5638, %v5637
    %v5674 = vpack.c.b16 %v5640, %v5639
    %v5675 = vpack.c.b16 %v5642, %v5641
    %v5676 = vpack.c.b16 %v5644, %v5643
    %5709 = vst [vmem:[#allocation2 + $0x18] sm:$0xff] %v5645
    %5710 = vst [vmem:[#allocation2 + $0x38] sm:$0xff] %v5646
    %5711 = vst [vmem:[#allocation2 + $0x58] sm:$0xff] %v5647
    %5712 = vst [vmem:[#allocation2 + $0x78] sm:$0xff] %v5648
    %5713 = vst [vmem:[#allocation2 + $0x98] sm:$0xff] %v5649
    %5714 = vst [vmem:[#allocation2 + $0xb8] sm:$0xff] %v5650
    %5715 = vst [vmem:[#allocation2 + $0xd8] sm:$0xff] %v5651
    %5716 = vst [vmem:[#allocation2 + $0xf8] sm:$0xff] %v5652
    %5717 = vst [vmem:[#allocation2 + $0x118] sm:$0xff] %v5653
    %5718 = vst [vmem:[#allocation2 + $0x138] sm:$0xff] %v5654
    %5719 = vst [vmem:[#allocation2 + $0x158] sm:$0xff] %v5655
    %5720 = vst [vmem:[#allocation2 + $0x178] sm:$0xff] %v5656
    %5721 = vst [vmem:[#allocation2 + $0x198] sm:$0xff] %v5657
    %5722 = vst [vmem:[#allocation2 + $0x1b8] sm:$0xff] %v5658
    %5723 = vst [vmem:[#allocation2 + $0x1d8] sm:$0xff] %v5659
    %5724 = vst [vmem:[#allocation2 + $0x1f8] sm:$0xff] %v5660
    %5725 = vst [vmem:[#allocation2 + $0x218] sm:$0xff] %v5661
    %5726 = vst [vmem:[#allocation2 + $0x238] sm:$0xff] %v5662
    %5727 = vst [vmem:[#allocation2 + $0x258] sm:$0xff] %v5663
    %5728 = vst [vmem:[#allocation2 + $0x278] sm:$0xff] %v5664
    %5729 = vst [vmem:[#allocation2 + $0x298] sm:$0xff] %v5665
    %5730 = vst [vmem:[#allocation2 + $0x2b8] sm:$0xff] %v5666
    %5731 = vst [vmem:[#allocation2 + $0x2d8] sm:$0xff] %v5667
    %5732 = vst [vmem:[#allocation2 + $0x2f8] sm:$0xff] %v5668
    %5733 = vst [vmem:[#allocation2 + $0x318] sm:$0xff] %v5669
    %5734 = vst [vmem:[#allocation2 + $0x338] sm:$0xff] %v5670
    %5735 = vst [vmem:[#allocation2 + $0x358] sm:$0xff] %v5671
    %5736 = vst [vmem:[#allocation2 + $0x378] sm:$0xff] %v5672
    %5737 = vst [vmem:[#allocation2 + $0x398] sm:$0xff] %v5673
    %5738 = vst [vmem:[#allocation2 + $0x3b8] sm:$0xff] %v5674
    %5739 = vst [vmem:[#allocation2 + $0x3d8] sm:$0xff] %v5675
    %5740 = vst [vmem:[#allocation2 + $0x3f8] sm:$0xff] %v5676
    %v5741 = vld [vmem:[#allocation2] sm:$0xff]
    %v5742 = vld [vmem:[#allocation2 + $0x8] sm:$0xff]
    %v5743 = vld [vmem:[#allocation2 + $0x10] sm:$0xff]
    %v5744 = vld [vmem:[#allocation2 + $0x18] sm:$0xff]
    %v5745 = vld [vmem:[#allocation2 + $0x20] sm:$0xff]
    %v5746 = vld [vmem:[#allocation2 + $0x28] sm:$0xff]
    %v5747 = vld [vmem:[#allocation2 + $0x30] sm:$0xff]
    %v5748 = vld [vmem:[#allocation2 + $0x38] sm:$0xff]
    %v5749 = vld [vmem:[#allocation2 + $0x40] sm:$0xff]
    %v5750 = vld [vmem:[#allocation2 + $0x48] sm:$0xff]
    %v5751 = vld [vmem:[#allocation2 + $0x50] sm:$0xff]
    %v5752 = vld [vmem:[#allocation2 + $0x58] sm:$0xff]
    %v5753 = vld [vmem:[#allocation2 + $0x60] sm:$0xff]
    %v5754 = vld [vmem:[#allocation2 + $0x68] sm:$0xff]
    %v5755 = vld [vmem:[#allocation2 + $0x70] sm:$0xff]
    %v5756 = vld [vmem:[#allocation2 + $0x78] sm:$0xff]
    %v5757 = vld [vmem:[#allocation2 + $0x80] sm:$0xff]
    %v5758 = vld [vmem:[#allocation2 + $0x88] sm:$0xff]
    %v5759 = vld [vmem:[#allocation2 + $0x90] sm:$0xff]
    %v5760 = vld [vmem:[#allocation2 + $0x98] sm:$0xff]
    %v5761 = vld [vmem:[#allocation2 + $0xa0] sm:$0xff]
    %v5762 = vld [vmem:[#allocation2 + $0xa8] sm:$0xff]
    %v5763 = vld [vmem:[#allocation2 + $0xb0] sm:$0xff]
    %v5764 = vld [vmem:[#allocation2 + $0xb8] sm:$0xff]
    %v5765 = vld [vmem:[#allocation2 + $0xc0] sm:$0xff]
    %v5766 = vld [vmem:[#allocation2 + $0xc8] sm:$0xff]
    %v5767 = vld [vmem:[#allocation2 + $0xd0] sm:$0xff]
    %v5768 = vld [vmem:[#allocation2 + $0xd8] sm:$0xff]
    %v5769 = vld [vmem:[#allocation2 + $0xe0] sm:$0xff]
    %v5770 = vld [vmem:[#allocation2 + $0xe8] sm:$0xff]
    %v5771 = vld [vmem:[#allocation2 + $0xf0] sm:$0xff]
    %v5772 = vld [vmem:[#allocation2 + $0xf8] sm:$0xff]
    %v5773 = vld [vmem:[#allocation2 + $0x100] sm:$0xff]
    %v5774 = vld [vmem:[#allocation2 + $0x108] sm:$0xff]
    %v5775 = vld [vmem:[#allocation2 + $0x110] sm:$0xff]
    %v5776 = vld [vmem:[#allocation2 + $0x118] sm:$0xff]
    %v5777 = vld [vmem:[#allocation2 + $0x120] sm:$0xff]
    %v5778 = vld [vmem:[#allocation2 + $0x128] sm:$0xff]
    %v5779 = vld [vmem:[#allocation2 + $0x130] sm:$0xff]
    %v5780 = vld [vmem:[#allocation2 + $0x138] sm:$0xff]
    %v5781 = vld [vmem:[#allocation2 + $0x140] sm:$0xff]
    %v5782 = vld [vmem:[#allocation2 + $0x148] sm:$0xff]
    %v5783 = vld [vmem:[#allocation2 + $0x150] sm:$0xff]
    %v5784 = vld [vmem:[#allocation2 + $0x158] sm:$0xff]
    %v5785 = vld [vmem:[#allocation2 + $0x160] sm:$0xff]
    %v5786 = vld [vmem:[#allocation2 + $0x168] sm:$0xff]
    %v5787 = vld [vmem:[#allocation2 + $0x170] sm:$0xff]
    %v5788 = vld [vmem:[#allocation2 + $0x178] sm:$0xff]
    %v5789 = vld [vmem:[#allocation2 + $0x180] sm:$0xff]
    %v5790 = vld [vmem:[#allocation2 + $0x188] sm:$0xff]
    %v5791 = vld [vmem:[#allocation2 + $0x190] sm:$0xff]
    %v5792 = vld [vmem:[#allocation2 + $0x198] sm:$0xff]
    %v5793 = vld [vmem:[#allocation2 + $0x1a0] sm:$0xff]
    %v5794 = vld [vmem:[#allocation2 + $0x1a8] sm:$0xff]
    %v5795 = vld [vmem:[#allocation2 + $0x1b0] sm:$0xff]
    %v5796 = vld [vmem:[#allocation2 + $0x1b8] sm:$0xff]
    %v5797 = vld [vmem:[#allocation2 + $0x1c0] sm:$0xff]
    %v5798 = vld [vmem:[#allocation2 + $0x1c8] sm:$0xff]
    %v5799 = vld [vmem:[#allocation2 + $0x1d0] sm:$0xff]
    %v5800 = vld [vmem:[#allocation2 + $0x1d8] sm:$0xff]
    %v5801 = vld [vmem:[#allocation2 + $0x1e0] sm:$0xff]
    %v5802 = vld [vmem:[#allocation2 + $0x1e8] sm:$0xff]
    %v5803 = vld [vmem:[#allocation2 + $0x1f0] sm:$0xff]
    %v5804 = vld [vmem:[#allocation2 + $0x1f8] sm:$0xff]
    %v5805 = vld [vmem:[#allocation2 + $0x200] sm:$0xff]
    %v5806 = vld [vmem:[#allocation2 + $0x208] sm:$0xff]
    %v5807 = vld [vmem:[#allocation2 + $0x210] sm:$0xff]
    %v5808 = vld [vmem:[#allocation2 + $0x218] sm:$0xff]
    %v5809 = vld [vmem:[#allocation2 + $0x220] sm:$0xff]
    %v5810 = vld [vmem:[#allocation2 + $0x228] sm:$0xff]
    %v5811 = vld [vmem:[#allocation2 + $0x230] sm:$0xff]
    %v5812 = vld [vmem:[#allocation2 + $0x238] sm:$0xff]
    %v5813 = vld [vmem:[#allocation2 + $0x240] sm:$0xff]
    %v5814 = vld [vmem:[#allocation2 + $0x248] sm:$0xff]
    %v5815 = vld [vmem:[#allocation2 + $0x250] sm:$0xff]
    %v5816 = vld [vmem:[#allocation2 + $0x258] sm:$0xff]
    %v5817 = vld [vmem:[#allocation2 + $0x260] sm:$0xff]
    %v5818 = vld [vmem:[#allocation2 + $0x268] sm:$0xff]
    %v5819 = vld [vmem:[#allocation2 + $0x270] sm:$0xff]
    %v5820 = vld [vmem:[#allocation2 + $0x278] sm:$0xff]
    %v5821 = vld [vmem:[#allocation2 + $0x280] sm:$0xff]
    %v5822 = vld [vmem:[#allocation2 + $0x288] sm:$0xff]
    %v5823 = vld [vmem:[#allocation2 + $0x290] sm:$0xff]
    %v5824 = vld [vmem:[#allocation2 + $0x298] sm:$0xff]
    %v5825 = vld [vmem:[#allocation2 + $0x2a0] sm:$0xff]
    %v5826 = vld [vmem:[#allocation2 + $0x2a8] sm:$0xff]
    %v5827 = vld [vmem:[#allocation2 + $0x2b0] sm:$0xff]
    %v5828 = vld [vmem:[#allocation2 + $0x2b8] sm:$0xff]
    %v5829 = vld [vmem:[#allocation2 + $0x2c0] sm:$0xff]
    %v5830 = vld [vmem:[#allocation2 + $0x2c8] sm:$0xff]
    %v5831 = vld [vmem:[#allocation2 + $0x2d0] sm:$0xff]
    %v5832 = vld [vmem:[#allocation2 + $0x2d8] sm:$0xff]
    %v5833 = vld [vmem:[#allocation2 + $0x2e0] sm:$0xff]
    %v5834 = vld [vmem:[#allocation2 + $0x2e8] sm:$0xff]
    %v5835 = vld [vmem:[#allocation2 + $0x2f0] sm:$0xff]
    %v5836 = vld [vmem:[#allocation2 + $0x2f8] sm:$0xff]
    %v5837 = vld [vmem:[#allocation2 + $0x300] sm:$0xff]
    %v5838 = vld [vmem:[#allocation2 + $0x308] sm:$0xff]
    %v5839 = vld [vmem:[#allocation2 + $0x310] sm:$0xff]
    %v5840 = vld [vmem:[#allocation2 + $0x318] sm:$0xff]
    %v5841 = vld [vmem:[#allocation2 + $0x320] sm:$0xff]
    %v5842 = vld [vmem:[#allocation2 + $0x328] sm:$0xff]
    %v5843 = vld [vmem:[#allocation2 + $0x330] sm:$0xff]
    %v5844 = vld [vmem:[#allocation2 + $0x338] sm:$0xff]
    %v5845 = vld [vmem:[#allocation2 + $0x340] sm:$0xff]
    %v5846 = vld [vmem:[#allocation2 + $0x348] sm:$0xff]
    %v5847 = vld [vmem:[#allocation2 + $0x350] sm:$0xff]
    %v5848 = vld [vmem:[#allocation2 + $0x358] sm:$0xff]
    %v5849 = vld [vmem:[#allocation2 + $0x360] sm:$0xff]
    %v5850 = vld [vmem:[#allocation2 + $0x368] sm:$0xff]
    %v5851 = vld [vmem:[#allocation2 + $0x370] sm:$0xff]
    %v5852 = vld [vmem:[#allocation2 + $0x378] sm:$0xff]
    %v5853 = vld [vmem:[#allocation2 + $0x380] sm:$0xff]
    %v5854 = vld [vmem:[#allocation2 + $0x388] sm:$0xff]
    %v5855 = vld [vmem:[#allocation2 + $0x390] sm:$0xff]
    %v5856 = vld [vmem:[#allocation2 + $0x398] sm:$0xff]
    %v5857 = vld [vmem:[#allocation2 + $0x3a0] sm:$0xff]
    %v5858 = vld [vmem:[#allocation2 + $0x3a8] sm:$0xff]
    %v5859 = vld [vmem:[#allocation2 + $0x3b0] sm:$0xff]
    %v5860 = vld [vmem:[#allocation2 + $0x3b8] sm:$0xff]
    %v5861 = vld [vmem:[#allocation2 + $0x3c0] sm:$0xff]
    %v5862 = vld [vmem:[#allocation2 + $0x3c8] sm:$0xff]
    %v5863 = vld [vmem:[#allocation2 + $0x3d0] sm:$0xff]
    %v5864 = vld [vmem:[#allocation2 + $0x3d8] sm:$0xff]
    %v5865 = vld [vmem:[#allocation2 + $0x3e0] sm:$0xff]
    %v5866 = vld [vmem:[#allocation2 + $0x3e8] sm:$0xff]
    %v5867 = vld [vmem:[#allocation2 + $0x3f0] sm:$0xff]
    %v5868 = vld [vmem:[#allocation2 + $0x3f8] sm:$0xff]
    %v5869 = vld [vmem:[#allocation8] sm:$0xff]
    %v5870 = vld [vmem:[#allocation8 + $0x8] sm:$0xff]
    %v5871 = vld [vmem:[#allocation8 + $0x10] sm:$0xff]
    %v5872 = vld [vmem:[#allocation8 + $0x18] sm:$0xff]
    %v5873 = vld [vmem:[#allocation8 + $0x20] sm:$0xff]
    %v5874 = vld [vmem:[#allocation8 + $0x28] sm:$0xff]
    %v5875 = vld [vmem:[#allocation8 + $0x30] sm:$0xff]
    %v5876 = vld [vmem:[#allocation8 + $0x38] sm:$0xff]
    %v5877 = vld [vmem:[#allocation8 + $0x40] sm:$0xff]
    %v5878 = vld [vmem:[#allocation8 + $0x48] sm:$0xff]
    %v5879 = vld [vmem:[#allocation8 + $0x50] sm:$0xff]
    %v5880 = vld [vmem:[#allocation8 + $0x58] sm:$0xff]
    %v5881 = vld [vmem:[#allocation8 + $0x60] sm:$0xff]
    %v5882 = vld [vmem:[#allocation8 + $0x68] sm:$0xff]
    %v5883 = vld [vmem:[#allocation8 + $0x70] sm:$0xff]
    %v5884 = vld [vmem:[#allocation8 + $0x78] sm:$0xff]
    %v5885 = vld [vmem:[#allocation8 + $0x80] sm:$0xff]
    %v5886 = vld [vmem:[#allocation8 + $0x88] sm:$0xff]
    %v5887 = vld [vmem:[#allocation8 + $0x90] sm:$0xff]
    %v5888 = vld [vmem:[#allocation8 + $0x98] sm:$0xff]
    %v5889 = vld [vmem:[#allocation8 + $0xa0] sm:$0xff]
    %v5890 = vld [vmem:[#allocation8 + $0xa8] sm:$0xff]
    %v5891 = vld [vmem:[#allocation8 + $0xb0] sm:$0xff]
    %v5892 = vld [vmem:[#allocation8 + $0xb8] sm:$0xff]
    %v5893 = vld [vmem:[#allocation8 + $0xc0] sm:$0xff]
    %v5894 = vld [vmem:[#allocation8 + $0xc8] sm:$0xff]
    %v5895 = vld [vmem:[#allocation8 + $0xd0] sm:$0xff]
    %v5896 = vld [vmem:[#allocation8 + $0xd8] sm:$0xff]
    %v5897 = vld [vmem:[#allocation8 + $0xe0] sm:$0xff]
    %v5898 = vld [vmem:[#allocation8 + $0xe8] sm:$0xff]
    %v5899 = vld [vmem:[#allocation8 + $0xf0] sm:$0xff]
    %v5900 = vld [vmem:[#allocation8 + $0xf8] sm:$0xff]
    %v5901 = vld [vmem:[#allocation8 + $0x100] sm:$0xff]
    %v5902 = vld [vmem:[#allocation8 + $0x108] sm:$0xff]
    %v5903 = vld [vmem:[#allocation8 + $0x110] sm:$0xff]
    %v5904 = vld [vmem:[#allocation8 + $0x118] sm:$0xff]
    %v5905 = vld [vmem:[#allocation8 + $0x120] sm:$0xff]
    %v5906 = vld [vmem:[#allocation8 + $0x128] sm:$0xff]
    %v5907 = vld [vmem:[#allocation8 + $0x130] sm:$0xff]
    %v5908 = vld [vmem:[#allocation8 + $0x138] sm:$0xff]
    %v5909 = vld [vmem:[#allocation8 + $0x140] sm:$0xff]
    %v5910 = vld [vmem:[#allocation8 + $0x148] sm:$0xff]
    %v5911 = vld [vmem:[#allocation8 + $0x150] sm:$0xff]
    %v5912 = vld [vmem:[#allocation8 + $0x158] sm:$0xff]
    %v5913 = vld [vmem:[#allocation8 + $0x160] sm:$0xff]
    %v5914 = vld [vmem:[#allocation8 + $0x168] sm:$0xff]
    %v5915 = vld [vmem:[#allocation8 + $0x170] sm:$0xff]
    %v5916 = vld [vmem:[#allocation8 + $0x178] sm:$0xff]
    %v5917 = vld [vmem:[#allocation8 + $0x180] sm:$0xff]
    %v5918 = vld [vmem:[#allocation8 + $0x188] sm:$0xff]
    %v5919 = vld [vmem:[#allocation8 + $0x190] sm:$0xff]
    %v5920 = vld [vmem:[#allocation8 + $0x198] sm:$0xff]
    %v5921 = vld [vmem:[#allocation8 + $0x1a0] sm:$0xff]
    %v5922 = vld [vmem:[#allocation8 + $0x1a8] sm:$0xff]
    %v5923 = vld [vmem:[#allocation8 + $0x1b0] sm:$0xff]
    %v5924 = vld [vmem:[#allocation8 + $0x1b8] sm:$0xff]
    %v5925 = vld [vmem:[#allocation8 + $0x1c0] sm:$0xff]
    %v5926 = vld [vmem:[#allocation8 + $0x1c8] sm:$0xff]
    %v5927 = vld [vmem:[#allocation8 + $0x1d0] sm:$0xff]
    %v5928 = vld [vmem:[#allocation8 + $0x1d8] sm:$0xff]
    %v5929 = vld [vmem:[#allocation8 + $0x1e0] sm:$0xff]
    %v5930 = vld [vmem:[#allocation8 + $0x1e8] sm:$0xff]
    %v5931 = vld [vmem:[#allocation8 + $0x1f0] sm:$0xff]
    %v5932 = vld [vmem:[#allocation8 + $0x1f8] sm:$0xff]
    %v5933 = vld [vmem:[#allocation8 + $0x200] sm:$0xff]
    %v5934 = vld [vmem:[#allocation8 + $0x208] sm:$0xff]
    %v5935 = vld [vmem:[#allocation8 + $0x210] sm:$0xff]
    %v5936 = vld [vmem:[#allocation8 + $0x218] sm:$0xff]
    %v5937 = vld [vmem:[#allocation8 + $0x220] sm:$0xff]
    %v5938 = vld [vmem:[#allocation8 + $0x228] sm:$0xff]
    %v5939 = vld [vmem:[#allocation8 + $0x230] sm:$0xff]
    %v5940 = vld [vmem:[#allocation8 + $0x238] sm:$0xff]
    %v5941 = vld [vmem:[#allocation8 + $0x240] sm:$0xff]
    %v5942 = vld [vmem:[#allocation8 + $0x248] sm:$0xff]
    %v5943 = vld [vmem:[#allocation8 + $0x250] sm:$0xff]
    %v5944 = vld [vmem:[#allocation8 + $0x258] sm:$0xff]
    %v5945 = vld [vmem:[#allocation8 + $0x260] sm:$0xff]
    %v5946 = vld [vmem:[#allocation8 + $0x268] sm:$0xff]
    %v5947 = vld [vmem:[#allocation8 + $0x270] sm:$0xff]
    %v5948 = vld [vmem:[#allocation8 + $0x278] sm:$0xff]
    %v5949 = vld [vmem:[#allocation8 + $0x280] sm:$0xff]
    %v5950 = vld [vmem:[#allocation8 + $0x288] sm:$0xff]
    %v5951 = vld [vmem:[#allocation8 + $0x290] sm:$0xff]
    %v5952 = vld [vmem:[#allocation8 + $0x298] sm:$0xff]
    %v5953 = vld [vmem:[#allocation8 + $0x2a0] sm:$0xff]
    %v5954 = vld [vmem:[#allocation8 + $0x2a8] sm:$0xff]
    %v5955 = vld [vmem:[#allocation8 + $0x2b0] sm:$0xff]
    %v5956 = vld [vmem:[#allocation8 + $0x2b8] sm:$0xff]
    %v5957 = vld [vmem:[#allocation8 + $0x2c0] sm:$0xff]
    %v5958 = vld [vmem:[#allocation8 + $0x2c8] sm:$0xff]
    %v5959 = vld [vmem:[#allocation8 + $0x2d0] sm:$0xff]
    %v5960 = vld [vmem:[#allocation8 + $0x2d8] sm:$0xff]
    %v5961 = vld [vmem:[#allocation8 + $0x2e0] sm:$0xff]
    %v5962 = vld [vmem:[#allocation8 + $0x2e8] sm:$0xff]
    %v5963 = vld [vmem:[#allocation8 + $0x2f0] sm:$0xff]
    %v5964 = vld [vmem:[#allocation8 + $0x2f8] sm:$0xff]
    %v5965 = vld [vmem:[#allocation8 + $0x300] sm:$0xff]
    %v5966 = vld [vmem:[#allocation8 + $0x308] sm:$0xff]
    %v5967 = vld [vmem:[#allocation8 + $0x310] sm:$0xff]
    %v5968 = vld [vmem:[#allocation8 + $0x318] sm:$0xff]
    %v5969 = vld [vmem:[#allocation8 + $0x320] sm:$0xff]
    %v5970 = vld [vmem:[#allocation8 + $0x328] sm:$0xff]
    %v5971 = vld [vmem:[#allocation8 + $0x330] sm:$0xff]
    %v5972 = vld [vmem:[#allocation8 + $0x338] sm:$0xff]
    %v5973 = vld [vmem:[#allocation8 + $0x340] sm:$0xff]
    %v5974 = vld [vmem:[#allocation8 + $0x348] sm:$0xff]
    %v5975 = vld [vmem:[#allocation8 + $0x350] sm:$0xff]
    %v5976 = vld [vmem:[#allocation8 + $0x358] sm:$0xff]
    %v5977 = vld [vmem:[#allocation8 + $0x360] sm:$0xff]
    %v5978 = vld [vmem:[#allocation8 + $0x368] sm:$0xff]
    %v5979 = vld [vmem:[#allocation8 + $0x370] sm:$0xff]
    %v5980 = vld [vmem:[#allocation8 + $0x378] sm:$0xff]
    %v5981 = vld [vmem:[#allocation8 + $0x380] sm:$0xff]
    %v5982 = vld [vmem:[#allocation8 + $0x388] sm:$0xff]
    %v5983 = vld [vmem:[#allocation8 + $0x390] sm:$0xff]
    %v5984 = vld [vmem:[#allocation8 + $0x398] sm:$0xff]
    %v5985 = vld [vmem:[#allocation8 + $0x3a0] sm:$0xff]
    %v5986 = vld [vmem:[#allocation8 + $0x3a8] sm:$0xff]
    %v5987 = vld [vmem:[#allocation8 + $0x3b0] sm:$0xff]
    %v5988 = vld [vmem:[#allocation8 + $0x3b8] sm:$0xff]
    %v5989 = vld [vmem:[#allocation8 + $0x3c0] sm:$0xff]
    %v5990 = vld [vmem:[#allocation8 + $0x3c8] sm:$0xff]
    %v5991 = vld [vmem:[#allocation8 + $0x3d0] sm:$0xff]
    %v5992 = vld [vmem:[#allocation8 + $0x3d8] sm:$0xff]
    %v5993 = vld [vmem:[#allocation8 + $0x3e0] sm:$0xff]
    %v5994 = vld [vmem:[#allocation8 + $0x3e8] sm:$0xff]
    %v5995 = vld [vmem:[#allocation8 + $0x3f0] sm:$0xff]
    %v5996 = vld [vmem:[#allocation8 + $0x3f8] sm:$0xff]
    %s5997 = scalar_lea.vmem %s6, 4
    %v5998 = vld [vmem:[%s5997] ss:$8 sm:$0x3]
    %v6000 = vlaneseq
    %v6001 = vshrl.u32 %v6000, 7
    %v6002 = vsub.s32 0, %v6001
    %v6003 = vrot.slane %v5998, %v6002
    %v6004 = vlaneseq
    %v6005 = vshrl.u32 %v6004, 7
    %v6006 = vsub.s32 1, %v6005
    %v6007 = vrot.slane %v5998, %v6006
    %v6138 = vunpack.c.l.b16 %v5741
    %v6139 = vunpack.c.h.b16 %v5741
    %v6140 = vunpack.c.l.b16 %v5742
    %v6141 = vunpack.c.h.b16 %v5742
    %v6142 = vunpack.c.l.b16 %v5743
    %v6143 = vunpack.c.h.b16 %v5743
    %v6144 = vunpack.c.l.b16 %v5744
    %v6145 = vunpack.c.h.b16 %v5744
    %v6146 = vunpack.c.l.b16 %v5745
    %v6147 = vunpack.c.h.b16 %v5745
    %v6148 = vunpack.c.l.b16 %v5746
    %v6149 = vunpack.c.h.b16 %v5746
    %v6150 = vunpack.c.l.b16 %v5747
    %v6151 = vunpack.c.h.b16 %v5747
    %v6152 = vunpack.c.l.b16 %v5748
    %v6153 = vunpack.c.h.b16 %v5748
    %v6154 = vunpack.c.l.b16 %v5749
    %v6155 = vunpack.c.h.b16 %v5749
    %v6156 = vunpack.c.l.b16 %v5750
    %v6157 = vunpack.c.h.b16 %v5750
    %v6158 = vunpack.c.l.b16 %v5751
    %v6159 = vunpack.c.h.b16 %v5751
    %v6160 = vunpack.c.l.b16 %v5752
    %v6161 = vunpack.c.h.b16 %v5752
    %v6162 = vunpack.c.l.b16 %v5753
    %v6163 = vunpack.c.h.b16 %v5753
    %v6164 = vunpack.c.l.b16 %v5754
    %v6165 = vunpack.c.h.b16 %v5754
    %v6166 = vunpack.c.l.b16 %v5755
    %v6167 = vunpack.c.h.b16 %v5755
    %v6168 = vunpack.c.l.b16 %v5756
    %v6169 = vunpack.c.h.b16 %v5756
    %v6170 = vunpack.c.l.b16 %v5757
    %v6171 = vunpack.c.h.b16 %v5757
    %v6172 = vunpack.c.l.b16 %v5758
    %v6173 = vunpack.c.h.b16 %v5758
    %v6174 = vunpack.c.l.b16 %v5759
    %v6175 = vunpack.c.h.b16 %v5759
    %v6176 = vunpack.c.l.b16 %v5760
    %v6177 = vunpack.c.h.b16 %v5760
    %v6178 = vunpack.c.l.b16 %v5761
    %v6179 = vunpack.c.h.b16 %v5761
    %v6180 = vunpack.c.l.b16 %v5762
    %v6181 = vunpack.c.h.b16 %v5762
    %v6182 = vunpack.c.l.b16 %v5763
    %v6183 = vunpack.c.h.b16 %v5763
    %v6184 = vunpack.c.l.b16 %v5764
    %v6185 = vunpack.c.h.b16 %v5764
    %v6186 = vunpack.c.l.b16 %v5765
    %v6187 = vunpack.c.h.b16 %v5765
    %v6188 = vunpack.c.l.b16 %v5766
    %v6189 = vunpack.c.h.b16 %v5766
    %v6190 = vunpack.c.l.b16 %v5767
    %v6191 = vunpack.c.h.b16 %v5767
    %v6192 = vunpack.c.l.b16 %v5768
    %v6193 = vunpack.c.h.b16 %v5768
    %v6194 = vunpack.c.l.b16 %v5769
    %v6195 = vunpack.c.h.b16 %v5769
    %v6196 = vunpack.c.l.b16 %v5770
    %v6197 = vunpack.c.h.b16 %v5770
    %v6198 = vunpack.c.l.b16 %v5771
    %v6199 = vunpack.c.h.b16 %v5771
    %v6200 = vunpack.c.l.b16 %v5772
    %v6201 = vunpack.c.h.b16 %v5772
    %v6202 = vunpack.c.l.b16 %v5773
    %v6203 = vunpack.c.h.b16 %v5773
    %v6204 = vunpack.c.l.b16 %v5774
    %v6205 = vunpack.c.h.b16 %v5774
    %v6206 = vunpack.c.l.b16 %v5775
    %v6207 = vunpack.c.h.b16 %v5775
    %v6208 = vunpack.c.l.b16 %v5776
    %v6209 = vunpack.c.h.b16 %v5776
    %v6210 = vunpack.c.l.b16 %v5777
    %v6211 = vunpack.c.h.b16 %v5777
    %v6212 = vunpack.c.l.b16 %v5778
    %v6213 = vunpack.c.h.b16 %v5778
    %v6214 = vunpack.c.l.b16 %v5779
    %v6215 = vunpack.c.h.b16 %v5779
    %v6216 = vunpack.c.l.b16 %v5780
    %v6217 = vunpack.c.h.b16 %v5780
    %v6218 = vunpack.c.l.b16 %v5781
    %v6219 = vunpack.c.h.b16 %v5781
    %v6220 = vunpack.c.l.b16 %v5782
    %v6221 = vunpack.c.h.b16 %v5782
    %v6222 = vunpack.c.l.b16 %v5783
    %v6223 = vunpack.c.h.b16 %v5783
    %v6224 = vunpack.c.l.b16 %v5784
    %v6225 = vunpack.c.h.b16 %v5784
    %v6226 = vunpack.c.l.b16 %v5785
    %v6227 = vunpack.c.h.b16 %v5785
    %v6228 = vunpack.c.l.b16 %v5786
    %v6229 = vunpack.c.h.b16 %v5786
    %v6230 = vunpack.c.l.b16 %v5787
    %v6231 = vunpack.c.h.b16 %v5787
    %v6232 = vunpack.c.l.b16 %v5788
    %v6233 = vunpack.c.h.b16 %v5788
    %v6234 = vunpack.c.l.b16 %v5789
    %v6235 = vunpack.c.h.b16 %v5789
    %v6236 = vunpack.c.l.b16 %v5790
    %v6237 = vunpack.c.h.b16 %v5790
    %v6238 = vunpack.c.l.b16 %v5791
    %v6239 = vunpack.c.h.b16 %v5791
    %v6240 = vunpack.c.l.b16 %v5792
    %v6241 = vunpack.c.h.b16 %v5792
    %v6242 = vunpack.c.l.b16 %v5793
    %v6243 = vunpack.c.h.b16 %v5793
    %v6244 = vunpack.c.l.b16 %v5794
    %v6245 = vunpack.c.h.b16 %v5794
    %v6246 = vunpack.c.l.b16 %v5795
    %v6247 = vunpack.c.h.b16 %v5795
    %v6248 = vunpack.c.l.b16 %v5796
    %v6249 = vunpack.c.h.b16 %v5796
    %v6250 = vunpack.c.l.b16 %v5797
    %v6251 = vunpack.c.h.b16 %v5797
    %v6252 = vunpack.c.l.b16 %v5798
    %v6253 = vunpack.c.h.b16 %v5798
    %v6254 = vunpack.c.l.b16 %v5799
    %v6255 = vunpack.c.h.b16 %v5799
    %v6256 = vunpack.c.l.b16 %v5800
    %v6257 = vunpack.c.h.b16 %v5800
    %v6258 = vunpack.c.l.b16 %v5801
    %v6259 = vunpack.c.h.b16 %v5801
    %v6260 = vunpack.c.l.b16 %v5802
    %v6261 = vunpack.c.h.b16 %v5802
    %v6262 = vunpack.c.l.b16 %v5803
    %v6263 = vunpack.c.h.b16 %v5803
    %v6264 = vunpack.c.l.b16 %v5804
    %v6265 = vunpack.c.h.b16 %v5804
    %v6266 = vunpack.c.l.b16 %v5805
    %v6267 = vunpack.c.h.b16 %v5805
    %v6268 = vunpack.c.l.b16 %v5806
    %v6269 = vunpack.c.h.b16 %v5806
    %v6270 = vunpack.c.l.b16 %v5807
    %v6271 = vunpack.c.h.b16 %v5807
    %v6272 = vunpack.c.l.b16 %v5808
    %v6273 = vunpack.c.h.b16 %v5808
    %v6274 = vunpack.c.l.b16 %v5809
    %v6275 = vunpack.c.h.b16 %v5809
    %v6276 = vunpack.c.l.b16 %v5810
    %v6277 = vunpack.c.h.b16 %v5810
    %v6278 = vunpack.c.l.b16 %v5811
    %v6279 = vunpack.c.h.b16 %v5811
    %v6280 = vunpack.c.l.b16 %v5812
    %v6281 = vunpack.c.h.b16 %v5812
    %v6282 = vunpack.c.l.b16 %v5813
    %v6283 = vunpack.c.h.b16 %v5813
    %v6284 = vunpack.c.l.b16 %v5814
    %v6285 = vunpack.c.h.b16 %v5814
    %v6286 = vunpack.c.l.b16 %v5815
    %v6287 = vunpack.c.h.b16 %v5815
    %v6288 = vunpack.c.l.b16 %v5816
    %v6289 = vunpack.c.h.b16 %v5816
    %v6290 = vunpack.c.l.b16 %v5817
    %v6291 = vunpack.c.h.b16 %v5817
    %v6292 = vunpack.c.l.b16 %v5818
    %v6293 = vunpack.c.h.b16 %v5818
    %v6294 = vunpack.c.l.b16 %v5819
    %v6295 = vunpack.c.h.b16 %v5819
    %v6296 = vunpack.c.l.b16 %v5820
    %v6297 = vunpack.c.h.b16 %v5820
    %v6298 = vunpack.c.l.b16 %v5821
    %v6299 = vunpack.c.h.b16 %v5821
    %v6300 = vunpack.c.l.b16 %v5822
    %v6301 = vunpack.c.h.b16 %v5822
    %v6302 = vunpack.c.l.b16 %v5823
    %v6303 = vunpack.c.h.b16 %v5823
    %v6304 = vunpack.c.l.b16 %v5824
    %v6305 = vunpack.c.h.b16 %v5824
    %v6306 = vunpack.c.l.b16 %v5825
    %v6307 = vunpack.c.h.b16 %v5825
    %v6308 = vunpack.c.l.b16 %v5826
    %v6309 = vunpack.c.h.b16 %v5826
    %v6310 = vunpack.c.l.b16 %v5827
    %v6311 = vunpack.c.h.b16 %v5827
    %v6312 = vunpack.c.l.b16 %v5828
    %v6313 = vunpack.c.h.b16 %v5828
    %v6314 = vunpack.c.l.b16 %v5829
    %v6315 = vunpack.c.h.b16 %v5829
    %v6316 = vunpack.c.l.b16 %v5830
    %v6317 = vunpack.c.h.b16 %v5830
    %v6318 = vunpack.c.l.b16 %v5831
    %v6319 = vunpack.c.h.b16 %v5831
    %v6320 = vunpack.c.l.b16 %v5832
    %v6321 = vunpack.c.h.b16 %v5832
    %v6322 = vunpack.c.l.b16 %v5833
    %v6323 = vunpack.c.h.b16 %v5833
    %v6324 = vunpack.c.l.b16 %v5834
    %v6325 = vunpack.c.h.b16 %v5834
    %v6326 = vunpack.c.l.b16 %v5835
    %v6327 = vunpack.c.h.b16 %v5835
    %v6328 = vunpack.c.l.b16 %v5836
    %v6329 = vunpack.c.h.b16 %v5836
    %v6330 = vunpack.c.l.b16 %v5837
    %v6331 = vunpack.c.h.b16 %v5837
    %v6332 = vunpack.c.l.b16 %v5838
    %v6333 = vunpack.c.h.b16 %v5838
    %v6334 = vunpack.c.l.b16 %v5839
    %v6335 = vunpack.c.h.b16 %v5839
    %v6336 = vunpack.c.l.b16 %v5840
    %v6337 = vunpack.c.h.b16 %v5840
    %v6338 = vunpack.c.l.b16 %v5841
    %v6339 = vunpack.c.h.b16 %v5841
    %v6340 = vunpack.c.l.b16 %v5842
    %v6341 = vunpack.c.h.b16 %v5842
    %v6342 = vunpack.c.l.b16 %v5843
    %v6343 = vunpack.c.h.b16 %v5843
    %v6344 = vunpack.c.l.b16 %v5844
    %v6345 = vunpack.c.h.b16 %v5844
    %v6346 = vunpack.c.l.b16 %v5845
    %v6347 = vunpack.c.h.b16 %v5845
    %v6348 = vunpack.c.l.b16 %v5846
    %v6349 = vunpack.c.h.b16 %v5846
    %v6350 = vunpack.c.l.b16 %v5847
    %v6351 = vunpack.c.h.b16 %v5847
    %v6352 = vunpack.c.l.b16 %v5848
    %v6353 = vunpack.c.h.b16 %v5848
    %v6354 = vunpack.c.l.b16 %v5849
    %v6355 = vunpack.c.h.b16 %v5849
    %v6356 = vunpack.c.l.b16 %v5850
    %v6357 = vunpack.c.h.b16 %v5850
    %v6358 = vunpack.c.l.b16 %v5851
    %v6359 = vunpack.c.h.b16 %v5851
    %v6360 = vunpack.c.l.b16 %v5852
    %v6361 = vunpack.c.h.b16 %v5852
    %v6362 = vunpack.c.l.b16 %v5853
    %v6363 = vunpack.c.h.b16 %v5853
    %v6364 = vunpack.c.l.b16 %v5854
    %v6365 = vunpack.c.h.b16 %v5854
    %v6366 = vunpack.c.l.b16 %v5855
    %v6367 = vunpack.c.h.b16 %v5855
    %v6368 = vunpack.c.l.b16 %v5856
    %v6369 = vunpack.c.h.b16 %v5856
    %v6370 = vunpack.c.l.b16 %v5857
    %v6371 = vunpack.c.h.b16 %v5857
    %v6372 = vunpack.c.l.b16 %v5858
    %v6373 = vunpack.c.h.b16 %v5858
    %v6374 = vunpack.c.l.b16 %v5859
    %v6375 = vunpack.c.h.b16 %v5859
    %v6376 = vunpack.c.l.b16 %v5860
    %v6377 = vunpack.c.h.b16 %v5860
    %v6378 = vunpack.c.l.b16 %v5861
    %v6379 = vunpack.c.h.b16 %v5861
    %v6380 = vunpack.c.l.b16 %v5862
    %v6381 = vunpack.c.h.b16 %v5862
    %v6382 = vunpack.c.l.b16 %v5863
    %v6383 = vunpack.c.h.b16 %v5863
    %v6384 = vunpack.c.l.b16 %v5864
    %v6385 = vunpack.c.h.b16 %v5864
    %v6386 = vunpack.c.l.b16 %v5865
    %v6387 = vunpack.c.h.b16 %v5865
    %v6388 = vunpack.c.l.b16 %v5866
    %v6389 = vunpack.c.h.b16 %v5866
    %v6390 = vunpack.c.l.b16 %v5867
    %v6391 = vunpack.c.h.b16 %v5867
    %v6392 = vunpack.c.l.b16 %v5868
    %v6393 = vunpack.c.h.b16 %v5868
    %v6394 = vpack.c.b16 %v6146, %v6138
    %v6395 = vpack.c.b16 %v6147, %v6139
    %v6396 = vpack.c.b16 %v6148, %v6140
    %v6397 = vpack.c.b16 %v6149, %v6141
    %v6398 = vpack.c.b16 %v6150, %v6142
    %v6399 = vpack.c.b16 %v6151, %v6143
    %v6400 = vpack.c.b16 %v6152, %v6144
    %v6401 = vpack.c.b16 %v6153, %v6145
    %v6402 = vpack.c.b16 %v6162, %v6154
    %v6403 = vpack.c.b16 %v6163, %v6155
    %v6404 = vpack.c.b16 %v6164, %v6156
    %v6405 = vpack.c.b16 %v6165, %v6157
    %v6406 = vpack.c.b16 %v6166, %v6158
    %v6407 = vpack.c.b16 %v6167, %v6159
    %v6408 = vpack.c.b16 %v6168, %v6160
    %v6409 = vpack.c.b16 %v6169, %v6161
    %v6410 = vpack.c.b16 %v6178, %v6170
    %v6411 = vpack.c.b16 %v6179, %v6171
    %v6412 = vpack.c.b16 %v6180, %v6172
    %v6413 = vpack.c.b16 %v6181, %v6173
    %v6414 = vpack.c.b16 %v6182, %v6174
    %v6415 = vpack.c.b16 %v6183, %v6175
    %v6416 = vpack.c.b16 %v6184, %v6176
    %v6417 = vpack.c.b16 %v6185, %v6177
    %v6418 = vpack.c.b16 %v6194, %v6186
    %v6419 = vpack.c.b16 %v6195, %v6187
    %v6420 = vpack.c.b16 %v6196, %v6188
    %v6421 = vpack.c.b16 %v6197, %v6189
    %v6422 = vpack.c.b16 %v6198, %v6190
    %v6423 = vpack.c.b16 %v6199, %v6191
    %v6424 = vpack.c.b16 %v6200, %v6192
    %v6425 = vpack.c.b16 %v6201, %v6193
    %v6426 = vpack.c.b16 %v6210, %v6202
    %v6427 = vpack.c.b16 %v6211, %v6203
    %v6428 = vpack.c.b16 %v6212, %v6204
    %v6429 = vpack.c.b16 %v6213, %v6205
    %v6430 = vpack.c.b16 %v6214, %v6206
    %v6431 = vpack.c.b16 %v6215, %v6207
    %v6432 = vpack.c.b16 %v6216, %v6208
    %v6433 = vpack.c.b16 %v6217, %v6209
    %v6434 = vpack.c.b16 %v6226, %v6218
    %v6435 = vpack.c.b16 %v6227, %v6219
    %v6436 = vpack.c.b16 %v6228, %v6220
    %v6437 = vpack.c.b16 %v6229, %v6221
    %v6438 = vpack.c.b16 %v6230, %v6222
    %v6439 = vpack.c.b16 %v6231, %v6223
    %v6440 = vpack.c.b16 %v6232, %v6224
    %v6441 = vpack.c.b16 %v6233, %v6225
    %v6442 = vpack.c.b16 %v6242, %v6234
    %v6443 = vpack.c.b16 %v6243, %v6235
    %v6444 = vpack.c.b16 %v6244, %v6236
    %v6445 = vpack.c.b16 %v6245, %v6237
    %v6446 = vpack.c.b16 %v6246, %v6238
    %v6447 = vpack.c.b16 %v6247, %v6239
    %v6448 = vpack.c.b16 %v6248, %v6240
    %v6449 = vpack.c.b16 %v6249, %v6241
    %v6450 = vpack.c.b16 %v6258, %v6250
    %v6451 = vpack.c.b16 %v6259, %v6251
    %v6452 = vpack.c.b16 %v6260, %v6252
    %v6453 = vpack.c.b16 %v6261, %v6253
    %v6454 = vpack.c.b16 %v6262, %v6254
    %v6455 = vpack.c.b16 %v6263, %v6255
    %v6456 = vpack.c.b16 %v6264, %v6256
    %v6457 = vpack.c.b16 %v6265, %v6257
    %v6458 = vpack.c.b16 %v6274, %v6266
    %v6459 = vpack.c.b16 %v6275, %v6267
    %v6460 = vpack.c.b16 %v6276, %v6268
    %v6461 = vpack.c.b16 %v6277, %v6269
    %v6462 = vpack.c.b16 %v6278, %v6270
    %v6463 = vpack.c.b16 %v6279, %v6271
    %v6464 = vpack.c.b16 %v6280, %v6272
    %v6465 = vpack.c.b16 %v6281, %v6273
    %v6466 = vpack.c.b16 %v6290, %v6282
    %v6467 = vpack.c.b16 %v6291, %v6283
    %v6468 = vpack.c.b16 %v6292, %v6284
    %v6469 = vpack.c.b16 %v6293, %v6285
    %v6470 = vpack.c.b16 %v6294, %v6286
    %v6471 = vpack.c.b16 %v6295, %v6287
    %v6472 = vpack.c.b16 %v6296, %v6288
    %v6473 = vpack.c.b16 %v6297, %v6289
    %v6474 = vpack.c.b16 %v6306, %v6298
    %v6475 = vpack.c.b16 %v6307, %v6299
    %v6476 = vpack.c.b16 %v6308, %v6300
    %v6477 = vpack.c.b16 %v6309, %v6301
    %v6478 = vpack.c.b16 %v6310, %v6302
    %v6479 = vpack.c.b16 %v6311, %v6303
    %v6480 = vpack.c.b16 %v6312, %v6304
    %v6481 = vpack.c.b16 %v6313, %v6305
    %v6482 = vpack.c.b16 %v6322, %v6314
    %v6483 = vpack.c.b16 %v6323, %v6315
    %v6484 = vpack.c.b16 %v6324, %v6316
    %v6485 = vpack.c.b16 %v6325, %v6317
    %v6486 = vpack.c.b16 %v6326, %v6318
    %v6487 = vpack.c.b16 %v6327, %v6319
    %v6488 = vpack.c.b16 %v6328, %v6320
    %v6489 = vpack.c.b16 %v6329, %v6321
    %v6490 = vpack.c.b16 %v6338, %v6330
    %v6491 = vpack.c.b16 %v6339, %v6331
    %v6492 = vpack.c.b16 %v6340, %v6332
    %v6493 = vpack.c.b16 %v6341, %v6333
    %v6494 = vpack.c.b16 %v6342, %v6334
    %v6495 = vpack.c.b16 %v6343, %v6335
    %v6496 = vpack.c.b16 %v6344, %v6336
    %v6497 = vpack.c.b16 %v6345, %v6337
    %v6498 = vpack.c.b16 %v6354, %v6346
    %v6499 = vpack.c.b16 %v6355, %v6347
    %v6500 = vpack.c.b16 %v6356, %v6348
    %v6501 = vpack.c.b16 %v6357, %v6349
    %v6502 = vpack.c.b16 %v6358, %v6350
    %v6503 = vpack.c.b16 %v6359, %v6351
    %v6504 = vpack.c.b16 %v6360, %v6352
    %v6505 = vpack.c.b16 %v6361, %v6353
    %v6506 = vpack.c.b16 %v6370, %v6362
    %v6507 = vpack.c.b16 %v6371, %v6363
    %v6508 = vpack.c.b16 %v6372, %v6364
    %v6509 = vpack.c.b16 %v6373, %v6365
    %v6510 = vpack.c.b16 %v6374, %v6366
    %v6511 = vpack.c.b16 %v6375, %v6367
    %v6512 = vpack.c.b16 %v6376, %v6368
    %v6513 = vpack.c.b16 %v6377, %v6369
    %v6514 = vpack.c.b16 %v6386, %v6378
    %v6515 = vpack.c.b16 %v6387, %v6379
    %v6516 = vpack.c.b16 %v6388, %v6380
    %v6517 = vpack.c.b16 %v6389, %v6381
    %v6518 = vpack.c.b16 %v6390, %v6382
    %v6519 = vpack.c.b16 %v6391, %v6383
    %v6520 = vpack.c.b16 %v6392, %v6384
    %v6521 = vpack.c.b16 %v6393, %v6385
    %v6778 = vunpack.c.l.b16 %v5869
    %v6779 = vunpack.c.h.b16 %v5869
    %v6780 = vunpack.c.l.b16 %v5870
    %v6781 = vunpack.c.h.b16 %v5870
    %v6782 = vunpack.c.l.b16 %v5871
    %v6783 = vunpack.c.h.b16 %v5871
    %v6784 = vunpack.c.l.b16 %v5872
    %v6785 = vunpack.c.h.b16 %v5872
    %v6786 = vunpack.c.l.b16 %v5873
    %v6787 = vunpack.c.h.b16 %v5873
    %v6788 = vunpack.c.l.b16 %v5874
    %v6789 = vunpack.c.h.b16 %v5874
    %v6790 = vunpack.c.l.b16 %v5875
    %v6791 = vunpack.c.h.b16 %v5875
    %v6792 = vunpack.c.l.b16 %v5876
    %v6793 = vunpack.c.h.b16 %v5876
    %v6794 = vunpack.c.l.b16 %v5877
    %v6795 = vunpack.c.h.b16 %v5877
    %v6796 = vunpack.c.l.b16 %v5878
    %v6797 = vunpack.c.h.b16 %v5878
    %v6798 = vunpack.c.l.b16 %v5879
    %v6799 = vunpack.c.h.b16 %v5879
    %v6800 = vunpack.c.l.b16 %v5880
    %v6801 = vunpack.c.h.b16 %v5880
    %v6802 = vunpack.c.l.b16 %v5881
    %v6803 = vunpack.c.h.b16 %v5881
    %v6804 = vunpack.c.l.b16 %v5882
    %v6805 = vunpack.c.h.b16 %v5882
    %v6806 = vunpack.c.l.b16 %v5883
    %v6807 = vunpack.c.h.b16 %v5883
    %v6808 = vunpack.c.l.b16 %v5884
    %v6809 = vunpack.c.h.b16 %v5884
    %v6810 = vunpack.c.l.b16 %v5885
    %v6811 = vunpack.c.h.b16 %v5885
    %v6812 = vunpack.c.l.b16 %v5886
    %v6813 = vunpack.c.h.b16 %v5886
    %v6814 = vunpack.c.l.b16 %v5887
    %v6815 = vunpack.c.h.b16 %v5887
    %v6816 = vunpack.c.l.b16 %v5888
    %v6817 = vunpack.c.h.b16 %v5888
    %v6818 = vunpack.c.l.b16 %v5889
    %v6819 = vunpack.c.h.b16 %v5889
    %v6820 = vunpack.c.l.b16 %v5890
    %v6821 = vunpack.c.h.b16 %v5890
    %v6822 = vunpack.c.l.b16 %v5891
    %v6823 = vunpack.c.h.b16 %v5891
    %v6824 = vunpack.c.l.b16 %v5892
    %v6825 = vunpack.c.h.b16 %v5892
    %v6826 = vunpack.c.l.b16 %v5893
    %v6827 = vunpack.c.h.b16 %v5893
    %v6828 = vunpack.c.l.b16 %v5894
    %v6829 = vunpack.c.h.b16 %v5894
    %v6830 = vunpack.c.l.b16 %v5895
    %v6831 = vunpack.c.h.b16 %v5895
    %v6832 = vunpack.c.l.b16 %v5896
    %v6833 = vunpack.c.h.b16 %v5896
    %v6834 = vunpack.c.l.b16 %v5897
    %v6835 = vunpack.c.h.b16 %v5897
    %v6836 = vunpack.c.l.b16 %v5898
    %v6837 = vunpack.c.h.b16 %v5898
    %v6838 = vunpack.c.l.b16 %v5899
    %v6839 = vunpack.c.h.b16 %v5899
    %v6840 = vunpack.c.l.b16 %v5900
    %v6841 = vunpack.c.h.b16 %v5900
    %v6842 = vunpack.c.l.b16 %v5901
    %v6843 = vunpack.c.h.b16 %v5901
    %v6844 = vunpack.c.l.b16 %v5902
    %v6845 = vunpack.c.h.b16 %v5902
    %v6846 = vunpack.c.l.b16 %v5903
    %v6847 = vunpack.c.h.b16 %v5903
    %v6848 = vunpack.c.l.b16 %v5904
    %v6849 = vunpack.c.h.b16 %v5904
    %v6850 = vunpack.c.l.b16 %v5905
    %v6851 = vunpack.c.h.b16 %v5905
    %v6852 = vunpack.c.l.b16 %v5906
    %v6853 = vunpack.c.h.b16 %v5906
    %v6854 = vunpack.c.l.b16 %v5907
    %v6855 = vunpack.c.h.b16 %v5907
    %v6856 = vunpack.c.l.b16 %v5908
    %v6857 = vunpack.c.h.b16 %v5908
    %v6858 = vunpack.c.l.b16 %v5909
    %v6859 = vunpack.c.h.b16 %v5909
    %v6860 = vunpack.c.l.b16 %v5910
    %v6861 = vunpack.c.h.b16 %v5910
    %v6862 = vunpack.c.l.b16 %v5911
    %v6863 = vunpack.c.h.b16 %v5911
    %v6864 = vunpack.c.l.b16 %v5912
    %v6865 = vunpack.c.h.b16 %v5912
    %v6866 = vunpack.c.l.b16 %v5913
    %v6867 = vunpack.c.h.b16 %v5913
    %v6868 = vunpack.c.l.b16 %v5914
    %v6869 = vunpack.c.h.b16 %v5914
    %v6870 = vunpack.c.l.b16 %v5915
    %v6871 = vunpack.c.h.b16 %v5915
    %v6872 = vunpack.c.l.b16 %v5916
    %v6873 = vunpack.c.h.b16 %v5916
    %v6874 = vunpack.c.l.b16 %v5917
    %v6875 = vunpack.c.h.b16 %v5917
    %v6876 = vunpack.c.l.b16 %v5918
    %v6877 = vunpack.c.h.b16 %v5918
    %v6878 = vunpack.c.l.b16 %v5919
    %v6879 = vunpack.c.h.b16 %v5919
    %v6880 = vunpack.c.l.b16 %v5920
    %v6881 = vunpack.c.h.b16 %v5920
    %v6882 = vunpack.c.l.b16 %v5921
    %v6883 = vunpack.c.h.b16 %v5921
    %v6884 = vunpack.c.l.b16 %v5922
    %v6885 = vunpack.c.h.b16 %v5922
    %v6886 = vunpack.c.l.b16 %v5923
    %v6887 = vunpack.c.h.b16 %v5923
    %v6888 = vunpack.c.l.b16 %v5924
    %v6889 = vunpack.c.h.b16 %v5924
    %v6890 = vunpack.c.l.b16 %v5925
    %v6891 = vunpack.c.h.b16 %v5925
    %v6892 = vunpack.c.l.b16 %v5926
    %v6893 = vunpack.c.h.b16 %v5926
    %v6894 = vunpack.c.l.b16 %v5927
    %v6895 = vunpack.c.h.b16 %v5927
    %v6896 = vunpack.c.l.b16 %v5928
    %v6897 = vunpack.c.h.b16 %v5928
    %v6898 = vunpack.c.l.b16 %v5929
    %v6899 = vunpack.c.h.b16 %v5929
    %v6900 = vunpack.c.l.b16 %v5930
    %v6901 = vunpack.c.h.b16 %v5930
    %v6902 = vunpack.c.l.b16 %v5931
    %v6903 = vunpack.c.h.b16 %v5931
    %v6904 = vunpack.c.l.b16 %v5932
    %v6905 = vunpack.c.h.b16 %v5932
    %v6906 = vunpack.c.l.b16 %v5933
    %v6907 = vunpack.c.h.b16 %v5933
    %v6908 = vunpack.c.l.b16 %v5934
    %v6909 = vunpack.c.h.b16 %v5934
    %v6910 = vunpack.c.l.b16 %v5935
    %v6911 = vunpack.c.h.b16 %v5935
    %v6912 = vunpack.c.l.b16 %v5936
    %v6913 = vunpack.c.h.b16 %v5936
    %v6914 = vunpack.c.l.b16 %v5937
    %v6915 = vunpack.c.h.b16 %v5937
    %v6916 = vunpack.c.l.b16 %v5938
    %v6917 = vunpack.c.h.b16 %v5938
    %v6918 = vunpack.c.l.b16 %v5939
    %v6919 = vunpack.c.h.b16 %v5939
    %v6920 = vunpack.c.l.b16 %v5940
    %v6921 = vunpack.c.h.b16 %v5940
    %v6922 = vunpack.c.l.b16 %v5941
    %v6923 = vunpack.c.h.b16 %v5941
    %v6924 = vunpack.c.l.b16 %v5942
    %v6925 = vunpack.c.h.b16 %v5942
    %v6926 = vunpack.c.l.b16 %v5943
    %v6927 = vunpack.c.h.b16 %v5943
    %v6928 = vunpack.c.l.b16 %v5944
    %v6929 = vunpack.c.h.b16 %v5944
    %v6930 = vunpack.c.l.b16 %v5945
    %v6931 = vunpack.c.h.b16 %v5945
    %v6932 = vunpack.c.l.b16 %v5946
    %v6933 = vunpack.c.h.b16 %v5946
    %v6934 = vunpack.c.l.b16 %v5947
    %v6935 = vunpack.c.h.b16 %v5947
    %v6936 = vunpack.c.l.b16 %v5948
    %v6937 = vunpack.c.h.b16 %v5948
    %v6938 = vunpack.c.l.b16 %v5949
    %v6939 = vunpack.c.h.b16 %v5949
    %v6940 = vunpack.c.l.b16 %v5950
    %v6941 = vunpack.c.h.b16 %v5950
    %v6942 = vunpack.c.l.b16 %v5951
    %v6943 = vunpack.c.h.b16 %v5951
    %v6944 = vunpack.c.l.b16 %v5952
    %v6945 = vunpack.c.h.b16 %v5952
    %v6946 = vunpack.c.l.b16 %v5953
    %v6947 = vunpack.c.h.b16 %v5953
    %v6948 = vunpack.c.l.b16 %v5954
    %v6949 = vunpack.c.h.b16 %v5954
    %v6950 = vunpack.c.l.b16 %v5955
    %v6951 = vunpack.c.h.b16 %v5955
    %v6952 = vunpack.c.l.b16 %v5956
    %v6953 = vunpack.c.h.b16 %v5956
    %v6954 = vunpack.c.l.b16 %v5957
    %v6955 = vunpack.c.h.b16 %v5957
    %v6956 = vunpack.c.l.b16 %v5958
    %v6957 = vunpack.c.h.b16 %v5958
    %v6958 = vunpack.c.l.b16 %v5959
    %v6959 = vunpack.c.h.b16 %v5959
    %v6960 = vunpack.c.l.b16 %v5960
    %v6961 = vunpack.c.h.b16 %v5960
    %v6962 = vunpack.c.l.b16 %v5961
    %v6963 = vunpack.c.h.b16 %v5961
    %v6964 = vunpack.c.l.b16 %v5962
    %v6965 = vunpack.c.h.b16 %v5962
    %v6966 = vunpack.c.l.b16 %v5963
    %v6967 = vunpack.c.h.b16 %v5963
    %v6968 = vunpack.c.l.b16 %v5964
    %v6969 = vunpack.c.h.b16 %v5964
    %v6970 = vunpack.c.l.b16 %v5965
    %v6971 = vunpack.c.h.b16 %v5965
    %v6972 = vunpack.c.l.b16 %v5966
    %v6973 = vunpack.c.h.b16 %v5966
    %v6974 = vunpack.c.l.b16 %v5967
    %v6975 = vunpack.c.h.b16 %v5967
    %v6976 = vunpack.c.l.b16 %v5968
    %v6977 = vunpack.c.h.b16 %v5968
    %v6978 = vunpack.c.l.b16 %v5969
    %v6979 = vunpack.c.h.b16 %v5969
    %v6980 = vunpack.c.l.b16 %v5970
    %v6981 = vunpack.c.h.b16 %v5970
    %v6982 = vunpack.c.l.b16 %v5971
    %v6983 = vunpack.c.h.b16 %v5971
    %v6984 = vunpack.c.l.b16 %v5972
    %v6985 = vunpack.c.h.b16 %v5972
    %v6986 = vunpack.c.l.b16 %v5973
    %v6987 = vunpack.c.h.b16 %v5973
    %v6988 = vunpack.c.l.b16 %v5974
    %v6989 = vunpack.c.h.b16 %v5974
    %v6990 = vunpack.c.l.b16 %v5975
    %v6991 = vunpack.c.h.b16 %v5975
    %v6992 = vunpack.c.l.b16 %v5976
    %v6993 = vunpack.c.h.b16 %v5976
    %v6994 = vunpack.c.l.b16 %v5977
    %v6995 = vunpack.c.h.b16 %v5977
    %v6996 = vunpack.c.l.b16 %v5978
    %v6997 = vunpack.c.h.b16 %v5978
    %v6998 = vunpack.c.l.b16 %v5979
    %v6999 = vunpack.c.h.b16 %v5979
    %v7000 = vunpack.c.l.b16 %v5980
    %v7001 = vunpack.c.h.b16 %v5980
    %v7002 = vunpack.c.l.b16 %v5981
    %v7003 = vunpack.c.h.b16 %v5981
    %v7004 = vunpack.c.l.b16 %v5982
    %v7005 = vunpack.c.h.b16 %v5982
    %v7006 = vunpack.c.l.b16 %v5983
    %v7007 = vunpack.c.h.b16 %v5983
    %v7008 = vunpack.c.l.b16 %v5984
    %v7009 = vunpack.c.h.b16 %v5984
    %v7010 = vunpack.c.l.b16 %v5985
    %v7011 = vunpack.c.h.b16 %v5985
    %v7012 = vunpack.c.l.b16 %v5986
    %v7013 = vunpack.c.h.b16 %v5986
    %v7014 = vunpack.c.l.b16 %v5987
    %v7015 = vunpack.c.h.b16 %v5987
    %v7016 = vunpack.c.l.b16 %v5988
    %v7017 = vunpack.c.h.b16 %v5988
    %v7018 = vunpack.c.l.b16 %v5989
    %v7019 = vunpack.c.h.b16 %v5989
    %v7020 = vunpack.c.l.b16 %v5990
    %v7021 = vunpack.c.h.b16 %v5990
    %v7022 = vunpack.c.l.b16 %v5991
    %v7023 = vunpack.c.h.b16 %v5991
    %v7024 = vunpack.c.l.b16 %v5992
    %v7025 = vunpack.c.h.b16 %v5992
    %v7026 = vunpack.c.l.b16 %v5993
    %v7027 = vunpack.c.h.b16 %v5993
    %v7028 = vunpack.c.l.b16 %v5994
    %v7029 = vunpack.c.h.b16 %v5994
    %v7030 = vunpack.c.l.b16 %v5995
    %v7031 = vunpack.c.h.b16 %v5995
    %v7032 = vunpack.c.l.b16 %v5996
    %v7033 = vunpack.c.h.b16 %v5996
    %v7034 = vpack.c.b16 %v6780, %v6778
    %v7035 = vpack.c.b16 %v6781, %v6779
    %v7036 = vpack.c.b16 %v6784, %v6782
    %v7037 = vpack.c.b16 %v6785, %v6783
    %v7038 = vpack.c.b16 %v6788, %v6786
    %v7039 = vpack.c.b16 %v6789, %v6787
    %v7040 = vpack.c.b16 %v6792, %v6790
    %v7041 = vpack.c.b16 %v6793, %v6791
    %v7042 = vpack.c.b16 %v6796, %v6794
    %v7043 = vpack.c.b16 %v6797, %v6795
    %v7044 = vpack.c.b16 %v6800, %v6798
    %v7045 = vpack.c.b16 %v6801, %v6799
    %v7046 = vpack.c.b16 %v6804, %v6802
    %v7047 = vpack.c.b16 %v6805, %v6803
    %v7048 = vpack.c.b16 %v6808, %v6806
    %v7049 = vpack.c.b16 %v6809, %v6807
    %v7050 = vpack.c.b16 %v6812, %v6810
    %v7051 = vpack.c.b16 %v6813, %v6811
    %v7052 = vpack.c.b16 %v6816, %v6814
    %v7053 = vpack.c.b16 %v6817, %v6815
    %v7054 = vpack.c.b16 %v6820, %v6818
    %v7055 = vpack.c.b16 %v6821, %v6819
    %v7056 = vpack.c.b16 %v6824, %v6822
    %v7057 = vpack.c.b16 %v6825, %v6823
    %v7058 = vpack.c.b16 %v6828, %v6826
    %v7059 = vpack.c.b16 %v6829, %v6827
    %v7060 = vpack.c.b16 %v6832, %v6830
    %v7061 = vpack.c.b16 %v6833, %v6831
    %v7062 = vpack.c.b16 %v6836, %v6834
    %v7063 = vpack.c.b16 %v6837, %v6835
    %v7064 = vpack.c.b16 %v6840, %v6838
    %v7065 = vpack.c.b16 %v6841, %v6839
    %v7066 = vpack.c.b16 %v6844, %v6842
    %v7067 = vpack.c.b16 %v6845, %v6843
    %v7068 = vpack.c.b16 %v6848, %v6846
    %v7069 = vpack.c.b16 %v6849, %v6847
    %v7070 = vpack.c.b16 %v6852, %v6850
    %v7071 = vpack.c.b16 %v6853, %v6851
    %v7072 = vpack.c.b16 %v6856, %v6854
    %v7073 = vpack.c.b16 %v6857, %v6855
    %v7074 = vpack.c.b16 %v6860, %v6858
    %v7075 = vpack.c.b16 %v6861, %v6859
    %v7076 = vpack.c.b16 %v6864, %v6862
    %v7077 = vpack.c.b16 %v6865, %v6863
    %v7078 = vpack.c.b16 %v6868, %v6866
    %v7079 = vpack.c.b16 %v6869, %v6867
    %v7080 = vpack.c.b16 %v6872, %v6870
    %v7081 = vpack.c.b16 %v6873, %v6871
    %v7082 = vpack.c.b16 %v6876, %v6874
    %v7083 = vpack.c.b16 %v6877, %v6875
    %v7084 = vpack.c.b16 %v6880, %v6878
    %v7085 = vpack.c.b16 %v6881, %v6879
    %v7086 = vpack.c.b16 %v6884, %v6882
    %v7087 = vpack.c.b16 %v6885, %v6883
    %v7088 = vpack.c.b16 %v6888, %v6886
    %v7089 = vpack.c.b16 %v6889, %v6887
    %v7090 = vpack.c.b16 %v6892, %v6890
    %v7091 = vpack.c.b16 %v6893, %v6891
    %v7092 = vpack.c.b16 %v6896, %v6894
    %v7093 = vpack.c.b16 %v6897, %v6895
    %v7094 = vpack.c.b16 %v6900, %v6898
    %v7095 = vpack.c.b16 %v6901, %v6899
    %v7096 = vpack.c.b16 %v6904, %v6902
    %v7097 = vpack.c.b16 %v6905, %v6903
    %v7098 = vpack.c.b16 %v6908, %v6906
    %v7099 = vpack.c.b16 %v6909, %v6907
    %v7100 = vpack.c.b16 %v6912, %v6910
    %v7101 = vpack.c.b16 %v6913, %v6911
    %v7102 = vpack.c.b16 %v6916, %v6914
    %v7103 = vpack.c.b16 %v6917, %v6915
    %v7104 = vpack.c.b16 %v6920, %v6918
    %v7105 = vpack.c.b16 %v6921, %v6919
    %v7106 = vpack.c.b16 %v6924, %v6922
    %v7107 = vpack.c.b16 %v6925, %v6923
    %v7108 = vpack.c.b16 %v6928, %v6926
    %v7109 = vpack.c.b16 %v6929, %v6927
    %v7110 = vpack.c.b16 %v6932, %v6930
    %v7111 = vpack.c.b16 %v6933, %v6931
    %v7112 = vpack.c.b16 %v6936, %v6934
    %v7113 = vpack.c.b16 %v6937, %v6935
    %v7114 = vpack.c.b16 %v6940, %v6938
    %v7115 = vpack.c.b16 %v6941, %v6939
    %v7116 = vpack.c.b16 %v6944, %v6942
    %v7117 = vpack.c.b16 %v6945, %v6943
    %v7118 = vpack.c.b16 %v6948, %v6946
    %v7119 = vpack.c.b16 %v6949, %v6947
    %v7120 = vpack.c.b16 %v6952, %v6950
    %v7121 = vpack.c.b16 %v6953, %v6951
    %v7122 = vpack.c.b16 %v6956, %v6954
    %v7123 = vpack.c.b16 %v6957, %v6955
    %v7124 = vpack.c.b16 %v6960, %v6958
    %v7125 = vpack.c.b16 %v6961, %v6959
    %v7126 = vpack.c.b16 %v6964, %v6962
    %v7127 = vpack.c.b16 %v6965, %v6963
    %v7128 = vpack.c.b16 %v6968, %v6966
    %v7129 = vpack.c.b16 %v6969, %v6967
    %v7130 = vpack.c.b16 %v6972, %v6970
    %v7131 = vpack.c.b16 %v6973, %v6971
    %v7132 = vpack.c.b16 %v6976, %v6974
    %v7133 = vpack.c.b16 %v6977, %v6975
    %v7134 = vpack.c.b16 %v6980, %v6978
    %v7135 = vpack.c.b16 %v6981, %v6979
    %v7136 = vpack.c.b16 %v6984, %v6982
    %v7137 = vpack.c.b16 %v6985, %v6983
    %v7138 = vpack.c.b16 %v6988, %v6986
    %v7139 = vpack.c.b16 %v6989, %v6987
    %v7140 = vpack.c.b16 %v6992, %v6990
    %v7141 = vpack.c.b16 %v6993, %v6991
    %v7142 = vpack.c.b16 %v6996, %v6994
    %v7143 = vpack.c.b16 %v6997, %v6995
    %v7144 = vpack.c.b16 %v7000, %v6998
    %v7145 = vpack.c.b16 %v7001, %v6999
    %v7146 = vpack.c.b16 %v7004, %v7002
    %v7147 = vpack.c.b16 %v7005, %v7003
    %v7148 = vpack.c.b16 %v7008, %v7006
    %v7149 = vpack.c.b16 %v7009, %v7007
    %v7150 = vpack.c.b16 %v7012, %v7010
    %v7151 = vpack.c.b16 %v7013, %v7011
    %v7152 = vpack.c.b16 %v7016, %v7014
    %v7153 = vpack.c.b16 %v7017, %v7015
    %v7154 = vpack.c.b16 %v7020, %v7018
    %v7155 = vpack.c.b16 %v7021, %v7019
    %v7156 = vpack.c.b16 %v7024, %v7022
    %v7157 = vpack.c.b16 %v7025, %v7023
    %v7158 = vpack.c.b16 %v7028, %v7026
    %v7159 = vpack.c.b16 %v7029, %v7027
    %v7160 = vpack.c.b16 %v7032, %v7030
    %v7161 = vpack.c.b16 %v7033, %v7031
    %7290 = vmatprep.subr.bf16.mxu0 %v7049
    %7291 = vmatpush1.bf16.msra.mxu0 %v7048
    %7292 = vmatprep.subr.bf16.mxu0 %v7047
    %7293 = vmatpush1.bf16.msra.mxu0 %v7046
    %7294 = vmatprep.subr.bf16.mxu0 %v7045
    %7295 = vmatpush1.bf16.msra.mxu0 %v7044
    %7296 = vmatprep.subr.bf16.mxu0 %v7043
    %7297 = vmatpush1.bf16.msra.mxu0 %v7042
    %7298 = vmatprep.subr.bf16.mxu0 %v7041
    %7299 = vmatpush1.bf16.msra.mxu0 %v7040
    %7300 = vmatprep.subr.bf16.mxu0 %v7039
    %7301 = vmatpush1.bf16.msra.mxu0 %v7038
    %7302 = vmatprep.subr.bf16.mxu0 %v7037
    %7303 = vmatpush1.bf16.msra.mxu0 %v7036
    %7304 = vmatprep.subr.bf16.mxu0 %v7035
    %7305 = vmatpush1.bf16.msra.mxu0 %v7034
    %7306 = vmatprep.subr.bf16.mxu0 %v7065
    %7307 = vmatpush2.bf16.msra.mxu0 %v7064
    %7308 = vmatprep.subr.bf16.mxu0 %v7063
    %7309 = vmatpush2.bf16.msra.mxu0 %v7062
    %7310 = vmatprep.subr.bf16.mxu0 %v7061
    %7311 = vmatpush2.bf16.msra.mxu0 %v7060
    %7312 = vmatprep.subr.bf16.mxu0 %v7059
    %7313 = vmatpush2.bf16.msra.mxu0 %v7058
    %7314 = vmatprep.subr.bf16.mxu0 %v7057
    %7315 = vmatpush2.bf16.msra.mxu0 %v7056
    %7316 = vmatprep.subr.bf16.mxu0 %v7055
    %7317 = vmatpush2.bf16.msra.mxu0 %v7054
    %7318 = vmatprep.subr.bf16.mxu0 %v7053
    %7319 = vmatpush2.bf16.msra.mxu0 %v7052
    %7320 = vmatprep.subr.bf16.mxu0 %v7051
    %7321 = vmatpush2.bf16.msra.mxu0 %v7050
    %7322 = vmatprep.mubr.bf16.mxu0 %v6395
    %7323 = vmatmul.mubr.bf16.gmra.mxu0 %v6394
    %v7324 = vpop.f32.mrf.mxu0
    %v7325 = vadd.f32 %v6003, %v7324
    %v7326 = vpop.f32.mrf.mxu0
    %v7327 = vadd.f32 %v6007, %v7326
    %v7328 = vpop.f32.mrf.mxu0
    %v7329 = vadd.f32 %v6003, %v7328
    %v7330 = vpop.f32.mrf.mxu0
    %v7331 = vadd.f32 %v6007, %v7330
    %7332 = vmatprep.mubr.bf16.mxu0 %v6403
    %7333 = vmatmul.mubr.bf16.gmra.mxu0 %v6402
    %v7334 = vpop.f32.mrf.mxu0
    %v7335 = vadd.f32 %v6003, %v7334
    %v7336 = vpop.f32.mrf.mxu0
    %v7337 = vadd.f32 %v6007, %v7336
    %v7338 = vpop.f32.mrf.mxu0
    %v7339 = vadd.f32 %v6003, %v7338
    %v7340 = vpop.f32.mrf.mxu0
    %v7341 = vadd.f32 %v6007, %v7340
    %7342 = vmatprep.mubr.bf16.mxu0 %v6411
    %7343 = vmatmul.mubr.bf16.gmra.mxu0 %v6410
    %v7344 = vpop.f32.mrf.mxu0
    %v7345 = vadd.f32 %v6003, %v7344
    %v7346 = vpop.f32.mrf.mxu0
    %v7347 = vadd.f32 %v6007, %v7346
    %v7348 = vpop.f32.mrf.mxu0
    %v7349 = vadd.f32 %v6003, %v7348
    %v7350 = vpop.f32.mrf.mxu0
    %v7351 = vadd.f32 %v6007, %v7350
    %7352 = vmatprep.mubr.bf16.mxu0 %v6419
    %7353 = vmatmul.mubr.bf16.gmra.mxu0 %v6418
    %v7354 = vpop.f32.mrf.mxu0
    %v7355 = vadd.f32 %v6003, %v7354
    %v7356 = vpop.f32.mrf.mxu0
    %v7357 = vadd.f32 %v6007, %v7356
    %v7358 = vpop.f32.mrf.mxu0
    %v7359 = vadd.f32 %v6003, %v7358
    %v7360 = vpop.f32.mrf.mxu0
    %v7361 = vadd.f32 %v6007, %v7360
    %7362 = vmatprep.mubr.bf16.mxu0 %v6427
    %7363 = vmatmul.mubr.bf16.gmra.mxu0 %v6426
    %v7364 = vpop.f32.mrf.mxu0
    %v7365 = vadd.f32 %v6003, %v7364
    %v7366 = vpop.f32.mrf.mxu0
    %v7367 = vadd.f32 %v6007, %v7366
    %v7368 = vpop.f32.mrf.mxu0
    %v7369 = vadd.f32 %v6003, %v7368
    %v7370 = vpop.f32.mrf.mxu0
    %v7371 = vadd.f32 %v6007, %v7370
    %7372 = vmatprep.mubr.bf16.mxu0 %v6435
    %7373 = vmatmul.mubr.bf16.gmra.mxu0 %v6434
    %v7374 = vpop.f32.mrf.mxu0
    %v7375 = vadd.f32 %v6003, %v7374
    %v7376 = vpop.f32.mrf.mxu0
    %v7377 = vadd.f32 %v6007, %v7376
    %v7378 = vpop.f32.mrf.mxu0
    %v7379 = vadd.f32 %v6003, %v7378
    %v7380 = vpop.f32.mrf.mxu0
    %v7381 = vadd.f32 %v6007, %v7380
    %7382 = vmatprep.mubr.bf16.mxu0 %v6443
    %7383 = vmatmul.mubr.bf16.gmra.mxu0 %v6442
    %v7384 = vpop.f32.mrf.mxu0
    %v7385 = vadd.f32 %v6003, %v7384
    %v7386 = vpop.f32.mrf.mxu0
    %v7387 = vadd.f32 %v6007, %v7386
    %v7388 = vpop.f32.mrf.mxu0
    %v7389 = vadd.f32 %v6003, %v7388
    %v7390 = vpop.f32.mrf.mxu0
    %v7391 = vadd.f32 %v6007, %v7390
    %7392 = vmatprep.mubr.bf16.mxu0 %v6451
    %7393 = vmatmul.mubr.bf16.gmra.mxu0 %v6450
    %v7394 = vpop.f32.mrf.mxu0
    %v7395 = vadd.f32 %v6003, %v7394
    %v7396 = vpop.f32.mrf.mxu0
    %v7397 = vadd.f32 %v6007, %v7396
    %v7398 = vpop.f32.mrf.mxu0
    %v7399 = vadd.f32 %v6003, %v7398
    %v7400 = vpop.f32.mrf.mxu0
    %v7401 = vadd.f32 %v6007, %v7400
    %7402 = vmatprep.mubr.bf16.mxu0 %v6459
    %7403 = vmatmul.mubr.bf16.gmra.mxu0 %v6458
    %v7404 = vpop.f32.mrf.mxu0
    %v7405 = vadd.f32 %v6003, %v7404
    %v7406 = vpop.f32.mrf.mxu0
    %v7407 = vadd.f32 %v6007, %v7406
    %v7408 = vpop.f32.mrf.mxu0
    %v7409 = vadd.f32 %v6003, %v7408
    %v7410 = vpop.f32.mrf.mxu0
    %v7411 = vadd.f32 %v6007, %v7410
    %7412 = vmatprep.mubr.bf16.mxu0 %v6467
    %7413 = vmatmul.mubr.bf16.gmra.mxu0 %v6466
    %v7414 = vpop.f32.mrf.mxu0
    %v7415 = vadd.f32 %v6003, %v7414
    %v7416 = vpop.f32.mrf.mxu0
    %v7417 = vadd.f32 %v6007, %v7416
    %v7418 = vpop.f32.mrf.mxu0
    %v7419 = vadd.f32 %v6003, %v7418
    %v7420 = vpop.f32.mrf.mxu0
    %v7421 = vadd.f32 %v6007, %v7420
    %7422 = vmatprep.mubr.bf16.mxu0 %v6475
    %7423 = vmatmul.mubr.bf16.gmra.mxu0 %v6474
    %v7424 = vpop.f32.mrf.mxu0
    %v7425 = vadd.f32 %v6003, %v7424
    %v7426 = vpop.f32.mrf.mxu0
    %v7427 = vadd.f32 %v6007, %v7426
    %v7428 = vpop.f32.mrf.mxu0
    %v7429 = vadd.f32 %v6003, %v7428
    %v7430 = vpop.f32.mrf.mxu0
    %v7431 = vadd.f32 %v6007, %v7430
    %7432 = vmatprep.mubr.bf16.mxu0 %v6483
    %7433 = vmatmul.mubr.bf16.gmra.mxu0 %v6482
    %v7434 = vpop.f32.mrf.mxu0
    %v7435 = vadd.f32 %v6003, %v7434
    %v7436 = vpop.f32.mrf.mxu0
    %v7437 = vadd.f32 %v6007, %v7436
    %v7438 = vpop.f32.mrf.mxu0
    %v7439 = vadd.f32 %v6003, %v7438
    %v7440 = vpop.f32.mrf.mxu0
    %v7441 = vadd.f32 %v6007, %v7440
    %7442 = vmatprep.mubr.bf16.mxu0 %v6491
    %7443 = vmatmul.mubr.bf16.gmra.mxu0 %v6490
    %v7444 = vpop.f32.mrf.mxu0
    %v7445 = vadd.f32 %v6003, %v7444
    %v7446 = vpop.f32.mrf.mxu0
    %v7447 = vadd.f32 %v6007, %v7446
    %v7448 = vpop.f32.mrf.mxu0
    %v7449 = vadd.f32 %v6003, %v7448
    %v7450 = vpop.f32.mrf.mxu0
    %v7451 = vadd.f32 %v6007, %v7450
    %7452 = vmatprep.mubr.bf16.mxu0 %v6499
    %7453 = vmatmul.mubr.bf16.gmra.mxu0 %v6498
    %v7454 = vpop.f32.mrf.mxu0
    %v7455 = vadd.f32 %v6003, %v7454
    %v7456 = vpop.f32.mrf.mxu0
    %v7457 = vadd.f32 %v6007, %v7456
    %v7458 = vpop.f32.mrf.mxu0
    %v7459 = vadd.f32 %v6003, %v7458
    %v7460 = vpop.f32.mrf.mxu0
    %v7461 = vadd.f32 %v6007, %v7460
    %7462 = vmatprep.mubr.bf16.mxu0 %v6507
    %7463 = vmatmul.mubr.bf16.gmra.mxu0 %v6506
    %v7464 = vpop.f32.mrf.mxu0
    %v7465 = vadd.f32 %v6003, %v7464
    %v7466 = vpop.f32.mrf.mxu0
    %v7467 = vadd.f32 %v6007, %v7466
    %v7468 = vpop.f32.mrf.mxu0
    %v7469 = vadd.f32 %v6003, %v7468
    %v7470 = vpop.f32.mrf.mxu0
    %v7471 = vadd.f32 %v6007, %v7470
    %7472 = vmatprep.mubr.bf16.mxu0 %v6515
    %7473 = vmatmul.mubr.bf16.gmra.mxu0 %v6514
    %v7474 = vpop.f32.mrf.mxu0
    %v7475 = vadd.f32 %v6003, %v7474
    %v7476 = vpop.f32.mrf.mxu0
    %v7477 = vadd.f32 %v6007, %v7476
    %v7478 = vpop.f32.mrf.mxu0
    %v7479 = vadd.f32 %v6003, %v7478
    %v7480 = vpop.f32.mrf.mxu0
    %v7481 = vadd.f32 %v6007, %v7480
    %7482 = vdwg.mxu0
    %7483 = vmatprep.subr.bf16.mxu0 %v7081
    %7484 = vmatpush1.bf16.msra.mxu0 %v7080
    %7485 = vmatprep.subr.bf16.mxu0 %v7079
    %7486 = vmatpush1.bf16.msra.mxu0 %v7078
    %7487 = vmatprep.subr.bf16.mxu0 %v7077
    %7488 = vmatpush1.bf16.msra.mxu0 %v7076
    %7489 = vmatprep.subr.bf16.mxu0 %v7075
    %7490 = vmatpush1.bf16.msra.mxu0 %v7074
    %7491 = vmatprep.subr.bf16.mxu0 %v7073
    %7492 = vmatpush1.bf16.msra.mxu0 %v7072
    %7493 = vmatprep.subr.bf16.mxu0 %v7071
    %7494 = vmatpush1.bf16.msra.mxu0 %v7070
    %7495 = vmatprep.subr.bf16.mxu0 %v7069
    %7496 = vmatpush1.bf16.msra.mxu0 %v7068
    %7497 = vmatprep.subr.bf16.mxu0 %v7067
    %7498 = vmatpush1.bf16.msra.mxu0 %v7066
    %7499 = vmatprep.subr.bf16.mxu0 %v7097
    %7500 = vmatpush2.bf16.msra.mxu0 %v7096
    %7501 = vmatprep.subr.bf16.mxu0 %v7095
    %7502 = vmatpush2.bf16.msra.mxu0 %v7094
    %7503 = vmatprep.subr.bf16.mxu0 %v7093
    %7504 = vmatpush2.bf16.msra.mxu0 %v7092
    %7505 = vmatprep.subr.bf16.mxu0 %v7091
    %7506 = vmatpush2.bf16.msra.mxu0 %v7090
    %7507 = vmatprep.subr.bf16.mxu0 %v7089
    %7508 = vmatpush2.bf16.msra.mxu0 %v7088
    %7509 = vmatprep.subr.bf16.mxu0 %v7087
    %7510 = vmatpush2.bf16.msra.mxu0 %v7086
    %7511 = vmatprep.subr.bf16.mxu0 %v7085
    %7512 = vmatpush2.bf16.msra.mxu0 %v7084
    %7513 = vmatprep.subr.bf16.mxu0 %v7083
    %7514 = vmatpush2.bf16.msra.mxu0 %v7082
    %7515 = vmatprep.mubr.bf16.mxu0 %v6397
    %7516 = vmatmul.mubr.bf16.gmra.mxu0 %v6396
    %v7517 = vpop.f32.mrf.mxu0
    %v7518 = vadd.f32 %v7325, %v7517
    %v7519 = vpop.f32.mrf.mxu0
    %v7520 = vadd.f32 %v7327, %v7519
    %v7521 = vpop.f32.mrf.mxu0
    %v7522 = vadd.f32 %v7329, %v7521
    %v7523 = vpop.f32.mrf.mxu0
    %v7524 = vadd.f32 %v7331, %v7523
    %7525 = vmatprep.mubr.bf16.mxu0 %v6405
    %7526 = vmatmul.mubr.bf16.gmra.mxu0 %v6404
    %v7527 = vpop.f32.mrf.mxu0
    %v7528 = vadd.f32 %v7335, %v7527
    %v7529 = vpop.f32.mrf.mxu0
    %v7530 = vadd.f32 %v7337, %v7529
    %v7531 = vpop.f32.mrf.mxu0
    %v7532 = vadd.f32 %v7339, %v7531
    %v7533 = vpop.f32.mrf.mxu0
    %v7534 = vadd.f32 %v7341, %v7533
    %7535 = vmatprep.mubr.bf16.mxu0 %v6413
    %7536 = vmatmul.mubr.bf16.gmra.mxu0 %v6412
    %v7537 = vpop.f32.mrf.mxu0
    %v7538 = vadd.f32 %v7345, %v7537
    %v7539 = vpop.f32.mrf.mxu0
    %v7540 = vadd.f32 %v7347, %v7539
    %v7541 = vpop.f32.mrf.mxu0
    %v7542 = vadd.f32 %v7349, %v7541
    %v7543 = vpop.f32.mrf.mxu0
    %v7544 = vadd.f32 %v7351, %v7543
    %7545 = vmatprep.mubr.bf16.mxu0 %v6421
    %7546 = vmatmul.mubr.bf16.gmra.mxu0 %v6420
    %v7547 = vpop.f32.mrf.mxu0
    %v7548 = vadd.f32 %v7355, %v7547
    %v7549 = vpop.f32.mrf.mxu0
    %v7550 = vadd.f32 %v7357, %v7549
    %v7551 = vpop.f32.mrf.mxu0
    %v7552 = vadd.f32 %v7359, %v7551
    %v7553 = vpop.f32.mrf.mxu0
    %v7554 = vadd.f32 %v7361, %v7553
    %7555 = vmatprep.mubr.bf16.mxu0 %v6429
    %7556 = vmatmul.mubr.bf16.gmra.mxu0 %v6428
    %v7557 = vpop.f32.mrf.mxu0
    %v7558 = vadd.f32 %v7365, %v7557
    %v7559 = vpop.f32.mrf.mxu0
    %v7560 = vadd.f32 %v7367, %v7559
    %v7561 = vpop.f32.mrf.mxu0
    %v7562 = vadd.f32 %v7369, %v7561
    %v7563 = vpop.f32.mrf.mxu0
    %v7564 = vadd.f32 %v7371, %v7563
    %7565 = vmatprep.mubr.bf16.mxu0 %v6437
    %7566 = vmatmul.mubr.bf16.gmra.mxu0 %v6436
    %v7567 = vpop.f32.mrf.mxu0
    %v7568 = vadd.f32 %v7375, %v7567
    %v7569 = vpop.f32.mrf.mxu0
    %v7570 = vadd.f32 %v7377, %v7569
    %v7571 = vpop.f32.mrf.mxu0
    %v7572 = vadd.f32 %v7379, %v7571
    %v7573 = vpop.f32.mrf.mxu0
    %v7574 = vadd.f32 %v7381, %v7573
    %7575 = vmatprep.mubr.bf16.mxu0 %v6445
    %7576 = vmatmul.mubr.bf16.gmra.mxu0 %v6444
    %v7577 = vpop.f32.mrf.mxu0
    %v7578 = vadd.f32 %v7385, %v7577
    %v7579 = vpop.f32.mrf.mxu0
    %v7580 = vadd.f32 %v7387, %v7579
    %v7581 = vpop.f32.mrf.mxu0
    %v7582 = vadd.f32 %v7389, %v7581
    %v7583 = vpop.f32.mrf.mxu0
    %v7584 = vadd.f32 %v7391, %v7583
    %7585 = vmatprep.mubr.bf16.mxu0 %v6453
    %7586 = vmatmul.mubr.bf16.gmra.mxu0 %v6452
    %v7587 = vpop.f32.mrf.mxu0
    %v7588 = vadd.f32 %v7395, %v7587
    %v7589 = vpop.f32.mrf.mxu0
    %v7590 = vadd.f32 %v7397, %v7589
    %v7591 = vpop.f32.mrf.mxu0
    %v7592 = vadd.f32 %v7399, %v7591
    %v7593 = vpop.f32.mrf.mxu0
    %v7594 = vadd.f32 %v7401, %v7593
    %7595 = vmatprep.mubr.bf16.mxu0 %v6461
    %7596 = vmatmul.mubr.bf16.gmra.mxu0 %v6460
    %v7597 = vpop.f32.mrf.mxu0
    %v7598 = vadd.f32 %v7405, %v7597
    %v7599 = vpop.f32.mrf.mxu0
    %v7600 = vadd.f32 %v7407, %v7599
    %v7601 = vpop.f32.mrf.mxu0
    %v7602 = vadd.f32 %v7409, %v7601
    %v7603 = vpop.f32.mrf.mxu0
    %v7604 = vadd.f32 %v7411, %v7603
    %7605 = vmatprep.mubr.bf16.mxu0 %v6469
    %7606 = vmatmul.mubr.bf16.gmra.mxu0 %v6468
    %v7607 = vpop.f32.mrf.mxu0
    %v7608 = vadd.f32 %v7415, %v7607
    %v7609 = vpop.f32.mrf.mxu0
    %v7610 = vadd.f32 %v7417, %v7609
    %v7611 = vpop.f32.mrf.mxu0
    %v7612 = vadd.f32 %v7419, %v7611
    %v7613 = vpop.f32.mrf.mxu0
    %v7614 = vadd.f32 %v7421, %v7613
    %7615 = vmatprep.mubr.bf16.mxu0 %v6477
    %7616 = vmatmul.mubr.bf16.gmra.mxu0 %v6476
    %v7617 = vpop.f32.mrf.mxu0
    %v7618 = vadd.f32 %v7425, %v7617
    %v7619 = vpop.f32.mrf.mxu0
    %v7620 = vadd.f32 %v7427, %v7619
    %v7621 = vpop.f32.mrf.mxu0
    %v7622 = vadd.f32 %v7429, %v7621
    %v7623 = vpop.f32.mrf.mxu0
    %v7624 = vadd.f32 %v7431, %v7623
    %7625 = vmatprep.mubr.bf16.mxu0 %v6485
    %7626 = vmatmul.mubr.bf16.gmra.mxu0 %v6484
    %v7627 = vpop.f32.mrf.mxu0
    %v7628 = vadd.f32 %v7435, %v7627
    %v7629 = vpop.f32.mrf.mxu0
    %v7630 = vadd.f32 %v7437, %v7629
    %v7631 = vpop.f32.mrf.mxu0
    %v7632 = vadd.f32 %v7439, %v7631
    %v7633 = vpop.f32.mrf.mxu0
    %v7634 = vadd.f32 %v7441, %v7633
    %7635 = vmatprep.mubr.bf16.mxu0 %v6493
    %7636 = vmatmul.mubr.bf16.gmra.mxu0 %v6492
    %v7637 = vpop.f32.mrf.mxu0
    %v7638 = vadd.f32 %v7445, %v7637
    %v7639 = vpop.f32.mrf.mxu0
    %v7640 = vadd.f32 %v7447, %v7639
    %v7641 = vpop.f32.mrf.mxu0
    %v7642 = vadd.f32 %v7449, %v7641
    %v7643 = vpop.f32.mrf.mxu0
    %v7644 = vadd.f32 %v7451, %v7643
    %7645 = vmatprep.mubr.bf16.mxu0 %v6501
    %7646 = vmatmul.mubr.bf16.gmra.mxu0 %v6500
    %v7647 = vpop.f32.mrf.mxu0
    %v7648 = vadd.f32 %v7455, %v7647
    %v7649 = vpop.f32.mrf.mxu0
    %v7650 = vadd.f32 %v7457, %v7649
    %v7651 = vpop.f32.mrf.mxu0
    %v7652 = vadd.f32 %v7459, %v7651
    %v7653 = vpop.f32.mrf.mxu0
    %v7654 = vadd.f32 %v7461, %v7653
    %7655 = vmatprep.mubr.bf16.mxu0 %v6509
    %7656 = vmatmul.mubr.bf16.gmra.mxu0 %v6508
    %v7657 = vpop.f32.mrf.mxu0
    %v7658 = vadd.f32 %v7465, %v7657
    %v7659 = vpop.f32.mrf.mxu0
    %v7660 = vadd.f32 %v7467, %v7659
    %v7661 = vpop.f32.mrf.mxu0
    %v7662 = vadd.f32 %v7469, %v7661
    %v7663 = vpop.f32.mrf.mxu0
    %v7664 = vadd.f32 %v7471, %v7663
    %7665 = vmatprep.mubr.bf16.mxu0 %v6517
    %7666 = vmatmul.mubr.bf16.gmra.mxu0 %v6516
    %v7667 = vpop.f32.mrf.mxu0
    %v7668 = vadd.f32 %v7475, %v7667
    %v7669 = vpop.f32.mrf.mxu0
    %v7670 = vadd.f32 %v7477, %v7669
    %v7671 = vpop.f32.mrf.mxu0
    %v7672 = vadd.f32 %v7479, %v7671
    %v7673 = vpop.f32.mrf.mxu0
    %v7674 = vadd.f32 %v7481, %v7673
    %7675 = vdwg.mxu0
    %7676 = vmatprep.subr.bf16.mxu0 %v7113
    %7677 = vmatpush1.bf16.msra.mxu0 %v7112
    %7678 = vmatprep.subr.bf16.mxu0 %v7111
    %7679 = vmatpush1.bf16.msra.mxu0 %v7110
    %7680 = vmatprep.subr.bf16.mxu0 %v7109
    %7681 = vmatpush1.bf16.msra.mxu0 %v7108
    %7682 = vmatprep.subr.bf16.mxu0 %v7107
    %7683 = vmatpush1.bf16.msra.mxu0 %v7106
    %7684 = vmatprep.subr.bf16.mxu0 %v7105
    %7685 = vmatpush1.bf16.msra.mxu0 %v7104
    %7686 = vmatprep.subr.bf16.mxu0 %v7103
    %7687 = vmatpush1.bf16.msra.mxu0 %v7102
    %7688 = vmatprep.subr.bf16.mxu0 %v7101
    %7689 = vmatpush1.bf16.msra.mxu0 %v7100
    %7690 = vmatprep.subr.bf16.mxu0 %v7099
    %7691 = vmatpush1.bf16.msra.mxu0 %v7098
    %7692 = vmatprep.subr.bf16.mxu0 %v7129
    %7693 = vmatpush2.bf16.msra.mxu0 %v7128
    %7694 = vmatprep.subr.bf16.mxu0 %v7127
    %7695 = vmatpush2.bf16.msra.mxu0 %v7126
    %7696 = vmatprep.subr.bf16.mxu0 %v7125
    %7697 = vmatpush2.bf16.msra.mxu0 %v7124
    %7698 = vmatprep.subr.bf16.mxu0 %v7123
    %7699 = vmatpush2.bf16.msra.mxu0 %v7122
    %7700 = vmatprep.subr.bf16.mxu0 %v7121
    %7701 = vmatpush2.bf16.msra.mxu0 %v7120
    %7702 = vmatprep.subr.bf16.mxu0 %v7119
    %7703 = vmatpush2.bf16.msra.mxu0 %v7118
    %7704 = vmatprep.subr.bf16.mxu0 %v7117
    %7705 = vmatpush2.bf16.msra.mxu0 %v7116
    %7706 = vmatprep.subr.bf16.mxu0 %v7115
    %7707 = vmatpush2.bf16.msra.mxu0 %v7114
    %7708 = vmatprep.mubr.bf16.mxu0 %v6399
    %7709 = vmatmul.mubr.bf16.gmra.mxu0 %v6398
    %v7710 = vpop.f32.mrf.mxu0
    %v7711 = vadd.f32 %v7518, %v7710
    %v7712 = vpop.f32.mrf.mxu0
    %v7713 = vadd.f32 %v7520, %v7712
    %v7714 = vpop.f32.mrf.mxu0
    %v7715 = vadd.f32 %v7522, %v7714
    %v7716 = vpop.f32.mrf.mxu0
    %v7717 = vadd.f32 %v7524, %v7716
    %7718 = vmatprep.mubr.bf16.mxu0 %v6407
    %7719 = vmatmul.mubr.bf16.gmra.mxu0 %v6406
    %v7720 = vpop.f32.mrf.mxu0
    %v7721 = vadd.f32 %v7528, %v7720
    %v7722 = vpop.f32.mrf.mxu0
    %v7723 = vadd.f32 %v7530, %v7722
    %v7724 = vpop.f32.mrf.mxu0
    %v7725 = vadd.f32 %v7532, %v7724
    %v7726 = vpop.f32.mrf.mxu0
    %v7727 = vadd.f32 %v7534, %v7726
    %7728 = vmatprep.mubr.bf16.mxu0 %v6415
    %7729 = vmatmul.mubr.bf16.gmra.mxu0 %v6414
    %v7730 = vpop.f32.mrf.mxu0
    %v7731 = vadd.f32 %v7538, %v7730
    %v7732 = vpop.f32.mrf.mxu0
    %v7733 = vadd.f32 %v7540, %v7732
    %v7734 = vpop.f32.mrf.mxu0
    %v7735 = vadd.f32 %v7542, %v7734
    %v7736 = vpop.f32.mrf.mxu0
    %v7737 = vadd.f32 %v7544, %v7736
    %7738 = vmatprep.mubr.bf16.mxu0 %v6423
    %7739 = vmatmul.mubr.bf16.gmra.mxu0 %v6422
    %v7740 = vpop.f32.mrf.mxu0
    %v7741 = vadd.f32 %v7548, %v7740
    %v7742 = vpop.f32.mrf.mxu0
    %v7743 = vadd.f32 %v7550, %v7742
    %v7744 = vpop.f32.mrf.mxu0
    %v7745 = vadd.f32 %v7552, %v7744
    %v7746 = vpop.f32.mrf.mxu0
    %v7747 = vadd.f32 %v7554, %v7746
    %7748 = vmatprep.mubr.bf16.mxu0 %v6431
    %7749 = vmatmul.mubr.bf16.gmra.mxu0 %v6430
    %v7750 = vpop.f32.mrf.mxu0
    %v7751 = vadd.f32 %v7558, %v7750
    %v7752 = vpop.f32.mrf.mxu0
    %v7753 = vadd.f32 %v7560, %v7752
    %v7754 = vpop.f32.mrf.mxu0
    %v7755 = vadd.f32 %v7562, %v7754
    %v7756 = vpop.f32.mrf.mxu0
    %v7757 = vadd.f32 %v7564, %v7756
    %7758 = vmatprep.mubr.bf16.mxu0 %v6439
    %7759 = vmatmul.mubr.bf16.gmra.mxu0 %v6438
    %v7760 = vpop.f32.mrf.mxu0
    %v7761 = vadd.f32 %v7568, %v7760
    %v7762 = vpop.f32.mrf.mxu0
    %v7763 = vadd.f32 %v7570, %v7762
    %v7764 = vpop.f32.mrf.mxu0
    %v7765 = vadd.f32 %v7572, %v7764
    %v7766 = vpop.f32.mrf.mxu0
    %v7767 = vadd.f32 %v7574, %v7766
    %7768 = vmatprep.mubr.bf16.mxu0 %v6447
    %7769 = vmatmul.mubr.bf16.gmra.mxu0 %v6446
    %v7770 = vpop.f32.mrf.mxu0
    %v7771 = vadd.f32 %v7578, %v7770
    %v7772 = vpop.f32.mrf.mxu0
    %v7773 = vadd.f32 %v7580, %v7772
    %v7774 = vpop.f32.mrf.mxu0
    %v7775 = vadd.f32 %v7582, %v7774
    %v7776 = vpop.f32.mrf.mxu0
    %v7777 = vadd.f32 %v7584, %v7776
    %7778 = vmatprep.mubr.bf16.mxu0 %v6455
    %7779 = vmatmul.mubr.bf16.gmra.mxu0 %v6454
    %v7780 = vpop.f32.mrf.mxu0
    %v7781 = vadd.f32 %v7588, %v7780
    %v7782 = vpop.f32.mrf.mxu0
    %v7783 = vadd.f32 %v7590, %v7782
    %v7784 = vpop.f32.mrf.mxu0
    %v7785 = vadd.f32 %v7592, %v7784
    %v7786 = vpop.f32.mrf.mxu0
    %v7787 = vadd.f32 %v7594, %v7786
    %7788 = vmatprep.mubr.bf16.mxu0 %v6463
    %7789 = vmatmul.mubr.bf16.gmra.mxu0 %v6462
    %v7790 = vpop.f32.mrf.mxu0
    %v7791 = vadd.f32 %v7598, %v7790
    %v7792 = vpop.f32.mrf.mxu0
    %v7793 = vadd.f32 %v7600, %v7792
    %v7794 = vpop.f32.mrf.mxu0
    %v7795 = vadd.f32 %v7602, %v7794
    %v7796 = vpop.f32.mrf.mxu0
    %v7797 = vadd.f32 %v7604, %v7796
    %7798 = vmatprep.mubr.bf16.mxu0 %v6471
    %7799 = vmatmul.mubr.bf16.gmra.mxu0 %v6470
    %v7800 = vpop.f32.mrf.mxu0
    %v7801 = vadd.f32 %v7608, %v7800
    %v7802 = vpop.f32.mrf.mxu0
    %v7803 = vadd.f32 %v7610, %v7802
    %v7804 = vpop.f32.mrf.mxu0
    %v7805 = vadd.f32 %v7612, %v7804
    %v7806 = vpop.f32.mrf.mxu0
    %v7807 = vadd.f32 %v7614, %v7806
    %7808 = vmatprep.mubr.bf16.mxu0 %v6479
    %7809 = vmatmul.mubr.bf16.gmra.mxu0 %v6478
    %v7810 = vpop.f32.mrf.mxu0
    %v7811 = vadd.f32 %v7618, %v7810
    %v7812 = vpop.f32.mrf.mxu0
    %v7813 = vadd.f32 %v7620, %v7812
    %v7814 = vpop.f32.mrf.mxu0
    %v7815 = vadd.f32 %v7622, %v7814
    %v7816 = vpop.f32.mrf.mxu0
    %v7817 = vadd.f32 %v7624, %v7816
    %7818 = vmatprep.mubr.bf16.mxu0 %v6487
    %7819 = vmatmul.mubr.bf16.gmra.mxu0 %v6486
    %v7820 = vpop.f32.mrf.mxu0
    %v7821 = vadd.f32 %v7628, %v7820
    %v7822 = vpop.f32.mrf.mxu0
    %v7823 = vadd.f32 %v7630, %v7822
    %v7824 = vpop.f32.mrf.mxu0
    %v7825 = vadd.f32 %v7632, %v7824
    %v7826 = vpop.f32.mrf.mxu0
    %v7827 = vadd.f32 %v7634, %v7826
    %7828 = vmatprep.mubr.bf16.mxu0 %v6495
    %7829 = vmatmul.mubr.bf16.gmra.mxu0 %v6494
    %v7830 = vpop.f32.mrf.mxu0
    %v7831 = vadd.f32 %v7638, %v7830
    %v7832 = vpop.f32.mrf.mxu0
    %v7833 = vadd.f32 %v7640, %v7832
    %v7834 = vpop.f32.mrf.mxu0
    %v7835 = vadd.f32 %v7642, %v7834
    %v7836 = vpop.f32.mrf.mxu0
    %v7837 = vadd.f32 %v7644, %v7836
    %7838 = vmatprep.mubr.bf16.mxu0 %v6503
    %7839 = vmatmul.mubr.bf16.gmra.mxu0 %v6502
    %v7840 = vpop.f32.mrf.mxu0
    %v7841 = vadd.f32 %v7648, %v7840
    %v7842 = vpop.f32.mrf.mxu0
    %v7843 = vadd.f32 %v7650, %v7842
    %v7844 = vpop.f32.mrf.mxu0
    %v7845 = vadd.f32 %v7652, %v7844
    %v7846 = vpop.f32.mrf.mxu0
    %v7847 = vadd.f32 %v7654, %v7846
    %7848 = vmatprep.mubr.bf16.mxu0 %v6511
    %7849 = vmatmul.mubr.bf16.gmra.mxu0 %v6510
    %v7850 = vpop.f32.mrf.mxu0
    %v7851 = vadd.f32 %v7658, %v7850
    %v7852 = vpop.f32.mrf.mxu0
    %v7853 = vadd.f32 %v7660, %v7852
    %v7854 = vpop.f32.mrf.mxu0
    %v7855 = vadd.f32 %v7662, %v7854
    %v7856 = vpop.f32.mrf.mxu0
    %v7857 = vadd.f32 %v7664, %v7856
    %7858 = vmatprep.mubr.bf16.mxu0 %v6519
    %7859 = vmatmul.mubr.bf16.gmra.mxu0 %v6518
    %v7860 = vpop.f32.mrf.mxu0
    %v7861 = vadd.f32 %v7668, %v7860
    %v7862 = vpop.f32.mrf.mxu0
    %v7863 = vadd.f32 %v7670, %v7862
    %v7864 = vpop.f32.mrf.mxu0
    %v7865 = vadd.f32 %v7672, %v7864
    %v7866 = vpop.f32.mrf.mxu0
    %v7867 = vadd.f32 %v7674, %v7866
    %7868 = vdwg.mxu0
    %7869 = vmatprep.subr.bf16.mxu0 %v7145
    %7870 = vmatpush1.bf16.msra.mxu0 %v7144
    %7871 = vmatprep.subr.bf16.mxu0 %v7143
    %7872 = vmatpush1.bf16.msra.mxu0 %v7142
    %7873 = vmatprep.subr.bf16.mxu0 %v7141
    %7874 = vmatpush1.bf16.msra.mxu0 %v7140
    %7875 = vmatprep.subr.bf16.mxu0 %v7139
    %7876 = vmatpush1.bf16.msra.mxu0 %v7138
    %7877 = vmatprep.subr.bf16.mxu0 %v7137
    %7878 = vmatpush1.bf16.msra.mxu0 %v7136
    %7879 = vmatprep.subr.bf16.mxu0 %v7135
    %7880 = vmatpush1.bf16.msra.mxu0 %v7134
    %7881 = vmatprep.subr.bf16.mxu0 %v7133
    %7882 = vmatpush1.bf16.msra.mxu0 %v7132
    %7883 = vmatprep.subr.bf16.mxu0 %v7131
    %7884 = vmatpush1.bf16.msra.mxu0 %v7130
    %7885 = vmatprep.subr.bf16.mxu0 %v7161
    %7886 = vmatpush2.bf16.msra.mxu0 %v7160
    %7887 = vmatprep.subr.bf16.mxu0 %v7159
    %7888 = vmatpush2.bf16.msra.mxu0 %v7158
    %7889 = vmatprep.subr.bf16.mxu0 %v7157
    %7890 = vmatpush2.bf16.msra.mxu0 %v7156
    %7891 = vmatprep.subr.bf16.mxu0 %v7155
    %7892 = vmatpush2.bf16.msra.mxu0 %v7154
    %7893 = vmatprep.subr.bf16.mxu0 %v7153
    %7894 = vmatpush2.bf16.msra.mxu0 %v7152
    %7895 = vmatprep.subr.bf16.mxu0 %v7151
    %7896 = vmatpush2.bf16.msra.mxu0 %v7150
    %7897 = vmatprep.subr.bf16.mxu0 %v7149
    %7898 = vmatpush2.bf16.msra.mxu0 %v7148
    %7899 = vmatprep.subr.bf16.mxu0 %v7147
    %7900 = vmatpush2.bf16.msra.mxu0 %v7146
    %7901 = vmatprep.mubr.bf16.mxu0 %v6401
    %7902 = vmatmul.mubr.bf16.gmra.mxu0 %v6400
    %v7903 = vpop.f32.mrf.mxu0
    %v7904 = vadd.f32 %v7711, %v7903
    %v7905 = vpop.f32.mrf.mxu0
    %v7906 = vadd.f32 %v7713, %v7905
    %v7907 = vpop.f32.mrf.mxu0
    %v7908 = vadd.f32 %v7715, %v7907
    %v7909 = vpop.f32.mrf.mxu0
    %v7910 = vadd.f32 %v7717, %v7909
    %7911 = vmatprep.mubr.bf16.mxu0 %v6409
    %7912 = vmatmul.mubr.bf16.gmra.mxu0 %v6408
    %v7913 = vpop.f32.mrf.mxu0
    %v7914 = vadd.f32 %v7721, %v7913
    %v7915 = vpop.f32.mrf.mxu0
    %v7916 = vadd.f32 %v7723, %v7915
    %v7917 = vpop.f32.mrf.mxu0
    %v7918 = vadd.f32 %v7725, %v7917
    %v7919 = vpop.f32.mrf.mxu0
    %v7920 = vadd.f32 %v7727, %v7919
    %7921 = vmatprep.mubr.bf16.mxu0 %v6417
    %7922 = vmatmul.mubr.bf16.gmra.mxu0 %v6416
    %v7923 = vpop.f32.mrf.mxu0
    %v7924 = vadd.f32 %v7731, %v7923
    %v7925 = vpop.f32.mrf.mxu0
    %v7926 = vadd.f32 %v7733, %v7925
    %v7927 = vpop.f32.mrf.mxu0
    %v7928 = vadd.f32 %v7735, %v7927
    %v7929 = vpop.f32.mrf.mxu0
    %v7930 = vadd.f32 %v7737, %v7929
    %7931 = vmatprep.mubr.bf16.mxu0 %v6425
    %7932 = vmatmul.mubr.bf16.gmra.mxu0 %v6424
    %v7933 = vpop.f32.mrf.mxu0
    %v7934 = vadd.f32 %v7741, %v7933
    %v7935 = vpop.f32.mrf.mxu0
    %v7936 = vadd.f32 %v7743, %v7935
    %v7937 = vpop.f32.mrf.mxu0
    %v7938 = vadd.f32 %v7745, %v7937
    %v7939 = vpop.f32.mrf.mxu0
    %v7940 = vadd.f32 %v7747, %v7939
    %7941 = vmatprep.mubr.bf16.mxu0 %v6433
    %7942 = vmatmul.mubr.bf16.gmra.mxu0 %v6432
    %v7943 = vpop.f32.mrf.mxu0
    %v7944 = vadd.f32 %v7751, %v7943
    %v7945 = vpop.f32.mrf.mxu0
    %v7946 = vadd.f32 %v7753, %v7945
    %v7947 = vpop.f32.mrf.mxu0
    %v7948 = vadd.f32 %v7755, %v7947
    %v7949 = vpop.f32.mrf.mxu0
    %v7950 = vadd.f32 %v7757, %v7949
    %7951 = vmatprep.mubr.bf16.mxu0 %v6441
    %7952 = vmatmul.mubr.bf16.gmra.mxu0 %v6440
    %v7953 = vpop.f32.mrf.mxu0
    %v7954 = vadd.f32 %v7761, %v7953
    %v7955 = vpop.f32.mrf.mxu0
    %v7956 = vadd.f32 %v7763, %v7955
    %v7957 = vpop.f32.mrf.mxu0
    %v7958 = vadd.f32 %v7765, %v7957
    %v7959 = vpop.f32.mrf.mxu0
    %v7960 = vadd.f32 %v7767, %v7959
    %7961 = vmatprep.mubr.bf16.mxu0 %v6449
    %7962 = vmatmul.mubr.bf16.gmra.mxu0 %v6448
    %v7963 = vpop.f32.mrf.mxu0
    %v7964 = vadd.f32 %v7771, %v7963
    %v7965 = vpop.f32.mrf.mxu0
    %v7966 = vadd.f32 %v7773, %v7965
    %v7967 = vpop.f32.mrf.mxu0
    %v7968 = vadd.f32 %v7775, %v7967
    %v7969 = vpop.f32.mrf.mxu0
    %v7970 = vadd.f32 %v7777, %v7969
    %7971 = vmatprep.mubr.bf16.mxu0 %v6457
    %7972 = vmatmul.mubr.bf16.gmra.mxu0 %v6456
    %v7973 = vpop.f32.mrf.mxu0
    %v7974 = vadd.f32 %v7781, %v7973
    %v7975 = vpop.f32.mrf.mxu0
    %v7976 = vadd.f32 %v7783, %v7975
    %v7977 = vpop.f32.mrf.mxu0
    %v7978 = vadd.f32 %v7785, %v7977
    %v7979 = vpop.f32.mrf.mxu0
    %v7980 = vadd.f32 %v7787, %v7979
    %7981 = vmatprep.mubr.bf16.mxu0 %v6465
    %7982 = vmatmul.mubr.bf16.gmra.mxu0 %v6464
    %v7983 = vpop.f32.mrf.mxu0
    %v7984 = vadd.f32 %v7791, %v7983
    %v7985 = vpop.f32.mrf.mxu0
    %v7986 = vadd.f32 %v7793, %v7985
    %v7987 = vpop.f32.mrf.mxu0
    %v7988 = vadd.f32 %v7795, %v7987
    %v7989 = vpop.f32.mrf.mxu0
    %v7990 = vadd.f32 %v7797, %v7989
    %7991 = vmatprep.mubr.bf16.mxu0 %v6473
    %7992 = vmatmul.mubr.bf16.gmra.mxu0 %v6472
    %v7993 = vpop.f32.mrf.mxu0
    %v7994 = vadd.f32 %v7801, %v7993
    %v7995 = vpop.f32.mrf.mxu0
    %v7996 = vadd.f32 %v7803, %v7995
    %v7997 = vpop.f32.mrf.mxu0
    %v7998 = vadd.f32 %v7805, %v7997
    %v7999 = vpop.f32.mrf.mxu0
    %v8000 = vadd.f32 %v7807, %v7999
    %8001 = vmatprep.mubr.bf16.mxu0 %v6481
    %8002 = vmatmul.mubr.bf16.gmra.mxu0 %v6480
    %v8003 = vpop.f32.mrf.mxu0
    %v8004 = vadd.f32 %v7811, %v8003
    %v8005 = vpop.f32.mrf.mxu0
    %v8006 = vadd.f32 %v7813, %v8005
    %v8007 = vpop.f32.mrf.mxu0
    %v8008 = vadd.f32 %v7815, %v8007
    %v8009 = vpop.f32.mrf.mxu0
    %v8010 = vadd.f32 %v7817, %v8009
    %8011 = vmatprep.mubr.bf16.mxu0 %v6489
    %8012 = vmatmul.mubr.bf16.gmra.mxu0 %v6488
    %v8013 = vpop.f32.mrf.mxu0
    %v8014 = vadd.f32 %v7821, %v8013
    %v8015 = vpop.f32.mrf.mxu0
    %v8016 = vadd.f32 %v7823, %v8015
    %v8017 = vpop.f32.mrf.mxu0
    %v8018 = vadd.f32 %v7825, %v8017
    %v8019 = vpop.f32.mrf.mxu0
    %v8020 = vadd.f32 %v7827, %v8019
    %8021 = vmatprep.mubr.bf16.mxu0 %v6497
    %8022 = vmatmul.mubr.bf16.gmra.mxu0 %v6496
    %v8023 = vpop.f32.mrf.mxu0
    %v8024 = vadd.f32 %v7831, %v8023
    %v8025 = vpop.f32.mrf.mxu0
    %v8026 = vadd.f32 %v7833, %v8025
    %v8027 = vpop.f32.mrf.mxu0
    %v8028 = vadd.f32 %v7835, %v8027
    %v8029 = vpop.f32.mrf.mxu0
    %v8030 = vadd.f32 %v7837, %v8029
    %8031 = vmatprep.mubr.bf16.mxu0 %v6505
    %8032 = vmatmul.mubr.bf16.gmra.mxu0 %v6504
    %v8033 = vpop.f32.mrf.mxu0
    %v8034 = vadd.f32 %v7841, %v8033
    %v8035 = vpop.f32.mrf.mxu0
    %v8036 = vadd.f32 %v7843, %v8035
    %v8037 = vpop.f32.mrf.mxu0
    %v8038 = vadd.f32 %v7845, %v8037
    %v8039 = vpop.f32.mrf.mxu0
    %v8040 = vadd.f32 %v7847, %v8039
    %8041 = vmatprep.mubr.bf16.mxu0 %v6513
    %8042 = vmatmul.mubr.bf16.gmra.mxu0 %v6512
    %v8043 = vpop.f32.mrf.mxu0
    %v8044 = vadd.f32 %v7851, %v8043
    %v8045 = vpop.f32.mrf.mxu0
    %v8046 = vadd.f32 %v7853, %v8045
    %v8047 = vpop.f32.mrf.mxu0
    %v8048 = vadd.f32 %v7855, %v8047
    %v8049 = vpop.f32.mrf.mxu0
    %v8050 = vadd.f32 %v7857, %v8049
    %8051 = vmatprep.mubr.bf16.mxu0 %v6521
    %8052 = vmatmul.mubr.bf16.gmra.mxu0 %v6520
    %v8053 = vpop.f32.mrf.mxu0
    %v8054 = vadd.f32 %v7861, %v8053
    %v8055 = vpop.f32.mrf.mxu0
    %v8056 = vadd.f32 %v7863, %v8055
    %v8057 = vpop.f32.mrf.mxu0
    %v8058 = vadd.f32 %v7865, %v8057
    %v8059 = vpop.f32.mrf.mxu0
    %v8060 = vadd.f32 %v7867, %v8059
    %8061 = vdwg.mxu0
    %v8062 = vmul.f32 %v7904, 0.2
    %v8063 = vmul.f32 %v7906, 0.2
    %v8064 = vmul.f32 %v7908, 0.2
    %v8065 = vmul.f32 %v7910, 0.2
    %v8066 = vmul.f32 %v7914, 0.2
    %v8067 = vmul.f32 %v7916, 0.2
    %v8068 = vmul.f32 %v7918, 0.2
    %v8069 = vmul.f32 %v7920, 0.2
    %v8070 = vmul.f32 %v7924, 0.2
    %v8071 = vmul.f32 %v7926, 0.2
    %v8072 = vmul.f32 %v7928, 0.2
    %v8073 = vmul.f32 %v7930, 0.2
    %v8074 = vmul.f32 %v7934, 0.2
    %v8075 = vmul.f32 %v7936, 0.2
    %v8076 = vmul.f32 %v7938, 0.2
    %v8077 = vmul.f32 %v7940, 0.2
    %v8078 = vmul.f32 %v7944, 0.2
    %v8079 = vmul.f32 %v7946, 0.2
    %v8080 = vmul.f32 %v7948, 0.2
    %v8081 = vmul.f32 %v7950, 0.2
    %v8082 = vmul.f32 %v7954, 0.2
    %v8083 = vmul.f32 %v7956, 0.2
    %v8084 = vmul.f32 %v7958, 0.2
    %v8085 = vmul.f32 %v7960, 0.2
    %v8086 = vmul.f32 %v7964, 0.2
    %v8087 = vmul.f32 %v7966, 0.2
    %v8088 = vmul.f32 %v7968, 0.2
    %v8089 = vmul.f32 %v7970, 0.2
    %v8090 = vmul.f32 %v7974, 0.2
    %v8091 = vmul.f32 %v7976, 0.2
    %v8092 = vmul.f32 %v7978, 0.2
    %v8093 = vmul.f32 %v7980, 0.2
    %v8094 = vmul.f32 %v7984, 0.2
    %v8095 = vmul.f32 %v7986, 0.2
    %v8096 = vmul.f32 %v7988, 0.2
    %v8097 = vmul.f32 %v7990, 0.2
    %v8098 = vmul.f32 %v7994, 0.2
    %v8099 = vmul.f32 %v7996, 0.2
    %v8100 = vmul.f32 %v7998, 0.2
    %v8101 = vmul.f32 %v8000, 0.2
    %v8102 = vmul.f32 %v8004, 0.2
    %v8103 = vmul.f32 %v8006, 0.2
    %v8104 = vmul.f32 %v8008, 0.2
    %v8105 = vmul.f32 %v8010, 0.2
    %v8106 = vmul.f32 %v8014, 0.2
    %v8107 = vmul.f32 %v8016, 0.2
    %v8108 = vmul.f32 %v8018, 0.2
    %v8109 = vmul.f32 %v8020, 0.2
    %v8110 = vmul.f32 %v8024, 0.2
    %v8111 = vmul.f32 %v8026, 0.2
    %v8112 = vmul.f32 %v8028, 0.2
    %v8113 = vmul.f32 %v8030, 0.2
    %v8114 = vmul.f32 %v8034, 0.2
    %v8115 = vmul.f32 %v8036, 0.2
    %v8116 = vmul.f32 %v8038, 0.2
    %v8117 = vmul.f32 %v8040, 0.2
    %v8118 = vmul.f32 %v8044, 0.2
    %v8119 = vmul.f32 %v8046, 0.2
    %v8120 = vmul.f32 %v8048, 0.2
    %v8121 = vmul.f32 %v8050, 0.2
    %v8122 = vmul.f32 %v8054, 0.2
    %v8123 = vmul.f32 %v8056, 0.2
    %v8124 = vmul.f32 %v8058, 0.2
    %v8125 = vmul.f32 %v8060, 0.2
    %v8126 = vmax.f32 %v7904, %v8062
    %v8127 = vmax.f32 %v7906, %v8063
    %v8128 = vmax.f32 %v7908, %v8064
    %v8129 = vmax.f32 %v7910, %v8065
    %v8130 = vmax.f32 %v7914, %v8066
    %v8131 = vmax.f32 %v7916, %v8067
    %v8132 = vmax.f32 %v7918, %v8068
    %v8133 = vmax.f32 %v7920, %v8069
    %v8134 = vmax.f32 %v7924, %v8070
    %v8135 = vmax.f32 %v7926, %v8071
    %v8136 = vmax.f32 %v7928, %v8072
    %v8137 = vmax.f32 %v7930, %v8073
    %v8138 = vmax.f32 %v7934, %v8074
    %v8139 = vmax.f32 %v7936, %v8075
    %v8140 = vmax.f32 %v7938, %v8076
    %v8141 = vmax.f32 %v7940, %v8077
    %v8142 = vmax.f32 %v7944, %v8078
    %v8143 = vmax.f32 %v7946, %v8079
    %v8144 = vmax.f32 %v7948, %v8080
    %v8145 = vmax.f32 %v7950, %v8081
    %v8146 = vmax.f32 %v7954, %v8082
    %v8147 = vmax.f32 %v7956, %v8083
    %v8148 = vmax.f32 %v7958, %v8084
    %v8149 = vmax.f32 %v7960, %v8085
    %v8150 = vmax.f32 %v7964, %v8086
    %v8151 = vmax.f32 %v7966, %v8087
    %v8152 = vmax.f32 %v7968, %v8088
    %v8153 = vmax.f32 %v7970, %v8089
    %v8154 = vmax.f32 %v7974, %v8090
    %v8155 = vmax.f32 %v7976, %v8091
    %v8156 = vmax.f32 %v7978, %v8092
    %v8157 = vmax.f32 %v7980, %v8093
    %v8158 = vmax.f32 %v7984, %v8094
    %v8159 = vmax.f32 %v7986, %v8095
    %v8160 = vmax.f32 %v7988, %v8096
    %v8161 = vmax.f32 %v7990, %v8097
    %v8162 = vmax.f32 %v7994, %v8098
    %v8163 = vmax.f32 %v7996, %v8099
    %v8164 = vmax.f32 %v7998, %v8100
    %v8165 = vmax.f32 %v8000, %v8101
    %v8166 = vmax.f32 %v8004, %v8102
    %v8167 = vmax.f32 %v8006, %v8103
    %v8168 = vmax.f32 %v8008, %v8104
    %v8169 = vmax.f32 %v8010, %v8105
    %v8170 = vmax.f32 %v8014, %v8106
    %v8171 = vmax.f32 %v8016, %v8107
    %v8172 = vmax.f32 %v8018, %v8108
    %v8173 = vmax.f32 %v8020, %v8109
    %v8174 = vmax.f32 %v8024, %v8110
    %v8175 = vmax.f32 %v8026, %v8111
    %v8176 = vmax.f32 %v8028, %v8112
    %v8177 = vmax.f32 %v8030, %v8113
    %v8178 = vmax.f32 %v8034, %v8114
    %v8179 = vmax.f32 %v8036, %v8115
    %v8180 = vmax.f32 %v8038, %v8116
    %v8181 = vmax.f32 %v8040, %v8117
    %v8182 = vmax.f32 %v8044, %v8118
    %v8183 = vmax.f32 %v8046, %v8119
    %v8184 = vmax.f32 %v8048, %v8120
    %v8185 = vmax.f32 %v8050, %v8121
    %v8186 = vmax.f32 %v8054, %v8122
    %v8187 = vmax.f32 %v8056, %v8123
    %v8188 = vmax.f32 %v8058, %v8124
    %v8189 = vmax.f32 %v8060, %v8125
    %v8190 = vld [vmem:[%s7 + $0x8] sm:$0x3]
    %v8192 = vlaneseq
    %v8193 = vshrl.u32 %v8192, 7
    %v8194 = vsub.s32 0, %v8193
    %v8195 = vrot.slane %v8190, %v8194
    %v8196 = vlaneseq
    %v8197 = vshrl.u32 %v8196, 7
    %v8198 = vsub.s32 1, %v8197
    %v8199 = vrot.slane %v8190, %v8198
    %v8202 = vmul.f32 %v8126, %v8195
    %v8203 = vmul.f32 %v8127, %v8199
    %v8204 = vmul.f32 %v8128, %v8195
    %v8205 = vmul.f32 %v8129, %v8199
    %v8206 = vmul.f32 %v8130, %v8195
    %v8207 = vmul.f32 %v8131, %v8199
    %v8208 = vmul.f32 %v8132, %v8195
    %v8209 = vmul.f32 %v8133, %v8199
    %v8210 = vmul.f32 %v8134, %v8195
    %v8211 = vmul.f32 %v8135, %v8199
    %v8212 = vmul.f32 %v8136, %v8195
    %v8213 = vmul.f32 %v8137, %v8199
    %v8214 = vmul.f32 %v8138, %v8195
    %v8215 = vmul.f32 %v8139, %v8199
    %v8216 = vmul.f32 %v8140, %v8195
    %v8217 = vmul.f32 %v8141, %v8199
    %v8218 = vmul.f32 %v8142, %v8195
    %v8219 = vmul.f32 %v8143, %v8199
    %v8220 = vmul.f32 %v8144, %v8195
    %v8221 = vmul.f32 %v8145, %v8199
    %v8222 = vmul.f32 %v8146, %v8195
    %v8223 = vmul.f32 %v8147, %v8199
    %v8224 = vmul.f32 %v8148, %v8195
    %v8225 = vmul.f32 %v8149, %v8199
    %v8226 = vmul.f32 %v8150, %v8195
    %v8227 = vmul.f32 %v8151, %v8199
    %v8228 = vmul.f32 %v8152, %v8195
    %v8229 = vmul.f32 %v8153, %v8199
    %v8230 = vmul.f32 %v8154, %v8195
    %v8231 = vmul.f32 %v8155, %v8199
    %v8232 = vmul.f32 %v8156, %v8195
    %v8233 = vmul.f32 %v8157, %v8199
    %v8234 = vmul.f32 %v8158, %v8195
    %v8235 = vmul.f32 %v8159, %v8199
    %v8236 = vmul.f32 %v8160, %v8195
    %v8237 = vmul.f32 %v8161, %v8199
    %v8238 = vmul.f32 %v8162, %v8195
    %v8239 = vmul.f32 %v8163, %v8199
    %v8240 = vmul.f32 %v8164, %v8195
    %v8241 = vmul.f32 %v8165, %v8199
    %v8242 = vmul.f32 %v8166, %v8195
    %v8243 = vmul.f32 %v8167, %v8199
    %v8244 = vmul.f32 %v8168, %v8195
    %v8245 = vmul.f32 %v8169, %v8199
    %v8246 = vmul.f32 %v8170, %v8195
    %v8247 = vmul.f32 %v8171, %v8199
    %v8248 = vmul.f32 %v8172, %v8195
    %v8249 = vmul.f32 %v8173, %v8199
    %v8250 = vmul.f32 %v8174, %v8195
    %v8251 = vmul.f32 %v8175, %v8199
    %v8252 = vmul.f32 %v8176, %v8195
    %v8253 = vmul.f32 %v8177, %v8199
    %v8254 = vmul.f32 %v8178, %v8195
    %v8255 = vmul.f32 %v8179, %v8199
    %v8256 = vmul.f32 %v8180, %v8195
    %v8257 = vmul.f32 %v8181, %v8199
    %v8258 = vmul.f32 %v8182, %v8195
    %v8259 = vmul.f32 %v8183, %v8199
    %v8260 = vmul.f32 %v8184, %v8195
    %v8261 = vmul.f32 %v8185, %v8199
    %v8262 = vmul.f32 %v8186, %v8195
    %v8263 = vmul.f32 %v8187, %v8199
    %v8264 = vmul.f32 %v8188, %v8195
    %v8265 = vmul.f32 %v8189, %v8199
    %v8266 = vadd.f32 %v5453, %v8202
    %v8267 = vadd.f32 %v5454, %v8203
    %v8268 = vadd.f32 %v5455, %v8204
    %v8269 = vadd.f32 %v5456, %v8205
    %v8270 = vadd.f32 %v5457, %v8206
    %v8271 = vadd.f32 %v5458, %v8207
    %v8272 = vadd.f32 %v5459, %v8208
    %v8273 = vadd.f32 %v5460, %v8209
    %v8274 = vadd.f32 %v5461, %v8210
    %v8275 = vadd.f32 %v5462, %v8211
    %v8276 = vadd.f32 %v5463, %v8212
    %v8277 = vadd.f32 %v5464, %v8213
    %v8278 = vadd.f32 %v5465, %v8214
    %v8279 = vadd.f32 %v5466, %v8215
    %v8280 = vadd.f32 %v5467, %v8216
    %v8281 = vadd.f32 %v5468, %v8217
    %v8282 = vadd.f32 %v5469, %v8218
    %v8283 = vadd.f32 %v5470, %v8219
    %v8284 = vadd.f32 %v5471, %v8220
    %v8285 = vadd.f32 %v5472, %v8221
    %v8286 = vadd.f32 %v5473, %v8222
    %v8287 = vadd.f32 %v5474, %v8223
    %v8288 = vadd.f32 %v5475, %v8224
    %v8289 = vadd.f32 %v5476, %v8225
    %v8290 = vadd.f32 %v5477, %v8226
    %v8291 = vadd.f32 %v5478, %v8227
    %v8292 = vadd.f32 %v5479, %v8228
    %v8293 = vadd.f32 %v5480, %v8229
    %v8294 = vadd.f32 %v5481, %v8230
    %v8295 = vadd.f32 %v5482, %v8231
    %v8296 = vadd.f32 %v5483, %v8232
    %v8297 = vadd.f32 %v5484, %v8233
    %v8298 = vadd.f32 %v5485, %v8234
    %v8299 = vadd.f32 %v5486, %v8235
    %v8300 = vadd.f32 %v5487, %v8236
    %v8301 = vadd.f32 %v5488, %v8237
    %v8302 = vadd.f32 %v5489, %v8238
    %v8303 = vadd.f32 %v5490, %v8239
    %v8304 = vadd.f32 %v5491, %v8240
    %v8305 = vadd.f32 %v5492, %v8241
    %v8306 = vadd.f32 %v5493, %v8242
    %v8307 = vadd.f32 %v5494, %v8243
    %v8308 = vadd.f32 %v5495, %v8244
    %v8309 = vadd.f32 %v5496, %v8245
    %v8310 = vadd.f32 %v5497, %v8246
    %v8311 = vadd.f32 %v5498, %v8247
    %v8312 = vadd.f32 %v5499, %v8248
    %v8313 = vadd.f32 %v5500, %v8249
    %v8314 = vadd.f32 %v5501, %v8250
    %v8315 = vadd.f32 %v5502, %v8251
    %v8316 = vadd.f32 %v5503, %v8252
    %v8317 = vadd.f32 %v5504, %v8253
    %v8318 = vadd.f32 %v5505, %v8254
    %v8319 = vadd.f32 %v5506, %v8255
    %v8320 = vadd.f32 %v5507, %v8256
    %v8321 = vadd.f32 %v5508, %v8257
    %v8322 = vadd.f32 %v5509, %v8258
    %v8323 = vadd.f32 %v5510, %v8259
    %v8324 = vadd.f32 %v5511, %v8260
    %v8325 = vadd.f32 %v5512, %v8261
    %v8326 = vadd.f32 %v5513, %v8262
    %v8327 = vadd.f32 %v5514, %v8263
    %v8328 = vadd.f32 %v5515, %v8264
    %v8329 = vadd.f32 %v5516, %v8265
    %8330 = vadd.xlane.f32.xlu0 %v636
    %v8331 = vpop.xlane.xlu0 %8330
    %8332 = vadd.xlane.f32.xlu0 %v637
    %v8333 = vpop.xlane.xlu0 %8332
    %8334 = vadd.xlane.f32.xlu0 %v638
    %v8335 = vpop.xlane.xlu0 %8334
    %8336 = vadd.xlane.f32.xlu0 %v639
    %v8337 = vpop.xlane.xlu0 %8336
    %8338 = vadd.xlane.f32.xlu0 %v640
    %v8339 = vpop.xlane.xlu0 %8338
    %8340 = vadd.xlane.f32.xlu0 %v641
    %v8341 = vpop.xlane.xlu0 %8340
    %8342 = vadd.xlane.f32.xlu0 %v642
    %v8343 = vpop.xlane.xlu0 %8342
    %8344 = vadd.xlane.f32.xlu0 %v643
    %v8345 = vpop.xlane.xlu0 %8344
    %8346 = vadd.xlane.f32.xlu0 %v644
    %v8347 = vpop.xlane.xlu0 %8346
    %8348 = vadd.xlane.f32.xlu0 %v645
    %v8349 = vpop.xlane.xlu0 %8348
    %8350 = vadd.xlane.f32.xlu0 %v646
    %v8351 = vpop.xlane.xlu0 %8350
    %8352 = vadd.xlane.f32.xlu0 %v647
    %v8353 = vpop.xlane.xlu0 %8352
    %8354 = vadd.xlane.f32.xlu0 %v648
    %v8355 = vpop.xlane.xlu0 %8354
    %8356 = vadd.xlane.f32.xlu0 %v649
    %v8357 = vpop.xlane.xlu0 %8356
    %8358 = vadd.xlane.f32.xlu0 %v650
    %v8359 = vpop.xlane.xlu0 %8358
    %8360 = vadd.xlane.f32.xlu0 %v651
    %v8361 = vpop.xlane.xlu0 %8360
    %8362 = vadd.xlane.f32.xlu0 %v652
    %v8363 = vpop.xlane.xlu0 %8362
    %8364 = vadd.xlane.f32.xlu0 %v653
    %v8365 = vpop.xlane.xlu0 %8364
    %8366 = vadd.xlane.f32.xlu0 %v654
    %v8367 = vpop.xlane.xlu0 %8366
    %8368 = vadd.xlane.f32.xlu0 %v655
    %v8369 = vpop.xlane.xlu0 %8368
    %8370 = vadd.xlane.f32.xlu0 %v656
    %v8371 = vpop.xlane.xlu0 %8370
    %8372 = vadd.xlane.f32.xlu0 %v657
    %v8373 = vpop.xlane.xlu0 %8372
    %8374 = vadd.xlane.f32.xlu0 %v658
    %v8375 = vpop.xlane.xlu0 %8374
    %8376 = vadd.xlane.f32.xlu0 %v659
    %v8377 = vpop.xlane.xlu0 %8376
    %8378 = vadd.xlane.f32.xlu0 %v660
    %v8379 = vpop.xlane.xlu0 %8378
    %8380 = vadd.xlane.f32.xlu0 %v661
    %v8381 = vpop.xlane.xlu0 %8380
    %8382 = vadd.xlane.f32.xlu0 %v662
    %v8383 = vpop.xlane.xlu0 %8382
    %8384 = vadd.xlane.f32.xlu0 %v663
    %v8385 = vpop.xlane.xlu0 %8384
    %8386 = vadd.xlane.f32.xlu0 %v664
    %v8387 = vpop.xlane.xlu0 %8386
    %8388 = vadd.xlane.f32.xlu0 %v665
    %v8389 = vpop.xlane.xlu0 %8388
    %8390 = vadd.xlane.f32.xlu0 %v666
    %v8391 = vpop.xlane.xlu0 %8390
    %8392 = vadd.xlane.f32.xlu0 %v667
    %v8393 = vpop.xlane.xlu0 %8392
    %v8394 = vadd.f32 %v8266, %v8267
    %8395 = vadd.xlane.f32.xlu0 %v8394
    %v8396 = vpop.xlane.xlu0 %8395
    %v8397 = vadd.f32 %v8268, %v8269
    %8398 = vadd.xlane.f32.xlu0 %v8397
    %v8399 = vpop.xlane.xlu0 %8398
    %v8400 = vadd.f32 %v8270, %v8271
    %8401 = vadd.xlane.f32.xlu0 %v8400
    %v8402 = vpop.xlane.xlu0 %8401
    %v8403 = vadd.f32 %v8272, %v8273
    %8404 = vadd.xlane.f32.xlu0 %v8403
    %v8405 = vpop.xlane.xlu0 %8404
    %v8406 = vadd.f32 %v8274, %v8275
    %8407 = vadd.xlane.f32.xlu0 %v8406
    %v8408 = vpop.xlane.xlu0 %8407
    %v8409 = vadd.f32 %v8276, %v8277
    %8410 = vadd.xlane.f32.xlu0 %v8409
    %v8411 = vpop.xlane.xlu0 %8410
    %v8412 = vadd.f32 %v8278, %v8279
    %8413 = vadd.xlane.f32.xlu0 %v8412
    %v8414 = vpop.xlane.xlu0 %8413
    %v8415 = vadd.f32 %v8280, %v8281
    %8416 = vadd.xlane.f32.xlu0 %v8415
    %v8417 = vpop.xlane.xlu0 %8416
    %v8418 = vadd.f32 %v8282, %v8283
    %8419 = vadd.xlane.f32.xlu0 %v8418
    %v8420 = vpop.xlane.xlu0 %8419
    %v8421 = vadd.f32 %v8284, %v8285
    %8422 = vadd.xlane.f32.xlu0 %v8421
    %v8423 = vpop.xlane.xlu0 %8422
    %v8424 = vadd.f32 %v8286, %v8287
    %8425 = vadd.xlane.f32.xlu0 %v8424
    %v8426 = vpop.xlane.xlu0 %8425
    %v8427 = vadd.f32 %v8288, %v8289
    %8428 = vadd.xlane.f32.xlu0 %v8427
    %v8429 = vpop.xlane.xlu0 %8428
    %v8430 = vadd.f32 %v8290, %v8291
    %8431 = vadd.xlane.f32.xlu0 %v8430
    %v8432 = vpop.xlane.xlu0 %8431
    %v8433 = vadd.f32 %v8292, %v8293
    %8434 = vadd.xlane.f32.xlu0 %v8433
    %v8435 = vpop.xlane.xlu0 %8434
    %v8436 = vadd.f32 %v8294, %v8295
    %8437 = vadd.xlane.f32.xlu0 %v8436
    %v8438 = vpop.xlane.xlu0 %8437
    %v8439 = vadd.f32 %v8296, %v8297
    %8440 = vadd.xlane.f32.xlu0 %v8439
    %v8441 = vpop.xlane.xlu0 %8440
    %v8442 = vadd.f32 %v8298, %v8299
    %8443 = vadd.xlane.f32.xlu0 %v8442
    %v8444 = vpop.xlane.xlu0 %8443
    %v8445 = vadd.f32 %v8300, %v8301
    %8446 = vadd.xlane.f32.xlu0 %v8445
    %v8447 = vpop.xlane.xlu0 %8446
    %v8448 = vadd.f32 %v8302, %v8303
    %8449 = vadd.xlane.f32.xlu0 %v8448
    %v8450 = vpop.xlane.xlu0 %8449
    %v8451 = vadd.f32 %v8304, %v8305
    %8452 = vadd.xlane.f32.xlu0 %v8451
    %v8453 = vpop.xlane.xlu0 %8452
    %v8454 = vadd.f32 %v8306, %v8307
    %8455 = vadd.xlane.f32.xlu0 %v8454
    %v8456 = vpop.xlane.xlu0 %8455
    %v8457 = vadd.f32 %v8308, %v8309
    %8458 = vadd.xlane.f32.xlu0 %v8457
    %v8459 = vpop.xlane.xlu0 %8458
    %v8460 = vadd.f32 %v8310, %v8311
    %8461 = vadd.xlane.f32.xlu0 %v8460
    %v8462 = vpop.xlane.xlu0 %8461
    %v8463 = vadd.f32 %v8312, %v8313
    %8464 = vadd.xlane.f32.xlu0 %v8463
    %v8465 = vpop.xlane.xlu0 %8464
    %v8466 = vadd.f32 %v8314, %v8315
    %8467 = vadd.xlane.f32.xlu0 %v8466
    %v8468 = vpop.xlane.xlu0 %8467
    %v8469 = vadd.f32 %v8316, %v8317
    %8470 = vadd.xlane.f32.xlu0 %v8469
    %v8471 = vpop.xlane.xlu0 %8470
    %v8472 = vadd.f32 %v8318, %v8319
    %8473 = vadd.xlane.f32.xlu0 %v8472
    %v8474 = vpop.xlane.xlu0 %8473
    %v8475 = vadd.f32 %v8320, %v8321
    %8476 = vadd.xlane.f32.xlu0 %v8475
    %v8477 = vpop.xlane.xlu0 %8476
    %v8478 = vadd.f32 %v8322, %v8323
    %8479 = vadd.xlane.f32.xlu0 %v8478
    %v8480 = vpop.xlane.xlu0 %8479
    %v8481 = vadd.f32 %v8324, %v8325
    %8482 = vadd.xlane.f32.xlu0 %v8481
    %v8483 = vpop.xlane.xlu0 %8482
    %v8484 = vadd.f32 %v8326, %v8327
    %8485 = vadd.xlane.f32.xlu0 %v8484
    %v8486 = vpop.xlane.xlu0 %8485
    %v8487 = vadd.f32 %v8328, %v8329
    %8488 = vadd.xlane.f32.xlu0 %v8487
    %v8489 = vpop.xlane.xlu0 %8488
    %v8490 = vadd.f32 %v8331, %v8396
    %v8491 = vadd.f32 %v8333, %v8399
    %v8492 = vadd.f32 %v8335, %v8402
    %v8493 = vadd.f32 %v8337, %v8405
    %v8494 = vadd.f32 %v8339, %v8408
    %v8495 = vadd.f32 %v8341, %v8411
    %v8496 = vadd.f32 %v8343, %v8414
    %v8497 = vadd.f32 %v8345, %v8417
    %v8498 = vadd.f32 %v8347, %v8420
    %v8499 = vadd.f32 %v8349, %v8423
    %v8500 = vadd.f32 %v8351, %v8426
    %v8501 = vadd.f32 %v8353, %v8429
    %v8502 = vadd.f32 %v8355, %v8432
    %v8503 = vadd.f32 %v8357, %v8435
    %v8504 = vadd.f32 %v8359, %v8438
    %v8505 = vadd.f32 %v8361, %v8441
    %v8506 = vadd.f32 %v8363, %v8444
    %v8507 = vadd.f32 %v8365, %v8447
    %v8508 = vadd.f32 %v8367, %v8450
    %v8509 = vadd.f32 %v8369, %v8453
    %v8510 = vadd.f32 %v8371, %v8456
    %v8511 = vadd.f32 %v8373, %v8459
    %v8512 = vadd.f32 %v8375, %v8462
    %v8513 = vadd.f32 %v8377, %v8465
    %v8514 = vadd.f32 %v8379, %v8468
    %v8515 = vadd.f32 %v8381, %v8471
    %v8516 = vadd.f32 %v8383, %v8474
    %v8517 = vadd.f32 %v8385, %v8477
    %v8518 = vadd.f32 %v8387, %v8480
    %v8519 = vadd.f32 %v8389, %v8483
    %v8520 = vadd.f32 %v8391, %v8486
    %v8521 = vadd.f32 %v8393, %v8489
    %v8522 = vld [vmem:[#allocation3] sm:$0x1]
    %v8524 = vlaneseq
    %v8525 = vshrl.u32 %v8524, 7
    %v8526 = vsub.s32 0, %v8525
    %v8527 = vrot.slane %v8522, %v8526
    %v8529 = vadd.f32 %v8490, %v8527
    %v8530 = vadd.f32 %v8491, %v8527
    %v8531 = vadd.f32 %v8492, %v8527
    %v8532 = vadd.f32 %v8493, %v8527
    %v8533 = vadd.f32 %v8494, %v8527
    %v8534 = vadd.f32 %v8495, %v8527
    %v8535 = vadd.f32 %v8496, %v8527
    %v8536 = vadd.f32 %v8497, %v8527
    %v8537 = vadd.f32 %v8498, %v8527
    %v8538 = vadd.f32 %v8499, %v8527
    %v8539 = vadd.f32 %v8500, %v8527
    %v8540 = vadd.f32 %v8501, %v8527
    %v8541 = vadd.f32 %v8502, %v8527
    %v8542 = vadd.f32 %v8503, %v8527
    %v8543 = vadd.f32 %v8504, %v8527
    %v8544 = vadd.f32 %v8505, %v8527
    %v8545 = vadd.f32 %v8506, %v8527
    %v8546 = vadd.f32 %v8507, %v8527
    %v8547 = vadd.f32 %v8508, %v8527
    %v8548 = vadd.f32 %v8509, %v8527
    %v8549 = vadd.f32 %v8510, %v8527
    %v8550 = vadd.f32 %v8511, %v8527
    %v8551 = vadd.f32 %v8512, %v8527
    %v8552 = vadd.f32 %v8513, %v8527
    %v8553 = vadd.f32 %v8514, %v8527
    %v8554 = vadd.f32 %v8515, %v8527
    %v8555 = vadd.f32 %v8516, %v8527
    %v8556 = vadd.f32 %v8517, %v8527
    %v8557 = vadd.f32 %v8518, %v8527
    %v8558 = vadd.f32 %v8519, %v8527
    %v8559 = vadd.f32 %v8520, %v8527
    %v8560 = vadd.f32 %v8521, %v8527
    %v8561 = vxor.u32 %v8529, 2147483648
    %v8562 = vxor.u32 %v8530, 2147483648
    %v8563 = vxor.u32 %v8531, 2147483648
    %v8564 = vxor.u32 %v8532, 2147483648
    %v8565 = vxor.u32 %v8533, 2147483648
    %v8566 = vxor.u32 %v8534, 2147483648
    %v8567 = vxor.u32 %v8535, 2147483648
    %v8568 = vxor.u32 %v8536, 2147483648
    %v8569 = vxor.u32 %v8537, 2147483648
    %v8570 = vxor.u32 %v8538, 2147483648
    %v8571 = vxor.u32 %v8539, 2147483648
    %v8572 = vxor.u32 %v8540, 2147483648
    %v8573 = vxor.u32 %v8541, 2147483648
    %v8574 = vxor.u32 %v8542, 2147483648
    %v8575 = vxor.u32 %v8543, 2147483648
    %v8576 = vxor.u32 %v8544, 2147483648
    %v8577 = vxor.u32 %v8545, 2147483648
    %v8578 = vxor.u32 %v8546, 2147483648
    %v8579 = vxor.u32 %v8547, 2147483648
    %v8580 = vxor.u32 %v8548, 2147483648
    %v8581 = vxor.u32 %v8549, 2147483648
    %v8582 = vxor.u32 %v8550, 2147483648
    %v8583 = vxor.u32 %v8551, 2147483648
    %v8584 = vxor.u32 %v8552, 2147483648
    %v8585 = vxor.u32 %v8553, 2147483648
    %v8586 = vxor.u32 %v8554, 2147483648
    %v8587 = vxor.u32 %v8555, 2147483648
    %v8588 = vxor.u32 %v8556, 2147483648
    %v8589 = vxor.u32 %v8557, 2147483648
    %v8590 = vxor.u32 %v8558, 2147483648
    %v8591 = vxor.u32 %v8559, 2147483648
    %v8592 = vxor.u32 %v8560, 2147483648
    %v8593 = vmul.f32 %v8561, 1.442695
    %v8594 = vpow.pop %v8593
    %v8595 = vmul.f32 %v8562, 1.442695
    %v8596 = vpow.pop %v8595
    %v8597 = vmul.f32 %v8563, 1.442695
    %v8598 = vpow.pop %v8597
    %v8599 = vmul.f32 %v8564, 1.442695
    %v8600 = vpow.pop %v8599
    %v8601 = vmul.f32 %v8565, 1.442695
    %v8602 = vpow.pop %v8601
    %v8603 = vmul.f32 %v8566, 1.442695
    %v8604 = vpow.pop %v8603
    %v8605 = vmul.f32 %v8567, 1.442695
    %v8606 = vpow.pop %v8605
    %v8607 = vmul.f32 %v8568, 1.442695
    %v8608 = vpow.pop %v8607
    %v8609 = vmul.f32 %v8569, 1.442695
    %v8610 = vpow.pop %v8609
    %v8611 = vmul.f32 %v8570, 1.442695
    %v8612 = vpow.pop %v8611
    %v8613 = vmul.f32 %v8571, 1.442695
    %v8614 = vpow.pop %v8613
    %v8615 = vmul.f32 %v8572, 1.442695
    %v8616 = vpow.pop %v8615
    %v8617 = vmul.f32 %v8573, 1.442695
    %v8618 = vpow.pop %v8617
    %v8619 = vmul.f32 %v8574, 1.442695
    %v8620 = vpow.pop %v8619
    %v8621 = vmul.f32 %v8575, 1.442695
    %v8622 = vpow.pop %v8621
    %v8623 = vmul.f32 %v8576, 1.442695
    %v8624 = vpow.pop %v8623
    %v8625 = vmul.f32 %v8577, 1.442695
    %v8626 = vpow.pop %v8625
    %v8627 = vmul.f32 %v8578, 1.442695
    %v8628 = vpow.pop %v8627
    %v8629 = vmul.f32 %v8579, 1.442695
    %v8630 = vpow.pop %v8629
    %v8631 = vmul.f32 %v8580, 1.442695
    %v8632 = vpow.pop %v8631
    %v8633 = vmul.f32 %v8581, 1.442695
    %v8634 = vpow.pop %v8633
    %v8635 = vmul.f32 %v8582, 1.442695
    %v8636 = vpow.pop %v8635
    %v8637 = vmul.f32 %v8583, 1.442695
    %v8638 = vpow.pop %v8637
    %v8639 = vmul.f32 %v8584, 1.442695
    %v8640 = vpow.pop %v8639
    %v8641 = vmul.f32 %v8585, 1.442695
    %v8642 = vpow.pop %v8641
    %v8643 = vmul.f32 %v8586, 1.442695
    %v8644 = vpow.pop %v8643
    %v8645 = vmul.f32 %v8587, 1.442695
    %v8646 = vpow.pop %v8645
    %v8647 = vmul.f32 %v8588, 1.442695
    %v8648 = vpow.pop %v8647
    %v8649 = vmul.f32 %v8589, 1.442695
    %v8650 = vpow.pop %v8649
    %v8651 = vmul.f32 %v8590, 1.442695
    %v8652 = vpow.pop %v8651
    %v8653 = vmul.f32 %v8591, 1.442695
    %v8654 = vpow.pop %v8653
    %v8655 = vmul.f32 %v8592, 1.442695
    %v8656 = vpow.pop %v8655
    %v8657 = vadd.f32 %v8594, 1.0
    %v8658 = vadd.f32 %v8596, 1.0
    %v8659 = vadd.f32 %v8598, 1.0
    %v8660 = vadd.f32 %v8600, 1.0
    %v8661 = vadd.f32 %v8602, 1.0
    %v8662 = vadd.f32 %v8604, 1.0
    %v8663 = vadd.f32 %v8606, 1.0
    %v8664 = vadd.f32 %v8608, 1.0
    %v8665 = vadd.f32 %v8610, 1.0
    %v8666 = vadd.f32 %v8612, 1.0
    %v8667 = vadd.f32 %v8614, 1.0
    %v8668 = vadd.f32 %v8616, 1.0
    %v8669 = vadd.f32 %v8618, 1.0
    %v8670 = vadd.f32 %v8620, 1.0
    %v8671 = vadd.f32 %v8622, 1.0
    %v8672 = vadd.f32 %v8624, 1.0
    %v8673 = vadd.f32 %v8626, 1.0
    %v8674 = vadd.f32 %v8628, 1.0
    %v8675 = vadd.f32 %v8630, 1.0
    %v8676 = vadd.f32 %v8632, 1.0
    %v8677 = vadd.f32 %v8634, 1.0
    %v8678 = vadd.f32 %v8636, 1.0
    %v8679 = vadd.f32 %v8638, 1.0
    %v8680 = vadd.f32 %v8640, 1.0
    %v8681 = vadd.f32 %v8642, 1.0
    %v8682 = vadd.f32 %v8644, 1.0
    %v8683 = vadd.f32 %v8646, 1.0
    %v8684 = vadd.f32 %v8648, 1.0
    %v8685 = vadd.f32 %v8650, 1.0
    %v8686 = vadd.f32 %v8652, 1.0
    %v8687 = vadd.f32 %v8654, 1.0
    %v8688 = vadd.f32 %v8656, 1.0
    %v8689 = vrcp.pop %v8657
    %v8690 = vmul.f32 1.0, %v8689
    %v8691 = vrcp.pop %v8658
    %v8692 = vmul.f32 1.0, %v8691
    %v8693 = vrcp.pop %v8659
    %v8694 = vmul.f32 1.0, %v8693
    %v8695 = vrcp.pop %v8660
    %v8696 = vmul.f32 1.0, %v8695
    %v8697 = vrcp.pop %v8661
    %v8698 = vmul.f32 1.0, %v8697
    %v8699 = vrcp.pop %v8662
    %v8700 = vmul.f32 1.0, %v8699
    %v8701 = vrcp.pop %v8663
    %v8702 = vmul.f32 1.0, %v8701
    %v8703 = vrcp.pop %v8664
    %v8704 = vmul.f32 1.0, %v8703
    %v8705 = vrcp.pop %v8665
    %v8706 = vmul.f32 1.0, %v8705
    %v8707 = vrcp.pop %v8666
    %v8708 = vmul.f32 1.0, %v8707
    %v8709 = vrcp.pop %v8667
    %v8710 = vmul.f32 1.0, %v8709
    %v8711 = vrcp.pop %v8668
    %v8712 = vmul.f32 1.0, %v8711
    %v8713 = vrcp.pop %v8669
    %v8714 = vmul.f32 1.0, %v8713
    %v8715 = vrcp.pop %v8670
    %v8716 = vmul.f32 1.0, %v8715
    %v8717 = vrcp.pop %v8671
    %v8718 = vmul.f32 1.0, %v8717
    %v8719 = vrcp.pop %v8672
    %v8720 = vmul.f32 1.0, %v8719
    %v8721 = vrcp.pop %v8673
    %v8722 = vmul.f32 1.0, %v8721
    %v8723 = vrcp.pop %v8674
    %v8724 = vmul.f32 1.0, %v8723
    %v8725 = vrcp.pop %v8675
    %v8726 = vmul.f32 1.0, %v8725
    %v8727 = vrcp.pop %v8676
    %v8728 = vmul.f32 1.0, %v8727
    %v8729 = vrcp.pop %v8677
    %v8730 = vmul.f32 1.0, %v8729
    %v8731 = vrcp.pop %v8678
    %v8732 = vmul.f32 1.0, %v8731
    %v8733 = vrcp.pop %v8679
    %v8734 = vmul.f32 1.0, %v8733
    %v8735 = vrcp.pop %v8680
    %v8736 = vmul.f32 1.0, %v8735
    %v8737 = vrcp.pop %v8681
    %v8738 = vmul.f32 1.0, %v8737
    %v8739 = vrcp.pop %v8682
    %v8740 = vmul.f32 1.0, %v8739
    %v8741 = vrcp.pop %v8683
    %v8742 = vmul.f32 1.0, %v8741
    %v8743 = vrcp.pop %v8684
    %v8744 = vmul.f32 1.0, %v8743
    %v8745 = vrcp.pop %v8685
    %v8746 = vmul.f32 1.0, %v8745
    %v8747 = vrcp.pop %v8686
    %v8748 = vmul.f32 1.0, %v8747
    %v8749 = vrcp.pop %v8687
    %v8750 = vmul.f32 1.0, %v8749
    %v8751 = vrcp.pop %v8688
    %v8752 = vmul.f32 1.0, %v8751
    %vm8753 = vcmask 7168
    %8754 = vst.msk [vmem:[%s9] sm:$0xff] %vm8753, %v8690
    %8755 = vst.msk [vmem:[%s9 + $0x8] sm:$0xff] %vm8753, %v8692
    %8756 = vst.msk [vmem:[%s9 + $0x10] sm:$0xff] %vm8753, %v8694
    %8757 = vst.msk [vmem:[%s9 + $0x18] sm:$0xff] %vm8753, %v8696
    %8758 = vst.msk [vmem:[%s9 + $0x20] sm:$0xff] %vm8753, %v8698
    %8759 = vst.msk [vmem:[%s9 + $0x28] sm:$0xff] %vm8753, %v8700
    %8760 = vst.msk [vmem:[%s9 + $0x30] sm:$0xff] %vm8753, %v8702
    %8761 = vst.msk [vmem:[%s9 + $0x38] sm:$0xff] %vm8753, %v8704
    %8762 = vst.msk [vmem:[%s9 + $0x40] sm:$0xff] %vm8753, %v8706
    %8763 = vst.msk [vmem:[%s9 + $0x48] sm:$0xff] %vm8753, %v8708
    %8764 = vst.msk [vmem:[%s9 + $0x50] sm:$0xff] %vm8753, %v8710
    %8765 = vst.msk [vmem:[%s9 + $0x58] sm:$0xff] %vm8753, %v8712
    %8766 = vst.msk [vmem:[%s9 + $0x60] sm:$0xff] %vm8753, %v8714
    %8767 = vst.msk [vmem:[%s9 + $0x68] sm:$0xff] %vm8753, %v8716
    %8768 = vst.msk [vmem:[%s9 + $0x70] sm:$0xff] %vm8753, %v8718
    %8769 = vst.msk [vmem:[%s9 + $0x78] sm:$0xff] %vm8753, %v8720
    %8770 = vst.msk [vmem:[%s9 + $0x80] sm:$0xff] %vm8753, %v8722
    %8771 = vst.msk [vmem:[%s9 + $0x88] sm:$0xff] %vm8753, %v8724
    %8772 = vst.msk [vmem:[%s9 + $0x90] sm:$0xff] %vm8753, %v8726
    %8773 = vst.msk [vmem:[%s9 + $0x98] sm:$0xff] %vm8753, %v8728
    %8774 = vst.msk [vmem:[%s9 + $0xa0] sm:$0xff] %vm8753, %v8730
    %8775 = vst.msk [vmem:[%s9 + $0xa8] sm:$0xff] %vm8753, %v8732
    %8776 = vst.msk [vmem:[%s9 + $0xb0] sm:$0xff] %vm8753, %v8734
    %8777 = vst.msk [vmem:[%s9 + $0xb8] sm:$0xff] %vm8753, %v8736
    %8778 = vst.msk [vmem:[%s9 + $0xc0] sm:$0xff] %vm8753, %v8738
    %8779 = vst.msk [vmem:[%s9 + $0xc8] sm:$0xff] %vm8753, %v8740
    %8780 = vst.msk [vmem:[%s9 + $0xd0] sm:$0xff] %vm8753, %v8742
    %8781 = vst.msk [vmem:[%s9 + $0xd8] sm:$0xff] %vm8753, %v8744
    %8782 = vst.msk [vmem:[%s9 + $0xe0] sm:$0xff] %vm8753, %v8746
    %8783 = vst.msk [vmem:[%s9 + $0xe8] sm:$0xff] %vm8753, %v8748
    %8784 = vst.msk [vmem:[%s9 + $0xf0] sm:$0xff] %vm8753, %v8750
    %8785 = vst.msk [vmem:[%s9 + $0xf8] sm:$0xff] %vm8753, %v8752
    // Predicated region
    $region50: #{_disc_forward.1} parent=1 // pred_check
      _
    $region51: #{_disc_forward.1} parent=1 // pred_check_branch
      %8787 = sbr.rel (0) target = $region53
    $region52: #{_disc_forward.1} parent=1 // pred_region
      _
    $region53: #{_disc_forward.1} parent=1 // pred_fallthru
      _
    // Predicated region
    $region54: #{_disc_forward.1} parent=1 // pred_check
      _
    $region55: #{_disc_forward.1} parent=1 // pred_check_branch
      %8789 = sbr.rel (0) target = $region57
    $region56: #{_disc_forward.1} parent=1 // pred_region
      _
    $region57: #{_disc_forward.1} parent=1 // pred_fallthru
      _
    %8790 = vsyncpa [#allocation5], 1
    %8791 = vsyncpa [#allocation7], 1

</llo_original>
